<compile_context>
chip_gen: v6e
topology: v6e:2x2x1
jax: 0.10.0
libtpu: 0.0.40
codegen_flags: <defaults>
</compile_context>

<pallas_src>
import functools

import numpy as np
import jax
import jax.numpy as jnp
from jax.experimental import pallas as pl
from jax.experimental.pallas import tpu as pltpu

_VMEM = pl.BlockSpec(memory_space=pltpu.MemorySpace.VMEM)
_SMEM = pl.BlockSpec(memory_space=pltpu.MemorySpace.SMEM)


# ----------------------------- Pallas kernels ------------------------------ #

def _st_gcn_kernel(v_ref, abd_ref, sprev_ref, snext_ref, wg_ref, gb_ref,
                   wt_ref, bt_ref, wr_ref, br_ref, alpha_ref, o_ref):
    """Fused st_gcn block, lane-dense layout (C, T*V).

    graph 1x1 conv -> block-diag adjacency mix -> (BN1 folded) -> PReLU ->
    (3,1) temporal conv via shift operators -> (BN2 folded) -> + residual
    (1x1 conv, BN folded) -> PReLU.
    """
    v = v_ref[...]                                                   # (Cin, TV)

    # residual branch: BN-folded 1x1 conv on the block input
    res = jnp.dot(wr_ref[...], v, preferred_element_type=jnp.float32) + br_ref[...]

    # ConvTemporalGraphical: 1x1 channel mix, then node mixing with block-diag A
    x = jnp.dot(wg_ref[...], v, preferred_element_type=jnp.float32)
    x = jnp.dot(x, abd_ref[...], preferred_element_type=jnp.float32) + gb_ref[...]

    # tcn: PReLU -> 3-tap temporal conv (zero-padded at T boundary via shift operators)
    a0 = alpha_ref[0]
    x = jnp.where(x >= 0, x, a0 * x)

    x_prev = jnp.dot(x, sprev_ref[...], preferred_element_type=jnp.float32)
    x_next = jnp.dot(x, snext_ref[...], preferred_element_type=jnp.float32)
    acc = (jnp.dot(wt_ref[0], x_prev, preferred_element_type=jnp.float32)
           + jnp.dot(wt_ref[1], x, preferred_element_type=jnp.float32)
           + jnp.dot(wt_ref[2], x_next, preferred_element_type=jnp.float32)
           + bt_ref[...])

    y = acc + res
    a1 = alpha_ref[1]
    o_ref[...] = jnp.where(y >= 0, y, a1 * y)


def _make_txp_kernel(n_layers):
    """Fused TXP-CNN stack: n_layers 3x3 convs, lane-dense layout (C, H*W).

    Layer 0: conv + PReLU.  Layers 1..n-2: conv + PReLU + residual (layer input).
    Layer n-1: conv only.  Each 3x3 tap is a plain 2-D matmul against a precomputed
    (H*W, H*W) gather operator: no padding / broadcast / reshape materialized in-kernel.
    """
    def kernel(*refs):
        x_ref, g_ref = refs[0], refs[1]
        wb = refs[2:2 + 2 * n_layers]
        alpha_ref = refs[2 + 2 * n_layers]
        o_ref = refs[3 + 2 * n_layers]

        x = x_ref[...]                                               # (C0, HW)
        for l in range(n_layers):                                    # static unroll
            w_ref, b_ref = wb[2 * l], wb[2 * l + 1]                  # (9,Cout,Cin), (Cout,1)
            x_in = x
            acc = b_ref[...]
            for k in range(9):                                       # static 3x3 taps
                tap = jnp.dot(x_in, g_ref[k], preferred_element_type=jnp.float32)
                acc = acc + jnp.dot(w_ref[k], tap, preferred_element_type=jnp.float32)
            if l < n_layers - 1:                                     # PReLU on all but last
                al = alpha_ref[l]
                acc = jnp.where(acc >= 0, acc, al * acc)
            if 0 < l < n_layers - 1:                                 # mid-block residual add
                acc = acc + x_in
            x = acc
        o_ref[...] = x
    return kernel


# ------------------------ compile-time constant operators ------------------ #

@functools.lru_cache(maxsize=None)
def _temporal_shift_operators(t, v):
    """(TV, TV) operators: (x @ s_prev)[:, t*V+v] = x[:, (t-1)*V+v] (0 at boundary),
    and likewise s_next for t+1.  Pure constants (NumPy)."""
    tv = t * v
    s_prev = np.eye(tv, k=v, dtype=np.float32)
    s_next = np.eye(tv, k=-v, dtype=np.float32)
    return s_prev, s_next


@functools.lru_cache(maxsize=None)
def _tap_gather_operators(H, W):
    """Nine (H*W, H*W) 0/1 operators: (x @ G[kh*3+kw])[:, h*W+w] = x[:, (h+kh-1)*W+(w+kw-1)]
    (zero when the source falls outside the HxW grid) -- i.e. 3x3 'same' conv taps.
    Pure constants (NumPy)."""
    HW = H * W
    g = np.zeros((9, HW, HW), np.float32)
    for kh in range(3):
        for kw in range(3):
            k = kh * 3 + kw
            for h in range(H):
                hs = h + kh - 1
                if not (0 <= hs < H):
                    continue
                for w in range(W):
                    ws = w + kw - 1
                    if 0 <= ws < W:
                        g[k, hs * W + ws, h * W + w] = 1.0
    return g


@functools.lru_cache(maxsize=None)
def _eye_np(n):
    return np.eye(n, dtype=np.float32)


# ------------------------------- JAX glue ---------------------------------- #

def _bn_affine(p, eps=1e-5):
    """Eval-mode BatchNorm as a per-channel affine: y = scale*x + shift."""
    scale = p['gamma'] / jnp.sqrt(p['var'] + eps)
    shift = p['beta'] - p['mean'] * scale
    return scale, shift


def st_gcn_fused(v_nchw, a, p):
    """v_nchw: (1, Cin, T, V) NCHW; a: (T, V, V). Returns (Cg, T*V) == flat NCHW (1,Cg,T,V)."""
    _, cin, t, vv = v_nchw.shape
    cg = p['wg'].shape[0]
    tv = t * vv
    v_flat = v_nchw[0].reshape(cin, tv)
    a = a.astype(jnp.float32)

    # block-diagonal adjacency: abd[t*V+v, t*V+w] = a[t, v, w]   (input-dependent)
    eye_t = _eye_np(t)
    abd = (eye_t[:, None, :, None] * a[:, :, None, :]).reshape(tv, tv)

    # constant temporal shift operators for the (3,1) conv
    s_prev, s_next = _temporal_shift_operators(t, vv)

    # fold eval-mode BatchNorm affine into conv weights / biases
    s1, b1 = _bn_affine(p['bn1'])
    s2, b2 = _bn_affine(p['bn2'])
    sr, br_shift = _bn_affine(p['bnr'])

    wg_f = s1[:, None] * p['wg']                                          # (Cg, Cin)
    colsum_a = a.sum(axis=1).reshape(tv)                                  # sum_v a[t, v, w]
    gcn_bias = (s1 * p['bg'])[:, None] * colsum_a[None, :] + b1[:, None]  # (Cg, TV)
    wt_f = p['wt'] * s2[None, :, None]                                    # (3, Cg, Cg)
    bt_f = (s2 * p['bt'] + b2)[:, None]                                   # (Cg, 1)
    wr_f = sr[:, None] * p['wr']                                          # (Cg, Cin)
    br_f = (sr * p['br'] + br_shift)[:, None]                             # (Cg, 1)
    alphas = jnp.concatenate([p['alpha_tcn'], p['alpha_out']])            # (2,)

    return pl.pallas_call(
        _st_gcn_kernel,
        out_shape=jax.ShapeDtypeStruct((cg, tv), jnp.float32),
        in_specs=[_VMEM] * 10 + [_SMEM],
        out_specs=_VMEM,
    )(v_flat, abd, s_prev, s_next, wg_f, gcn_bias, wt_f, bt_f, wr_f, br_f, alphas)


def txp_fused(x_flat, layers, H, W):
    """x_flat: (C0, H*W); layers: [{'w','b'[,'alpha']}, ...]. Returns (Cout_last, H*W)."""
    hw = H * W
    n_layers = len(layers)
    g = _tap_gather_operators(H, W)                                       # const (9, HW, HW)

    wb_args = []
    for lp in layers:
        cout, cin = lp['w'].shape[0], lp['w'].shape[1]
        w_taps = jnp.transpose(lp['w'], (2, 3, 0, 1)).reshape(9, cout, cin)
        wb_args += [w_taps, lp['b'][:, None]]
    alpha_list = [layers[l]['alpha'] for l in range(n_layers - 1)]
    alphas = (jnp.concatenate(alpha_list) if alpha_list
              else jnp.zeros((1,), jnp.float32))

    cout_last = layers[-1]['w'].shape[0]
    return pl.pallas_call(
        _make_txp_kernel(n_layers),
        out_shape=jax.ShapeDtypeStruct((cout_last, hw), jnp.float32),
        in_specs=[_VMEM, _VMEM] + [_VMEM] * len(wb_args) + [_SMEM],
        out_specs=_VMEM,
    )(x_flat, g, *wb_args, alphas)


def social_stgcnn_forward(v, a, params):
    """Single-column social_stgcnn.forward. v: (1, input_feat, T, V), a: (T, V, V)."""
    assert v.shape[0] == 1, "single-column / batch-1 path"
    _, _, t, vv = v.shape
    cg = params['stgcn']['wg'].shape[0]

    st_out = st_gcn_fused(v, a, params['stgcn'])          # flat NCHW (1, Cg, T, V)
    # torch .view((N, T, Cg, V)): pure row-major reinterpretation -> free reshape
    x = st_out.reshape(t, cg * vv)

    layers = [params['txp_first']] + list(params['txp_mid']) + [params['txp_last']]
    out = txp_fused(x, layers, H=cg, W=vv)                # flat NCHW (1, P, Cg, V)
    p_len = out.shape[0]
    # final torch .view((N, Cg, P, V)): again a pure reinterpretation
    return out.reshape(1, cg, p_len, vv)


# ---------------------------- deterministic init ---------------------------- #

def init_params(key, input_feat, output_feat, seq_len, pred_seq_len, n_txpcnn):
    keys = iter(jax.random.split(key, 64))

    def nrm(shape, scale=0.1):
        return scale * jax.random.normal(next(keys), shape, jnp.float32)

    def bn(c):
        return dict(gamma=jnp.ones((c,), jnp.float32),
                    beta=jnp.zeros((c,), jnp.float32),
                    mean=jnp.zeros((c,), jnp.float32),
                    var=jnp.ones((c,), jnp.float32))

    prelu = lambda: jnp.full((1,), 0.25, jnp.float32)                 # torch default

    stgcn = dict(
        wg=nrm((output_feat, input_feat)), bg=nrm((output_feat,)),    # Conv2d(Cin,Cg,(1,1))
        wt=nrm((3, output_feat, output_feat)), bt=nrm((output_feat,)),# Conv2d(Cg,Cg,(3,1))
        wr=nrm((output_feat, input_feat)), br=nrm((output_feat,)),    # residual Conv2d 1x1
        bn1=bn(output_feat), bn2=bn(output_feat), bnr=bn(output_feat),
        alpha_tcn=prelu(), alpha_out=prelu(),
    )
    txp_first = dict(w=nrm((pred_seq_len, seq_len, 3, 3)),
                     b=nrm((pred_seq_len,)), alpha=prelu())
    txp_mid = [dict(w=nrm((pred_seq_len, pred_seq_len, 3, 3)),
                    b=nrm((pred_seq_len,)), alpha=prelu())
               for _ in range(n_txpcnn - 1)]
    txp_last = dict(w=nrm((pred_seq_len, pred_seq_len, 3, 3)),
                    b=nrm((pred_seq_len,)))
    return dict(stgcn=stgcn, txp_first=txp_first, txp_mid=txp_mid,
                txp_last=txp_last)


if __name__ == "__main__":
    # small shapes consistent with the module (n_stgcnn=1, kernel_size=3)
    input_feat, output_feat = 2, 5
    seq_len, pred_seq_len = 8, 12
    n_txpcnn = 3
    V = 8                                # number of pedestrians (graph nodes)

    key = jax.random.PRNGKey(0)
    kp, kv, ka = jax.random.split(key, 3)
    params = init_params(kp, input_feat, output_feat, seq_len, pred_seq_len, n_txpcnn)

    v = jax.random.normal(kv, (1, input_feat, seq_len, V), jnp.float32)
    a = jax.random.normal(ka, (seq_len, V, V), jnp.float32)

    fwd = jax.jit(lambda v_, a_: social_stgcnn_forward(v_, a_, params))
    out = jax.block_until_ready(fwd(v, a))
    assert out.shape == (1, output_feat, pred_seq_len, V), out.shape
    print("KERNEL_OK")
</pallas_src>

<mosaic_0001>
module attributes {stable_mosaic.version = 11 : i64} {
  func.func @_st_gcn_kernel(%arg0: memref<2x64xf32, #tpu.memory_space<vmem>>, %arg1: memref<64x64xf32, #tpu.memory_space<vmem>>, %arg2: memref<64x64xf32, #tpu.memory_space<vmem>>, %arg3: memref<64x64xf32, #tpu.memory_space<vmem>>, %arg4: memref<5x2xf32, #tpu.memory_space<vmem>>, %arg5: memref<5x64xf32, #tpu.memory_space<vmem>>, %arg6: memref<3x5x5xf32, #tpu.memory_space<vmem>>, %arg7: memref<5x1xf32, #tpu.memory_space<vmem>>, %arg8: memref<5x2xf32, #tpu.memory_space<vmem>>, %arg9: memref<5x1xf32, #tpu.memory_space<vmem>>, %arg10: memref<2xf32, #tpu.memory_space<smem>>, %arg11: memref<5x64xf32, #tpu.memory_space<vmem>>) attributes {dimension_semantics = [], scalar_prefetch = 0 : i64, scratch_operands = 0 : i64, tpu.core_type = #tpu.core_type<tc>} {
    %c0 = arith.constant 0 : index
    %c0_0 = arith.constant 0 : index
    %0 = vector.load %arg0[%c0, %c0_0] : memref<2x64xf32, #tpu.memory_space<vmem>>, vector<2x64xf32>
    %c0_1 = arith.constant 0 : index
    %c0_2 = arith.constant 0 : index
    %1 = vector.load %arg8[%c0_1, %c0_2] : memref<5x2xf32, #tpu.memory_space<vmem>>, vector<5x2xf32>
    %cst = arith.constant dense<0.000000e+00> : vector<5x64xf32>
    %2 = tpu.matmul %1, %0, %cst {dimension_numbers = #tpu.dot_dimension_numbers<[1], [0], [0], [1], [0, 0, 1, 1], [], []>} : vector<5x2xf32>, vector<2x64xf32>, vector<5x64xf32> -> vector<5x64xf32>
    %c0_3 = arith.constant 0 : index
    %c0_4 = arith.constant 0 : index
    %3 = vector.load %arg9[%c0_3, %c0_4] : memref<5x1xf32, #tpu.memory_space<vmem>>, vector<5x1xf32>
    %4 = vector.broadcast %3 : vector<5x1xf32> to vector<5x64xf32>
    %5 = arith.addf %2, %4 : vector<5x64xf32>
    %c0_5 = arith.constant 0 : index
    %c0_6 = arith.constant 0 : index
    %6 = vector.load %arg4[%c0_5, %c0_6] : memref<5x2xf32, #tpu.memory_space<vmem>>, vector<5x2xf32>
    %cst_7 = arith.constant dense<0.000000e+00> : vector<5x64xf32>
    %7 = tpu.matmul %6, %0, %cst_7 {dimension_numbers = #tpu.dot_dimension_numbers<[1], [0], [0], [1], [0, 0, 1, 1], [], []>} : vector<5x2xf32>, vector<2x64xf32>, vector<5x64xf32> -> vector<5x64xf32>
    %c0_8 = arith.constant 0 : index
    %c0_9 = arith.constant 0 : index
    %8 = vector.load %arg1[%c0_8, %c0_9] : memref<64x64xf32, #tpu.memory_space<vmem>>, vector<64x64xf32>
    %cst_10 = arith.constant dense<0.000000e+00> : vector<5x64xf32>
    %9 = tpu.matmul %7, %8, %cst_10 {dimension_numbers = #tpu.dot_dimension_numbers<[1], [0], [0], [1], [0, 0, 1, 1], [], []>} : vector<5x64xf32>, vector<64x64xf32>, vector<5x64xf32> -> vector<5x64xf32>
    %c0_11 = arith.constant 0 : index
    %c0_12 = arith.constant 0 : index
    %10 = vector.load %arg5[%c0_11, %c0_12] : memref<5x64xf32, #tpu.memory_space<vmem>>, vector<5x64xf32>
    %11 = arith.addf %9, %10 : vector<5x64xf32>
    %c0_13 = arith.constant 0 : index
    %12 = memref.load %arg10[%c0_13] : memref<2xf32, #tpu.memory_space<smem>>
    %cst_14 = arith.constant 0.000000e+00 : f32
    %13 = vector.broadcast %cst_14 : f32 to vector<5x64xf32>
    %14 = arith.cmpf oge, %11, %13 : vector<5x64xf32>
    %15 = vector.broadcast %12 : f32 to vector<5x64xf32>
    %16 = arith.mulf %15, %11 : vector<5x64xf32>
    %17 = arith.select %14, %11, %16 : vector<5x64xi1>, vector<5x64xf32>
    %c0_15 = arith.constant 0 : index
    %c0_16 = arith.constant 0 : index
    %18 = vector.load %arg2[%c0_15, %c0_16] : memref<64x64xf32, #tpu.memory_space<vmem>>, vector<64x64xf32>
    %cst_17 = arith.constant dense<0.000000e+00> : vector<5x64xf32>
    %19 = tpu.matmul %17, %18, %cst_17 {dimension_numbers = #tpu.dot_dimension_numbers<[1], [0], [0], [1], [0, 0, 1, 1], [], []>} : vector<5x64xf32>, vector<64x64xf32>, vector<5x64xf32> -> vector<5x64xf32>
    %c0_18 = arith.constant 0 : index
    %c0_19 = arith.constant 0 : index
    %20 = vector.load %arg3[%c0_18, %c0_19] : memref<64x64xf32, #tpu.memory_space<vmem>>, vector<64x64xf32>
    %cst_20 = arith.constant dense<0.000000e+00> : vector<5x64xf32>
    %21 = tpu.matmul %17, %20, %cst_20 {dimension_numbers = #tpu.dot_dimension_numbers<[1], [0], [0], [1], [0, 0, 1, 1], [], []>} : vector<5x64xf32>, vector<64x64xf32>, vector<5x64xf32> -> vector<5x64xf32>
    %c0_21 = arith.constant 0 : index
    %c0_22 = arith.constant 0 : index
    %c0_23 = arith.constant 0 : index
    %22 = vector.load %arg6[%c0_21, %c0_22, %c0_23] : memref<3x5x5xf32, #tpu.memory_space<vmem>>, vector<1x5x5xf32>
    %23 = vector.shape_cast %22 : vector<1x5x5xf32> to vector<5x5xf32>
    %cst_24 = arith.constant dense<0.000000e+00> : vector<5x64xf32>
    %24 = tpu.matmul %23, %19, %cst_24 {dimension_numbers = #tpu.dot_dimension_numbers<[1], [0], [0], [1], [0, 0, 1, 1], [], []>} : vector<5x5xf32>, vector<5x64xf32>, vector<5x64xf32> -> vector<5x64xf32>
    %c1 = arith.constant 1 : index
    %c0_25 = arith.constant 0 : index
    %c0_26 = arith.constant 0 : index
    %25 = vector.load %arg6[%c1, %c0_25, %c0_26] : memref<3x5x5xf32, #tpu.memory_space<vmem>>, vector<1x5x5xf32>
    %26 = vector.shape_cast %25 : vector<1x5x5xf32> to vector<5x5xf32>
    %cst_27 = arith.constant dense<0.000000e+00> : vector<5x64xf32>
    %27 = tpu.matmul %26, %17, %cst_27 {dimension_numbers = #tpu.dot_dimension_numbers<[1], [0], [0], [1], [0, 0, 1, 1], [], []>} : vector<5x5xf32>, vector<5x64xf32>, vector<5x64xf32> -> vector<5x64xf32>
    %28 = arith.addf %24, %27 : vector<5x64xf32>
    %c2 = arith.constant 2 : index
    %c0_28 = arith.constant 0 : index
    %c0_29 = arith.constant 0 : index
    %29 = vector.load %arg6[%c2, %c0_28, %c0_29] : memref<3x5x5xf32, #tpu.memory_space<vmem>>, vector<1x5x5xf32>
    %30 = vector.shape_cast %29 : vector<1x5x5xf32> to vector<5x5xf32>
    %cst_30 = arith.constant dense<0.000000e+00> : vector<5x64xf32>
    %31 = tpu.matmul %30, %21, %cst_30 {dimension_numbers = #tpu.dot_dimension_numbers<[1], [0], [0], [1], [0, 0, 1, 1], [], []>} : vector<5x5xf32>, vector<5x64xf32>, vector<5x64xf32> -> vector<5x64xf32>
    %32 = arith.addf %28, %31 : vector<5x64xf32>
    %c0_31 = arith.constant 0 : index
    %c0_32 = arith.constant 0 : index
    %33 = vector.load %arg7[%c0_31, %c0_32] : memref<5x1xf32, #tpu.memory_space<vmem>>, vector<5x1xf32>
    %34 = vector.broadcast %33 : vector<5x1xf32> to vector<5x64xf32>
    %35 = arith.addf %32, %34 : vector<5x64xf32>
    %36 = arith.addf %35, %5 : vector<5x64xf32>
    %c1_33 = arith.constant 1 : index
    %37 = memref.load %arg10[%c1_33] : memref<2xf32, #tpu.memory_space<smem>>
    %cst_34 = arith.constant 0.000000e+00 : f32
    %38 = vector.broadcast %cst_34 : f32 to vector<5x64xf32>
    %39 = arith.cmpf oge, %36, %38 : vector<5x64xf32>
    %40 = vector.broadcast %37 : f32 to vector<5x64xf32>
    %41 = arith.mulf %40, %36 : vector<5x64xf32>
    %42 = arith.select %39, %36, %41 : vector<5x64xi1>, vector<5x64xf32>
    %c0_35 = arith.constant 0 : index
    %c0_36 = arith.constant 0 : index
    %43 = vector.load %arg11[%c0_35, %c0_36] : memref<5x64xf32, #tpu.memory_space<vmem>>, vector<5x64xf32>
    tpu.vector_store %arg11[%c0_35, %c0_36], %42 {strides = array<i32>} : memref<5x64xf32, #tpu.memory_space<vmem>>, vector<5x64xf32>,
    return
  }
}

module attributes {stable_mosaic.version = 11 : i64} {
  func.func @kernel(%arg0: memref<8x40xf32, #tpu.memory_space<vmem>>, %arg1: memref<9x40x40xf32, #tpu.memory_space<vmem>>, %arg2: memref<9x12x8xf32, #tpu.memory_space<vmem>>, %arg3: memref<12x1xf32, #tpu.memory_space<vmem>>, %arg4: memref<9x12x12xf32, #tpu.memory_space<vmem>>, %arg5: memref<12x1xf32, #tpu.memory_space<vmem>>, %arg6: memref<9x12x12xf32, #tpu.memory_space<vmem>>, %arg7: memref<12x1xf32, #tpu.memory_space<vmem>>, %arg8: memref<9x12x12xf32, #tpu.memory_space<vmem>>, %arg9: memref<12x1xf32, #tpu.memory_space<vmem>>, %arg10: memref<3xf32, #tpu.memory_space<smem>>, %arg11: memref<12x40xf32, #tpu.memory_space<vmem>>) attributes {dimension_semantics = [], scalar_prefetch = 0 : i64, scratch_operands = 0 : i64, tpu.core_type = #tpu.core_type<tc>} {
    %c0 = arith.constant 0 : index
    %c0_0 = arith.constant 0 : index
    %0 = vector.load %arg0[%c0, %c0_0] : memref<8x40xf32, #tpu.memory_space<vmem>>, vector<8x40xf32>
    %c0_1 = arith.constant 0 : index
    %c0_2 = arith.constant 0 : index
    %1 = vector.load %arg3[%c0_1, %c0_2] : memref<12x1xf32, #tpu.memory_space<vmem>>, vector<12x1xf32>
    %c0_3 = arith.constant 0 : index
    %c0_4 = arith.constant 0 : index
    %c0_5 = arith.constant 0 : index
    %2 = vector.load %arg1[%c0_3, %c0_4, %c0_5] : memref<9x40x40xf32, #tpu.memory_space<vmem>>, vector<1x40x40xf32>
    %3 = vector.shape_cast %2 : vector<1x40x40xf32> to vector<40x40xf32>
    %cst = arith.constant dense<0.000000e+00> : vector<8x40xf32>
    %4 = tpu.matmul %0, %3, %cst {dimension_numbers = #tpu.dot_dimension_numbers<[1], [0], [0], [1], [0, 0, 1, 1], [], []>} : vector<8x40xf32>, vector<40x40xf32>, vector<8x40xf32> -> vector<8x40xf32>
    %c0_6 = arith.constant 0 : index
    %c0_7 = arith.constant 0 : index
    %c0_8 = arith.constant 0 : index
    %5 = vector.load %arg2[%c0_6, %c0_7, %c0_8] : memref<9x12x8xf32, #tpu.memory_space<vmem>>, vector<1x12x8xf32>
    %6 = vector.shape_cast %5 : vector<1x12x8xf32> to vector<12x8xf32>
    %cst_9 = arith.constant dense<0.000000e+00> : vector<12x40xf32>
    %7 = tpu.matmul %6, %4, %cst_9 {dimension_numbers = #tpu.dot_dimension_numbers<[1], [0], [0], [1], [0, 0, 1, 1], [], []>} : vector<12x8xf32>, vector<8x40xf32>, vector<12x40xf32> -> vector<12x40xf32>
    %8 = vector.broadcast %1 : vector<12x1xf32> to vector<12x40xf32>
    %9 = arith.addf %8, %7 : vector<12x40xf32>
    %c1 = arith.constant 1 : index
    %c0_10 = arith.constant 0 : index
    %c0_11 = arith.constant 0 : index
    %10 = vector.load %arg1[%c1, %c0_10, %c0_11] : memref<9x40x40xf32, #tpu.memory_space<vmem>>, vector<1x40x40xf32>
    %11 = vector.shape_cast %10 : vector<1x40x40xf32> to vector<40x40xf32>
    %cst_12 = arith.constant dense<0.000000e+00> : vector<8x40xf32>
    %12 = tpu.matmul %0, %11, %cst_12 {dimension_numbers = #tpu.dot_dimension_numbers<[1], [0], [0], [1], [0, 0, 1, 1], [], []>} : vector<8x40xf32>, vector<40x40xf32>, vector<8x40xf32> -> vector<8x40xf32>
    %c1_13 = arith.constant 1 : index
    %c0_14 = arith.constant 0 : index
    %c0_15 = arith.constant 0 : index
    %13 = vector.load %arg2[%c1_13, %c0_14, %c0_15] : memref<9x12x8xf32, #tpu.memory_space<vmem>>, vector<1x12x8xf32>
    %14 = vector.shape_cast %13 : vector<1x12x8xf32> to vector<12x8xf32>
    %cst_16 = arith.constant dense<0.000000e+00> : vector<12x40xf32>
    %15 = tpu.matmul %14, %12, %cst_16 {dimension_numbers = #tpu.dot_dimension_numbers<[1], [0], [0], [1], [0, 0, 1, 1], [], []>} : vector<12x8xf32>, vector<8x40xf32>, vector<12x40xf32> -> vector<12x40xf32>
    %16 = arith.addf %9, %15 : vector<12x40xf32>
    %c2 = arith.constant 2 : index
    %c0_17 = arith.constant 0 : index
    %c0_18 = arith.constant 0 : index
    %17 = vector.load %arg1[%c2, %c0_17, %c0_18] : memref<9x40x40xf32, #tpu.memory_space<vmem>>, vector<1x40x40xf32>
    %18 = vector.shape_cast %17 : vector<1x40x40xf32> to vector<40x40xf32>
    %cst_19 = arith.constant dense<0.000000e+00> : vector<8x40xf32>
    %19 = tpu.matmul %0, %18, %cst_19 {dimension_numbers = #tpu.dot_dimension_numbers<[1], [0], [0], [1], [0, 0, 1, 1], [], []>} : vector<8x40xf32>, vector<40x40xf32>, vector<8x40xf32> -> vector<8x40xf32>
    %c2_20 = arith.constant 2 : index
    %c0_21 = arith.constant 0 : index
    %c0_22 = arith.constant 0 : index
    %20 = vector.load %arg2[%c2_20, %c0_21, %c0_22] : memref<9x12x8xf32, #tpu.memory_space<vmem>>, vector<1x12x8xf32>
    %21 = vector.shape_cast %20 : vector<1x12x8xf32> to vector<12x8xf32>
    %cst_23 = arith.constant dense<0.000000e+00> : vector<12x40xf32>
    %22 = tpu.matmul %21, %19, %cst_23 {dimension_numbers = #tpu.dot_dimension_numbers<[1], [0], [0], [1], [0, 0, 1, 1], [], []>} : vector<12x8xf32>, vector<8x40xf32>, vector<12x40xf32> -> vector<12x40xf32>
    %23 = arith.addf %16, %22 : vector<12x40xf32>
    %c3 = arith.constant 3 : index
    %c0_24 = arith.constant 0 : index
    %c0_25 = arith.constant 0 : index
    %24 = vector.load %arg1[%c3, %c0_24, %c0_25] : memref<9x40x40xf32, #tpu.memory_space<vmem>>, vector<1x40x40xf32>
    %25 = vector.shape_cast %24 : vector<1x40x40xf32> to vector<40x40xf32>
    %cst_26 = arith.constant dense<0.000000e+00> : vector<8x40xf32>
    %26 = tpu.matmul %0, %25, %cst_26 {dimension_numbers = #tpu.dot_dimension_numbers<[1], [0], [0], [1], [0, 0, 1, 1], [], []>} : vector<8x40xf32>, vector<40x40xf32>, vector<8x40xf32> -> vector<8x40xf32>
    %c3_27 = arith.constant 3 : index
    %c0_28 = arith.constant 0 : index
    %c0_29 = arith.constant 0 : index
    %27 = vector.load %arg2[%c3_27, %c0_28, %c0_29] : memref<9x12x8xf32, #tpu.memory_space<vmem>>, vector<1x12x8xf32>
    %28 = vector.shape_cast %27 : vector<1x12x8xf32> to vector<12x8xf32>
    %cst_30 = arith.constant dense<0.000000e+00> : vector<12x40xf32>
    %29 = tpu.matmul %28, %26, %cst_30 {dimension_numbers = #tpu.dot_dimension_numbers<[1], [0], [0], [1], [0, 0, 1, 1], [], []>} : vector<12x8xf32>, vector<8x40xf32>, vector<12x40xf32> -> vector<12x40xf32>
    %30 = arith.addf %23, %29 : vector<12x40xf32>
    %c4 = arith.constant 4 : index
    %c0_31 = arith.constant 0 : index
    %c0_32 = arith.constant 0 : index
    %31 = vector.load %arg1[%c4, %c0_31, %c0_32] : memref<9x40x40xf32, #tpu.memory_space<vmem>>, vector<1x40x40xf32>
    %32 = vector.shape_cast %31 : vector<1x40x40xf32> to vector<40x40xf32>
    %cst_33 = arith.constant dense<0.000000e+00> : vector<8x40xf32>
    %33 = tpu.matmul %0, %32, %cst_33 {dimension_numbers = #tpu.dot_dimension_numbers<[1], [0], [0], [1], [0, 0, 1, 1], [], []>} : vector<8x40xf32>, vector<40x40xf32>, vector<8x40xf32> -> vector<8x40xf32>
    %c4_34 = arith.constant 4 : index
    %c0_35 = arith.constant 0 : index
    %c0_36 = arith.constant 0 : index
    %34 = vector.load %arg2[%c4_34, %c0_35, %c0_36] : memref<9x12x8xf32, #tpu.memory_space<vmem>>, vector<1x12x8xf32>
    %35 = vector.shape_cast %34 : vector<1x12x8xf32> to vector<12x8xf32>
    %cst_37 = arith.constant dense<0.000000e+00> : vector<12x40xf32>
    %36 = tpu.matmul %35, %33, %cst_37 {dimension_numbers = #tpu.dot_dimension_numbers<[1], [0], [0], [1], [0, 0, 1, 1], [], []>} : vector<12x8xf32>, vector<8x40xf32>, vector<12x40xf32> -> vector<12x40xf32>
    %37 = arith.addf %30, %36 : vector<12x40xf32>
    %c5 = arith.constant 5 : index
    %c0_38 = arith.constant 0 : index
    %c0_39 = arith.constant 0 : index
    %38 = vector.load %arg1[%c5, %c0_38, %c0_39] : memref<9x40x40xf32, #tpu.memory_space<vmem>>, vector<1x40x40xf32>
    %39 = vector.shape_cast %38 : vector<1x40x40xf32> to vector<40x40xf32>
    %cst_40 = arith.constant dense<0.000000e+00> : vector<8x40xf32>
    %40 = tpu.matmul %0, %39, %cst_40 {dimension_numbers = #tpu.dot_dimension_numbers<[1], [0], [0], [1], [0, 0, 1, 1], [], []>} : vector<8x40xf32>, vector<40x40xf32>, vector<8x40xf32> -> vector<8x40xf32>
    %c5_41 = arith.constant 5 : index
    %c0_42 = arith.constant 0 : index
    %c0_43 = arith.constant 0 : index
    %41 = vector.load %arg2[%c5_41, %c0_42, %c0_43] : memref<9x12x8xf32, #tpu.memory_space<vmem>>, vector<1x12x8xf32>
    %42 = vector.shape_cast %41 : vector<1x12x8xf32> to vector<12x8xf32>
    %cst_44 = arith.constant dense<0.000000e+00> : vector<12x40xf32>
    %43 = tpu.matmul %42, %40, %cst_44 {dimension_numbers = #tpu.dot_dimension_numbers<[1], [0], [0], [1], [0, 0, 1, 1], [], []>} : vector<12x8xf32>, vector<8x40xf32>, vector<12x40xf32> -> vector<12x40xf32>
    %44 = arith.addf %37, %43 : vector<12x40xf32>
    %c6 = arith.constant 6 : index
    %c0_45 = arith.constant 0 : index
    %c0_46 = arith.constant 0 : index
    %45 = vector.load %arg1[%c6, %c0_45, %c0_46] : memref<9x40x40xf32, #tpu.memory_space<vmem>>, vector<1x40x40xf32>
    %46 = vector.shape_cast %45 : vector<1x40x40xf32> to vector<40x40xf32>
    %cst_47 = arith.constant dense<0.000000e+00> : vector<8x40xf32>
    %47 = tpu.matmul %0, %46, %cst_47 {dimension_numbers = #tpu.dot_dimension_numbers<[1], [0], [0], [1], [0, 0, 1, 1], [], []>} : vector<8x40xf32>, vector<40x40xf32>, vector<8x40xf32> -> vector<8x40xf32>
    %c6_48 = arith.constant 6 : index
    %c0_49 = arith.constant 0 : index
    %c0_50 = arith.constant 0 : index
    %48 = vector.load %arg2[%c6_48, %c0_49, %c0_50] : memref<9x12x8xf32, #tpu.memory_space<vmem>>, vector<1x12x8xf32>
    %49 = vector.shape_cast %48 : vector<1x12x8xf32> to vector<12x8xf32>
    %cst_51 = arith.constant dense<0.000000e+00> : vector<12x40xf32>
    %50 = tpu.matmul %49, %47, %cst_51 {dimension_numbers = #tpu.dot_dimension_numbers<[1], [0], [0], [1], [0, 0, 1, 1], [], []>} : vector<12x8xf32>, vector<8x40xf32>, vector<12x40xf32> -> vector<12x40xf32>
    %51 = arith.addf %44, %50 : vector<12x40xf32>
    %c7 = arith.constant 7 : index
    %c0_52 = arith.constant 0 : index
    %c0_53 = arith.constant 0 : index
    %52 = vector.load %arg1[%c7, %c0_52, %c0_53] : memref<9x40x40xf32, #tpu.memory_space<vmem>>, vector<1x40x40xf32>
    %53 = vector.shape_cast %52 : vector<1x40x40xf32> to vector<40x40xf32>
    %cst_54 = arith.constant dense<0.000000e+00> : vector<8x40xf32>
    %54 = tpu.matmul %0, %53, %cst_54 {dimension_numbers = #tpu.dot_dimension_numbers<[1], [0], [0], [1], [0, 0, 1, 1], [], []>} : vector<8x40xf32>, vector<40x40xf32>, vector<8x40xf32> -> vector<8x40xf32>
    %c7_55 = arith.constant 7 : index
    %c0_56 = arith.constant 0 : index
    %c0_57 = arith.constant 0 : index
    %55 = vector.load %arg2[%c7_55, %c0_56, %c0_57] : memref<9x12x8xf32, #tpu.memory_space<vmem>>, vector<1x12x8xf32>
    %56 = vector.shape_cast %55 : vector<1x12x8xf32> to vector<12x8xf32>
    %cst_58 = arith.constant dense<0.000000e+00> : vector<12x40xf32>
    %57 = tpu.matmul %56, %54, %cst_58 {dimension_numbers = #tpu.dot_dimension_numbers<[1], [0], [0], [1], [0, 0, 1, 1], [], []>} : vector<12x8xf32>, vector<8x40xf32>, vector<12x40xf32> -> vector<12x40xf32>
    %58 = arith.addf %51, %57 : vector<12x40xf32>
    %c8 = arith.constant 8 : index
    %c0_59 = arith.constant 0 : index
    %c0_60 = arith.constant 0 : index
    %59 = vector.load %arg1[%c8, %c0_59, %c0_60] : memref<9x40x40xf32, #tpu.memory_space<vmem>>, vector<1x40x40xf32>
    %60 = vector.shape_cast %59 : vector<1x40x40xf32> to vector<40x40xf32>
    %cst_61 = arith.constant dense<0.000000e+00> : vector<8x40xf32>
    %61 = tpu.matmul %0, %60, %cst_61 {dimension_numbers = #tpu.dot_dimension_numbers<[1], [0], [0], [1], [0, 0, 1, 1], [], []>} : vector<8x40xf32>, vector<40x40xf32>, vector<8x40xf32> -> vector<8x40xf32>
    %c8_62 = arith.constant 8 : index
    %c0_63 = arith.constant 0 : index
    %c0_64 = arith.constant 0 : index
    %62 = vector.load %arg2[%c8_62, %c0_63, %c0_64] : memref<9x12x8xf32, #tpu.memory_space<vmem>>, vector<1x12x8xf32>
    %63 = vector.shape_cast %62 : vector<1x12x8xf32> to vector<12x8xf32>
    %cst_65 = arith.constant dense<0.000000e+00> : vector<12x40xf32>
    %64 = tpu.matmul %63, %61, %cst_65 {dimension_numbers = #tpu.dot_dimension_numbers<[1], [0], [0], [1], [0, 0, 1, 1], [], []>} : vector<12x8xf32>, vector<8x40xf32>, vector<12x40xf32> -> vector<12x40xf32>
    %65 = arith.addf %58, %64 : vector<12x40xf32>
    %c0_66 = arith.constant 0 : index
    %66 = memref.load %arg10[%c0_66] : memref<3xf32, #tpu.memory_space<smem>>
    %cst_67 = arith.constant 0.000000e+00 : f32
    %67 = vector.broadcast %cst_67 : f32 to vector<12x40xf32>
    %68 = arith.cmpf oge, %65, %67 : vector<12x40xf32>
    %69 = vector.broadcast %66 : f32 to vector<12x40xf32>
    %70 = arith.mulf %69, %65 : vector<12x40xf32>
    %71 = arith.select %68, %65, %70 : vector<12x40xi1>, vector<12x40xf32>
    %c0_68 = arith.constant 0 : index
    %c0_69 = arith.constant 0 : index
    %72 = vector.load %arg5[%c0_68, %c0_69] : memref<12x1xf32, #tpu.memory_space<vmem>>, vector<12x1xf32>
    %c0_70 = arith.constant 0 : index
    %c0_71 = arith.constant 0 : index
    %c0_72 = arith.constant 0 : index
    %73 = vector.load %arg1[%c0_70, %c0_71, %c0_72] : memref<9x40x40xf32, #tpu.memory_space<vmem>>, vector<1x40x40xf32>
    %74 = vector.shape_cast %73 : vector<1x40x40xf32> to vector<40x40xf32>
    %cst_73 = arith.constant dense<0.000000e+00> : vector<12x40xf32>
    %75 = tpu.matmul %71, %74, %cst_73 {dimension_numbers = #tpu.dot_dimension_numbers<[1], [0], [0], [1], [0, 0, 1, 1], [], []>} : vector<12x40xf32>, vector<40x40xf32>, vector<12x40xf32> -> vector<12x40xf32>
    %c0_74 = arith.constant 0 : index
    %c0_75 = arith.constant 0 : index
    %c0_76 = arith.constant 0 : index
    %76 = vector.load %arg4[%c0_74, %c0_75, %c0_76] : memref<9x12x12xf32, #tpu.memory_space<vmem>>, vector<1x12x12xf32>
    %77 = vector.shape_cast %76 : vector<1x12x12xf32> to vector<12x12xf32>
    %cst_77 = arith.constant dense<0.000000e+00> : vector<12x40xf32>
    %78 = tpu.matmul %77, %75, %cst_77 {dimension_numbers = #tpu.dot_dimension_numbers<[1], [0], [0], [1], [0, 0, 1, 1], [], []>} : vector<12x12xf32>, vector<12x40xf32>, vector<12x40xf32> -> vector<12x40xf32>
    %79 = vector.broadcast %72 : vector<12x1xf32> to vector<12x40xf32>
    %80 = arith.addf %79, %78 : vector<12x40xf32>
    %c1_78 = arith.constant 1 : index
    %c0_79 = arith.constant 0 : index
    %c0_80 = arith.constant 0 : index
    %81 = vector.load %arg1[%c1_78, %c0_79, %c0_80] : memref<9x40x40xf32, #tpu.memory_space<vmem>>, vector<1x40x40xf32>
    %82 = vector.shape_cast %81 : vector<1x40x40xf32> to vector<40x40xf32>
    %cst_81 = arith.constant dense<0.000000e+00> : vector<12x40xf32>
    %83 = tpu.matmul %71, %82, %cst_81 {dimension_numbers = #tpu.dot_dimension_numbers<[1], [0], [0], [1], [0, 0, 1, 1], [], []>} : vector<12x40xf32>, vector<40x40xf32>, vector<12x40xf32> -> vector<12x40xf32>
    %c1_82 = arith.constant 1 : index
    %c0_83 = arith.constant 0 : index
    %c0_84 = arith.constant 0 : index
    %84 = vector.load %arg4[%c1_82, %c0_83, %c0_84] : memref<9x12x12xf32, #tpu.memory_space<vmem>>, vector<1x12x12xf32>
    %85 = vector.shape_cast %84 : vector<1x12x12xf32> to vector<12x12xf32>
    %cst_85 = arith.constant dense<0.000000e+00> : vector<12x40xf32>
    %86 = tpu.matmul %85, %83, %cst_85 {dimension_numbers = #tpu.dot_dimension_numbers<[1], [0], [0], [1], [0, 0, 1, 1], [], []>} : vector<12x12xf32>, vector<12x40xf32>, vector<12x40xf32> -> vector<12x40xf32>
    %87 = arith.addf %80, %86 : vector<12x40xf32>
    %c2_86 = arith.constant 2 : index
    %c0_87 = arith.constant 0 : index
    %c0_88 = arith.constant 0 : index
    %88 = vector.load %arg1[%c2_86, %c0_87, %c0_88] : memref<9x40x40xf32, #tpu.memory_space<vmem>>, vector<1x40x40xf32>
    %89 = vector.shape_cast %88 : vector<1x40x40xf32> to vector<40x40xf32>
    %cst_89 = arith.constant dense<0.000000e+00> : vector<12x40xf32>
    %90 = tpu.matmul %71, %89, %cst_89 {dimension_numbers = #tpu.dot_dimension_numbers<[1], [0], [0], [1], [0, 0, 1, 1], [], []>} : vector<12x40xf32>, vector<40x40xf32>, vector<12x40xf32> -> vector<12x40xf32>
    %c2_90 = arith.constant 2 : index
    %c0_91 = arith.constant 0 : index
    %c0_92 = arith.constant 0 : index
    %91 = vector.load %arg4[%c2_90, %c0_91, %c0_92] : memref<9x12x12xf32, #tpu.memory_space<vmem>>, vector<1x12x12xf32>
    %92 = vector.shape_cast %91 : vector<1x12x12xf32> to vector<12x12xf32>
    %cst_93 = arith.constant dense<0.000000e+00> : vector<12x40xf32>
    %93 = tpu.matmul %92, %90, %cst_93 {dimension_numbers = #tpu.dot_dimension_numbers<[1], [0], [0], [1], [0, 0, 1, 1], [], []>} : vector<12x12xf32>, vector<12x40xf32>, vector<12x40xf32> -> vector<12x40xf32>
    %94 = arith.addf %87, %93 : vector<12x40xf32>
    %c3_94 = arith.constant 3 : index
    %c0_95 = arith.constant 0 : index
    %c0_96 = arith.constant 0 : index
    %95 = vector.load %arg1[%c3_94, %c0_95, %c0_96] : memref<9x40x40xf32, #tpu.memory_space<vmem>>, vector<1x40x40xf32>
    %96 = vector.shape_cast %95 : vector<1x40x40xf32> to vector<40x40xf32>
    %cst_97 = arith.constant dense<0.000000e+00> : vector<12x40xf32>
    %97 = tpu.matmul %71, %96, %cst_97 {dimension_numbers = #tpu.dot_dimension_numbers<[1], [0], [0], [1], [0, 0, 1, 1], [], []>} : vector<12x40xf32>, vector<40x40xf32>, vector<12x40xf32> -> vector<12x40xf32>
    %c3_98 = arith.constant 3 : index
    %c0_99 = arith.constant 0 : index
    %c0_100 = arith.constant 0 : index
    %98 = vector.load %arg4[%c3_98, %c0_99, %c0_100] : memref<9x12x12xf32, #tpu.memory_space<vmem>>, vector<1x12x12xf32>
    %99 = vector.shape_cast %98 : vector<1x12x12xf32> to vector<12x12xf32>
    %cst_101 = arith.constant dense<0.000000e+00> : vector<12x40xf32>
    %100 = tpu.matmul %99, %97, %cst_101 {dimension_numbers = #tpu.dot_dimension_numbers<[1], [0], [0], [1], [0, 0, 1, 1], [], []>} : vector<12x12xf32>, vector<12x40xf32>, vector<12x40xf32> -> vector<12x40xf32>
    %101 = arith.addf %94, %100 : vector<12x40xf32>
    %c4_102 = arith.constant 4 : index
    %c0_103 = arith.constant 0 : index
    %c0_104 = arith.constant 0 : index
    %102 = vector.load %arg1[%c4_102, %c0_103, %c0_104] : memref<9x40x40xf32, #tpu.memory_space<vmem>>, vector<1x40x40xf32>
    %103 = vector.shape_cast %102 : vector<1x40x40xf32> to vector<40x40xf32>
    %cst_105 = arith.constant dense<0.000000e+00> : vector<12x40xf32>
    %104 = tpu.matmul %71, %103, %cst_105 {dimension_numbers = #tpu.dot_dimension_numbers<[1], [0], [0], [1], [0, 0, 1, 1], [], []>} : vector<12x40xf32>, vector<40x40xf32>, vector<12x40xf32> -> vector<12x40xf32>
    %c4_106 = arith.constant 4 : index
    %c0_107 = arith.constant 0 : index
    %c0_108 = arith.constant 0 : index
    %105 = vector.load %arg4[%c4_106, %c0_107, %c0_108] : memref<9x12x12xf32, #tpu.memory_space<vmem>>, vector<1x12x12xf32>
    %106 = vector.shape_cast %105 : vector<1x12x12xf32> to vector<12x12xf32>
    %cst_109 = arith.constant dense<0.000000e+00> : vector<12x40xf32>
    %107 = tpu.matmul %106, %104, %cst_109 {dimension_numbers = #tpu.dot_dimension_numbers<[1], [0], [0], [1], [0, 0, 1, 1], [], []>} : vector<12x12xf32>, vector<12x40xf32>, vector<12x40xf32> -> vector<12x40xf32>
    %108 = arith.addf %101, %107 : vector<12x40xf32>
    %c5_110 = arith.constant 5 : index
    %c0_111 = arith.constant 0 : index
    %c0_112 = arith.constant 0 : index
    %109 = vector.load %arg1[%c5_110, %c0_111, %c0_112] : memref<9x40x40xf32, #tpu.memory_space<vmem>>, vector<1x40x40xf32>
    %110 = vector.shape_cast %109 : vector<1x40x40xf32> to vector<40x40xf32>
    %cst_113 = arith.constant dense<0.000000e+00> : vector<12x40xf32>
    %111 = tpu.matmul %71, %110, %cst_113 {dimension_numbers = #tpu.dot_dimension_numbers<[1], [0], [0], [1], [0, 0, 1, 1], [], []>} : vector<12x40xf32>, vector<40x40xf32>, vector<12x40xf32> -> vector<12x40xf32>
    %c5_114 = arith.constant 5 : index
    %c0_115 = arith.constant 0 : index
    %c0_116 = arith.constant 0 : index
    %112 = vector.load %arg4[%c5_114, %c0_115, %c0_116] : memref<9x12x12xf32, #tpu.memory_space<vmem>>, vector<1x12x12xf32>
    %113 = vector.shape_cast %112 : vector<1x12x12xf32> to vector<12x12xf32>
    %cst_117 = arith.constant dense<0.000000e+00> : vector<12x40xf32>
    %114 = tpu.matmul %113, %111, %cst_117 {dimension_numbers = #tpu.dot_dimension_numbers<[1], [0], [0], [1], [0, 0, 1, 1], [], []>} : vector<12x12xf32>, vector<12x40xf32>, vector<12x40xf32> -> vector<12x40xf32>
    %115 = arith.addf %108, %114 : vector<12x40xf32>
    %c6_118 = arith.constant 6 : index
    %c0_119 = arith.constant 0 : index
    %c0_120 = arith.constant 0 : index
    %116 = vector.load %arg1[%c6_118, %c0_119, %c0_120] : memref<9x40x40xf32, #tpu.memory_space<vmem>>, vector<1x40x40xf32>
    %117 = vector.shape_cast %116 : vector<1x40x40xf32> to vector<40x40xf32>
    %cst_121 = arith.constant dense<0.000000e+00> : vector<12x40xf32>
    %118 = tpu.matmul %71, %117, %cst_121 {dimension_numbers = #tpu.dot_dimension_numbers<[1], [0], [0], [1], [0, 0, 1, 1], [], []>} : vector<12x40xf32>, vector<40x40xf32>, vector<12x40xf32> -> vector<12x40xf32>
    %c6_122 = arith.constant 6 : index
    %c0_123 = arith.constant 0 : index
    %c0_124 = arith.constant 0 : index
    %119 = vector.load %arg4[%c6_122, %c0_123, %c0_124] : memref<9x12x12xf32, #tpu.memory_space<vmem>>, vector<1x12x12xf32>
    %120 = vector.shape_cast %119 : vector<1x12x12xf32> to vector<12x12xf32>
    %cst_125 = arith.constant dense<0.000000e+00> : vector<12x40xf32>
    %121 = tpu.matmul %120, %118, %cst_125 {dimension_numbers = #tpu.dot_dimension_numbers<[1], [0], [0], [1], [0, 0, 1, 1], [], []>} : vector<12x12xf32>, vector<12x40xf32>, vector<12x40xf32> -> vector<12x40xf32>
    %122 = arith.addf %115, %121 : vector<12x40xf32>
    %c7_126 = arith.constant 7 : index
    %c0_127 = arith.constant 0 : index
    %c0_128 = arith.constant 0 : index
    %123 = vector.load %arg1[%c7_126, %c0_127, %c0_128] : memref<9x40x40xf32, #tpu.memory_space<vmem>>, vector<1x40x40xf32>
    %124 = vector.shape_cast %123 : vector<1x40x40xf32> to vector<40x40xf32>
    %cst_129 = arith.constant dense<0.000000e+00> : vector<12x40xf32>
    %125 = tpu.matmul %71, %124, %cst_129 {dimension_numbers = #tpu.dot_dimension_numbers<[1], [0], [0], [1], [0, 0, 1, 1], [], []>} : vector<12x40xf32>, vector<40x40xf32>, vector<12x40xf32> -> vector<12x40xf32>
    %c7_130 = arith.constant 7 : index
    %c0_131 = arith.constant 0 : index
    %c0_132 = arith.constant 0 : index
    %126 = vector.load %arg4[%c7_130, %c0_131, %c0_132] : memref<9x12x12xf32, #tpu.memory_space<vmem>>, vector<1x12x12xf32>
    %127 = vector.shape_cast %126 : vector<1x12x12xf32> to vector<12x12xf32>
    %cst_133 = arith.constant dense<0.000000e+00> : vector<12x40xf32>
    %128 = tpu.matmul %127, %125, %cst_133 {dimension_numbers = #tpu.dot_dimension_numbers<[1], [0], [0], [1], [0, 0, 1, 1], [], []>} : vector<12x12xf32>, vector<12x40xf32>, vector<12x40xf32> -> vector<12x40xf32>
    %129 = arith.addf %122, %128 : vector<12x40xf32>
    %c8_134 = arith.constant 8 : index
    %c0_135 = arith.constant 0 : index
    %c0_136 = arith.constant 0 : index
    %130 = vector.load %arg1[%c8_134, %c0_135, %c0_136] : memref<9x40x40xf32, #tpu.memory_space<vmem>>, vector<1x40x40xf32>
    %131 = vector.shape_cast %130 : vector<1x40x40xf32> to vector<40x40xf32>
    %cst_137 = arith.constant dense<0.000000e+00> : vector<12x40xf32>
    %132 = tpu.matmul %71, %131, %cst_137 {dimension_numbers = #tpu.dot_dimension_numbers<[1], [0], [0], [1], [0, 0, 1, 1], [], []>} : vector<12x40xf32>, vector<40x40xf32>, vector<12x40xf32> -> vector<12x40xf32>
    %c8_138 = arith.constant 8 : index
    %c0_139 = arith.constant 0 : index
    %c0_140 = arith.constant 0 : index
    %133 = vector.load %arg4[%c8_138, %c0_139, %c0_140] : memref<9x12x12xf32, #tpu.memory_space<vmem>>, vector<1x12x12xf32>
    %134 = vector.shape_cast %133 : vector<1x12x12xf32> to vector<12x12xf32>
    %cst_141 = arith.constant dense<0.000000e+00> : vector<12x40xf32>
    %135 = tpu.matmul %134, %132, %cst_141 {dimension_numbers = #tpu.dot_dimension_numbers<[1], [0], [0], [1], [0, 0, 1, 1], [], []>} : vector<12x12xf32>, vector<12x40xf32>, vector<12x40xf32> -> vector<12x40xf32>
    %136 = arith.addf %129, %135 : vector<12x40xf32>
    %c1_142 = arith.constant 1 : index
    %137 = memref.load %arg10[%c1_142] : memref<3xf32, #tpu.memory_space<smem>>
    %cst_143 = arith.constant 0.000000e+00 : f32
    %138 = vector.broadcast %cst_143 : f32 to vector<12x40xf32>
    %139 = arith.cmpf oge, %136, %138 : vector<12x40xf32>
    %140 = vector.broadcast %137 : f32 to vector<12x40xf32>
    %141 = arith.mulf %140, %136 : vector<12x40xf32>
    %142 = arith.select %139, %136, %141 : vector<12x40xi1>, vector<12x40xf32>
    %143 = arith.addf %142, %71 : vector<12x40xf32>
    %c0_144 = arith.constant 0 : index
    %c0_145 = arith.constant 0 : index
    %144 = vector.load %arg7[%c0_144, %c0_145] : memref<12x1xf32, #tpu.memory_space<vmem>>, vector<12x1xf32>
    %c0_146 = arith.constant 0 : index
    %c0_147 = arith.constant 0 : index
    %c0_148 = arith.constant 0 : index
    %145 = vector.load %arg1[%c0_146, %c0_147, %c0_148] : memref<9x40x40xf32, #tpu.memory_space<vmem>>, vector<1x40x40xf32>
    %146 = vector.shape_cast %145 : vector<1x40x40xf32> to vector<40x40xf32>
    %cst_149 = arith.constant dense<0.000000e+00> : vector<12x40xf32>
    %147 = tpu.matmul %143, %146, %cst_149 {dimension_numbers = #tpu.dot_dimension_numbers<[1], [0], [0], [1], [0, 0, 1, 1], [], []>} : vector<12x40xf32>, vector<40x40xf32>, vector<12x40xf32> -> vector<12x40xf32>
    %c0_150 = arith.constant 0 : index
    %c0_151 = arith.constant 0 : index
    %c0_152 = arith.constant 0 : index
    %148 = vector.load %arg6[%c0_150, %c0_151, %c0_152] : memref<9x12x12xf32, #tpu.memory_space<vmem>>, vector<1x12x12xf32>
    %149 = vector.shape_cast %148 : vector<1x12x12xf32> to vector<12x12xf32>
    %cst_153 = arith.constant dense<0.000000e+00> : vector<12x40xf32>
    %150 = tpu.matmul %149, %147, %cst_153 {dimension_numbers = #tpu.dot_dimension_numbers<[1], [0], [0], [1], [0, 0, 1, 1], [], []>} : vector<12x12xf32>, vector<12x40xf32>, vector<12x40xf32> -> vector<12x40xf32>
    %151 = vector.broadcast %144 : vector<12x1xf32> to vector<12x40xf32>
    %152 = arith.addf %151, %150 : vector<12x40xf32>
    %c1_154 = arith.constant 1 : index
    %c0_155 = arith.constant 0 : index
    %c0_156 = arith.constant 0 : index
    %153 = vector.load %arg1[%c1_154, %c0_155, %c0_156] : memref<9x40x40xf32, #tpu.memory_space<vmem>>, vector<1x40x40xf32>
    %154 = vector.shape_cast %153 : vector<1x40x40xf32> to vector<40x40xf32>
    %cst_157 = arith.constant dense<0.000000e+00> : vector<12x40xf32>
    %155 = tpu.matmul %143, %154, %cst_157 {dimension_numbers = #tpu.dot_dimension_numbers<[1], [0], [0], [1], [0, 0, 1, 1], [], []>} : vector<12x40xf32>, vector<40x40xf32>, vector<12x40xf32> -> vector<12x40xf32>
    %c1_158 = arith.constant 1 : index
    %c0_159 = arith.constant 0 : index
    %c0_160 = arith.constant 0 : index
    %156 = vector.load %arg6[%c1_158, %c0_159, %c0_160] : memref<9x12x12xf32, #tpu.memory_space<vmem>>, vector<1x12x12xf32>
    %157 = vector.shape_cast %156 : vector<1x12x12xf32> to vector<12x12xf32>
    %cst_161 = arith.constant dense<0.000000e+00> : vector<12x40xf32>
    %158 = tpu.matmul %157, %155, %cst_161 {dimension_numbers = #tpu.dot_dimension_numbers<[1], [0], [0], [1], [0, 0, 1, 1], [], []>} : vector<12x12xf32>, vector<12x40xf32>, vector<12x40xf32> -> vector<12x40xf32>
    %159 = arith.addf %152, %158 : vector<12x40xf32>
    %c2_162 = arith.constant 2 : index
    %c0_163 = arith.constant 0 : index
    %c0_164 = arith.constant 0 : index
    %160 = vector.load %arg1[%c2_162, %c0_163, %c0_164] : memref<9x40x40xf32, #tpu.memory_space<vmem>>, vector<1x40x40xf32>
    %161 = vector.shape_cast %160 : vector<1x40x40xf32> to vector<40x40xf32>
    %cst_165 = arith.constant dense<0.000000e+00> : vector<12x40xf32>
    %162 = tpu.matmul %143, %161, %cst_165 {dimension_numbers = #tpu.dot_dimension_numbers<[1], [0], [0], [1], [0, 0, 1, 1], [], []>} : vector<12x40xf32>, vector<40x40xf32>, vector<12x40xf32> -> vector<12x40xf32>
    %c2_166 = arith.constant 2 : index
    %c0_167 = arith.constant 0 : index
    %c0_168 = arith.constant 0 : index
    %163 = vector.load %arg6[%c2_166, %c0_167, %c0_168] : memref<9x12x12xf32, #tpu.memory_space<vmem>>, vector<1x12x12xf32>
    %164 = vector.shape_cast %163 : vector<1x12x12xf32> to vector<12x12xf32>
    %cst_169 = arith.constant dense<0.000000e+00> : vector<12x40xf32>
    %165 = tpu.matmul %164, %162, %cst_169 {dimension_numbers = #tpu.dot_dimension_numbers<[1], [0], [0], [1], [0, 0, 1, 1], [], []>} : vector<12x12xf32>, vector<12x40xf32>, vector<12x40xf32> -> vector<12x40xf32>
    %166 = arith.addf %159, %165 : vector<12x40xf32>
    %c3_170 = arith.constant 3 : index
    %c0_171 = arith.constant 0 : index
    %c0_172 = arith.constant 0 : index
    %167 = vector.load %arg1[%c3_170, %c0_171, %c0_172] : memref<9x40x40xf32, #tpu.memory_space<vmem>>, vector<1x40x40xf32>
    %168 = vector.shape_cast %167 : vector<1x40x40xf32> to vector<40x40xf32>
    %cst_173 = arith.constant dense<0.000000e+00> : vector<12x40xf32>
    %169 = tpu.matmul %143, %168, %cst_173 {dimension_numbers = #tpu.dot_dimension_numbers<[1], [0], [0], [1], [0, 0, 1, 1], [], []>} : vector<12x40xf32>, vector<40x40xf32>, vector<12x40xf32> -> vector<12x40xf32>
    %c3_174 = arith.constant 3 : index
    %c0_175 = arith.constant 0 : index
    %c0_176 = arith.constant 0 : index
    %170 = vector.load %arg6[%c3_174, %c0_175, %c0_176] : memref<9x12x12xf32, #tpu.memory_space<vmem>>, vector<1x12x12xf32>
    %171 = vector.shape_cast %170 : vector<1x12x12xf32> to vector<12x12xf32>
    %cst_177 = arith.constant dense<0.000000e+00> : vector<12x40xf32>
    %172 = tpu.matmul %171, %169, %cst_177 {dimension_numbers = #tpu.dot_dimension_numbers<[1], [0], [0], [1], [0, 0, 1, 1], [], []>} : vector<12x12xf32>, vector<12x40xf32>, vector<12x40xf32> -> vector<12x40xf32>
    %173 = arith.addf %166, %172 : vector<12x40xf32>
    %c4_178 = arith.constant 4 : index
    %c0_179 = arith.constant 0 : index
    %c0_180 = arith.constant 0 : index
    %174 = vector.load %arg1[%c4_178, %c0_179, %c0_180] : memref<9x40x40xf32, #tpu.memory_space<vmem>>, vector<1x40x40xf32>
    %175 = vector.shape_cast %174 : vector<1x40x40xf32> to vector<40x40xf32>
    %cst_181 = arith.constant dense<0.000000e+00> : vector<12x40xf32>
    %176 = tpu.matmul %143, %175, %cst_181 {dimension_numbers = #tpu.dot_dimension_numbers<[1], [0], [0], [1], [0, 0, 1, 1], [], []>} : vector<12x40xf32>, vector<40x40xf32>, vector<12x40xf32> -> vector<12x40xf32>
    %c4_182 = arith.constant 4 : index
    %c0_183 = arith.constant 0 : index
    %c0_184 = arith.constant 0 : index
    %177 = vector.load %arg6[%c4_182, %c0_183, %c0_184] : memref<9x12x12xf32, #tpu.memory_space<vmem>>, vector<1x12x12xf32>
    %178 = vector.shape_cast %177 : vector<1x12x12xf32> to vector<12x12xf32>
    %cst_185 = arith.constant dense<0.000000e+00> : vector<12x40xf32>
    %179 = tpu.matmul %178, %176, %cst_185 {dimension_numbers = #tpu.dot_dimension_numbers<[1], [0], [0], [1], [0, 0, 1, 1], [], []>} : vector<12x12xf32>, vector<12x40xf32>, vector<12x40xf32> -> vector<12x40xf32>
    %180 = arith.addf %173, %179 : vector<12x40xf32>
    %c5_186 = arith.constant 5 : index
    %c0_187 = arith.constant 0 : index
    %c0_188 = arith.constant 0 : index
    %181 = vector.load %arg1[%c5_186, %c0_187, %c0_188] : memref<9x40x40xf32, #tpu.memory_space<vmem>>, vector<1x40x40xf32>
    %182 = vector.shape_cast %181 : vector<1x40x40xf32> to vector<40x40xf32>
    %cst_189 = arith.constant dense<0.000000e+00> : vector<12x40xf32>
    %183 = tpu.matmul %143, %182, %cst_189 {dimension_numbers = #tpu.dot_dimension_numbers<[1], [0], [0], [1], [0, 0, 1, 1], [], []>} : vector<12x40xf32>, vector<40x40xf32>, vector<12x40xf32> -> vector<12x40xf32>
    %c5_190 = arith.constant 5 : index
    %c0_191 = arith.constant 0 : index
    %c0_192 = arith.constant 0 : index
    %184 = vector.load %arg6[%c5_190, %c0_191, %c0_192] : memref<9x12x12xf32, #tpu.memory_space<vmem>>, vector<1x12x12xf32>
    %185 = vector.shape_cast %184 : vector<1x12x12xf32> to vector<12x12xf32>
    %cst_193 = arith.constant dense<0.000000e+00> : vector<12x40xf32>
    %186 = tpu.matmul %185, %183, %cst_193 {dimension_numbers = #tpu.dot_dimension_numbers<[1], [0], [0], [1], [0, 0, 1, 1], [], []>} : vector<12x12xf32>, vector<12x40xf32>, vector<12x40xf32> -> vector<12x40xf32>
    %187 = arith.addf %180, %186 : vector<12x40xf32>
    %c6_194 = arith.constant 6 : index
    %c0_195 = arith.constant 0 : index
    %c0_196 = arith.constant 0 : index
    %188 = vector.load %arg1[%c6_194, %c0_195, %c0_196] : memref<9x40x40xf32, #tpu.memory_space<vmem>>, vector<1x40x40xf32>
    %189 = vector.shape_cast %188 : vector<1x40x40xf32> to vector<40x40xf32>
    %cst_197 = arith.constant dense<0.000000e+00> : vector<12x40xf32>
    %190 = tpu.matmul %143, %189, %cst_197 {dimension_numbers = #tpu.dot_dimension_numbers<[1], [0], [0], [1], [0, 0, 1, 1], [], []>} : vector<12x40xf32>, vector<40x40xf32>, vector<12x40xf32> -> vector<12x40xf32>
    %c6_198 = arith.constant 6 : index
    %c0_199 = arith.constant 0 : index
    %c0_200 = arith.constant 0 : index
    %191 = vector.load %arg6[%c6_198, %c0_199, %c0_200] : memref<9x12x12xf32, #tpu.memory_space<vmem>>, vector<1x12x12xf32>
    %192 = vector.shape_cast %191 : vector<1x12x12xf32> to vector<12x12xf32>
    %cst_201 = arith.constant dense<0.000000e+00> : vector<12x40xf32>
    %193 = tpu.matmul %192, %190, %cst_201 {dimension_numbers = #tpu.dot_dimension_numbers<[1], [0], [0], [1], [0, 0, 1, 1], [], []>} : vector<12x12xf32>, vector<12x40xf32>, vector<12x40xf32> -> vector<12x40xf32>
    %194 = arith.addf %187, %193 : vector<12x40xf32>
    %c7_202 = arith.constant 7 : index
    %c0_203 = arith.constant 0 : index
    %c0_204 = arith.constant 0 : index
    %195 = vector.load %arg1[%c7_202, %c0_203, %c0_204] : memref<9x40x40xf32, #tpu.memory_space<vmem>>, vector<1x40x40xf32>
    %196 = vector.shape_cast %195 : vector<1x40x40xf32> to vector<40x40xf32>
    %cst_205 = arith.constant dense<0.000000e+00> : vector<12x40xf32>
    %197 = tpu.matmul %143, %196, %cst_205 {dimension_numbers = #tpu.dot_dimension_numbers<[1], [0], [0], [1], [0, 0, 1, 1], [], []>} : vector<12x40xf32>, vector<40x40xf32>, vector<12x40xf32> -> vector<12x40xf32>
    %c7_206 = arith.constant 7 : index
    %c0_207 = arith.constant 0 : index
    %c0_208 = arith.constant 0 : index
    %198 = vector.load %arg6[%c7_206, %c0_207, %c0_208] : memref<9x12x12xf32, #tpu.memory_space<vmem>>, vector<1x12x12xf32>
    %199 = vector.shape_cast %198 : vector<1x12x12xf32> to vector<12x12xf32>
    %cst_209 = arith.constant dense<0.000000e+00> : vector<12x40xf32>
    %200 = tpu.matmul %199, %197, %cst_209 {dimension_numbers = #tpu.dot_dimension_numbers<[1], [0], [0], [1], [0, 0, 1, 1], [], []>} : vector<12x12xf32>, vector<12x40xf32>, vector<12x40xf32> -> vector<12x40xf32>
    %201 = arith.addf %194, %200 : vector<12x40xf32>
    %c8_210 = arith.constant 8 : index
    %c0_211 = arith.constant 0 : index
    %c0_212 = arith.constant 0 : index
    %202 = vector.load %arg1[%c8_210, %c0_211, %c0_212] : memref<9x40x40xf32, #tpu.memory_space<vmem>>, vector<1x40x40xf32>
    %203 = vector.shape_cast %202 : vector<1x40x40xf32> to vector<40x40xf32>
    %cst_213 = arith.constant dense<0.000000e+00> : vector<12x40xf32>
    %204 = tpu.matmul %143, %203, %cst_213 {dimension_numbers = #tpu.dot_dimension_numbers<[1], [0], [0], [1], [0, 0, 1, 1], [], []>} : vector<12x40xf32>, vector<40x40xf32>, vector<12x40xf32> -> vector<12x40xf32>
    %c8_214 = arith.constant 8 : index
    %c0_215 = arith.constant 0 : index
    %c0_216 = arith.constant 0 : index
    %205 = vector.load %arg6[%c8_214, %c0_215, %c0_216] : memref<9x12x12xf32, #tpu.memory_space<vmem>>, vector<1x12x12xf32>
    %206 = vector.shape_cast %205 : vector<1x12x12xf32> to vector<12x12xf32>
    %cst_217 = arith.constant dense<0.000000e+00> : vector<12x40xf32>
    %207 = tpu.matmul %206, %204, %cst_217 {dimension_numbers = #tpu.dot_dimension_numbers<[1], [0], [0], [1], [0, 0, 1, 1], [], []>} : vector<12x12xf32>, vector<12x40xf32>, vector<12x40xf32> -> vector<12x40xf32>
    %208 = arith.addf %201, %207 : vector<12x40xf32>
    %c2_218 = arith.constant 2 : index
    %209 = memref.load %arg10[%c2_218] : memref<3xf32, #tpu.memory_space<smem>>
    %cst_219 = arith.constant 0.000000e+00 : f32
    %210 = vector.broadcast %cst_219 : f32 to vector<12x40xf32>
    %211 = arith.cmpf oge, %208, %210 : vector<12x40xf32>
    %212 = vector.broadcast %209 : f32 to vector<12x40xf32>
    %213 = arith.mulf %212, %208 : vector<12x40xf32>
    %214 = arith.select %211, %208, %213 : vector<12x40xi1>, vector<12x40xf32>
    %215 = arith.addf %214, %143 : vector<12x40xf32>
    %c0_220 = arith.constant 0 : index
    %c0_221 = arith.constant 0 : index
    %216 = vector.load %arg9[%c0_220, %c0_221] : memref<12x1xf32, #tpu.memory_space<vmem>>, vector<12x1xf32>
    %c0_222 = arith.constant 0 : index
    %c0_223 = arith.constant 0 : index
    %c0_224 = arith.constant 0 : index
    %217 = vector.load %arg1[%c0_222, %c0_223, %c0_224] : memref<9x40x40xf32, #tpu.memory_space<vmem>>, vector<1x40x40xf32>
    %218 = vector.shape_cast %217 : vector<1x40x40xf32> to vector<40x40xf32>
    %cst_225 = arith.constant dense<0.000000e+00> : vector<12x40xf32>
    %219 = tpu.matmul %215, %218, %cst_225 {dimension_numbers = #tpu.dot_dimension_numbers<[1], [0], [0], [1], [0, 0, 1, 1], [], []>} : vector<12x40xf32>, vector<40x40xf32>, vector<12x40xf32> -> vector<12x40xf32>
    %c0_226 = arith.constant 0 : index
    %c0_227 = arith.constant 0 : index
    %c0_228 = arith.constant 0 : index
    %220 = vector.load %arg8[%c0_226, %c0_227, %c0_228] : memref<9x12x12xf32, #tpu.memory_space<vmem>>, vector<1x12x12xf32>
    %221 = vector.shape_cast %220 : vector<1x12x12xf32> to vector<12x12xf32>
    %cst_229 = arith.constant dense<0.000000e+00> : vector<12x40xf32>
    %222 = tpu.matmul %221, %219, %cst_229 {dimension_numbers = #tpu.dot_dimension_numbers<[1], [0], [0], [1], [0, 0, 1, 1], [], []>} : vector<12x12xf32>, vector<12x40xf32>, vector<12x40xf32> -> vector<12x40xf32>
    %223 = vector.broadcast %216 : vector<12x1xf32> to vector<12x40xf32>
    %224 = arith.addf %223, %222 : vector<12x40xf32>
    %c1_230 = arith.constant 1 : index
    %c0_231 = arith.constant 0 : index
    %c0_232 = arith.constant 0 : index
    %225 = vector.load %arg1[%c1_230, %c0_231, %c0_232] : memref<9x40x40xf32, #tpu.memory_space<vmem>>, vector<1x40x40xf32>
    %226 = vector.shape_cast %225 : vector<1x40x40xf32> to vector<40x40xf32>
    %cst_233 = arith.constant dense<0.000000e+00> : vector<12x40xf32>
    %227 = tpu.matmul %215, %226, %cst_233 {dimension_numbers = #tpu.dot_dimension_numbers<[1], [0], [0], [1], [0, 0, 1, 1], [], []>} : vector<12x40xf32>, vector<40x40xf32>, vector<12x40xf32> -> vector<12x40xf32>
    %c1_234 = arith.constant 1 : index
    %c0_235 = arith.constant 0 : index
    %c0_236 = arith.constant 0 : index
    %228 = vector.load %arg8[%c1_234, %c0_235, %c0_236] : memref<9x12x12xf32, #tpu.memory_space<vmem>>, vector<1x12x12xf32>
    %229 = vector.shape_cast %228 : vector<1x12x12xf32> to vector<12x12xf32>
    %cst_237 = arith.constant dense<0.000000e+00> : vector<12x40xf32>
    %230 = tpu.matmul %229, %227, %cst_237 {dimension_numbers = #tpu.dot_dimension_numbers<[1], [0], [0], [1], [0, 0, 1, 1], [], []>} : vector<12x12xf32>, vector<12x40xf32>, vector<12x40xf32> -> vector<12x40xf32>
    %231 = arith.addf %224, %230 : vector<12x40xf32>
    %c2_238 = arith.constant 2 : index
    %c0_239 = arith.constant 0 : index
    %c0_240 = arith.constant 0 : index
    %232 = vector.load %arg1[%c2_238, %c0_239, %c0_240] : memref<9x40x40xf32, #tpu.memory_space<vmem>>, vector<1x40x40xf32>
    %233 = vector.shape_cast %232 : vector<1x40x40xf32> to vector<40x40xf32>
    %cst_241 = arith.constant dense<0.000000e+00> : vector<12x40xf32>
    %234 = tpu.matmul %215, %233, %cst_241 {dimension_numbers = #tpu.dot_dimension_numbers<[1], [0], [0], [1], [0, 0, 1, 1], [], []>} : vector<12x40xf32>, vector<40x40xf32>, vector<12x40xf32> -> vector<12x40xf32>
    %c2_242 = arith.constant 2 : index
    %c0_243 = arith.constant 0 : index
    %c0_244 = arith.constant 0 : index
    %235 = vector.load %arg8[%c2_242, %c0_243, %c0_244] : memref<9x12x12xf32, #tpu.memory_space<vmem>>, vector<1x12x12xf32>
    %236 = vector.shape_cast %235 : vector<1x12x12xf32> to vector<12x12xf32>
    %cst_245 = arith.constant dense<0.000000e+00> : vector<12x40xf32>
    %237 = tpu.matmul %236, %234, %cst_245 {dimension_numbers = #tpu.dot_dimension_numbers<[1], [0], [0], [1], [0, 0, 1, 1], [], []>} : vector<12x12xf32>, vector<12x40xf32>, vector<12x40xf32> -> vector<12x40xf32>
    %238 = arith.addf %231, %237 : vector<12x40xf32>
    %c3_246 = arith.constant 3 : index
    %c0_247 = arith.constant 0 : index
    %c0_248 = arith.constant 0 : index
    %239 = vector.load %arg1[%c3_246, %c0_247, %c0_248] : memref<9x40x40xf32, #tpu.memory_space<vmem>>, vector<1x40x40xf32>
    %240 = vector.shape_cast %239 : vector<1x40x40xf32> to vector<40x40xf32>
    %cst_249 = arith.constant dense<0.000000e+00> : vector<12x40xf32>
    %241 = tpu.matmul %215, %240, %cst_249 {dimension_numbers = #tpu.dot_dimension_numbers<[1], [0], [0], [1], [0, 0, 1, 1], [], []>} : vector<12x40xf32>, vector<40x40xf32>, vector<12x40xf32> -> vector<12x40xf32>
    %c3_250 = arith.constant 3 : index
    %c0_251 = arith.constant 0 : index
    %c0_252 = arith.constant 0 : index
    %242 = vector.load %arg8[%c3_250, %c0_251, %c0_252] : memref<9x12x12xf32, #tpu.memory_space<vmem>>, vector<1x12x12xf32>
    %243 = vector.shape_cast %242 : vector<1x12x12xf32> to vector<12x12xf32>
    %cst_253 = arith.constant dense<0.000000e+00> : vector<12x40xf32>
    %244 = tpu.matmul %243, %241, %cst_253 {dimension_numbers = #tpu.dot_dimension_numbers<[1], [0], [0], [1], [0, 0, 1, 1], [], []>} : vector<12x12xf32>, vector<12x40xf32>, vector<12x40xf32> -> vector<12x40xf32>
    %245 = arith.addf %238, %244 : vector<12x40xf32>
    %c4_254 = arith.constant 4 : index
    %c0_255 = arith.constant 0 : index
    %c0_256 = arith.constant 0 : index
    %246 = vector.load %arg1[%c4_254, %c0_255, %c0_256] : memref<9x40x40xf32, #tpu.memory_space<vmem>>, vector<1x40x40xf32>
    %247 = vector.shape_cast %246 : vector<1x40x40xf32> to vector<40x40xf32>
    %cst_257 = arith.constant dense<0.000000e+00> : vector<12x40xf32>
    %248 = tpu.matmul %215, %247, %cst_257 {dimension_numbers = #tpu.dot_dimension_numbers<[1], [0], [0], [1], [0, 0, 1, 1], [], []>} : vector<12x40xf32>, vector<40x40xf32>, vector<12x40xf32> -> vector<12x40xf32>
    %c4_258 = arith.constant 4 : index
    %c0_259 = arith.constant 0 : index
    %c0_260 = arith.constant 0 : index
    %249 = vector.load %arg8[%c4_258, %c0_259, %c0_260] : memref<9x12x12xf32, #tpu.memory_space<vmem>>, vector<1x12x12xf32>
    %250 = vector.shape_cast %249 : vector<1x12x12xf32> to vector<12x12xf32>
    %cst_261 = arith.constant dense<0.000000e+00> : vector<12x40xf32>
    %251 = tpu.matmul %250, %248, %cst_261 {dimension_numbers = #tpu.dot_dimension_numbers<[1], [0], [0], [1], [0, 0, 1, 1], [], []>} : vector<12x12xf32>, vector<12x40xf32>, vector<12x40xf32> -> vector<12x40xf32>
    %252 = arith.addf %245, %251 : vector<12x40xf32>
    %c5_262 = arith.constant 5 : index
    %c0_263 = arith.constant 0 : index
    %c0_264 = arith.constant 0 : index
    %253 = vector.load %arg1[%c5_262, %c0_263, %c0_264] : memref<9x40x40xf32, #tpu.memory_space<vmem>>, vector<1x40x40xf32>
    %254 = vector.shape_cast %253 : vector<1x40x40xf32> to vector<40x40xf32>
    %cst_265 = arith.constant dense<0.000000e+00> : vector<12x40xf32>
    %255 = tpu.matmul %215, %254, %cst_265 {dimension_numbers = #tpu.dot_dimension_numbers<[1], [0], [0], [1], [0, 0, 1, 1], [], []>} : vector<12x40xf32>, vector<40x40xf32>, vector<12x40xf32> -> vector<12x40xf32>
    %c5_266 = arith.constant 5 : index
    %c0_267 = arith.constant 0 : index
    %c0_268 = arith.constant 0 : index
    %256 = vector.load %arg8[%c5_266, %c0_267, %c0_268] : memref<9x12x12xf32, #tpu.memory_space<vmem>>, vector<1x12x12xf32>
    %257 = vector.shape_cast %256 : vector<1x12x12xf32> to vector<12x12xf32>
    %cst_269 = arith.constant dense<0.000000e+00> : vector<12x40xf32>
    %258 = tpu.matmul %257, %255, %cst_269 {dimension_numbers = #tpu.dot_dimension_numbers<[1], [0], [0], [1], [0, 0, 1, 1], [], []>} : vector<12x12xf32>, vector<12x40xf32>, vector<12x40xf32> -> vector<12x40xf32>
    %259 = arith.addf %252, %258 : vector<12x40xf32>
    %c6_270 = arith.constant 6 : index
    %c0_271 = arith.constant 0 : index
    %c0_272 = arith.constant 0 : index
    %260 = vector.load %arg1[%c6_270, %c0_271, %c0_272] : memref<9x40x40xf32, #tpu.memory_space<vmem>>, vector<1x40x40xf32>
    %261 = vector.shape_cast %260 : vector<1x40x40xf32> to vector<40x40xf32>
    %cst_273 = arith.constant dense<0.000000e+00> : vector<12x40xf32>
    %262 = tpu.matmul %215, %261, %cst_273 {dimension_numbers = #tpu.dot_dimension_numbers<[1], [0], [0], [1], [0, 0, 1, 1], [], []>} : vector<12x40xf32>, vector<40x40xf32>, vector<12x40xf32> -> vector<12x40xf32>
    %c6_274 = arith.constant 6 : index
    %c0_275 = arith.constant 0 : index
    %c0_276 = arith.constant 0 : index
    %263 = vector.load %arg8[%c6_274, %c0_275, %c0_276] : memref<9x12x12xf32, #tpu.memory_space<vmem>>, vector<1x12x12xf32>
    %264 = vector.shape_cast %263 : vector<1x12x12xf32> to vector<12x12xf32>
    %cst_277 = arith.constant dense<0.000000e+00> : vector<12x40xf32>
    %265 = tpu.matmul %264, %262, %cst_277 {dimension_numbers = #tpu.dot_dimension_numbers<[1], [0], [0], [1], [0, 0, 1, 1], [], []>} : vector<12x12xf32>, vector<12x40xf32>, vector<12x40xf32> -> vector<12x40xf32>
    %266 = arith.addf %259, %265 : vector<12x40xf32>
    %c7_278 = arith.constant 7 : index
    %c0_279 = arith.constant 0 : index
    %c0_280 = arith.constant 0 : index
    %267 = vector.load %arg1[%c7_278, %c0_279, %c0_280] : memref<9x40x40xf32, #tpu.memory_space<vmem>>, vector<1x40x40xf32>
    %268 = vector.shape_cast %267 : vector<1x40x40xf32> to vector<40x40xf32>
    %cst_281 = arith.constant dense<0.000000e+00> : vector<12x40xf32>
    %269 = tpu.matmul %215, %268, %cst_281 {dimension_numbers = #tpu.dot_dimension_numbers<[1], [0], [0], [1], [0, 0, 1, 1], [], []>} : vector<12x40xf32>, vector<40x40xf32>, vector<12x40xf32> -> vector<12x40xf32>
    %c7_282 = arith.constant 7 : index
    %c0_283 = arith.constant 0 : index
    %c0_284 = arith.constant 0 : index
    %270 = vector.load %arg8[%c7_282, %c0_283, %c0_284] : memref<9x12x12xf32, #tpu.memory_space<vmem>>, vector<1x12x12xf32>
    %271 = vector.shape_cast %270 : vector<1x12x12xf32> to vector<12x12xf32>
    %cst_285 = arith.constant dense<0.000000e+00> : vector<12x40xf32>
    %272 = tpu.matmul %271, %269, %cst_285 {dimension_numbers = #tpu.dot_dimension_numbers<[1], [0], [0], [1], [0, 0, 1, 1], [], []>} : vector<12x12xf32>, vector<12x40xf32>, vector<12x40xf32> -> vector<12x40xf32>
    %273 = arith.addf %266, %272 : vector<12x40xf32>
    %c8_286 = arith.constant 8 : index
    %c0_287 = arith.constant 0 : index
    %c0_288 = arith.constant 0 : index
    %274 = vector.load %arg1[%c8_286, %c0_287, %c0_288] : memref<9x40x40xf32, #tpu.memory_space<vmem>>, vector<1x40x40xf32>
    %275 = vector.shape_cast %274 : vector<1x40x40xf32> to vector<40x40xf32>
    %cst_289 = arith.constant dense<0.000000e+00> : vector<12x40xf32>
    %276 = tpu.matmul %215, %275, %cst_289 {dimension_numbers = #tpu.dot_dimension_numbers<[1], [0], [0], [1], [0, 0, 1, 1], [], []>} : vector<12x40xf32>, vector<40x40xf32>, vector<12x40xf32> -> vector<12x40xf32>
    %c8_290 = arith.constant 8 : index
    %c0_291 = arith.constant 0 : index
    %c0_292 = arith.constant 0 : index
    %277 = vector.load %arg8[%c8_290, %c0_291, %c0_292] : memref<9x12x12xf32, #tpu.memory_space<vmem>>, vector<1x12x12xf32>
    %278 = vector.shape_cast %277 : vector<1x12x12xf32> to vector<12x12xf32>
    %cst_293 = arith.constant dense<0.000000e+00> : vector<12x40xf32>
    %279 = tpu.matmul %278, %276, %cst_293 {dimension_numbers = #tpu.dot_dimension_numbers<[1], [0], [0], [1], [0, 0, 1, 1], [], []>} : vector<12x12xf32>, vector<12x40xf32>, vector<12x40xf32> -> vector<12x40xf32>
    %280 = arith.addf %273, %279 : vector<12x40xf32>
    %c0_294 = arith.constant 0 : index
    %c0_295 = arith.constant 0 : index
    %281 = vector.load %arg11[%c0_294, %c0_295] : memref<12x40xf32, #tpu.memory_space<vmem>>, vector<12x40xf32>
    tpu.vector_store %arg11[%c0_294, %c0_295], %280 {strides = array<i32>} : memref<12x40xf32, #tpu.memory_space<vmem>>, vector<12x40xf32>,
    return
  }
}

</mosaic_0001>

<llo_original>
// kernel: mul.25
$region0: #{mul.25}
  %s0 = inlined_call_operand.vmem [shape: f32[8,8], index: 0, kind: input, shape index: {}]
  %s1 = inlined_call_operand.vmem [shape: f32[64], index: 1, kind: output, shape index: {}]
  $region1: #{mul.25} parent=0
    #allocation0 [shape = 'u8[4096]{0}', space=vmem, size = 0x1000, scoped, tag = 'scoped mem for output reshape']
    %v2 = vld [vmem:[%s0] sm:$0x1]
    %vm3 = vcmask 64512
    %4 = vst.msk [vmem:[#allocation0] sm:$0x1] %vm3, %v2
    %s5 = scalar_lea.vmem %s0, 7
    %v6 = vld [vmem:[%s5] sm:$0x1]
    %7 = vrot.lane.b32.xlu0 %v6, 56
    %v8 = vpop.permute.xlu0 %7
    %vm9 = vcmask 523712
    %10 = vst.msk [vmem:[#allocation0] sm:$0x1] %vm9, %v8
    %s11 = scalar_lea.vmem %s0, 6
    %v12 = vld [vmem:[%s11] sm:$0x1]
    %13 = vrot.lane.b32.xlu0 %v12, 48
    %v14 = vpop.permute.xlu0 %13
    %vm15 = vcmask 458112
    %16 = vst.msk [vmem:[#allocation0] sm:$0x1] %vm15, %v14
    %s17 = scalar_lea.vmem %s0, 5
    %v18 = vld [vmem:[%s17] sm:$0x1]
    %19 = vrot.lane.b32.xlu0 %v18, 40
    %v20 = vpop.permute.xlu0 %19
    %vm21 = vcmask 392512
    %22 = vst.msk [vmem:[#allocation0] sm:$0x1] %vm21, %v20
    %s23 = scalar_lea.vmem %s0, 4
    %v24 = vld [vmem:[%s23] sm:$0x1]
    %25 = vrot.lane.b32.xlu0 %v24, 32
    %v26 = vpop.permute.xlu0 %25
    %vm27 = vcmask 326912
    %28 = vst.msk [vmem:[#allocation0] sm:$0x1] %vm27, %v26
    %s29 = scalar_lea.vmem %s0, 3
    %v30 = vld [vmem:[%s29] sm:$0x1]
    %31 = vrot.lane.b32.xlu0 %v30, 24
    %v32 = vpop.permute.xlu0 %31
    %vm33 = vcmask 261312
    %34 = vst.msk [vmem:[#allocation0] sm:$0x1] %vm33, %v32
    %s35 = scalar_lea.vmem %s0, 2
    %v36 = vld [vmem:[%s35] sm:$0x1]
    %37 = vrot.lane.b32.xlu0 %v36, 16
    %v38 = vpop.permute.xlu0 %37
    %vm39 = vcmask 195712
    %40 = vst.msk [vmem:[#allocation0] sm:$0x1] %vm39, %v38
    %s41 = scalar_lea.vmem %s0, 1
    %v42 = vld [vmem:[%s41] sm:$0x1]
    %43 = vrot.lane.b32.xlu0 %v42, 8
    %v44 = vpop.permute.xlu0 %43
    %vm45 = vcmask 130112
    %46 = vst.msk [vmem:[#allocation0] sm:$0x1] %vm45, %v44
    %s48 = sshll.u32 1, 1
    %s49 = ssub.s32 %s48, 1
    %v51 = vld [vmem:[#allocation0] sm:%s49]
    %s52 = sshll.u32 1, 1
    %s53 = ssub.s32 %s52, 1
    %54 = vst [vmem:[%s1] sm:%s53] %v51

// kernel: squeeze.1
$region0: #{squeeze.1}
  %s0 = inlined_call_operand.vmem [shape: f32[1,2,8,8], index: 0, kind: input, shape index: {}]
  %s1 = inlined_call_operand.vmem [shape: f32[2,64], index: 1, kind: output, shape index: {}]
  $region1: #{squeeze.1} parent=0
    #allocation0 [shape = 'u8[4096]{0}', space=vmem, size = 0x1000, scoped, tag = 'scoped mem for output reshape']
    %s2 = smov 3
    %v3 = vld [vmem:[%s0] ss:$8 sm:%s2]
    %vm4 = vcmask 64512
    %5 = vst.msk [vmem:[#allocation0] sm:$0x3] %vm4, %v3
    %s6 = scalar_lea.vmem %s0, 7
    %s7 = smov 3
    %v8 = vld [vmem:[%s6] ss:$8 sm:%s7]
    %9 = vrot.lane.b32.xlu0 %v8, 56
    %v10 = vpop.permute.xlu0 %9
    %vm11 = vcmask 523712
    %12 = vst.msk [vmem:[#allocation0] sm:$0x3] %vm11, %v10
    %s13 = scalar_lea.vmem %s0, 6
    %s14 = smov 3
    %v15 = vld [vmem:[%s13] ss:$8 sm:%s14]
    %16 = vrot.lane.b32.xlu0 %v15, 48
    %v17 = vpop.permute.xlu0 %16
    %vm18 = vcmask 458112
    %19 = vst.msk [vmem:[#allocation0] sm:$0x3] %vm18, %v17
    %s20 = scalar_lea.vmem %s0, 5
    %s21 = smov 3
    %v22 = vld [vmem:[%s20] ss:$8 sm:%s21]
    %23 = vrot.lane.b32.xlu0 %v22, 40
    %v24 = vpop.permute.xlu0 %23
    %vm25 = vcmask 392512
    %26 = vst.msk [vmem:[#allocation0] sm:$0x3] %vm25, %v24
    %s27 = scalar_lea.vmem %s0, 4
    %s28 = smov 3
    %v29 = vld [vmem:[%s27] ss:$8 sm:%s28]
    %30 = vrot.lane.b32.xlu0 %v29, 32
    %v31 = vpop.permute.xlu0 %30
    %vm32 = vcmask 326912
    %33 = vst.msk [vmem:[#allocation0] sm:$0x3] %vm32, %v31
    %s34 = scalar_lea.vmem %s0, 3
    %s35 = smov 3
    %v36 = vld [vmem:[%s34] ss:$8 sm:%s35]
    %37 = vrot.lane.b32.xlu0 %v36, 24
    %v38 = vpop.permute.xlu0 %37
    %vm39 = vcmask 261312
    %40 = vst.msk [vmem:[#allocation0] sm:$0x3] %vm39, %v38
    %s41 = scalar_lea.vmem %s0, 2
    %s42 = smov 3
    %v43 = vld [vmem:[%s41] ss:$8 sm:%s42]
    %44 = vrot.lane.b32.xlu0 %v43, 16
    %v45 = vpop.permute.xlu0 %44
    %vm46 = vcmask 195712
    %47 = vst.msk [vmem:[#allocation0] sm:$0x3] %vm46, %v45
    %s48 = scalar_lea.vmem %s0, 1
    %s49 = smov 3
    %v50 = vld [vmem:[%s48] ss:$8 sm:%s49]
    %51 = vrot.lane.b32.xlu0 %v50, 8
    %v52 = vpop.permute.xlu0 %51
    %vm53 = vcmask 130112
    %54 = vst.msk [vmem:[#allocation0] sm:$0x3] %vm53, %v52
    %s56 = sshll.u32 1, 2
    %s57 = ssub.s32 %s56, 1
    %v59 = vld [vmem:[#allocation0] sm:%s57]
    %s60 = sshll.u32 1, 2
    %s61 = ssub.s32 %s60, 1
    %62 = vst [vmem:[%s1] sm:%s61] %v59

// kernel: _lambda_.2
$region0: #{_lambda_.2}
  #allocation0 [shape = 'u32[]', space=smem, size = 0x4, offset = 0x4, fixed_abs, tag = 'smem constant byte address 0x4 - core index']
  #allocation1 [shape = 'u32[144,128]{1,0:T(1,128)}', space=vmem, size = 0x12000, scoped, tag = 'internal scratch']
  %s0 = inlined_call_operand.vmem [shape: f32[2,64], index: 0, kind: input, shape index: {}]
  %s1 = inlined_call_operand.vmem [shape: f32[64,64], index: 1, kind: input, shape index: {}]
  %s2 = inlined_call_operand.vmem [shape: f32[64,64], index: 2, kind: input, shape index: {}]
  %s3 = inlined_call_operand.vmem [shape: f32[64,64], index: 3, kind: input, shape index: {}]
  %s4 = inlined_call_operand.vmem [shape: f32[5,2], index: 4, kind: input, shape index: {}]
  %s5 = inlined_call_operand.vmem [shape: f32[5,64], index: 5, kind: input, shape index: {}]
  %s6 = inlined_call_operand.vmem [shape: f32[3,5,5], index: 6, kind: input, shape index: {}]
  %s7 = inlined_call_operand.vmem [shape: f32[5,1], index: 7, kind: input, shape index: {}]
  %s8 = inlined_call_operand.vmem [shape: f32[5,2], index: 8, kind: input, shape index: {}]
  %s9 = inlined_call_operand.vmem [shape: f32[5,1], index: 9, kind: input, shape index: {}]
  %s10 = inlined_call_operand.vmem [shape: f32[2], index: 10, kind: input, shape index: {}]
  %s11 = inlined_call_operand.vmem [shape: f32[5,64], index: 11, kind: output, shape index: {}]
  %s12 = sld [smem:[#allocation0]]
  $region58: #{_lambda_.2} parent=0
    _
  %s14 = ssub.s32 1, %s12
  %s15 = scalar_select 0, %s14, %s12
  $region1: #{_lambda_.2} parent=0
    #allocation2 [shape = 'u8[512]{0}', space=smem, size = 0x200, scoped, tag = 'input window, operand 10, single buffered']
    #allocation3 [shape = 's32[1]{0}', space=sflag, size = 0x4, scoped, tag = 'scoped memory for _lambda_.2']
    %16 = vsyncpa [#allocation3], 0
    // Predicated region
    $region2: #{_lambda_.2} parent=1 // pred_check
      _
    $region3: #{_lambda_.2} parent=1 // pred_check_branch
      %18 = sbr.rel (0) target = $region5
    $region4: #{_lambda_.2} parent=1 // pred_region
      _
    $region5: #{_lambda_.2} parent=1 // pred_fallthru
      _
    // Predicated region
    $region6: #{_lambda_.2} parent=1 // pred_check
      _
    $region7: #{_lambda_.2} parent=1 // pred_check_branch
      %20 = sbr.rel (0) target = $region9
    $region8: #{_lambda_.2} parent=1 // pred_region
      _
    $region9: #{_lambda_.2} parent=1 // pred_fallthru
      _
    // Predicated region
    $region10: #{_lambda_.2} parent=1 // pred_check
      _
    $region11: #{_lambda_.2} parent=1 // pred_check_branch
      %22 = sbr.rel (0) target = $region13
    $region12: #{_lambda_.2} parent=1 // pred_region
      _
    $region13: #{_lambda_.2} parent=1 // pred_fallthru
      _
    // Predicated region
    $region14: #{_lambda_.2} parent=1 // pred_check
      _
    $region15: #{_lambda_.2} parent=1 // pred_check_branch
      %24 = sbr.rel (0) target = $region17
    $region16: #{_lambda_.2} parent=1 // pred_region
      _
    $region17: #{_lambda_.2} parent=1 // pred_fallthru
      _
    // Predicated region
    $region18: #{_lambda_.2} parent=1 // pred_check
      _
    $region19: #{_lambda_.2} parent=1 // pred_check_branch
      %26 = sbr.rel (0) target = $region21
    $region20: #{_lambda_.2} parent=1 // pred_region
      _
    $region21: #{_lambda_.2} parent=1 // pred_fallthru
      _
    // Predicated region
    $region22: #{_lambda_.2} parent=1 // pred_check
      _
    $region23: #{_lambda_.2} parent=1 // pred_check_branch
      %28 = sbr.rel (0) target = $region25
    $region24: #{_lambda_.2} parent=1 // pred_region
      _
    $region25: #{_lambda_.2} parent=1 // pred_fallthru
      _
    // Predicated region
    $region26: #{_lambda_.2} parent=1 // pred_check
      _
    $region27: #{_lambda_.2} parent=1 // pred_check_branch
      %30 = sbr.rel (0) target = $region29
    $region28: #{_lambda_.2} parent=1 // pred_region
      _
    $region29: #{_lambda_.2} parent=1 // pred_fallthru
      _
    // Predicated region
    $region30: #{_lambda_.2} parent=1 // pred_check
      _
    $region31: #{_lambda_.2} parent=1 // pred_check_branch
      %32 = sbr.rel (0) target = $region33
    $region32: #{_lambda_.2} parent=1 // pred_region
      _
    $region33: #{_lambda_.2} parent=1 // pred_fallthru
      _
    // Predicated region
    $region34: #{_lambda_.2} parent=1 // pred_check
      _
    $region35: #{_lambda_.2} parent=1 // pred_check_branch
      %34 = sbr.rel (0) target = $region37
    $region36: #{_lambda_.2} parent=1 // pred_region
      _
    $region37: #{_lambda_.2} parent=1 // pred_fallthru
      _
    // Predicated region
    $region38: #{_lambda_.2} parent=1 // pred_check
      _
    $region39: #{_lambda_.2} parent=1 // pred_check_branch
      %36 = sbr.rel (0) target = $region41
    $region40: #{_lambda_.2} parent=1 // pred_region
      _
    $region41: #{_lambda_.2} parent=1 // pred_fallthru
      _
    // Predicated region
    $region42: #{_lambda_.2} parent=1 // pred_check
      _
    $region43: #{_lambda_.2} parent=1 // pred_check_branch
      %38 = sbr.rel (0) target = $region45
    $region44: #{_lambda_.2} parent=1 // pred_region
      %s40 = ssub.s32 16, 16
      %41 = vsyncadd [#allocation3], %s40
      %s43 = sshll.u32 %s10, 4
      %s44 = int_to_ptr.vmem [resolvable:$true] %s43
      %46 = dma.vmem_to_smem %s44, 16, [#allocation2], [#allocation3]
    $region45: #{_lambda_.2} parent=1 // pred_fallthru
      _
    // Predicated region
    $region46: #{_lambda_.2} parent=1 // pred_check
      _
    $region47: #{_lambda_.2} parent=1 // pred_check_branch
      %48 = sbr.rel (0) target = $region49
    $region48: #{_lambda_.2} parent=1 // pred_region
      %49 = dma.done [#allocation3], 16
    $region49: #{_lambda_.2} parent=1 // pred_fallthru
      _
    %50 = sfence
    %v51 = vld [vmem:[%s0] sm:$0x3]
    %v52 = vld [vmem:[%s8] sm:$0x1f]
    %v53 = vld [vmem:[%s9] sm:$0x1f]
    %55 = vset.pattern.permute.xlu0 0
    %56 = vperm.xlu0 %55, %v53
    %v57 = vpop.permute.xlu0 %56
    %vm59 = vcmask 15360
    %v61 = vsel %vm59, %v52, 0
    %vm63 = vcmask 1041408
    %v65 = vsel %vm63, %v51, 0
    %67 = vmatprep.subr.mxu0 0.0
    %68 = vmatpush1.msra.mxu0 0.0
    %69 = vmatprep.subr.mxu0 0.0
    %70 = vmatpush1.msra.mxu0 0.0
    %71 = vmatprep.subr.mxu0 0.0
    %72 = vmatpush1.msra.mxu0 0.0
    %73 = vmatprep.subr.mxu0 0.0
    %74 = vmatpush1.msra.mxu0 0.0
    %75 = vmatprep.subr.mxu0 0.0
    %76 = vmatpush1.msra.mxu0 0.0
    %77 = vmatprep.subr.mxu0 0.0
    %78 = vmatpush1.msra.mxu0 0.0
    %79 = vmatprep.subr.mxu0 0.0
    %80 = vmatpush1.msra.mxu0 0.0
    %81 = vmatprep.subr.mxu0 0.0
    %82 = vmatpush1.msra.mxu0 0.0
    %83 = vmatprep.subr.mxu0 0.0
    %84 = vmatpush1.msra.mxu0 0.0
    %85 = vmatprep.subr.mxu0 0.0
    %86 = vmatpush1.msra.mxu0 0.0
    %87 = vmatprep.subr.mxu0 0.0
    %88 = vmatpush1.msra.mxu0 0.0
    %89 = vmatprep.subr.mxu0 0.0
    %90 = vmatpush1.msra.mxu0 0.0
    %91 = vmatprep.subr.mxu0 0.0
    %92 = vmatpush1.msra.mxu0 0.0
    %93 = vmatprep.subr.mxu0 0.0
    %94 = vmatpush1.msra.mxu0 0.0
    %95 = vmatprep.subr.mxu0 0.0
    %96 = vmatpush1.msra.mxu0 0.0
    %97 = vmatprep.subr.mxu0 0.0
    %98 = vmatpush1.msra.mxu0 %v65
    %99 = vmatprep.subr.mxu0 0.0
    %100 = vmatpush2.msra.mxu0 0.0
    %101 = vmatprep.subr.mxu0 0.0
    %102 = vmatpush2.msra.mxu0 0.0
    %103 = vmatprep.subr.mxu0 0.0
    %104 = vmatpush2.msra.mxu0 0.0
    %105 = vmatprep.subr.mxu0 0.0
    %106 = vmatpush2.msra.mxu0 0.0
    %107 = vmatprep.subr.mxu0 0.0
    %108 = vmatpush2.msra.mxu0 0.0
    %109 = vmatprep.subr.mxu0 0.0
    %110 = vmatpush2.msra.mxu0 0.0
    %111 = vmatprep.subr.mxu0 0.0
    %112 = vmatpush2.msra.mxu0 0.0
    %113 = vmatprep.subr.mxu0 0.0
    %114 = vmatpush2.msra.mxu0 0.0
    %115 = vmatprep.subr.mxu0 0.0
    %116 = vmatpush2.msra.mxu0 0.0
    %117 = vmatprep.subr.mxu0 0.0
    %118 = vmatpush2.msra.mxu0 0.0
    %119 = vmatprep.subr.mxu0 0.0
    %120 = vmatpush2.msra.mxu0 0.0
    %121 = vmatprep.subr.mxu0 0.0
    %122 = vmatpush2.msra.mxu0 0.0
    %123 = vmatprep.subr.mxu0 0.0
    %124 = vmatpush2.msra.mxu0 0.0
    %125 = vmatprep.subr.mxu0 0.0
    %126 = vmatpush2.msra.mxu0 0.0
    %127 = vmatprep.subr.mxu0 0.0
    %128 = vmatpush2.msra.mxu0 0.0
    %129 = vmatprep.subr.mxu0 0.0
    %130 = vmatpush2.msra.mxu0 0.0
    %131 = vmatprep.mubr.f32.mxu0 0.0
    %132 = vmatmul.mubr.f32.gmra.mxu0 %v61
    %v133 = vpop.f32.mrf.mxu0
    %v134 = vadd.f32 %v57, %v133
    %v135 = vpop.f32.mrf.mxu0
    %136 = vdwg.mxu0
    %v137 = vld [vmem:[%s4] sm:$0x1f]
    %v139 = vsel %vm59, %v137, 0
    %141 = vmatprep.subr.mxu0 0.0
    %142 = vmatpush1.msra.mxu0 0.0
    %143 = vmatprep.subr.mxu0 0.0
    %144 = vmatpush1.msra.mxu0 0.0
    %145 = vmatprep.subr.mxu0 0.0
    %146 = vmatpush1.msra.mxu0 0.0
    %147 = vmatprep.subr.mxu0 0.0
    %148 = vmatpush1.msra.mxu0 0.0
    %149 = vmatprep.subr.mxu0 0.0
    %150 = vmatpush1.msra.mxu0 0.0
    %151 = vmatprep.subr.mxu0 0.0
    %152 = vmatpush1.msra.mxu0 0.0
    %153 = vmatprep.subr.mxu0 0.0
    %154 = vmatpush1.msra.mxu0 0.0
    %155 = vmatprep.subr.mxu0 0.0
    %156 = vmatpush1.msra.mxu0 0.0
    %157 = vmatprep.subr.mxu0 0.0
    %158 = vmatpush1.msra.mxu0 0.0
    %159 = vmatprep.subr.mxu0 0.0
    %160 = vmatpush1.msra.mxu0 0.0
    %161 = vmatprep.subr.mxu0 0.0
    %162 = vmatpush1.msra.mxu0 0.0
    %163 = vmatprep.subr.mxu0 0.0
    %164 = vmatpush1.msra.mxu0 0.0
    %165 = vmatprep.subr.mxu0 0.0
    %166 = vmatpush1.msra.mxu0 0.0
    %167 = vmatprep.subr.mxu0 0.0
    %168 = vmatpush1.msra.mxu0 0.0
    %169 = vmatprep.subr.mxu0 0.0
    %170 = vmatpush1.msra.mxu0 0.0
    %171 = vmatprep.subr.mxu0 0.0
    %172 = vmatpush1.msra.mxu0 %v65
    %173 = vmatprep.subr.mxu0 0.0
    %174 = vmatpush2.msra.mxu0 0.0
    %175 = vmatprep.subr.mxu0 0.0
    %176 = vmatpush2.msra.mxu0 0.0
    %177 = vmatprep.subr.mxu0 0.0
    %178 = vmatpush2.msra.mxu0 0.0
    %179 = vmatprep.subr.mxu0 0.0
    %180 = vmatpush2.msra.mxu0 0.0
    %181 = vmatprep.subr.mxu0 0.0
    %182 = vmatpush2.msra.mxu0 0.0
    %183 = vmatprep.subr.mxu0 0.0
    %184 = vmatpush2.msra.mxu0 0.0
    %185 = vmatprep.subr.mxu0 0.0
    %186 = vmatpush2.msra.mxu0 0.0
    %187 = vmatprep.subr.mxu0 0.0
    %188 = vmatpush2.msra.mxu0 0.0
    %189 = vmatprep.subr.mxu0 0.0
    %190 = vmatpush2.msra.mxu0 0.0
    %191 = vmatprep.subr.mxu0 0.0
    %192 = vmatpush2.msra.mxu0 0.0
    %193 = vmatprep.subr.mxu0 0.0
    %194 = vmatpush2.msra.mxu0 0.0
    %195 = vmatprep.subr.mxu0 0.0
    %196 = vmatpush2.msra.mxu0 0.0
    %197 = vmatprep.subr.mxu0 0.0
    %198 = vmatpush2.msra.mxu0 0.0
    %199 = vmatprep.subr.mxu0 0.0
    %200 = vmatpush2.msra.mxu0 0.0
    %201 = vmatprep.subr.mxu0 0.0
    %202 = vmatpush2.msra.mxu0 0.0
    %203 = vmatprep.subr.mxu0 0.0
    %204 = vmatpush2.msra.mxu0 0.0
    %205 = vmatprep.mubr.f32.mxu0 0.0
    %206 = vmatmul.mubr.f32.gmra.mxu0 %v139
    %v207 = vpop.f32.mrf.mxu0
    %v208 = vadd.f32 0.0, %v207
    %v209 = vpop.f32.mrf.mxu0
    %210 = vdwg.mxu0
    %v211 = vld [vmem:[%s1] sm:$0xff]
    %v212 = vld [vmem:[%s1 + $0x8] sm:$0xff]
    %v213 = vld [vmem:[%s1 + $0x10] sm:$0xff]
    %v214 = vld [vmem:[%s1 + $0x18] sm:$0xff]
    %v215 = vld [vmem:[%s1 + $0x20] sm:$0xff]
    %v216 = vld [vmem:[%s1 + $0x28] sm:$0xff]
    %v217 = vld [vmem:[%s1 + $0x30] sm:$0xff]
    %v218 = vld [vmem:[%s1 + $0x38] sm:$0xff]
    %v219 = vld [vmem:[%s5] sm:$0x1f]
    %vm220 = vcmask 523264
    %v222 = vsel %vm220, %v208, 0
    %224 = vmatprep.subr.mxu0 0.0
    %225 = vmatpush1.msra.mxu0 0.0
    %226 = vmatprep.subr.mxu0 0.0
    %227 = vmatpush1.msra.mxu0 0.0
    %228 = vmatprep.subr.mxu0 0.0
    %229 = vmatpush1.msra.mxu0 0.0
    %230 = vmatprep.subr.mxu0 0.0
    %231 = vmatpush1.msra.mxu0 0.0
    %232 = vmatprep.subr.mxu0 0.0
    %233 = vmatpush1.msra.mxu0 0.0
    %234 = vmatprep.subr.mxu0 0.0
    %235 = vmatpush1.msra.mxu0 0.0
    %236 = vmatprep.subr.mxu0 0.0
    %237 = vmatpush1.msra.mxu0 0.0
    %238 = vmatprep.subr.mxu0 0.0
    %239 = vmatpush1.msra.mxu0 0.0
    %240 = vmatprep.subr.mxu0 0.0
    %241 = vmatpush1.msra.mxu0 %v218
    %242 = vmatprep.subr.mxu0 0.0
    %243 = vmatpush1.msra.mxu0 %v217
    %244 = vmatprep.subr.mxu0 0.0
    %245 = vmatpush1.msra.mxu0 %v216
    %246 = vmatprep.subr.mxu0 0.0
    %247 = vmatpush1.msra.mxu0 %v215
    %248 = vmatprep.subr.mxu0 0.0
    %249 = vmatpush1.msra.mxu0 %v214
    %250 = vmatprep.subr.mxu0 0.0
    %251 = vmatpush1.msra.mxu0 %v213
    %252 = vmatprep.subr.mxu0 0.0
    %253 = vmatpush1.msra.mxu0 %v212
    %254 = vmatprep.subr.mxu0 0.0
    %255 = vmatpush1.msra.mxu0 %v211
    %256 = vmatprep.subr.mxu0 0.0
    %257 = vmatpush2.msra.mxu0 0.0
    %258 = vmatprep.subr.mxu0 0.0
    %259 = vmatpush2.msra.mxu0 0.0
    %260 = vmatprep.subr.mxu0 0.0
    %261 = vmatpush2.msra.mxu0 0.0
    %262 = vmatprep.subr.mxu0 0.0
    %263 = vmatpush2.msra.mxu0 0.0
    %264 = vmatprep.subr.mxu0 0.0
    %265 = vmatpush2.msra.mxu0 0.0
    %266 = vmatprep.subr.mxu0 0.0
    %267 = vmatpush2.msra.mxu0 0.0
    %268 = vmatprep.subr.mxu0 0.0
    %269 = vmatpush2.msra.mxu0 0.0
    %270 = vmatprep.subr.mxu0 0.0
    %271 = vmatpush2.msra.mxu0 0.0
    %272 = vmatprep.subr.mxu0 0.0
    %273 = vmatpush2.msra.mxu0 0.0
    %274 = vmatprep.subr.mxu0 0.0
    %275 = vmatpush2.msra.mxu0 0.0
    %276 = vmatprep.subr.mxu0 0.0
    %277 = vmatpush2.msra.mxu0 0.0
    %278 = vmatprep.subr.mxu0 0.0
    %279 = vmatpush2.msra.mxu0 0.0
    %280 = vmatprep.subr.mxu0 0.0
    %281 = vmatpush2.msra.mxu0 0.0
    %282 = vmatprep.subr.mxu0 0.0
    %283 = vmatpush2.msra.mxu0 0.0
    %284 = vmatprep.subr.mxu0 0.0
    %285 = vmatpush2.msra.mxu0 0.0
    %286 = vmatprep.subr.mxu0 0.0
    %287 = vmatpush2.msra.mxu0 0.0
    %288 = vmatprep.mubr.f32.mxu0 0.0
    %289 = vmatmul.mubr.f32.gmra.mxu0 %v222
    %v290 = vpop.f32.mrf.mxu0
    %v291 = vadd.f32 %v219, %v290
    %v292 = vpop.f32.mrf.mxu0
    %293 = vdwg.mxu0
    %s294 = sld [smem:[#allocation2]]
    %vm295 = vcmp.ge.f32.partialorder %v291, 0.0
    %v296 = vstv %s294
    %v297 = vmul.f32 %v296, %v291
    %v298 = vsel %vm295, %v291, %v297
    %v299 = vld [vmem:[%s2] sm:$0xff]
    %v300 = vld [vmem:[%s2 + $0x8] sm:$0xff]
    %v301 = vld [vmem:[%s2 + $0x10] sm:$0xff]
    %v302 = vld [vmem:[%s2 + $0x18] sm:$0xff]
    %v303 = vld [vmem:[%s2 + $0x20] sm:$0xff]
    %v304 = vld [vmem:[%s2 + $0x28] sm:$0xff]
    %v305 = vld [vmem:[%s2 + $0x30] sm:$0xff]
    %v306 = vld [vmem:[%s2 + $0x38] sm:$0xff]
    %v308 = vsel %vm220, %v298, 0
    %310 = vmatprep.subr.mxu0 0.0
    %311 = vmatpush1.msra.mxu0 0.0
    %312 = vmatprep.subr.mxu0 0.0
    %313 = vmatpush1.msra.mxu0 0.0
    %314 = vmatprep.subr.mxu0 0.0
    %315 = vmatpush1.msra.mxu0 0.0
    %316 = vmatprep.subr.mxu0 0.0
    %317 = vmatpush1.msra.mxu0 0.0
    %318 = vmatprep.subr.mxu0 0.0
    %319 = vmatpush1.msra.mxu0 0.0
    %320 = vmatprep.subr.mxu0 0.0
    %321 = vmatpush1.msra.mxu0 0.0
    %322 = vmatprep.subr.mxu0 0.0
    %323 = vmatpush1.msra.mxu0 0.0
    %324 = vmatprep.subr.mxu0 0.0
    %325 = vmatpush1.msra.mxu0 0.0
    %326 = vmatprep.subr.mxu0 0.0
    %327 = vmatpush1.msra.mxu0 %v306
    %328 = vmatprep.subr.mxu0 0.0
    %329 = vmatpush1.msra.mxu0 %v305
    %330 = vmatprep.subr.mxu0 0.0
    %331 = vmatpush1.msra.mxu0 %v304
    %332 = vmatprep.subr.mxu0 0.0
    %333 = vmatpush1.msra.mxu0 %v303
    %334 = vmatprep.subr.mxu0 0.0
    %335 = vmatpush1.msra.mxu0 %v302
    %336 = vmatprep.subr.mxu0 0.0
    %337 = vmatpush1.msra.mxu0 %v301
    %338 = vmatprep.subr.mxu0 0.0
    %339 = vmatpush1.msra.mxu0 %v300
    %340 = vmatprep.subr.mxu0 0.0
    %341 = vmatpush1.msra.mxu0 %v299
    %342 = vmatprep.subr.mxu0 0.0
    %343 = vmatpush2.msra.mxu0 0.0
    %344 = vmatprep.subr.mxu0 0.0
    %345 = vmatpush2.msra.mxu0 0.0
    %346 = vmatprep.subr.mxu0 0.0
    %347 = vmatpush2.msra.mxu0 0.0
    %348 = vmatprep.subr.mxu0 0.0
    %349 = vmatpush2.msra.mxu0 0.0
    %350 = vmatprep.subr.mxu0 0.0
    %351 = vmatpush2.msra.mxu0 0.0
    %352 = vmatprep.subr.mxu0 0.0
    %353 = vmatpush2.msra.mxu0 0.0
    %354 = vmatprep.subr.mxu0 0.0
    %355 = vmatpush2.msra.mxu0 0.0
    %356 = vmatprep.subr.mxu0 0.0
    %357 = vmatpush2.msra.mxu0 0.0
    %358 = vmatprep.subr.mxu0 0.0
    %359 = vmatpush2.msra.mxu0 0.0
    %360 = vmatprep.subr.mxu0 0.0
    %361 = vmatpush2.msra.mxu0 0.0
    %362 = vmatprep.subr.mxu0 0.0
    %363 = vmatpush2.msra.mxu0 0.0
    %364 = vmatprep.subr.mxu0 0.0
    %365 = vmatpush2.msra.mxu0 0.0
    %366 = vmatprep.subr.mxu0 0.0
    %367 = vmatpush2.msra.mxu0 0.0
    %368 = vmatprep.subr.mxu0 0.0
    %369 = vmatpush2.msra.mxu0 0.0
    %370 = vmatprep.subr.mxu0 0.0
    %371 = vmatpush2.msra.mxu0 0.0
    %372 = vmatprep.subr.mxu0 0.0
    %373 = vmatpush2.msra.mxu0 0.0
    %374 = vmatprep.mubr.f32.mxu0 0.0
    %375 = vmatmul.mubr.f32.gmra.mxu0 %v308
    %v376 = vpop.f32.mrf.mxu0
    %v377 = vadd.f32 0.0, %v376
    %v378 = vpop.f32.mrf.mxu0
    %379 = vdwg.mxu0
    %v380 = vld [vmem:[%s3] sm:$0xff]
    %v381 = vld [vmem:[%s3 + $0x8] sm:$0xff]
    %v382 = vld [vmem:[%s3 + $0x10] sm:$0xff]
    %v383 = vld [vmem:[%s3 + $0x18] sm:$0xff]
    %v384 = vld [vmem:[%s3 + $0x20] sm:$0xff]
    %v385 = vld [vmem:[%s3 + $0x28] sm:$0xff]
    %v386 = vld [vmem:[%s3 + $0x30] sm:$0xff]
    %v387 = vld [vmem:[%s3 + $0x38] sm:$0xff]
    %388 = vmatprep.subr.mxu0 0.0
    %389 = vmatpush1.msra.mxu0 0.0
    %390 = vmatprep.subr.mxu0 0.0
    %391 = vmatpush1.msra.mxu0 0.0
    %392 = vmatprep.subr.mxu0 0.0
    %393 = vmatpush1.msra.mxu0 0.0
    %394 = vmatprep.subr.mxu0 0.0
    %395 = vmatpush1.msra.mxu0 0.0
    %396 = vmatprep.subr.mxu0 0.0
    %397 = vmatpush1.msra.mxu0 0.0
    %398 = vmatprep.subr.mxu0 0.0
    %399 = vmatpush1.msra.mxu0 0.0
    %400 = vmatprep.subr.mxu0 0.0
    %401 = vmatpush1.msra.mxu0 0.0
    %402 = vmatprep.subr.mxu0 0.0
    %403 = vmatpush1.msra.mxu0 0.0
    %404 = vmatprep.subr.mxu0 0.0
    %405 = vmatpush1.msra.mxu0 %v387
    %406 = vmatprep.subr.mxu0 0.0
    %407 = vmatpush1.msra.mxu0 %v386
    %408 = vmatprep.subr.mxu0 0.0
    %409 = vmatpush1.msra.mxu0 %v385
    %410 = vmatprep.subr.mxu0 0.0
    %411 = vmatpush1.msra.mxu0 %v384
    %412 = vmatprep.subr.mxu0 0.0
    %413 = vmatpush1.msra.mxu0 %v383
    %414 = vmatprep.subr.mxu0 0.0
    %415 = vmatpush1.msra.mxu0 %v382
    %416 = vmatprep.subr.mxu0 0.0
    %417 = vmatpush1.msra.mxu0 %v381
    %418 = vmatprep.subr.mxu0 0.0
    %419 = vmatpush1.msra.mxu0 %v380
    %420 = vmatprep.subr.mxu0 0.0
    %421 = vmatpush2.msra.mxu0 0.0
    %422 = vmatprep.subr.mxu0 0.0
    %423 = vmatpush2.msra.mxu0 0.0
    %424 = vmatprep.subr.mxu0 0.0
    %425 = vmatpush2.msra.mxu0 0.0
    %426 = vmatprep.subr.mxu0 0.0
    %427 = vmatpush2.msra.mxu0 0.0
    %428 = vmatprep.subr.mxu0 0.0
    %429 = vmatpush2.msra.mxu0 0.0
    %430 = vmatprep.subr.mxu0 0.0
    %431 = vmatpush2.msra.mxu0 0.0
    %432 = vmatprep.subr.mxu0 0.0
    %433 = vmatpush2.msra.mxu0 0.0
    %434 = vmatprep.subr.mxu0 0.0
    %435 = vmatpush2.msra.mxu0 0.0
    %436 = vmatprep.subr.mxu0 0.0
    %437 = vmatpush2.msra.mxu0 0.0
    %438 = vmatprep.subr.mxu0 0.0
    %439 = vmatpush2.msra.mxu0 0.0
    %440 = vmatprep.subr.mxu0 0.0
    %441 = vmatpush2.msra.mxu0 0.0
    %442 = vmatprep.subr.mxu0 0.0
    %443 = vmatpush2.msra.mxu0 0.0
    %444 = vmatprep.subr.mxu0 0.0
    %445 = vmatpush2.msra.mxu0 0.0
    %446 = vmatprep.subr.mxu0 0.0
    %447 = vmatpush2.msra.mxu0 0.0
    %448 = vmatprep.subr.mxu0 0.0
    %449 = vmatpush2.msra.mxu0 0.0
    %450 = vmatprep.subr.mxu0 0.0
    %451 = vmatpush2.msra.mxu0 0.0
    %452 = vmatprep.mubr.f32.mxu0 0.0
    %453 = vmatmul.mubr.f32.gmra.mxu0 %v308
    %v454 = vpop.f32.mrf.mxu0
    %v455 = vadd.f32 0.0, %v454
    %v456 = vpop.f32.mrf.mxu0
    %457 = vdwg.mxu0
    %v458 = vld [vmem:[%s6] sm:$0x1f]
    %s459 = scalar_lea.vmem %s6, 8
    %v460 = vld [vmem:[%s459] sm:$0x1f]
    %vm461 = vcmask 39936
    %v463 = vsel %vm461, %v460, 0
    %vm465 = vcmask 1044480
    %v466 = vsel %vm465, %v298, 0
    %468 = vmatprep.subr.mxu0 0.0
    %469 = vmatpush1.msra.mxu0 0.0
    %470 = vmatprep.subr.mxu0 0.0
    %471 = vmatpush1.msra.mxu0 0.0
    %472 = vmatprep.subr.mxu0 0.0
    %473 = vmatpush1.msra.mxu0 0.0
    %474 = vmatprep.subr.mxu0 0.0
    %475 = vmatpush1.msra.mxu0 0.0
    %476 = vmatprep.subr.mxu0 0.0
    %477 = vmatpush1.msra.mxu0 0.0
    %478 = vmatprep.subr.mxu0 0.0
    %479 = vmatpush1.msra.mxu0 0.0
    %480 = vmatprep.subr.mxu0 0.0
    %481 = vmatpush1.msra.mxu0 0.0
    %482 = vmatprep.subr.mxu0 0.0
    %483 = vmatpush1.msra.mxu0 0.0
    %484 = vmatprep.subr.mxu0 0.0
    %485 = vmatpush1.msra.mxu0 0.0
    %486 = vmatprep.subr.mxu0 0.0
    %487 = vmatpush1.msra.mxu0 0.0
    %488 = vmatprep.subr.mxu0 0.0
    %489 = vmatpush1.msra.mxu0 0.0
    %490 = vmatprep.subr.mxu0 0.0
    %491 = vmatpush1.msra.mxu0 0.0
    %492 = vmatprep.subr.mxu0 0.0
    %493 = vmatpush1.msra.mxu0 0.0
    %494 = vmatprep.subr.mxu0 0.0
    %495 = vmatpush1.msra.mxu0 0.0
    %496 = vmatprep.subr.mxu0 0.0
    %497 = vmatpush1.msra.mxu0 0.0
    %498 = vmatprep.subr.mxu0 0.0
    %499 = vmatpush1.msra.mxu0 %v466
    %500 = vmatprep.subr.mxu0 0.0
    %501 = vmatpush2.msra.mxu0 0.0
    %502 = vmatprep.subr.mxu0 0.0
    %503 = vmatpush2.msra.mxu0 0.0
    %504 = vmatprep.subr.mxu0 0.0
    %505 = vmatpush2.msra.mxu0 0.0
    %506 = vmatprep.subr.mxu0 0.0
    %507 = vmatpush2.msra.mxu0 0.0
    %508 = vmatprep.subr.mxu0 0.0
    %509 = vmatpush2.msra.mxu0 0.0
    %510 = vmatprep.subr.mxu0 0.0
    %511 = vmatpush2.msra.mxu0 0.0
    %512 = vmatprep.subr.mxu0 0.0
    %513 = vmatpush2.msra.mxu0 0.0
    %514 = vmatprep.subr.mxu0 0.0
    %515 = vmatpush2.msra.mxu0 0.0
    %516 = vmatprep.subr.mxu0 0.0
    %517 = vmatpush2.msra.mxu0 0.0
    %518 = vmatprep.subr.mxu0 0.0
    %519 = vmatpush2.msra.mxu0 0.0
    %520 = vmatprep.subr.mxu0 0.0
    %521 = vmatpush2.msra.mxu0 0.0
    %522 = vmatprep.subr.mxu0 0.0
    %523 = vmatpush2.msra.mxu0 0.0
    %524 = vmatprep.subr.mxu0 0.0
    %525 = vmatpush2.msra.mxu0 0.0
    %526 = vmatprep.subr.mxu0 0.0
    %527 = vmatpush2.msra.mxu0 0.0
    %528 = vmatprep.subr.mxu0 0.0
    %529 = vmatpush2.msra.mxu0 0.0
    %530 = vmatprep.subr.mxu0 0.0
    %531 = vmatpush2.msra.mxu0 0.0
    %532 = vmatprep.mubr.f32.mxu0 0.0
    %533 = vmatmul.mubr.f32.gmra.mxu0 %v463
    %v534 = vpop.f32.mrf.mxu0
    %v535 = vadd.f32 0.0, %v534
    %v536 = vpop.f32.mrf.mxu0
    %537 = vdwg.mxu0
    %v539 = vsel %vm461, %v458, 0
    %v542 = vsel %vm465, %v377, 0
    %544 = vmatprep.subr.mxu0 0.0
    %545 = vmatpush1.msra.mxu0 0.0
    %546 = vmatprep.subr.mxu0 0.0
    %547 = vmatpush1.msra.mxu0 0.0
    %548 = vmatprep.subr.mxu0 0.0
    %549 = vmatpush1.msra.mxu0 0.0
    %550 = vmatprep.subr.mxu0 0.0
    %551 = vmatpush1.msra.mxu0 0.0
    %552 = vmatprep.subr.mxu0 0.0
    %553 = vmatpush1.msra.mxu0 0.0
    %554 = vmatprep.subr.mxu0 0.0
    %555 = vmatpush1.msra.mxu0 0.0
    %556 = vmatprep.subr.mxu0 0.0
    %557 = vmatpush1.msra.mxu0 0.0
    %558 = vmatprep.subr.mxu0 0.0
    %559 = vmatpush1.msra.mxu0 0.0
    %560 = vmatprep.subr.mxu0 0.0
    %561 = vmatpush1.msra.mxu0 0.0
    %562 = vmatprep.subr.mxu0 0.0
    %563 = vmatpush1.msra.mxu0 0.0
    %564 = vmatprep.subr.mxu0 0.0
    %565 = vmatpush1.msra.mxu0 0.0
    %566 = vmatprep.subr.mxu0 0.0
    %567 = vmatpush1.msra.mxu0 0.0
    %568 = vmatprep.subr.mxu0 0.0
    %569 = vmatpush1.msra.mxu0 0.0
    %570 = vmatprep.subr.mxu0 0.0
    %571 = vmatpush1.msra.mxu0 0.0
    %572 = vmatprep.subr.mxu0 0.0
    %573 = vmatpush1.msra.mxu0 0.0
    %574 = vmatprep.subr.mxu0 0.0
    %575 = vmatpush1.msra.mxu0 %v542
    %576 = vmatprep.subr.mxu0 0.0
    %577 = vmatpush2.msra.mxu0 0.0
    %578 = vmatprep.subr.mxu0 0.0
    %579 = vmatpush2.msra.mxu0 0.0
    %580 = vmatprep.subr.mxu0 0.0
    %581 = vmatpush2.msra.mxu0 0.0
    %582 = vmatprep.subr.mxu0 0.0
    %583 = vmatpush2.msra.mxu0 0.0
    %584 = vmatprep.subr.mxu0 0.0
    %585 = vmatpush2.msra.mxu0 0.0
    %586 = vmatprep.subr.mxu0 0.0
    %587 = vmatpush2.msra.mxu0 0.0
    %588 = vmatprep.subr.mxu0 0.0
    %589 = vmatpush2.msra.mxu0 0.0
    %590 = vmatprep.subr.mxu0 0.0
    %591 = vmatpush2.msra.mxu0 0.0
    %592 = vmatprep.subr.mxu0 0.0
    %593 = vmatpush2.msra.mxu0 0.0
    %594 = vmatprep.subr.mxu0 0.0
    %595 = vmatpush2.msra.mxu0 0.0
    %596 = vmatprep.subr.mxu0 0.0
    %597 = vmatpush2.msra.mxu0 0.0
    %598 = vmatprep.subr.mxu0 0.0
    %599 = vmatpush2.msra.mxu0 0.0
    %600 = vmatprep.subr.mxu0 0.0
    %601 = vmatpush2.msra.mxu0 0.0
    %602 = vmatprep.subr.mxu0 0.0
    %603 = vmatpush2.msra.mxu0 0.0
    %604 = vmatprep.subr.mxu0 0.0
    %605 = vmatpush2.msra.mxu0 0.0
    %606 = vmatprep.subr.mxu0 0.0
    %607 = vmatpush2.msra.mxu0 0.0
    %608 = vmatprep.mubr.f32.mxu0 0.0
    %609 = vmatmul.mubr.f32.gmra.mxu0 %v539
    %v610 = vpop.f32.mrf.mxu0
    %v611 = vadd.f32 %v535, %v610
    %v612 = vpop.f32.mrf.mxu0
    %613 = vdwg.mxu0
    %s614 = scalar_lea.vmem %s6, 16
    %v615 = vld [vmem:[%s614] sm:$0x1f]
    %v617 = vsel %vm461, %v615, 0
    %v620 = vsel %vm465, %v455, 0
    %622 = vmatprep.subr.mxu0 0.0
    %623 = vmatpush1.msra.mxu0 0.0
    %624 = vmatprep.subr.mxu0 0.0
    %625 = vmatpush1.msra.mxu0 0.0
    %626 = vmatprep.subr.mxu0 0.0
    %627 = vmatpush1.msra.mxu0 0.0
    %628 = vmatprep.subr.mxu0 0.0
    %629 = vmatpush1.msra.mxu0 0.0
    %630 = vmatprep.subr.mxu0 0.0
    %631 = vmatpush1.msra.mxu0 0.0
    %632 = vmatprep.subr.mxu0 0.0
    %633 = vmatpush1.msra.mxu0 0.0
    %634 = vmatprep.subr.mxu0 0.0
    %635 = vmatpush1.msra.mxu0 0.0
    %636 = vmatprep.subr.mxu0 0.0
    %637 = vmatpush1.msra.mxu0 0.0
    %638 = vmatprep.subr.mxu0 0.0
    %639 = vmatpush1.msra.mxu0 0.0
    %640 = vmatprep.subr.mxu0 0.0
    %641 = vmatpush1.msra.mxu0 0.0
    %642 = vmatprep.subr.mxu0 0.0
    %643 = vmatpush1.msra.mxu0 0.0
    %644 = vmatprep.subr.mxu0 0.0
    %645 = vmatpush1.msra.mxu0 0.0
    %646 = vmatprep.subr.mxu0 0.0
    %647 = vmatpush1.msra.mxu0 0.0
    %648 = vmatprep.subr.mxu0 0.0
    %649 = vmatpush1.msra.mxu0 0.0
    %650 = vmatprep.subr.mxu0 0.0
    %651 = vmatpush1.msra.mxu0 0.0
    %652 = vmatprep.subr.mxu0 0.0
    %653 = vmatpush1.msra.mxu0 %v620
    %654 = vmatprep.subr.mxu0 0.0
    %655 = vmatpush2.msra.mxu0 0.0
    %656 = vmatprep.subr.mxu0 0.0
    %657 = vmatpush2.msra.mxu0 0.0
    %658 = vmatprep.subr.mxu0 0.0
    %659 = vmatpush2.msra.mxu0 0.0
    %660 = vmatprep.subr.mxu0 0.0
    %661 = vmatpush2.msra.mxu0 0.0
    %662 = vmatprep.subr.mxu0 0.0
    %663 = vmatpush2.msra.mxu0 0.0
    %664 = vmatprep.subr.mxu0 0.0
    %665 = vmatpush2.msra.mxu0 0.0
    %666 = vmatprep.subr.mxu0 0.0
    %667 = vmatpush2.msra.mxu0 0.0
    %668 = vmatprep.subr.mxu0 0.0
    %669 = vmatpush2.msra.mxu0 0.0
    %670 = vmatprep.subr.mxu0 0.0
    %671 = vmatpush2.msra.mxu0 0.0
    %672 = vmatprep.subr.mxu0 0.0
    %673 = vmatpush2.msra.mxu0 0.0
    %674 = vmatprep.subr.mxu0 0.0
    %675 = vmatpush2.msra.mxu0 0.0
    %676 = vmatprep.subr.mxu0 0.0
    %677 = vmatpush2.msra.mxu0 0.0
    %678 = vmatprep.subr.mxu0 0.0
    %679 = vmatpush2.msra.mxu0 0.0
    %680 = vmatprep.subr.mxu0 0.0
    %681 = vmatpush2.msra.mxu0 0.0
    %682 = vmatprep.subr.mxu0 0.0
    %683 = vmatpush2.msra.mxu0 0.0
    %684 = vmatprep.subr.mxu0 0.0
    %685 = vmatpush2.msra.mxu0 0.0
    %686 = vmatprep.mubr.f32.mxu0 0.0
    %687 = vmatmul.mubr.f32.gmra.mxu0 %v617
    %v688 = vpop.f32.mrf.mxu0
    %v689 = vadd.f32 0.0, %v688
    %v690 = vpop.f32.mrf.mxu0
    %691 = vdwg.mxu0
    %v692 = vadd.f32 %v611, %v689
    %v693 = vld [vmem:[%s7] sm:$0x1f]
    %695 = vset.pattern.permute.xlu0 0
    %696 = vperm.xlu0 %695, %v693
    %v697 = vpop.permute.xlu0 %696
    %v699 = vadd.f32 %v692, %v697
    %v700 = vadd.f32 %v699, %v134
    %s701 = sld [smem:[#allocation2 + $0x1]]
    %vm702 = vcmp.ge.f32.partialorder %v700, 0.0
    %v703 = vstv %s701
    %v704 = vmul.f32 %v703, %v700
    %v705 = vsel %vm702, %v700, %v704
    %vm706 = vcmask 520192
    %707 = vst.msk [vmem:[%s11] sm:$0x1f] %vm706, %v705
    // Predicated region
    $region50: #{_lambda_.2} parent=1 // pred_check
      _
    $region51: #{_lambda_.2} parent=1 // pred_check_branch
      %709 = sbr.rel (0) target = $region53
    $region52: #{_lambda_.2} parent=1 // pred_region
      _
    $region53: #{_lambda_.2} parent=1 // pred_fallthru
      _
    // Predicated region
    $region54: #{_lambda_.2} parent=1 // pred_check
      _
    $region55: #{_lambda_.2} parent=1 // pred_check_branch
      %711 = sbr.rel (0) target = $region57
    $region56: #{_lambda_.2} parent=1 // pred_region
      _
    $region57: #{_lambda_.2} parent=1 // pred_fallthru
      _
    %712 = vsyncpa [#allocation3], 1

// kernel: _lambda_.3
$region0: #{_lambda_.3}
  #allocation0 [shape = 'u32[]', space=smem, size = 0x4, offset = 0x4, fixed_abs, tag = 'smem constant byte address 0x4 - core index']
  #allocation1 [shape = 'u32[144,128]{1,0:T(1,128)}', space=vmem, size = 0x12000, scoped, tag = 'internal scratch']
  %s0 = inlined_call_operand.vmem [shape: f32[8,40], index: 0, kind: input, shape index: {}]
  %s1 = inlined_call_operand.vmem [shape: f32[9,40,40], index: 1, kind: input, shape index: {}]
  %s2 = inlined_call_operand.vmem [shape: f32[9,12,8], index: 2, kind: input, shape index: {}]
  %s3 = inlined_call_operand.vmem [shape: f32[12,1], index: 3, kind: input, shape index: {}]
  %s4 = inlined_call_operand.vmem [shape: f32[9,12,12], index: 4, kind: input, shape index: {}]
  %s5 = inlined_call_operand.vmem [shape: f32[12,1], index: 5, kind: input, shape index: {}]
  %s6 = inlined_call_operand.vmem [shape: f32[9,12,12], index: 6, kind: input, shape index: {}]
  %s7 = inlined_call_operand.vmem [shape: f32[12,1], index: 7, kind: input, shape index: {}]
  %s8 = inlined_call_operand.vmem [shape: f32[9,12,12], index: 8, kind: input, shape index: {}]
  %s9 = inlined_call_operand.vmem [shape: f32[12,1], index: 9, kind: input, shape index: {}]
  %s10 = inlined_call_operand.vmem [shape: f32[3], index: 10, kind: input, shape index: {}]
  %s11 = inlined_call_operand.vmem [shape: f32[12,40], index: 11, kind: output, shape index: {}]
  %s12 = sld [smem:[#allocation0]]
  $region58: #{_lambda_.3} parent=0
    _
  %s14 = ssub.s32 1, %s12
  %s15 = scalar_select 0, %s14, %s12
  $region1: #{_lambda_.3} parent=0
    #allocation2 [shape = 'u8[512]{0}', space=smem, size = 0x200, scoped, tag = 'input window, operand 10, single buffered']
    #allocation3 [shape = 's32[1]{0}', space=sflag, size = 0x4, scoped, tag = 'scoped memory for _lambda_.3']
    %16 = vsyncpa [#allocation3], 0
    // Predicated region
    $region2: #{_lambda_.3} parent=1 // pred_check
      _
    $region3: #{_lambda_.3} parent=1 // pred_check_branch
      %18 = sbr.rel (0) target = $region5
    $region4: #{_lambda_.3} parent=1 // pred_region
      _
    $region5: #{_lambda_.3} parent=1 // pred_fallthru
      _
    // Predicated region
    $region6: #{_lambda_.3} parent=1 // pred_check
      _
    $region7: #{_lambda_.3} parent=1 // pred_check_branch
      %20 = sbr.rel (0) target = $region9
    $region8: #{_lambda_.3} parent=1 // pred_region
      _
    $region9: #{_lambda_.3} parent=1 // pred_fallthru
      _
    // Predicated region
    $region10: #{_lambda_.3} parent=1 // pred_check
      _
    $region11: #{_lambda_.3} parent=1 // pred_check_branch
      %22 = sbr.rel (0) target = $region13
    $region12: #{_lambda_.3} parent=1 // pred_region
      _
    $region13: #{_lambda_.3} parent=1 // pred_fallthru
      _
    // Predicated region
    $region14: #{_lambda_.3} parent=1 // pred_check
      _
    $region15: #{_lambda_.3} parent=1 // pred_check_branch
      %24 = sbr.rel (0) target = $region17
    $region16: #{_lambda_.3} parent=1 // pred_region
      _
    $region17: #{_lambda_.3} parent=1 // pred_fallthru
      _
    // Predicated region
    $region18: #{_lambda_.3} parent=1 // pred_check
      _
    $region19: #{_lambda_.3} parent=1 // pred_check_branch
      %26 = sbr.rel (0) target = $region21
    $region20: #{_lambda_.3} parent=1 // pred_region
      _
    $region21: #{_lambda_.3} parent=1 // pred_fallthru
      _
    // Predicated region
    $region22: #{_lambda_.3} parent=1 // pred_check
      _
    $region23: #{_lambda_.3} parent=1 // pred_check_branch
      %28 = sbr.rel (0) target = $region25
    $region24: #{_lambda_.3} parent=1 // pred_region
      _
    $region25: #{_lambda_.3} parent=1 // pred_fallthru
      _
    // Predicated region
    $region26: #{_lambda_.3} parent=1 // pred_check
      _
    $region27: #{_lambda_.3} parent=1 // pred_check_branch
      %30 = sbr.rel (0) target = $region29
    $region28: #{_lambda_.3} parent=1 // pred_region
      _
    $region29: #{_lambda_.3} parent=1 // pred_fallthru
      _
    // Predicated region
    $region30: #{_lambda_.3} parent=1 // pred_check
      _
    $region31: #{_lambda_.3} parent=1 // pred_check_branch
      %32 = sbr.rel (0) target = $region33
    $region32: #{_lambda_.3} parent=1 // pred_region
      _
    $region33: #{_lambda_.3} parent=1 // pred_fallthru
      _
    // Predicated region
    $region34: #{_lambda_.3} parent=1 // pred_check
      _
    $region35: #{_lambda_.3} parent=1 // pred_check_branch
      %34 = sbr.rel (0) target = $region37
    $region36: #{_lambda_.3} parent=1 // pred_region
      _
    $region37: #{_lambda_.3} parent=1 // pred_fallthru
      _
    // Predicated region
    $region38: #{_lambda_.3} parent=1 // pred_check
      _
    $region39: #{_lambda_.3} parent=1 // pred_check_branch
      %36 = sbr.rel (0) target = $region41
    $region40: #{_lambda_.3} parent=1 // pred_region
      _
    $region41: #{_lambda_.3} parent=1 // pred_fallthru
      _
    // Predicated region
    $region42: #{_lambda_.3} parent=1 // pred_check
      _
    $region43: #{_lambda_.3} parent=1 // pred_check_branch
      %38 = sbr.rel (0) target = $region45
    $region44: #{_lambda_.3} parent=1 // pred_region
      %s40 = ssub.s32 16, 16
      %41 = vsyncadd [#allocation3], %s40
      %s43 = sshll.u32 %s10, 4
      %s44 = int_to_ptr.vmem [resolvable:$true] %s43
      %46 = dma.vmem_to_smem %s44, 16, [#allocation2], [#allocation3]
    $region45: #{_lambda_.3} parent=1 // pred_fallthru
      _
    // Predicated region
    $region46: #{_lambda_.3} parent=1 // pred_check
      _
    $region47: #{_lambda_.3} parent=1 // pred_check_branch
      %48 = sbr.rel (0) target = $region49
    $region48: #{_lambda_.3} parent=1 // pred_region
      %49 = dma.done [#allocation3], 16
    $region49: #{_lambda_.3} parent=1 // pred_fallthru
      _
    %50 = sfence
    %v51 = vld [vmem:[%s0] sm:$0xff]
    %v52 = vld [vmem:[%s3] sm:$0xff]
    %v53 = vld [vmem:[%s3 + $0x8] sm:$0xf]
    %v54 = vld [vmem:[%s1] sm:$0xff]
    %v55 = vld [vmem:[%s1 + $0x8] sm:$0xff]
    %v56 = vld [vmem:[%s1 + $0x10] sm:$0xff]
    %v57 = vld [vmem:[%s1 + $0x18] sm:$0xff]
    %v58 = vld [vmem:[%s1 + $0x20] sm:$0xff]
    %vm59 = vcmask 326656
    %v61 = vsel %vm59, %v51, 0
    %63 = vmatprep.subr.mxu0 0.0
    %64 = vmatpush1.msra.mxu0 0.0
    %65 = vmatprep.subr.mxu0 0.0
    %66 = vmatpush1.msra.mxu0 0.0
    %67 = vmatprep.subr.mxu0 0.0
    %68 = vmatpush1.msra.mxu0 0.0
    %69 = vmatprep.subr.mxu0 0.0
    %70 = vmatpush1.msra.mxu0 0.0
    %71 = vmatprep.subr.mxu0 0.0
    %72 = vmatpush1.msra.mxu0 0.0
    %73 = vmatprep.subr.mxu0 0.0
    %74 = vmatpush1.msra.mxu0 0.0
    %75 = vmatprep.subr.mxu0 0.0
    %76 = vmatpush1.msra.mxu0 0.0
    %77 = vmatprep.subr.mxu0 0.0
    %78 = vmatpush1.msra.mxu0 0.0
    %79 = vmatprep.subr.mxu0 0.0
    %80 = vmatpush1.msra.mxu0 0.0
    %81 = vmatprep.subr.mxu0 0.0
    %82 = vmatpush1.msra.mxu0 0.0
    %83 = vmatprep.subr.mxu0 0.0
    %84 = vmatpush1.msra.mxu0 0.0
    %85 = vmatprep.subr.mxu0 0.0
    %86 = vmatpush1.msra.mxu0 %v58
    %87 = vmatprep.subr.mxu0 0.0
    %88 = vmatpush1.msra.mxu0 %v57
    %89 = vmatprep.subr.mxu0 0.0
    %90 = vmatpush1.msra.mxu0 %v56
    %91 = vmatprep.subr.mxu0 0.0
    %92 = vmatpush1.msra.mxu0 %v55
    %93 = vmatprep.subr.mxu0 0.0
    %94 = vmatpush1.msra.mxu0 %v54
    %95 = vmatprep.subr.mxu0 0.0
    %96 = vmatpush2.msra.mxu0 0.0
    %97 = vmatprep.subr.mxu0 0.0
    %98 = vmatpush2.msra.mxu0 0.0
    %99 = vmatprep.subr.mxu0 0.0
    %100 = vmatpush2.msra.mxu0 0.0
    %101 = vmatprep.subr.mxu0 0.0
    %102 = vmatpush2.msra.mxu0 0.0
    %103 = vmatprep.subr.mxu0 0.0
    %104 = vmatpush2.msra.mxu0 0.0
    %105 = vmatprep.subr.mxu0 0.0
    %106 = vmatpush2.msra.mxu0 0.0
    %107 = vmatprep.subr.mxu0 0.0
    %108 = vmatpush2.msra.mxu0 0.0
    %109 = vmatprep.subr.mxu0 0.0
    %110 = vmatpush2.msra.mxu0 0.0
    %111 = vmatprep.subr.mxu0 0.0
    %112 = vmatpush2.msra.mxu0 0.0
    %113 = vmatprep.subr.mxu0 0.0
    %114 = vmatpush2.msra.mxu0 0.0
    %115 = vmatprep.subr.mxu0 0.0
    %116 = vmatpush2.msra.mxu0 0.0
    %117 = vmatprep.subr.mxu0 0.0
    %118 = vmatpush2.msra.mxu0 0.0
    %119 = vmatprep.subr.mxu0 0.0
    %120 = vmatpush2.msra.mxu0 0.0
    %121 = vmatprep.subr.mxu0 0.0
    %122 = vmatpush2.msra.mxu0 0.0
    %123 = vmatprep.subr.mxu0 0.0
    %124 = vmatpush2.msra.mxu0 0.0
    %125 = vmatprep.subr.mxu0 0.0
    %126 = vmatpush2.msra.mxu0 0.0
    %127 = vmatprep.mubr.f32.mxu0 0.0
    %128 = vmatmul.mubr.f32.gmra.mxu0 %v61
    %v129 = vpop.f32.mrf.mxu0
    %v130 = vadd.f32 0.0, %v129
    %v131 = vpop.f32.mrf.mxu0
    %132 = vdwg.mxu0
    %v133 = vld [vmem:[%s2] sm:$0xff]
    %v134 = vld [vmem:[%s2 + $0x8] sm:$0xf]
    %vm135 = vcmask 64512
    %v137 = vsel %vm135, %v133, 0
    %v140 = vsel %vm135, %v134, 0
    %142 = vmatprep.subr.mxu0 0.0
    %143 = vmatpush1.msra.mxu0 0.0
    %144 = vmatprep.subr.mxu0 0.0
    %145 = vmatpush1.msra.mxu0 0.0
    %146 = vmatprep.subr.mxu0 0.0
    %147 = vmatpush1.msra.mxu0 0.0
    %148 = vmatprep.subr.mxu0 0.0
    %149 = vmatpush1.msra.mxu0 0.0
    %150 = vmatprep.subr.mxu0 0.0
    %151 = vmatpush1.msra.mxu0 0.0
    %152 = vmatprep.subr.mxu0 0.0
    %153 = vmatpush1.msra.mxu0 0.0
    %154 = vmatprep.subr.mxu0 0.0
    %155 = vmatpush1.msra.mxu0 0.0
    %156 = vmatprep.subr.mxu0 0.0
    %157 = vmatpush1.msra.mxu0 0.0
    %158 = vmatprep.subr.mxu0 0.0
    %159 = vmatpush1.msra.mxu0 0.0
    %160 = vmatprep.subr.mxu0 0.0
    %161 = vmatpush1.msra.mxu0 0.0
    %162 = vmatprep.subr.mxu0 0.0
    %163 = vmatpush1.msra.mxu0 0.0
    %164 = vmatprep.subr.mxu0 0.0
    %165 = vmatpush1.msra.mxu0 0.0
    %166 = vmatprep.subr.mxu0 0.0
    %167 = vmatpush1.msra.mxu0 0.0
    %168 = vmatprep.subr.mxu0 0.0
    %169 = vmatpush1.msra.mxu0 0.0
    %170 = vmatprep.subr.mxu0 0.0
    %171 = vmatpush1.msra.mxu0 0.0
    %172 = vmatprep.subr.mxu0 0.0
    %173 = vmatpush1.msra.mxu0 %v130
    %174 = vmatprep.subr.mxu0 0.0
    %175 = vmatpush2.msra.mxu0 0.0
    %176 = vmatprep.subr.mxu0 0.0
    %177 = vmatpush2.msra.mxu0 0.0
    %178 = vmatprep.subr.mxu0 0.0
    %179 = vmatpush2.msra.mxu0 0.0
    %180 = vmatprep.subr.mxu0 0.0
    %181 = vmatpush2.msra.mxu0 0.0
    %182 = vmatprep.subr.mxu0 0.0
    %183 = vmatpush2.msra.mxu0 0.0
    %184 = vmatprep.subr.mxu0 0.0
    %185 = vmatpush2.msra.mxu0 0.0
    %186 = vmatprep.subr.mxu0 0.0
    %187 = vmatpush2.msra.mxu0 0.0
    %188 = vmatprep.subr.mxu0 0.0
    %189 = vmatpush2.msra.mxu0 0.0
    %190 = vmatprep.subr.mxu0 0.0
    %191 = vmatpush2.msra.mxu0 0.0
    %192 = vmatprep.subr.mxu0 0.0
    %193 = vmatpush2.msra.mxu0 0.0
    %194 = vmatprep.subr.mxu0 0.0
    %195 = vmatpush2.msra.mxu0 0.0
    %196 = vmatprep.subr.mxu0 0.0
    %197 = vmatpush2.msra.mxu0 0.0
    %198 = vmatprep.subr.mxu0 0.0
    %199 = vmatpush2.msra.mxu0 0.0
    %200 = vmatprep.subr.mxu0 0.0
    %201 = vmatpush2.msra.mxu0 0.0
    %202 = vmatprep.subr.mxu0 0.0
    %203 = vmatpush2.msra.mxu0 0.0
    %204 = vmatprep.subr.mxu0 0.0
    %205 = vmatpush2.msra.mxu0 0.0
    %206 = vmatprep.mubr.f32.mxu0 0.0
    %207 = vmatmul.mubr.f32.gmra.mxu0 %v137
    %v208 = vpop.f32.mrf.mxu0
    %v209 = vadd.f32 0.0, %v208
    %v210 = vpop.f32.mrf.mxu0
    %211 = vmatprep.mubr.f32.mxu0 0.0
    %212 = vmatmul.mubr.f32.gmra.mxu0 %v140
    %v213 = vpop.f32.mrf.mxu0
    %v214 = vadd.f32 0.0, %v213
    %v215 = vpop.f32.mrf.mxu0
    %216 = vdwg.mxu0
    %218 = vset.pattern.permute.xlu0 0
    %219 = vperm.xlu0 %218, %v52
    %v220 = vpop.permute.xlu0 %219
    %223 = vset.pattern.permute.xlu0 0
    %224 = vperm.xlu0 %223, %v53
    %v225 = vpop.permute.xlu0 %224
    %v227 = vadd.f32 %v220, %v209
    %v228 = vadd.f32 %v225, %v214
    %s229 = scalar_lea.vmem %s1, 40
    %v230 = vld [vmem:[%s229] sm:$0xff]
    %v231 = vld [vmem:[%s229 + $0x8] sm:$0xff]
    %v232 = vld [vmem:[%s229 + $0x10] sm:$0xff]
    %v233 = vld [vmem:[%s229 + $0x18] sm:$0xff]
    %v234 = vld [vmem:[%s229 + $0x20] sm:$0xff]
    %235 = vmatprep.subr.mxu0 0.0
    %236 = vmatpush1.msra.mxu0 0.0
    %237 = vmatprep.subr.mxu0 0.0
    %238 = vmatpush1.msra.mxu0 0.0
    %239 = vmatprep.subr.mxu0 0.0
    %240 = vmatpush1.msra.mxu0 0.0
    %241 = vmatprep.subr.mxu0 0.0
    %242 = vmatpush1.msra.mxu0 0.0
    %243 = vmatprep.subr.mxu0 0.0
    %244 = vmatpush1.msra.mxu0 0.0
    %245 = vmatprep.subr.mxu0 0.0
    %246 = vmatpush1.msra.mxu0 0.0
    %247 = vmatprep.subr.mxu0 0.0
    %248 = vmatpush1.msra.mxu0 0.0
    %249 = vmatprep.subr.mxu0 0.0
    %250 = vmatpush1.msra.mxu0 0.0
    %251 = vmatprep.subr.mxu0 0.0
    %252 = vmatpush1.msra.mxu0 0.0
    %253 = vmatprep.subr.mxu0 0.0
    %254 = vmatpush1.msra.mxu0 0.0
    %255 = vmatprep.subr.mxu0 0.0
    %256 = vmatpush1.msra.mxu0 0.0
    %257 = vmatprep.subr.mxu0 0.0
    %258 = vmatpush1.msra.mxu0 %v234
    %259 = vmatprep.subr.mxu0 0.0
    %260 = vmatpush1.msra.mxu0 %v233
    %261 = vmatprep.subr.mxu0 0.0
    %262 = vmatpush1.msra.mxu0 %v232
    %263 = vmatprep.subr.mxu0 0.0
    %264 = vmatpush1.msra.mxu0 %v231
    %265 = vmatprep.subr.mxu0 0.0
    %266 = vmatpush1.msra.mxu0 %v230
    %267 = vmatprep.subr.mxu0 0.0
    %268 = vmatpush2.msra.mxu0 0.0
    %269 = vmatprep.subr.mxu0 0.0
    %270 = vmatpush2.msra.mxu0 0.0
    %271 = vmatprep.subr.mxu0 0.0
    %272 = vmatpush2.msra.mxu0 0.0
    %273 = vmatprep.subr.mxu0 0.0
    %274 = vmatpush2.msra.mxu0 0.0
    %275 = vmatprep.subr.mxu0 0.0
    %276 = vmatpush2.msra.mxu0 0.0
    %277 = vmatprep.subr.mxu0 0.0
    %278 = vmatpush2.msra.mxu0 0.0
    %279 = vmatprep.subr.mxu0 0.0
    %280 = vmatpush2.msra.mxu0 0.0
    %281 = vmatprep.subr.mxu0 0.0
    %282 = vmatpush2.msra.mxu0 0.0
    %283 = vmatprep.subr.mxu0 0.0
    %284 = vmatpush2.msra.mxu0 0.0
    %285 = vmatprep.subr.mxu0 0.0
    %286 = vmatpush2.msra.mxu0 0.0
    %287 = vmatprep.subr.mxu0 0.0
    %288 = vmatpush2.msra.mxu0 0.0
    %289 = vmatprep.subr.mxu0 0.0
    %290 = vmatpush2.msra.mxu0 0.0
    %291 = vmatprep.subr.mxu0 0.0
    %292 = vmatpush2.msra.mxu0 0.0
    %293 = vmatprep.subr.mxu0 0.0
    %294 = vmatpush2.msra.mxu0 0.0
    %295 = vmatprep.subr.mxu0 0.0
    %296 = vmatpush2.msra.mxu0 0.0
    %297 = vmatprep.subr.mxu0 0.0
    %298 = vmatpush2.msra.mxu0 0.0
    %299 = vmatprep.mubr.f32.mxu0 0.0
    %300 = vmatmul.mubr.f32.gmra.mxu0 %v61
    %v301 = vpop.f32.mrf.mxu0
    %v302 = vadd.f32 0.0, %v301
    %v303 = vpop.f32.mrf.mxu0
    %304 = vdwg.mxu0
    %s305 = scalar_lea.vmem %s2, 16
    %v306 = vld [vmem:[%s305] sm:$0xff]
    %v307 = vld [vmem:[%s305 + $0x8] sm:$0xf]
    %v309 = vsel %vm135, %v306, 0
    %v312 = vsel %vm135, %v307, 0
    %314 = vmatprep.subr.mxu0 0.0
    %315 = vmatpush1.msra.mxu0 0.0
    %316 = vmatprep.subr.mxu0 0.0
    %317 = vmatpush1.msra.mxu0 0.0
    %318 = vmatprep.subr.mxu0 0.0
    %319 = vmatpush1.msra.mxu0 0.0
    %320 = vmatprep.subr.mxu0 0.0
    %321 = vmatpush1.msra.mxu0 0.0
    %322 = vmatprep.subr.mxu0 0.0
    %323 = vmatpush1.msra.mxu0 0.0
    %324 = vmatprep.subr.mxu0 0.0
    %325 = vmatpush1.msra.mxu0 0.0
    %326 = vmatprep.subr.mxu0 0.0
    %327 = vmatpush1.msra.mxu0 0.0
    %328 = vmatprep.subr.mxu0 0.0
    %329 = vmatpush1.msra.mxu0 0.0
    %330 = vmatprep.subr.mxu0 0.0
    %331 = vmatpush1.msra.mxu0 0.0
    %332 = vmatprep.subr.mxu0 0.0
    %333 = vmatpush1.msra.mxu0 0.0
    %334 = vmatprep.subr.mxu0 0.0
    %335 = vmatpush1.msra.mxu0 0.0
    %336 = vmatprep.subr.mxu0 0.0
    %337 = vmatpush1.msra.mxu0 0.0
    %338 = vmatprep.subr.mxu0 0.0
    %339 = vmatpush1.msra.mxu0 0.0
    %340 = vmatprep.subr.mxu0 0.0
    %341 = vmatpush1.msra.mxu0 0.0
    %342 = vmatprep.subr.mxu0 0.0
    %343 = vmatpush1.msra.mxu0 0.0
    %344 = vmatprep.subr.mxu0 0.0
    %345 = vmatpush1.msra.mxu0 %v302
    %346 = vmatprep.subr.mxu0 0.0
    %347 = vmatpush2.msra.mxu0 0.0
    %348 = vmatprep.subr.mxu0 0.0
    %349 = vmatpush2.msra.mxu0 0.0
    %350 = vmatprep.subr.mxu0 0.0
    %351 = vmatpush2.msra.mxu0 0.0
    %352 = vmatprep.subr.mxu0 0.0
    %353 = vmatpush2.msra.mxu0 0.0
    %354 = vmatprep.subr.mxu0 0.0
    %355 = vmatpush2.msra.mxu0 0.0
    %356 = vmatprep.subr.mxu0 0.0
    %357 = vmatpush2.msra.mxu0 0.0
    %358 = vmatprep.subr.mxu0 0.0
    %359 = vmatpush2.msra.mxu0 0.0
    %360 = vmatprep.subr.mxu0 0.0
    %361 = vmatpush2.msra.mxu0 0.0
    %362 = vmatprep.subr.mxu0 0.0
    %363 = vmatpush2.msra.mxu0 0.0
    %364 = vmatprep.subr.mxu0 0.0
    %365 = vmatpush2.msra.mxu0 0.0
    %366 = vmatprep.subr.mxu0 0.0
    %367 = vmatpush2.msra.mxu0 0.0
    %368 = vmatprep.subr.mxu0 0.0
    %369 = vmatpush2.msra.mxu0 0.0
    %370 = vmatprep.subr.mxu0 0.0
    %371 = vmatpush2.msra.mxu0 0.0
    %372 = vmatprep.subr.mxu0 0.0
    %373 = vmatpush2.msra.mxu0 0.0
    %374 = vmatprep.subr.mxu0 0.0
    %375 = vmatpush2.msra.mxu0 0.0
    %376 = vmatprep.subr.mxu0 0.0
    %377 = vmatpush2.msra.mxu0 0.0
    %378 = vmatprep.mubr.f32.mxu0 0.0
    %379 = vmatmul.mubr.f32.gmra.mxu0 %v309
    %v380 = vpop.f32.mrf.mxu0
    %v381 = vadd.f32 0.0, %v380
    %v382 = vpop.f32.mrf.mxu0
    %383 = vmatprep.mubr.f32.mxu0 0.0
    %384 = vmatmul.mubr.f32.gmra.mxu0 %v312
    %v385 = vpop.f32.mrf.mxu0
    %v386 = vadd.f32 0.0, %v385
    %v387 = vpop.f32.mrf.mxu0
    %388 = vdwg.mxu0
    %v389 = vadd.f32 %v227, %v381
    %v390 = vadd.f32 %v228, %v386
    %s391 = scalar_lea.vmem %s1, 80
    %v392 = vld [vmem:[%s391] sm:$0xff]
    %v393 = vld [vmem:[%s391 + $0x8] sm:$0xff]
    %v394 = vld [vmem:[%s391 + $0x10] sm:$0xff]
    %v395 = vld [vmem:[%s391 + $0x18] sm:$0xff]
    %v396 = vld [vmem:[%s391 + $0x20] sm:$0xff]
    %397 = vmatprep.subr.mxu0 0.0
    %398 = vmatpush1.msra.mxu0 0.0
    %399 = vmatprep.subr.mxu0 0.0
    %400 = vmatpush1.msra.mxu0 0.0
    %401 = vmatprep.subr.mxu0 0.0
    %402 = vmatpush1.msra.mxu0 0.0
    %403 = vmatprep.subr.mxu0 0.0
    %404 = vmatpush1.msra.mxu0 0.0
    %405 = vmatprep.subr.mxu0 0.0
    %406 = vmatpush1.msra.mxu0 0.0
    %407 = vmatprep.subr.mxu0 0.0
    %408 = vmatpush1.msra.mxu0 0.0
    %409 = vmatprep.subr.mxu0 0.0
    %410 = vmatpush1.msra.mxu0 0.0
    %411 = vmatprep.subr.mxu0 0.0
    %412 = vmatpush1.msra.mxu0 0.0
    %413 = vmatprep.subr.mxu0 0.0
    %414 = vmatpush1.msra.mxu0 0.0
    %415 = vmatprep.subr.mxu0 0.0
    %416 = vmatpush1.msra.mxu0 0.0
    %417 = vmatprep.subr.mxu0 0.0
    %418 = vmatpush1.msra.mxu0 0.0
    %419 = vmatprep.subr.mxu0 0.0
    %420 = vmatpush1.msra.mxu0 %v396
    %421 = vmatprep.subr.mxu0 0.0
    %422 = vmatpush1.msra.mxu0 %v395
    %423 = vmatprep.subr.mxu0 0.0
    %424 = vmatpush1.msra.mxu0 %v394
    %425 = vmatprep.subr.mxu0 0.0
    %426 = vmatpush1.msra.mxu0 %v393
    %427 = vmatprep.subr.mxu0 0.0
    %428 = vmatpush1.msra.mxu0 %v392
    %429 = vmatprep.subr.mxu0 0.0
    %430 = vmatpush2.msra.mxu0 0.0
    %431 = vmatprep.subr.mxu0 0.0
    %432 = vmatpush2.msra.mxu0 0.0
    %433 = vmatprep.subr.mxu0 0.0
    %434 = vmatpush2.msra.mxu0 0.0
    %435 = vmatprep.subr.mxu0 0.0
    %436 = vmatpush2.msra.mxu0 0.0
    %437 = vmatprep.subr.mxu0 0.0
    %438 = vmatpush2.msra.mxu0 0.0
    %439 = vmatprep.subr.mxu0 0.0
    %440 = vmatpush2.msra.mxu0 0.0
    %441 = vmatprep.subr.mxu0 0.0
    %442 = vmatpush2.msra.mxu0 0.0
    %443 = vmatprep.subr.mxu0 0.0
    %444 = vmatpush2.msra.mxu0 0.0
    %445 = vmatprep.subr.mxu0 0.0
    %446 = vmatpush2.msra.mxu0 0.0
    %447 = vmatprep.subr.mxu0 0.0
    %448 = vmatpush2.msra.mxu0 0.0
    %449 = vmatprep.subr.mxu0 0.0
    %450 = vmatpush2.msra.mxu0 0.0
    %451 = vmatprep.subr.mxu0 0.0
    %452 = vmatpush2.msra.mxu0 0.0
    %453 = vmatprep.subr.mxu0 0.0
    %454 = vmatpush2.msra.mxu0 0.0
    %455 = vmatprep.subr.mxu0 0.0
    %456 = vmatpush2.msra.mxu0 0.0
    %457 = vmatprep.subr.mxu0 0.0
    %458 = vmatpush2.msra.mxu0 0.0
    %459 = vmatprep.subr.mxu0 0.0
    %460 = vmatpush2.msra.mxu0 0.0
    %461 = vmatprep.mubr.f32.mxu0 0.0
    %462 = vmatmul.mubr.f32.gmra.mxu0 %v61
    %v463 = vpop.f32.mrf.mxu0
    %v464 = vadd.f32 0.0, %v463
    %v465 = vpop.f32.mrf.mxu0
    %466 = vdwg.mxu0
    %s467 = scalar_lea.vmem %s2, 32
    %v468 = vld [vmem:[%s467] sm:$0xff]
    %v469 = vld [vmem:[%s467 + $0x8] sm:$0xf]
    %v471 = vsel %vm135, %v468, 0
    %v474 = vsel %vm135, %v469, 0
    %476 = vmatprep.subr.mxu0 0.0
    %477 = vmatpush1.msra.mxu0 0.0
    %478 = vmatprep.subr.mxu0 0.0
    %479 = vmatpush1.msra.mxu0 0.0
    %480 = vmatprep.subr.mxu0 0.0
    %481 = vmatpush1.msra.mxu0 0.0
    %482 = vmatprep.subr.mxu0 0.0
    %483 = vmatpush1.msra.mxu0 0.0
    %484 = vmatprep.subr.mxu0 0.0
    %485 = vmatpush1.msra.mxu0 0.0
    %486 = vmatprep.subr.mxu0 0.0
    %487 = vmatpush1.msra.mxu0 0.0
    %488 = vmatprep.subr.mxu0 0.0
    %489 = vmatpush1.msra.mxu0 0.0
    %490 = vmatprep.subr.mxu0 0.0
    %491 = vmatpush1.msra.mxu0 0.0
    %492 = vmatprep.subr.mxu0 0.0
    %493 = vmatpush1.msra.mxu0 0.0
    %494 = vmatprep.subr.mxu0 0.0
    %495 = vmatpush1.msra.mxu0 0.0
    %496 = vmatprep.subr.mxu0 0.0
    %497 = vmatpush1.msra.mxu0 0.0
    %498 = vmatprep.subr.mxu0 0.0
    %499 = vmatpush1.msra.mxu0 0.0
    %500 = vmatprep.subr.mxu0 0.0
    %501 = vmatpush1.msra.mxu0 0.0
    %502 = vmatprep.subr.mxu0 0.0
    %503 = vmatpush1.msra.mxu0 0.0
    %504 = vmatprep.subr.mxu0 0.0
    %505 = vmatpush1.msra.mxu0 0.0
    %506 = vmatprep.subr.mxu0 0.0
    %507 = vmatpush1.msra.mxu0 %v464
    %508 = vmatprep.subr.mxu0 0.0
    %509 = vmatpush2.msra.mxu0 0.0
    %510 = vmatprep.subr.mxu0 0.0
    %511 = vmatpush2.msra.mxu0 0.0
    %512 = vmatprep.subr.mxu0 0.0
    %513 = vmatpush2.msra.mxu0 0.0
    %514 = vmatprep.subr.mxu0 0.0
    %515 = vmatpush2.msra.mxu0 0.0
    %516 = vmatprep.subr.mxu0 0.0
    %517 = vmatpush2.msra.mxu0 0.0
    %518 = vmatprep.subr.mxu0 0.0
    %519 = vmatpush2.msra.mxu0 0.0
    %520 = vmatprep.subr.mxu0 0.0
    %521 = vmatpush2.msra.mxu0 0.0
    %522 = vmatprep.subr.mxu0 0.0
    %523 = vmatpush2.msra.mxu0 0.0
    %524 = vmatprep.subr.mxu0 0.0
    %525 = vmatpush2.msra.mxu0 0.0
    %526 = vmatprep.subr.mxu0 0.0
    %527 = vmatpush2.msra.mxu0 0.0
    %528 = vmatprep.subr.mxu0 0.0
    %529 = vmatpush2.msra.mxu0 0.0
    %530 = vmatprep.subr.mxu0 0.0
    %531 = vmatpush2.msra.mxu0 0.0
    %532 = vmatprep.subr.mxu0 0.0
    %533 = vmatpush2.msra.mxu0 0.0
    %534 = vmatprep.subr.mxu0 0.0
    %535 = vmatpush2.msra.mxu0 0.0
    %536 = vmatprep.subr.mxu0 0.0
    %537 = vmatpush2.msra.mxu0 0.0
    %538 = vmatprep.subr.mxu0 0.0
    %539 = vmatpush2.msra.mxu0 0.0
    %540 = vmatprep.mubr.f32.mxu0 0.0
    %541 = vmatmul.mubr.f32.gmra.mxu0 %v471
    %v542 = vpop.f32.mrf.mxu0
    %v543 = vadd.f32 0.0, %v542
    %v544 = vpop.f32.mrf.mxu0
    %545 = vmatprep.mubr.f32.mxu0 0.0
    %546 = vmatmul.mubr.f32.gmra.mxu0 %v474
    %v547 = vpop.f32.mrf.mxu0
    %v548 = vadd.f32 0.0, %v547
    %v549 = vpop.f32.mrf.mxu0
    %550 = vdwg.mxu0
    %v551 = vadd.f32 %v389, %v543
    %v552 = vadd.f32 %v390, %v548
    %s553 = scalar_lea.vmem %s1, 120
    %v554 = vld [vmem:[%s553] sm:$0xff]
    %v555 = vld [vmem:[%s553 + $0x8] sm:$0xff]
    %v556 = vld [vmem:[%s553 + $0x10] sm:$0xff]
    %v557 = vld [vmem:[%s553 + $0x18] sm:$0xff]
    %v558 = vld [vmem:[%s553 + $0x20] sm:$0xff]
    %559 = vmatprep.subr.mxu0 0.0
    %560 = vmatpush1.msra.mxu0 0.0
    %561 = vmatprep.subr.mxu0 0.0
    %562 = vmatpush1.msra.mxu0 0.0
    %563 = vmatprep.subr.mxu0 0.0
    %564 = vmatpush1.msra.mxu0 0.0
    %565 = vmatprep.subr.mxu0 0.0
    %566 = vmatpush1.msra.mxu0 0.0
    %567 = vmatprep.subr.mxu0 0.0
    %568 = vmatpush1.msra.mxu0 0.0
    %569 = vmatprep.subr.mxu0 0.0
    %570 = vmatpush1.msra.mxu0 0.0
    %571 = vmatprep.subr.mxu0 0.0
    %572 = vmatpush1.msra.mxu0 0.0
    %573 = vmatprep.subr.mxu0 0.0
    %574 = vmatpush1.msra.mxu0 0.0
    %575 = vmatprep.subr.mxu0 0.0
    %576 = vmatpush1.msra.mxu0 0.0
    %577 = vmatprep.subr.mxu0 0.0
    %578 = vmatpush1.msra.mxu0 0.0
    %579 = vmatprep.subr.mxu0 0.0
    %580 = vmatpush1.msra.mxu0 0.0
    %581 = vmatprep.subr.mxu0 0.0
    %582 = vmatpush1.msra.mxu0 %v558
    %583 = vmatprep.subr.mxu0 0.0
    %584 = vmatpush1.msra.mxu0 %v557
    %585 = vmatprep.subr.mxu0 0.0
    %586 = vmatpush1.msra.mxu0 %v556
    %587 = vmatprep.subr.mxu0 0.0
    %588 = vmatpush1.msra.mxu0 %v555
    %589 = vmatprep.subr.mxu0 0.0
    %590 = vmatpush1.msra.mxu0 %v554
    %591 = vmatprep.subr.mxu0 0.0
    %592 = vmatpush2.msra.mxu0 0.0
    %593 = vmatprep.subr.mxu0 0.0
    %594 = vmatpush2.msra.mxu0 0.0
    %595 = vmatprep.subr.mxu0 0.0
    %596 = vmatpush2.msra.mxu0 0.0
    %597 = vmatprep.subr.mxu0 0.0
    %598 = vmatpush2.msra.mxu0 0.0
    %599 = vmatprep.subr.mxu0 0.0
    %600 = vmatpush2.msra.mxu0 0.0
    %601 = vmatprep.subr.mxu0 0.0
    %602 = vmatpush2.msra.mxu0 0.0
    %603 = vmatprep.subr.mxu0 0.0
    %604 = vmatpush2.msra.mxu0 0.0
    %605 = vmatprep.subr.mxu0 0.0
    %606 = vmatpush2.msra.mxu0 0.0
    %607 = vmatprep.subr.mxu0 0.0
    %608 = vmatpush2.msra.mxu0 0.0
    %609 = vmatprep.subr.mxu0 0.0
    %610 = vmatpush2.msra.mxu0 0.0
    %611 = vmatprep.subr.mxu0 0.0
    %612 = vmatpush2.msra.mxu0 0.0
    %613 = vmatprep.subr.mxu0 0.0
    %614 = vmatpush2.msra.mxu0 0.0
    %615 = vmatprep.subr.mxu0 0.0
    %616 = vmatpush2.msra.mxu0 0.0
    %617 = vmatprep.subr.mxu0 0.0
    %618 = vmatpush2.msra.mxu0 0.0
    %619 = vmatprep.subr.mxu0 0.0
    %620 = vmatpush2.msra.mxu0 0.0
    %621 = vmatprep.subr.mxu0 0.0
    %622 = vmatpush2.msra.mxu0 0.0
    %623 = vmatprep.mubr.f32.mxu0 0.0
    %624 = vmatmul.mubr.f32.gmra.mxu0 %v61
    %v625 = vpop.f32.mrf.mxu0
    %v626 = vadd.f32 0.0, %v625
    %v627 = vpop.f32.mrf.mxu0
    %628 = vdwg.mxu0
    %s629 = scalar_lea.vmem %s2, 48
    %v630 = vld [vmem:[%s629] sm:$0xff]
    %v631 = vld [vmem:[%s629 + $0x8] sm:$0xf]
    %v633 = vsel %vm135, %v630, 0
    %v636 = vsel %vm135, %v631, 0
    %638 = vmatprep.subr.mxu0 0.0
    %639 = vmatpush1.msra.mxu0 0.0
    %640 = vmatprep.subr.mxu0 0.0
    %641 = vmatpush1.msra.mxu0 0.0
    %642 = vmatprep.subr.mxu0 0.0
    %643 = vmatpush1.msra.mxu0 0.0
    %644 = vmatprep.subr.mxu0 0.0
    %645 = vmatpush1.msra.mxu0 0.0
    %646 = vmatprep.subr.mxu0 0.0
    %647 = vmatpush1.msra.mxu0 0.0
    %648 = vmatprep.subr.mxu0 0.0
    %649 = vmatpush1.msra.mxu0 0.0
    %650 = vmatprep.subr.mxu0 0.0
    %651 = vmatpush1.msra.mxu0 0.0
    %652 = vmatprep.subr.mxu0 0.0
    %653 = vmatpush1.msra.mxu0 0.0
    %654 = vmatprep.subr.mxu0 0.0
    %655 = vmatpush1.msra.mxu0 0.0
    %656 = vmatprep.subr.mxu0 0.0
    %657 = vmatpush1.msra.mxu0 0.0
    %658 = vmatprep.subr.mxu0 0.0
    %659 = vmatpush1.msra.mxu0 0.0
    %660 = vmatprep.subr.mxu0 0.0
    %661 = vmatpush1.msra.mxu0 0.0
    %662 = vmatprep.subr.mxu0 0.0
    %663 = vmatpush1.msra.mxu0 0.0
    %664 = vmatprep.subr.mxu0 0.0
    %665 = vmatpush1.msra.mxu0 0.0
    %666 = vmatprep.subr.mxu0 0.0
    %667 = vmatpush1.msra.mxu0 0.0
    %668 = vmatprep.subr.mxu0 0.0
    %669 = vmatpush1.msra.mxu0 %v626
    %670 = vmatprep.subr.mxu0 0.0
    %671 = vmatpush2.msra.mxu0 0.0
    %672 = vmatprep.subr.mxu0 0.0
    %673 = vmatpush2.msra.mxu0 0.0
    %674 = vmatprep.subr.mxu0 0.0
    %675 = vmatpush2.msra.mxu0 0.0
    %676 = vmatprep.subr.mxu0 0.0
    %677 = vmatpush2.msra.mxu0 0.0
    %678 = vmatprep.subr.mxu0 0.0
    %679 = vmatpush2.msra.mxu0 0.0
    %680 = vmatprep.subr.mxu0 0.0
    %681 = vmatpush2.msra.mxu0 0.0
    %682 = vmatprep.subr.mxu0 0.0
    %683 = vmatpush2.msra.mxu0 0.0
    %684 = vmatprep.subr.mxu0 0.0
    %685 = vmatpush2.msra.mxu0 0.0
    %686 = vmatprep.subr.mxu0 0.0
    %687 = vmatpush2.msra.mxu0 0.0
    %688 = vmatprep.subr.mxu0 0.0
    %689 = vmatpush2.msra.mxu0 0.0
    %690 = vmatprep.subr.mxu0 0.0
    %691 = vmatpush2.msra.mxu0 0.0
    %692 = vmatprep.subr.mxu0 0.0
    %693 = vmatpush2.msra.mxu0 0.0
    %694 = vmatprep.subr.mxu0 0.0
    %695 = vmatpush2.msra.mxu0 0.0
    %696 = vmatprep.subr.mxu0 0.0
    %697 = vmatpush2.msra.mxu0 0.0
    %698 = vmatprep.subr.mxu0 0.0
    %699 = vmatpush2.msra.mxu0 0.0
    %700 = vmatprep.subr.mxu0 0.0
    %701 = vmatpush2.msra.mxu0 0.0
    %702 = vmatprep.mubr.f32.mxu0 0.0
    %703 = vmatmul.mubr.f32.gmra.mxu0 %v633
    %v704 = vpop.f32.mrf.mxu0
    %v705 = vadd.f32 0.0, %v704
    %v706 = vpop.f32.mrf.mxu0
    %707 = vmatprep.mubr.f32.mxu0 0.0
    %708 = vmatmul.mubr.f32.gmra.mxu0 %v636
    %v709 = vpop.f32.mrf.mxu0
    %v710 = vadd.f32 0.0, %v709
    %v711 = vpop.f32.mrf.mxu0
    %712 = vdwg.mxu0
    %v713 = vadd.f32 %v551, %v705
    %v714 = vadd.f32 %v552, %v710
    %s715 = scalar_lea.vmem %s1, 160
    %v716 = vld [vmem:[%s715] sm:$0xff]
    %v717 = vld [vmem:[%s715 + $0x8] sm:$0xff]
    %v718 = vld [vmem:[%s715 + $0x10] sm:$0xff]
    %v719 = vld [vmem:[%s715 + $0x18] sm:$0xff]
    %v720 = vld [vmem:[%s715 + $0x20] sm:$0xff]
    %721 = vmatprep.subr.mxu0 0.0
    %722 = vmatpush1.msra.mxu0 0.0
    %723 = vmatprep.subr.mxu0 0.0
    %724 = vmatpush1.msra.mxu0 0.0
    %725 = vmatprep.subr.mxu0 0.0
    %726 = vmatpush1.msra.mxu0 0.0
    %727 = vmatprep.subr.mxu0 0.0
    %728 = vmatpush1.msra.mxu0 0.0
    %729 = vmatprep.subr.mxu0 0.0
    %730 = vmatpush1.msra.mxu0 0.0
    %731 = vmatprep.subr.mxu0 0.0
    %732 = vmatpush1.msra.mxu0 0.0
    %733 = vmatprep.subr.mxu0 0.0
    %734 = vmatpush1.msra.mxu0 0.0
    %735 = vmatprep.subr.mxu0 0.0
    %736 = vmatpush1.msra.mxu0 0.0
    %737 = vmatprep.subr.mxu0 0.0
    %738 = vmatpush1.msra.mxu0 0.0
    %739 = vmatprep.subr.mxu0 0.0
    %740 = vmatpush1.msra.mxu0 0.0
    %741 = vmatprep.subr.mxu0 0.0
    %742 = vmatpush1.msra.mxu0 0.0
    %743 = vmatprep.subr.mxu0 0.0
    %744 = vmatpush1.msra.mxu0 %v720
    %745 = vmatprep.subr.mxu0 0.0
    %746 = vmatpush1.msra.mxu0 %v719
    %747 = vmatprep.subr.mxu0 0.0
    %748 = vmatpush1.msra.mxu0 %v718
    %749 = vmatprep.subr.mxu0 0.0
    %750 = vmatpush1.msra.mxu0 %v717
    %751 = vmatprep.subr.mxu0 0.0
    %752 = vmatpush1.msra.mxu0 %v716
    %753 = vmatprep.subr.mxu0 0.0
    %754 = vmatpush2.msra.mxu0 0.0
    %755 = vmatprep.subr.mxu0 0.0
    %756 = vmatpush2.msra.mxu0 0.0
    %757 = vmatprep.subr.mxu0 0.0
    %758 = vmatpush2.msra.mxu0 0.0
    %759 = vmatprep.subr.mxu0 0.0
    %760 = vmatpush2.msra.mxu0 0.0
    %761 = vmatprep.subr.mxu0 0.0
    %762 = vmatpush2.msra.mxu0 0.0
    %763 = vmatprep.subr.mxu0 0.0
    %764 = vmatpush2.msra.mxu0 0.0
    %765 = vmatprep.subr.mxu0 0.0
    %766 = vmatpush2.msra.mxu0 0.0
    %767 = vmatprep.subr.mxu0 0.0
    %768 = vmatpush2.msra.mxu0 0.0
    %769 = vmatprep.subr.mxu0 0.0
    %770 = vmatpush2.msra.mxu0 0.0
    %771 = vmatprep.subr.mxu0 0.0
    %772 = vmatpush2.msra.mxu0 0.0
    %773 = vmatprep.subr.mxu0 0.0
    %774 = vmatpush2.msra.mxu0 0.0
    %775 = vmatprep.subr.mxu0 0.0
    %776 = vmatpush2.msra.mxu0 0.0
    %777 = vmatprep.subr.mxu0 0.0
    %778 = vmatpush2.msra.mxu0 0.0
    %779 = vmatprep.subr.mxu0 0.0
    %780 = vmatpush2.msra.mxu0 0.0
    %781 = vmatprep.subr.mxu0 0.0
    %782 = vmatpush2.msra.mxu0 0.0
    %783 = vmatprep.subr.mxu0 0.0
    %784 = vmatpush2.msra.mxu0 0.0
    %785 = vmatprep.mubr.f32.mxu0 0.0
    %786 = vmatmul.mubr.f32.gmra.mxu0 %v61
    %v787 = vpop.f32.mrf.mxu0
    %v788 = vadd.f32 0.0, %v787
    %v789 = vpop.f32.mrf.mxu0
    %790 = vdwg.mxu0
    %s791 = scalar_lea.vmem %s2, 64
    %v792 = vld [vmem:[%s791] sm:$0xff]
    %v793 = vld [vmem:[%s791 + $0x8] sm:$0xf]
    %v795 = vsel %vm135, %v792, 0
    %v798 = vsel %vm135, %v793, 0
    %800 = vmatprep.subr.mxu0 0.0
    %801 = vmatpush1.msra.mxu0 0.0
    %802 = vmatprep.subr.mxu0 0.0
    %803 = vmatpush1.msra.mxu0 0.0
    %804 = vmatprep.subr.mxu0 0.0
    %805 = vmatpush1.msra.mxu0 0.0
    %806 = vmatprep.subr.mxu0 0.0
    %807 = vmatpush1.msra.mxu0 0.0
    %808 = vmatprep.subr.mxu0 0.0
    %809 = vmatpush1.msra.mxu0 0.0
    %810 = vmatprep.subr.mxu0 0.0
    %811 = vmatpush1.msra.mxu0 0.0
    %812 = vmatprep.subr.mxu0 0.0
    %813 = vmatpush1.msra.mxu0 0.0
    %814 = vmatprep.subr.mxu0 0.0
    %815 = vmatpush1.msra.mxu0 0.0
    %816 = vmatprep.subr.mxu0 0.0
    %817 = vmatpush1.msra.mxu0 0.0
    %818 = vmatprep.subr.mxu0 0.0
    %819 = vmatpush1.msra.mxu0 0.0
    %820 = vmatprep.subr.mxu0 0.0
    %821 = vmatpush1.msra.mxu0 0.0
    %822 = vmatprep.subr.mxu0 0.0
    %823 = vmatpush1.msra.mxu0 0.0
    %824 = vmatprep.subr.mxu0 0.0
    %825 = vmatpush1.msra.mxu0 0.0
    %826 = vmatprep.subr.mxu0 0.0
    %827 = vmatpush1.msra.mxu0 0.0
    %828 = vmatprep.subr.mxu0 0.0
    %829 = vmatpush1.msra.mxu0 0.0
    %830 = vmatprep.subr.mxu0 0.0
    %831 = vmatpush1.msra.mxu0 %v788
    %832 = vmatprep.subr.mxu0 0.0
    %833 = vmatpush2.msra.mxu0 0.0
    %834 = vmatprep.subr.mxu0 0.0
    %835 = vmatpush2.msra.mxu0 0.0
    %836 = vmatprep.subr.mxu0 0.0
    %837 = vmatpush2.msra.mxu0 0.0
    %838 = vmatprep.subr.mxu0 0.0
    %839 = vmatpush2.msra.mxu0 0.0
    %840 = vmatprep.subr.mxu0 0.0
    %841 = vmatpush2.msra.mxu0 0.0
    %842 = vmatprep.subr.mxu0 0.0
    %843 = vmatpush2.msra.mxu0 0.0
    %844 = vmatprep.subr.mxu0 0.0
    %845 = vmatpush2.msra.mxu0 0.0
    %846 = vmatprep.subr.mxu0 0.0
    %847 = vmatpush2.msra.mxu0 0.0
    %848 = vmatprep.subr.mxu0 0.0
    %849 = vmatpush2.msra.mxu0 0.0
    %850 = vmatprep.subr.mxu0 0.0
    %851 = vmatpush2.msra.mxu0 0.0
    %852 = vmatprep.subr.mxu0 0.0
    %853 = vmatpush2.msra.mxu0 0.0
    %854 = vmatprep.subr.mxu0 0.0
    %855 = vmatpush2.msra.mxu0 0.0
    %856 = vmatprep.subr.mxu0 0.0
    %857 = vmatpush2.msra.mxu0 0.0
    %858 = vmatprep.subr.mxu0 0.0
    %859 = vmatpush2.msra.mxu0 0.0
    %860 = vmatprep.subr.mxu0 0.0
    %861 = vmatpush2.msra.mxu0 0.0
    %862 = vmatprep.subr.mxu0 0.0
    %863 = vmatpush2.msra.mxu0 0.0
    %864 = vmatprep.mubr.f32.mxu0 0.0
    %865 = vmatmul.mubr.f32.gmra.mxu0 %v795
    %v866 = vpop.f32.mrf.mxu0
    %v867 = vadd.f32 0.0, %v866
    %v868 = vpop.f32.mrf.mxu0
    %869 = vmatprep.mubr.f32.mxu0 0.0
    %870 = vmatmul.mubr.f32.gmra.mxu0 %v798
    %v871 = vpop.f32.mrf.mxu0
    %v872 = vadd.f32 0.0, %v871
    %v873 = vpop.f32.mrf.mxu0
    %874 = vdwg.mxu0
    %v875 = vadd.f32 %v713, %v867
    %v876 = vadd.f32 %v714, %v872
    %s877 = scalar_lea.vmem %s1, 200
    %v878 = vld [vmem:[%s877] sm:$0xff]
    %v879 = vld [vmem:[%s877 + $0x8] sm:$0xff]
    %v880 = vld [vmem:[%s877 + $0x10] sm:$0xff]
    %v881 = vld [vmem:[%s877 + $0x18] sm:$0xff]
    %v882 = vld [vmem:[%s877 + $0x20] sm:$0xff]
    %883 = vmatprep.subr.mxu0 0.0
    %884 = vmatpush1.msra.mxu0 0.0
    %885 = vmatprep.subr.mxu0 0.0
    %886 = vmatpush1.msra.mxu0 0.0
    %887 = vmatprep.subr.mxu0 0.0
    %888 = vmatpush1.msra.mxu0 0.0
    %889 = vmatprep.subr.mxu0 0.0
    %890 = vmatpush1.msra.mxu0 0.0
    %891 = vmatprep.subr.mxu0 0.0
    %892 = vmatpush1.msra.mxu0 0.0
    %893 = vmatprep.subr.mxu0 0.0
    %894 = vmatpush1.msra.mxu0 0.0
    %895 = vmatprep.subr.mxu0 0.0
    %896 = vmatpush1.msra.mxu0 0.0
    %897 = vmatprep.subr.mxu0 0.0
    %898 = vmatpush1.msra.mxu0 0.0
    %899 = vmatprep.subr.mxu0 0.0
    %900 = vmatpush1.msra.mxu0 0.0
    %901 = vmatprep.subr.mxu0 0.0
    %902 = vmatpush1.msra.mxu0 0.0
    %903 = vmatprep.subr.mxu0 0.0
    %904 = vmatpush1.msra.mxu0 0.0
    %905 = vmatprep.subr.mxu0 0.0
    %906 = vmatpush1.msra.mxu0 %v882
    %907 = vmatprep.subr.mxu0 0.0
    %908 = vmatpush1.msra.mxu0 %v881
    %909 = vmatprep.subr.mxu0 0.0
    %910 = vmatpush1.msra.mxu0 %v880
    %911 = vmatprep.subr.mxu0 0.0
    %912 = vmatpush1.msra.mxu0 %v879
    %913 = vmatprep.subr.mxu0 0.0
    %914 = vmatpush1.msra.mxu0 %v878
    %915 = vmatprep.subr.mxu0 0.0
    %916 = vmatpush2.msra.mxu0 0.0
    %917 = vmatprep.subr.mxu0 0.0
    %918 = vmatpush2.msra.mxu0 0.0
    %919 = vmatprep.subr.mxu0 0.0
    %920 = vmatpush2.msra.mxu0 0.0
    %921 = vmatprep.subr.mxu0 0.0
    %922 = vmatpush2.msra.mxu0 0.0
    %923 = vmatprep.subr.mxu0 0.0
    %924 = vmatpush2.msra.mxu0 0.0
    %925 = vmatprep.subr.mxu0 0.0
    %926 = vmatpush2.msra.mxu0 0.0
    %927 = vmatprep.subr.mxu0 0.0
    %928 = vmatpush2.msra.mxu0 0.0
    %929 = vmatprep.subr.mxu0 0.0
    %930 = vmatpush2.msra.mxu0 0.0
    %931 = vmatprep.subr.mxu0 0.0
    %932 = vmatpush2.msra.mxu0 0.0
    %933 = vmatprep.subr.mxu0 0.0
    %934 = vmatpush2.msra.mxu0 0.0
    %935 = vmatprep.subr.mxu0 0.0
    %936 = vmatpush2.msra.mxu0 0.0
    %937 = vmatprep.subr.mxu0 0.0
    %938 = vmatpush2.msra.mxu0 0.0
    %939 = vmatprep.subr.mxu0 0.0
    %940 = vmatpush2.msra.mxu0 0.0
    %941 = vmatprep.subr.mxu0 0.0
    %942 = vmatpush2.msra.mxu0 0.0
    %943 = vmatprep.subr.mxu0 0.0
    %944 = vmatpush2.msra.mxu0 0.0
    %945 = vmatprep.subr.mxu0 0.0
    %946 = vmatpush2.msra.mxu0 0.0
    %947 = vmatprep.mubr.f32.mxu0 0.0
    %948 = vmatmul.mubr.f32.gmra.mxu0 %v61
    %v949 = vpop.f32.mrf.mxu0
    %v950 = vadd.f32 0.0, %v949
    %v951 = vpop.f32.mrf.mxu0
    %952 = vdwg.mxu0
    %s953 = scalar_lea.vmem %s2, 80
    %v954 = vld [vmem:[%s953] sm:$0xff]
    %v955 = vld [vmem:[%s953 + $0x8] sm:$0xf]
    %v957 = vsel %vm135, %v954, 0
    %v960 = vsel %vm135, %v955, 0
    %962 = vmatprep.subr.mxu0 0.0
    %963 = vmatpush1.msra.mxu0 0.0
    %964 = vmatprep.subr.mxu0 0.0
    %965 = vmatpush1.msra.mxu0 0.0
    %966 = vmatprep.subr.mxu0 0.0
    %967 = vmatpush1.msra.mxu0 0.0
    %968 = vmatprep.subr.mxu0 0.0
    %969 = vmatpush1.msra.mxu0 0.0
    %970 = vmatprep.subr.mxu0 0.0
    %971 = vmatpush1.msra.mxu0 0.0
    %972 = vmatprep.subr.mxu0 0.0
    %973 = vmatpush1.msra.mxu0 0.0
    %974 = vmatprep.subr.mxu0 0.0
    %975 = vmatpush1.msra.mxu0 0.0
    %976 = vmatprep.subr.mxu0 0.0
    %977 = vmatpush1.msra.mxu0 0.0
    %978 = vmatprep.subr.mxu0 0.0
    %979 = vmatpush1.msra.mxu0 0.0
    %980 = vmatprep.subr.mxu0 0.0
    %981 = vmatpush1.msra.mxu0 0.0
    %982 = vmatprep.subr.mxu0 0.0
    %983 = vmatpush1.msra.mxu0 0.0
    %984 = vmatprep.subr.mxu0 0.0
    %985 = vmatpush1.msra.mxu0 0.0
    %986 = vmatprep.subr.mxu0 0.0
    %987 = vmatpush1.msra.mxu0 0.0
    %988 = vmatprep.subr.mxu0 0.0
    %989 = vmatpush1.msra.mxu0 0.0
    %990 = vmatprep.subr.mxu0 0.0
    %991 = vmatpush1.msra.mxu0 0.0
    %992 = vmatprep.subr.mxu0 0.0
    %993 = vmatpush1.msra.mxu0 %v950
    %994 = vmatprep.subr.mxu0 0.0
    %995 = vmatpush2.msra.mxu0 0.0
    %996 = vmatprep.subr.mxu0 0.0
    %997 = vmatpush2.msra.mxu0 0.0
    %998 = vmatprep.subr.mxu0 0.0
    %999 = vmatpush2.msra.mxu0 0.0
    %1000 = vmatprep.subr.mxu0 0.0
    %1001 = vmatpush2.msra.mxu0 0.0
    %1002 = vmatprep.subr.mxu0 0.0
    %1003 = vmatpush2.msra.mxu0 0.0
    %1004 = vmatprep.subr.mxu0 0.0
    %1005 = vmatpush2.msra.mxu0 0.0
    %1006 = vmatprep.subr.mxu0 0.0
    %1007 = vmatpush2.msra.mxu0 0.0
    %1008 = vmatprep.subr.mxu0 0.0
    %1009 = vmatpush2.msra.mxu0 0.0
    %1010 = vmatprep.subr.mxu0 0.0
    %1011 = vmatpush2.msra.mxu0 0.0
    %1012 = vmatprep.subr.mxu0 0.0
    %1013 = vmatpush2.msra.mxu0 0.0
    %1014 = vmatprep.subr.mxu0 0.0
    %1015 = vmatpush2.msra.mxu0 0.0
    %1016 = vmatprep.subr.mxu0 0.0
    %1017 = vmatpush2.msra.mxu0 0.0
    %1018 = vmatprep.subr.mxu0 0.0
    %1019 = vmatpush2.msra.mxu0 0.0
    %1020 = vmatprep.subr.mxu0 0.0
    %1021 = vmatpush2.msra.mxu0 0.0
    %1022 = vmatprep.subr.mxu0 0.0
    %1023 = vmatpush2.msra.mxu0 0.0
    %1024 = vmatprep.subr.mxu0 0.0
    %1025 = vmatpush2.msra.mxu0 0.0
    %1026 = vmatprep.mubr.f32.mxu0 0.0
    %1027 = vmatmul.mubr.f32.gmra.mxu0 %v957
    %v1028 = vpop.f32.mrf.mxu0
    %v1029 = vadd.f32 0.0, %v1028
    %v1030 = vpop.f32.mrf.mxu0
    %1031 = vmatprep.mubr.f32.mxu0 0.0
    %1032 = vmatmul.mubr.f32.gmra.mxu0 %v960
    %v1033 = vpop.f32.mrf.mxu0
    %v1034 = vadd.f32 0.0, %v1033
    %v1035 = vpop.f32.mrf.mxu0
    %1036 = vdwg.mxu0
    %v1037 = vadd.f32 %v875, %v1029
    %v1038 = vadd.f32 %v876, %v1034
    %s1039 = scalar_lea.vmem %s1, 240
    %v1040 = vld [vmem:[%s1039] sm:$0xff]
    %v1041 = vld [vmem:[%s1039 + $0x8] sm:$0xff]
    %v1042 = vld [vmem:[%s1039 + $0x10] sm:$0xff]
    %v1043 = vld [vmem:[%s1039 + $0x18] sm:$0xff]
    %v1044 = vld [vmem:[%s1039 + $0x20] sm:$0xff]
    %1045 = vmatprep.subr.mxu0 0.0
    %1046 = vmatpush1.msra.mxu0 0.0
    %1047 = vmatprep.subr.mxu0 0.0
    %1048 = vmatpush1.msra.mxu0 0.0
    %1049 = vmatprep.subr.mxu0 0.0
    %1050 = vmatpush1.msra.mxu0 0.0
    %1051 = vmatprep.subr.mxu0 0.0
    %1052 = vmatpush1.msra.mxu0 0.0
    %1053 = vmatprep.subr.mxu0 0.0
    %1054 = vmatpush1.msra.mxu0 0.0
    %1055 = vmatprep.subr.mxu0 0.0
    %1056 = vmatpush1.msra.mxu0 0.0
    %1057 = vmatprep.subr.mxu0 0.0
    %1058 = vmatpush1.msra.mxu0 0.0
    %1059 = vmatprep.subr.mxu0 0.0
    %1060 = vmatpush1.msra.mxu0 0.0
    %1061 = vmatprep.subr.mxu0 0.0
    %1062 = vmatpush1.msra.mxu0 0.0
    %1063 = vmatprep.subr.mxu0 0.0
    %1064 = vmatpush1.msra.mxu0 0.0
    %1065 = vmatprep.subr.mxu0 0.0
    %1066 = vmatpush1.msra.mxu0 0.0
    %1067 = vmatprep.subr.mxu0 0.0
    %1068 = vmatpush1.msra.mxu0 %v1044
    %1069 = vmatprep.subr.mxu0 0.0
    %1070 = vmatpush1.msra.mxu0 %v1043
    %1071 = vmatprep.subr.mxu0 0.0
    %1072 = vmatpush1.msra.mxu0 %v1042
    %1073 = vmatprep.subr.mxu0 0.0
    %1074 = vmatpush1.msra.mxu0 %v1041
    %1075 = vmatprep.subr.mxu0 0.0
    %1076 = vmatpush1.msra.mxu0 %v1040
    %1077 = vmatprep.subr.mxu0 0.0
    %1078 = vmatpush2.msra.mxu0 0.0
    %1079 = vmatprep.subr.mxu0 0.0
    %1080 = vmatpush2.msra.mxu0 0.0
    %1081 = vmatprep.subr.mxu0 0.0
    %1082 = vmatpush2.msra.mxu0 0.0
    %1083 = vmatprep.subr.mxu0 0.0
    %1084 = vmatpush2.msra.mxu0 0.0
    %1085 = vmatprep.subr.mxu0 0.0
    %1086 = vmatpush2.msra.mxu0 0.0
    %1087 = vmatprep.subr.mxu0 0.0
    %1088 = vmatpush2.msra.mxu0 0.0
    %1089 = vmatprep.subr.mxu0 0.0
    %1090 = vmatpush2.msra.mxu0 0.0
    %1091 = vmatprep.subr.mxu0 0.0
    %1092 = vmatpush2.msra.mxu0 0.0
    %1093 = vmatprep.subr.mxu0 0.0
    %1094 = vmatpush2.msra.mxu0 0.0
    %1095 = vmatprep.subr.mxu0 0.0
    %1096 = vmatpush2.msra.mxu0 0.0
    %1097 = vmatprep.subr.mxu0 0.0
    %1098 = vmatpush2.msra.mxu0 0.0
    %1099 = vmatprep.subr.mxu0 0.0
    %1100 = vmatpush2.msra.mxu0 0.0
    %1101 = vmatprep.subr.mxu0 0.0
    %1102 = vmatpush2.msra.mxu0 0.0
    %1103 = vmatprep.subr.mxu0 0.0
    %1104 = vmatpush2.msra.mxu0 0.0
    %1105 = vmatprep.subr.mxu0 0.0
    %1106 = vmatpush2.msra.mxu0 0.0
    %1107 = vmatprep.subr.mxu0 0.0
    %1108 = vmatpush2.msra.mxu0 0.0
    %1109 = vmatprep.mubr.f32.mxu0 0.0
    %1110 = vmatmul.mubr.f32.gmra.mxu0 %v61
    %v1111 = vpop.f32.mrf.mxu0
    %v1112 = vadd.f32 0.0, %v1111
    %v1113 = vpop.f32.mrf.mxu0
    %1114 = vdwg.mxu0
    %s1115 = scalar_lea.vmem %s2, 96
    %v1116 = vld [vmem:[%s1115] sm:$0xff]
    %v1117 = vld [vmem:[%s1115 + $0x8] sm:$0xf]
    %v1119 = vsel %vm135, %v1116, 0
    %v1122 = vsel %vm135, %v1117, 0
    %1124 = vmatprep.subr.mxu0 0.0
    %1125 = vmatpush1.msra.mxu0 0.0
    %1126 = vmatprep.subr.mxu0 0.0
    %1127 = vmatpush1.msra.mxu0 0.0
    %1128 = vmatprep.subr.mxu0 0.0
    %1129 = vmatpush1.msra.mxu0 0.0
    %1130 = vmatprep.subr.mxu0 0.0
    %1131 = vmatpush1.msra.mxu0 0.0
    %1132 = vmatprep.subr.mxu0 0.0
    %1133 = vmatpush1.msra.mxu0 0.0
    %1134 = vmatprep.subr.mxu0 0.0
    %1135 = vmatpush1.msra.mxu0 0.0
    %1136 = vmatprep.subr.mxu0 0.0
    %1137 = vmatpush1.msra.mxu0 0.0
    %1138 = vmatprep.subr.mxu0 0.0
    %1139 = vmatpush1.msra.mxu0 0.0
    %1140 = vmatprep.subr.mxu0 0.0
    %1141 = vmatpush1.msra.mxu0 0.0
    %1142 = vmatprep.subr.mxu0 0.0
    %1143 = vmatpush1.msra.mxu0 0.0
    %1144 = vmatprep.subr.mxu0 0.0
    %1145 = vmatpush1.msra.mxu0 0.0
    %1146 = vmatprep.subr.mxu0 0.0
    %1147 = vmatpush1.msra.mxu0 0.0
    %1148 = vmatprep.subr.mxu0 0.0
    %1149 = vmatpush1.msra.mxu0 0.0
    %1150 = vmatprep.subr.mxu0 0.0
    %1151 = vmatpush1.msra.mxu0 0.0
    %1152 = vmatprep.subr.mxu0 0.0
    %1153 = vmatpush1.msra.mxu0 0.0
    %1154 = vmatprep.subr.mxu0 0.0
    %1155 = vmatpush1.msra.mxu0 %v1112
    %1156 = vmatprep.subr.mxu0 0.0
    %1157 = vmatpush2.msra.mxu0 0.0
    %1158 = vmatprep.subr.mxu0 0.0
    %1159 = vmatpush2.msra.mxu0 0.0
    %1160 = vmatprep.subr.mxu0 0.0
    %1161 = vmatpush2.msra.mxu0 0.0
    %1162 = vmatprep.subr.mxu0 0.0
    %1163 = vmatpush2.msra.mxu0 0.0
    %1164 = vmatprep.subr.mxu0 0.0
    %1165 = vmatpush2.msra.mxu0 0.0
    %1166 = vmatprep.subr.mxu0 0.0
    %1167 = vmatpush2.msra.mxu0 0.0
    %1168 = vmatprep.subr.mxu0 0.0
    %1169 = vmatpush2.msra.mxu0 0.0
    %1170 = vmatprep.subr.mxu0 0.0
    %1171 = vmatpush2.msra.mxu0 0.0
    %1172 = vmatprep.subr.mxu0 0.0
    %1173 = vmatpush2.msra.mxu0 0.0
    %1174 = vmatprep.subr.mxu0 0.0
    %1175 = vmatpush2.msra.mxu0 0.0
    %1176 = vmatprep.subr.mxu0 0.0
    %1177 = vmatpush2.msra.mxu0 0.0
    %1178 = vmatprep.subr.mxu0 0.0
    %1179 = vmatpush2.msra.mxu0 0.0
    %1180 = vmatprep.subr.mxu0 0.0
    %1181 = vmatpush2.msra.mxu0 0.0
    %1182 = vmatprep.subr.mxu0 0.0
    %1183 = vmatpush2.msra.mxu0 0.0
    %1184 = vmatprep.subr.mxu0 0.0
    %1185 = vmatpush2.msra.mxu0 0.0
    %1186 = vmatprep.subr.mxu0 0.0
    %1187 = vmatpush2.msra.mxu0 0.0
    %1188 = vmatprep.mubr.f32.mxu0 0.0
    %1189 = vmatmul.mubr.f32.gmra.mxu0 %v1119
    %v1190 = vpop.f32.mrf.mxu0
    %v1191 = vadd.f32 0.0, %v1190
    %v1192 = vpop.f32.mrf.mxu0
    %1193 = vmatprep.mubr.f32.mxu0 0.0
    %1194 = vmatmul.mubr.f32.gmra.mxu0 %v1122
    %v1195 = vpop.f32.mrf.mxu0
    %v1196 = vadd.f32 0.0, %v1195
    %v1197 = vpop.f32.mrf.mxu0
    %1198 = vdwg.mxu0
    %v1199 = vadd.f32 %v1037, %v1191
    %v1200 = vadd.f32 %v1038, %v1196
    %s1201 = scalar_lea.vmem %s1, 280
    %v1202 = vld [vmem:[%s1201] sm:$0xff]
    %v1203 = vld [vmem:[%s1201 + $0x8] sm:$0xff]
    %v1204 = vld [vmem:[%s1201 + $0x10] sm:$0xff]
    %v1205 = vld [vmem:[%s1201 + $0x18] sm:$0xff]
    %v1206 = vld [vmem:[%s1201 + $0x20] sm:$0xff]
    %1207 = vmatprep.subr.mxu0 0.0
    %1208 = vmatpush1.msra.mxu0 0.0
    %1209 = vmatprep.subr.mxu0 0.0
    %1210 = vmatpush1.msra.mxu0 0.0
    %1211 = vmatprep.subr.mxu0 0.0
    %1212 = vmatpush1.msra.mxu0 0.0
    %1213 = vmatprep.subr.mxu0 0.0
    %1214 = vmatpush1.msra.mxu0 0.0
    %1215 = vmatprep.subr.mxu0 0.0
    %1216 = vmatpush1.msra.mxu0 0.0
    %1217 = vmatprep.subr.mxu0 0.0
    %1218 = vmatpush1.msra.mxu0 0.0
    %1219 = vmatprep.subr.mxu0 0.0
    %1220 = vmatpush1.msra.mxu0 0.0
    %1221 = vmatprep.subr.mxu0 0.0
    %1222 = vmatpush1.msra.mxu0 0.0
    %1223 = vmatprep.subr.mxu0 0.0
    %1224 = vmatpush1.msra.mxu0 0.0
    %1225 = vmatprep.subr.mxu0 0.0
    %1226 = vmatpush1.msra.mxu0 0.0
    %1227 = vmatprep.subr.mxu0 0.0
    %1228 = vmatpush1.msra.mxu0 0.0
    %1229 = vmatprep.subr.mxu0 0.0
    %1230 = vmatpush1.msra.mxu0 %v1206
    %1231 = vmatprep.subr.mxu0 0.0
    %1232 = vmatpush1.msra.mxu0 %v1205
    %1233 = vmatprep.subr.mxu0 0.0
    %1234 = vmatpush1.msra.mxu0 %v1204
    %1235 = vmatprep.subr.mxu0 0.0
    %1236 = vmatpush1.msra.mxu0 %v1203
    %1237 = vmatprep.subr.mxu0 0.0
    %1238 = vmatpush1.msra.mxu0 %v1202
    %1239 = vmatprep.subr.mxu0 0.0
    %1240 = vmatpush2.msra.mxu0 0.0
    %1241 = vmatprep.subr.mxu0 0.0
    %1242 = vmatpush2.msra.mxu0 0.0
    %1243 = vmatprep.subr.mxu0 0.0
    %1244 = vmatpush2.msra.mxu0 0.0
    %1245 = vmatprep.subr.mxu0 0.0
    %1246 = vmatpush2.msra.mxu0 0.0
    %1247 = vmatprep.subr.mxu0 0.0
    %1248 = vmatpush2.msra.mxu0 0.0
    %1249 = vmatprep.subr.mxu0 0.0
    %1250 = vmatpush2.msra.mxu0 0.0
    %1251 = vmatprep.subr.mxu0 0.0
    %1252 = vmatpush2.msra.mxu0 0.0
    %1253 = vmatprep.subr.mxu0 0.0
    %1254 = vmatpush2.msra.mxu0 0.0
    %1255 = vmatprep.subr.mxu0 0.0
    %1256 = vmatpush2.msra.mxu0 0.0
    %1257 = vmatprep.subr.mxu0 0.0
    %1258 = vmatpush2.msra.mxu0 0.0
    %1259 = vmatprep.subr.mxu0 0.0
    %1260 = vmatpush2.msra.mxu0 0.0
    %1261 = vmatprep.subr.mxu0 0.0
    %1262 = vmatpush2.msra.mxu0 0.0
    %1263 = vmatprep.subr.mxu0 0.0
    %1264 = vmatpush2.msra.mxu0 0.0
    %1265 = vmatprep.subr.mxu0 0.0
    %1266 = vmatpush2.msra.mxu0 0.0
    %1267 = vmatprep.subr.mxu0 0.0
    %1268 = vmatpush2.msra.mxu0 0.0
    %1269 = vmatprep.subr.mxu0 0.0
    %1270 = vmatpush2.msra.mxu0 0.0
    %1271 = vmatprep.mubr.f32.mxu0 0.0
    %1272 = vmatmul.mubr.f32.gmra.mxu0 %v61
    %v1273 = vpop.f32.mrf.mxu0
    %v1274 = vadd.f32 0.0, %v1273
    %v1275 = vpop.f32.mrf.mxu0
    %1276 = vdwg.mxu0
    %s1277 = scalar_lea.vmem %s2, 112
    %v1278 = vld [vmem:[%s1277] sm:$0xff]
    %v1279 = vld [vmem:[%s1277 + $0x8] sm:$0xf]
    %v1281 = vsel %vm135, %v1278, 0
    %v1284 = vsel %vm135, %v1279, 0
    %1286 = vmatprep.subr.mxu0 0.0
    %1287 = vmatpush1.msra.mxu0 0.0
    %1288 = vmatprep.subr.mxu0 0.0
    %1289 = vmatpush1.msra.mxu0 0.0
    %1290 = vmatprep.subr.mxu0 0.0
    %1291 = vmatpush1.msra.mxu0 0.0
    %1292 = vmatprep.subr.mxu0 0.0
    %1293 = vmatpush1.msra.mxu0 0.0
    %1294 = vmatprep.subr.mxu0 0.0
    %1295 = vmatpush1.msra.mxu0 0.0
    %1296 = vmatprep.subr.mxu0 0.0
    %1297 = vmatpush1.msra.mxu0 0.0
    %1298 = vmatprep.subr.mxu0 0.0
    %1299 = vmatpush1.msra.mxu0 0.0
    %1300 = vmatprep.subr.mxu0 0.0
    %1301 = vmatpush1.msra.mxu0 0.0
    %1302 = vmatprep.subr.mxu0 0.0
    %1303 = vmatpush1.msra.mxu0 0.0
    %1304 = vmatprep.subr.mxu0 0.0
    %1305 = vmatpush1.msra.mxu0 0.0
    %1306 = vmatprep.subr.mxu0 0.0
    %1307 = vmatpush1.msra.mxu0 0.0
    %1308 = vmatprep.subr.mxu0 0.0
    %1309 = vmatpush1.msra.mxu0 0.0
    %1310 = vmatprep.subr.mxu0 0.0
    %1311 = vmatpush1.msra.mxu0 0.0
    %1312 = vmatprep.subr.mxu0 0.0
    %1313 = vmatpush1.msra.mxu0 0.0
    %1314 = vmatprep.subr.mxu0 0.0
    %1315 = vmatpush1.msra.mxu0 0.0
    %1316 = vmatprep.subr.mxu0 0.0
    %1317 = vmatpush1.msra.mxu0 %v1274
    %1318 = vmatprep.subr.mxu0 0.0
    %1319 = vmatpush2.msra.mxu0 0.0
    %1320 = vmatprep.subr.mxu0 0.0
    %1321 = vmatpush2.msra.mxu0 0.0
    %1322 = vmatprep.subr.mxu0 0.0
    %1323 = vmatpush2.msra.mxu0 0.0
    %1324 = vmatprep.subr.mxu0 0.0
    %1325 = vmatpush2.msra.mxu0 0.0
    %1326 = vmatprep.subr.mxu0 0.0
    %1327 = vmatpush2.msra.mxu0 0.0
    %1328 = vmatprep.subr.mxu0 0.0
    %1329 = vmatpush2.msra.mxu0 0.0
    %1330 = vmatprep.subr.mxu0 0.0
    %1331 = vmatpush2.msra.mxu0 0.0
    %1332 = vmatprep.subr.mxu0 0.0
    %1333 = vmatpush2.msra.mxu0 0.0
    %1334 = vmatprep.subr.mxu0 0.0
    %1335 = vmatpush2.msra.mxu0 0.0
    %1336 = vmatprep.subr.mxu0 0.0
    %1337 = vmatpush2.msra.mxu0 0.0
    %1338 = vmatprep.subr.mxu0 0.0
    %1339 = vmatpush2.msra.mxu0 0.0
    %1340 = vmatprep.subr.mxu0 0.0
    %1341 = vmatpush2.msra.mxu0 0.0
    %1342 = vmatprep.subr.mxu0 0.0
    %1343 = vmatpush2.msra.mxu0 0.0
    %1344 = vmatprep.subr.mxu0 0.0
    %1345 = vmatpush2.msra.mxu0 0.0
    %1346 = vmatprep.subr.mxu0 0.0
    %1347 = vmatpush2.msra.mxu0 0.0
    %1348 = vmatprep.subr.mxu0 0.0
    %1349 = vmatpush2.msra.mxu0 0.0
    %1350 = vmatprep.mubr.f32.mxu0 0.0
    %1351 = vmatmul.mubr.f32.gmra.mxu0 %v1281
    %v1352 = vpop.f32.mrf.mxu0
    %v1353 = vadd.f32 0.0, %v1352
    %v1354 = vpop.f32.mrf.mxu0
    %1355 = vmatprep.mubr.f32.mxu0 0.0
    %1356 = vmatmul.mubr.f32.gmra.mxu0 %v1284
    %v1357 = vpop.f32.mrf.mxu0
    %v1358 = vadd.f32 0.0, %v1357
    %v1359 = vpop.f32.mrf.mxu0
    %1360 = vdwg.mxu0
    %v1361 = vadd.f32 %v1199, %v1353
    %v1362 = vadd.f32 %v1200, %v1358
    %s1363 = scalar_lea.vmem %s1, 320
    %v1364 = vld [vmem:[%s1363] sm:$0xff]
    %v1365 = vld [vmem:[%s1363 + $0x8] sm:$0xff]
    %v1366 = vld [vmem:[%s1363 + $0x10] sm:$0xff]
    %v1367 = vld [vmem:[%s1363 + $0x18] sm:$0xff]
    %v1368 = vld [vmem:[%s1363 + $0x20] sm:$0xff]
    %1369 = vmatprep.subr.mxu0 0.0
    %1370 = vmatpush1.msra.mxu0 0.0
    %1371 = vmatprep.subr.mxu0 0.0
    %1372 = vmatpush1.msra.mxu0 0.0
    %1373 = vmatprep.subr.mxu0 0.0
    %1374 = vmatpush1.msra.mxu0 0.0
    %1375 = vmatprep.subr.mxu0 0.0
    %1376 = vmatpush1.msra.mxu0 0.0
    %1377 = vmatprep.subr.mxu0 0.0
    %1378 = vmatpush1.msra.mxu0 0.0
    %1379 = vmatprep.subr.mxu0 0.0
    %1380 = vmatpush1.msra.mxu0 0.0
    %1381 = vmatprep.subr.mxu0 0.0
    %1382 = vmatpush1.msra.mxu0 0.0
    %1383 = vmatprep.subr.mxu0 0.0
    %1384 = vmatpush1.msra.mxu0 0.0
    %1385 = vmatprep.subr.mxu0 0.0
    %1386 = vmatpush1.msra.mxu0 0.0
    %1387 = vmatprep.subr.mxu0 0.0
    %1388 = vmatpush1.msra.mxu0 0.0
    %1389 = vmatprep.subr.mxu0 0.0
    %1390 = vmatpush1.msra.mxu0 0.0
    %1391 = vmatprep.subr.mxu0 0.0
    %1392 = vmatpush1.msra.mxu0 %v1368
    %1393 = vmatprep.subr.mxu0 0.0
    %1394 = vmatpush1.msra.mxu0 %v1367
    %1395 = vmatprep.subr.mxu0 0.0
    %1396 = vmatpush1.msra.mxu0 %v1366
    %1397 = vmatprep.subr.mxu0 0.0
    %1398 = vmatpush1.msra.mxu0 %v1365
    %1399 = vmatprep.subr.mxu0 0.0
    %1400 = vmatpush1.msra.mxu0 %v1364
    %1401 = vmatprep.subr.mxu0 0.0
    %1402 = vmatpush2.msra.mxu0 0.0
    %1403 = vmatprep.subr.mxu0 0.0
    %1404 = vmatpush2.msra.mxu0 0.0
    %1405 = vmatprep.subr.mxu0 0.0
    %1406 = vmatpush2.msra.mxu0 0.0
    %1407 = vmatprep.subr.mxu0 0.0
    %1408 = vmatpush2.msra.mxu0 0.0
    %1409 = vmatprep.subr.mxu0 0.0
    %1410 = vmatpush2.msra.mxu0 0.0
    %1411 = vmatprep.subr.mxu0 0.0
    %1412 = vmatpush2.msra.mxu0 0.0
    %1413 = vmatprep.subr.mxu0 0.0
    %1414 = vmatpush2.msra.mxu0 0.0
    %1415 = vmatprep.subr.mxu0 0.0
    %1416 = vmatpush2.msra.mxu0 0.0
    %1417 = vmatprep.subr.mxu0 0.0
    %1418 = vmatpush2.msra.mxu0 0.0
    %1419 = vmatprep.subr.mxu0 0.0
    %1420 = vmatpush2.msra.mxu0 0.0
    %1421 = vmatprep.subr.mxu0 0.0
    %1422 = vmatpush2.msra.mxu0 0.0
    %1423 = vmatprep.subr.mxu0 0.0
    %1424 = vmatpush2.msra.mxu0 0.0
    %1425 = vmatprep.subr.mxu0 0.0
    %1426 = vmatpush2.msra.mxu0 0.0
    %1427 = vmatprep.subr.mxu0 0.0
    %1428 = vmatpush2.msra.mxu0 0.0
    %1429 = vmatprep.subr.mxu0 0.0
    %1430 = vmatpush2.msra.mxu0 0.0
    %1431 = vmatprep.subr.mxu0 0.0
    %1432 = vmatpush2.msra.mxu0 0.0
    %1433 = vmatprep.mubr.f32.mxu0 0.0
    %1434 = vmatmul.mubr.f32.gmra.mxu0 %v61
    %v1435 = vpop.f32.mrf.mxu0
    %v1436 = vadd.f32 0.0, %v1435
    %v1437 = vpop.f32.mrf.mxu0
    %1438 = vdwg.mxu0
    %s1439 = scalar_lea.vmem %s2, 128
    %v1440 = vld [vmem:[%s1439] sm:$0xff]
    %v1441 = vld [vmem:[%s1439 + $0x8] sm:$0xf]
    %v1443 = vsel %vm135, %v1440, 0
    %v1446 = vsel %vm135, %v1441, 0
    %1448 = vmatprep.subr.mxu0 0.0
    %1449 = vmatpush1.msra.mxu0 0.0
    %1450 = vmatprep.subr.mxu0 0.0
    %1451 = vmatpush1.msra.mxu0 0.0
    %1452 = vmatprep.subr.mxu0 0.0
    %1453 = vmatpush1.msra.mxu0 0.0
    %1454 = vmatprep.subr.mxu0 0.0
    %1455 = vmatpush1.msra.mxu0 0.0
    %1456 = vmatprep.subr.mxu0 0.0
    %1457 = vmatpush1.msra.mxu0 0.0
    %1458 = vmatprep.subr.mxu0 0.0
    %1459 = vmatpush1.msra.mxu0 0.0
    %1460 = vmatprep.subr.mxu0 0.0
    %1461 = vmatpush1.msra.mxu0 0.0
    %1462 = vmatprep.subr.mxu0 0.0
    %1463 = vmatpush1.msra.mxu0 0.0
    %1464 = vmatprep.subr.mxu0 0.0
    %1465 = vmatpush1.msra.mxu0 0.0
    %1466 = vmatprep.subr.mxu0 0.0
    %1467 = vmatpush1.msra.mxu0 0.0
    %1468 = vmatprep.subr.mxu0 0.0
    %1469 = vmatpush1.msra.mxu0 0.0
    %1470 = vmatprep.subr.mxu0 0.0
    %1471 = vmatpush1.msra.mxu0 0.0
    %1472 = vmatprep.subr.mxu0 0.0
    %1473 = vmatpush1.msra.mxu0 0.0
    %1474 = vmatprep.subr.mxu0 0.0
    %1475 = vmatpush1.msra.mxu0 0.0
    %1476 = vmatprep.subr.mxu0 0.0
    %1477 = vmatpush1.msra.mxu0 0.0
    %1478 = vmatprep.subr.mxu0 0.0
    %1479 = vmatpush1.msra.mxu0 %v1436
    %1480 = vmatprep.subr.mxu0 0.0
    %1481 = vmatpush2.msra.mxu0 0.0
    %1482 = vmatprep.subr.mxu0 0.0
    %1483 = vmatpush2.msra.mxu0 0.0
    %1484 = vmatprep.subr.mxu0 0.0
    %1485 = vmatpush2.msra.mxu0 0.0
    %1486 = vmatprep.subr.mxu0 0.0
    %1487 = vmatpush2.msra.mxu0 0.0
    %1488 = vmatprep.subr.mxu0 0.0
    %1489 = vmatpush2.msra.mxu0 0.0
    %1490 = vmatprep.subr.mxu0 0.0
    %1491 = vmatpush2.msra.mxu0 0.0
    %1492 = vmatprep.subr.mxu0 0.0
    %1493 = vmatpush2.msra.mxu0 0.0
    %1494 = vmatprep.subr.mxu0 0.0
    %1495 = vmatpush2.msra.mxu0 0.0
    %1496 = vmatprep.subr.mxu0 0.0
    %1497 = vmatpush2.msra.mxu0 0.0
    %1498 = vmatprep.subr.mxu0 0.0
    %1499 = vmatpush2.msra.mxu0 0.0
    %1500 = vmatprep.subr.mxu0 0.0
    %1501 = vmatpush2.msra.mxu0 0.0
    %1502 = vmatprep.subr.mxu0 0.0
    %1503 = vmatpush2.msra.mxu0 0.0
    %1504 = vmatprep.subr.mxu0 0.0
    %1505 = vmatpush2.msra.mxu0 0.0
    %1506 = vmatprep.subr.mxu0 0.0
    %1507 = vmatpush2.msra.mxu0 0.0
    %1508 = vmatprep.subr.mxu0 0.0
    %1509 = vmatpush2.msra.mxu0 0.0
    %1510 = vmatprep.subr.mxu0 0.0
    %1511 = vmatpush2.msra.mxu0 0.0
    %1512 = vmatprep.mubr.f32.mxu0 0.0
    %1513 = vmatmul.mubr.f32.gmra.mxu0 %v1443
    %v1514 = vpop.f32.mrf.mxu0
    %v1515 = vadd.f32 0.0, %v1514
    %v1516 = vpop.f32.mrf.mxu0
    %1517 = vmatprep.mubr.f32.mxu0 0.0
    %1518 = vmatmul.mubr.f32.gmra.mxu0 %v1446
    %v1519 = vpop.f32.mrf.mxu0
    %v1520 = vadd.f32 0.0, %v1519
    %v1521 = vpop.f32.mrf.mxu0
    %1522 = vdwg.mxu0
    %v1523 = vadd.f32 %v1361, %v1515
    %v1524 = vadd.f32 %v1362, %v1520
    %s1525 = sld [smem:[#allocation2]]
    %vm1526 = vcmp.ge.f32.partialorder %v1523, 0.0
    %vm1527 = vcmp.ge.f32.partialorder %v1524, 0.0
    %v1528 = vstv %s1525
    %v1529 = vmul.f32 %v1528, %v1523
    %v1530 = vmul.f32 %v1528, %v1524
    %v1531 = vsel %vm1526, %v1523, %v1529
    %v1532 = vsel %vm1527, %v1524, %v1530
    %v1533 = vld [vmem:[%s5] sm:$0xff]
    %v1534 = vld [vmem:[%s5 + $0x8] sm:$0xf]
    %v1536 = vsel %vm59, %v1531, 0
    %v1539 = vsel %vm59, %v1532, 0
    %1541 = vmatprep.subr.mxu0 0.0
    %1542 = vmatpush1.msra.mxu0 0.0
    %1543 = vmatprep.subr.mxu0 0.0
    %1544 = vmatpush1.msra.mxu0 0.0
    %1545 = vmatprep.subr.mxu0 0.0
    %1546 = vmatpush1.msra.mxu0 0.0
    %1547 = vmatprep.subr.mxu0 0.0
    %1548 = vmatpush1.msra.mxu0 0.0
    %1549 = vmatprep.subr.mxu0 0.0
    %1550 = vmatpush1.msra.mxu0 0.0
    %1551 = vmatprep.subr.mxu0 0.0
    %1552 = vmatpush1.msra.mxu0 0.0
    %1553 = vmatprep.subr.mxu0 0.0
    %1554 = vmatpush1.msra.mxu0 0.0
    %1555 = vmatprep.subr.mxu0 0.0
    %1556 = vmatpush1.msra.mxu0 0.0
    %1557 = vmatprep.subr.mxu0 0.0
    %1558 = vmatpush1.msra.mxu0 0.0
    %1559 = vmatprep.subr.mxu0 0.0
    %1560 = vmatpush1.msra.mxu0 0.0
    %1561 = vmatprep.subr.mxu0 0.0
    %1562 = vmatpush1.msra.mxu0 0.0
    %1563 = vmatprep.subr.mxu0 0.0
    %1564 = vmatpush1.msra.mxu0 %v58
    %1565 = vmatprep.subr.mxu0 0.0
    %1566 = vmatpush1.msra.mxu0 %v57
    %1567 = vmatprep.subr.mxu0 0.0
    %1568 = vmatpush1.msra.mxu0 %v56
    %1569 = vmatprep.subr.mxu0 0.0
    %1570 = vmatpush1.msra.mxu0 %v55
    %1571 = vmatprep.subr.mxu0 0.0
    %1572 = vmatpush1.msra.mxu0 %v54
    %1573 = vmatprep.subr.mxu0 0.0
    %1574 = vmatpush2.msra.mxu0 0.0
    %1575 = vmatprep.subr.mxu0 0.0
    %1576 = vmatpush2.msra.mxu0 0.0
    %1577 = vmatprep.subr.mxu0 0.0
    %1578 = vmatpush2.msra.mxu0 0.0
    %1579 = vmatprep.subr.mxu0 0.0
    %1580 = vmatpush2.msra.mxu0 0.0
    %1581 = vmatprep.subr.mxu0 0.0
    %1582 = vmatpush2.msra.mxu0 0.0
    %1583 = vmatprep.subr.mxu0 0.0
    %1584 = vmatpush2.msra.mxu0 0.0
    %1585 = vmatprep.subr.mxu0 0.0
    %1586 = vmatpush2.msra.mxu0 0.0
    %1587 = vmatprep.subr.mxu0 0.0
    %1588 = vmatpush2.msra.mxu0 0.0
    %1589 = vmatprep.subr.mxu0 0.0
    %1590 = vmatpush2.msra.mxu0 0.0
    %1591 = vmatprep.subr.mxu0 0.0
    %1592 = vmatpush2.msra.mxu0 0.0
    %1593 = vmatprep.subr.mxu0 0.0
    %1594 = vmatpush2.msra.mxu0 0.0
    %1595 = vmatprep.subr.mxu0 0.0
    %1596 = vmatpush2.msra.mxu0 0.0
    %1597 = vmatprep.subr.mxu0 0.0
    %1598 = vmatpush2.msra.mxu0 0.0
    %1599 = vmatprep.subr.mxu0 0.0
    %1600 = vmatpush2.msra.mxu0 0.0
    %1601 = vmatprep.subr.mxu0 0.0
    %1602 = vmatpush2.msra.mxu0 0.0
    %1603 = vmatprep.subr.mxu0 0.0
    %1604 = vmatpush2.msra.mxu0 0.0
    %1605 = vmatprep.mubr.f32.mxu0 0.0
    %1606 = vmatmul.mubr.f32.gmra.mxu0 %v1536
    %v1607 = vpop.f32.mrf.mxu0
    %v1608 = vadd.f32 0.0, %v1607
    %v1609 = vpop.f32.mrf.mxu0
    %1610 = vmatprep.mubr.f32.mxu0 0.0
    %1611 = vmatmul.mubr.f32.gmra.mxu0 %v1539
    %v1612 = vpop.f32.mrf.mxu0
    %v1613 = vadd.f32 0.0, %v1612
    %v1614 = vpop.f32.mrf.mxu0
    %1615 = vdwg.mxu0
    %v1616 = vld [vmem:[%s4] sm:$0xff]
    %v1617 = vld [vmem:[%s4 + $0x8] sm:$0xf]
    %vm1618 = vcmask 97280
    %v1620 = vsel %vm1618, %v1616, 0
    %v1623 = vsel %vm1618, %v1617, 0
    %vm1625 = vcmask 1043456
    %v1627 = vsel %vm1625, %v1613, 0
    %1629 = vmatprep.subr.mxu0 0.0
    %1630 = vmatpush1.msra.mxu0 0.0
    %1631 = vmatprep.subr.mxu0 0.0
    %1632 = vmatpush1.msra.mxu0 0.0
    %1633 = vmatprep.subr.mxu0 0.0
    %1634 = vmatpush1.msra.mxu0 0.0
    %1635 = vmatprep.subr.mxu0 0.0
    %1636 = vmatpush1.msra.mxu0 0.0
    %1637 = vmatprep.subr.mxu0 0.0
    %1638 = vmatpush1.msra.mxu0 0.0
    %1639 = vmatprep.subr.mxu0 0.0
    %1640 = vmatpush1.msra.mxu0 0.0
    %1641 = vmatprep.subr.mxu0 0.0
    %1642 = vmatpush1.msra.mxu0 0.0
    %1643 = vmatprep.subr.mxu0 0.0
    %1644 = vmatpush1.msra.mxu0 0.0
    %1645 = vmatprep.subr.mxu0 0.0
    %1646 = vmatpush1.msra.mxu0 0.0
    %1647 = vmatprep.subr.mxu0 0.0
    %1648 = vmatpush1.msra.mxu0 0.0
    %1649 = vmatprep.subr.mxu0 0.0
    %1650 = vmatpush1.msra.mxu0 0.0
    %1651 = vmatprep.subr.mxu0 0.0
    %1652 = vmatpush1.msra.mxu0 0.0
    %1653 = vmatprep.subr.mxu0 0.0
    %1654 = vmatpush1.msra.mxu0 0.0
    %1655 = vmatprep.subr.mxu0 0.0
    %1656 = vmatpush1.msra.mxu0 0.0
    %1657 = vmatprep.subr.mxu0 0.0
    %1658 = vmatpush1.msra.mxu0 %v1627
    %1659 = vmatprep.subr.mxu0 0.0
    %1660 = vmatpush1.msra.mxu0 %v1608
    %1661 = vmatprep.subr.mxu0 0.0
    %1662 = vmatpush2.msra.mxu0 0.0
    %1663 = vmatprep.subr.mxu0 0.0
    %1664 = vmatpush2.msra.mxu0 0.0
    %1665 = vmatprep.subr.mxu0 0.0
    %1666 = vmatpush2.msra.mxu0 0.0
    %1667 = vmatprep.subr.mxu0 0.0
    %1668 = vmatpush2.msra.mxu0 0.0
    %1669 = vmatprep.subr.mxu0 0.0
    %1670 = vmatpush2.msra.mxu0 0.0
    %1671 = vmatprep.subr.mxu0 0.0
    %1672 = vmatpush2.msra.mxu0 0.0
    %1673 = vmatprep.subr.mxu0 0.0
    %1674 = vmatpush2.msra.mxu0 0.0
    %1675 = vmatprep.subr.mxu0 0.0
    %1676 = vmatpush2.msra.mxu0 0.0
    %1677 = vmatprep.subr.mxu0 0.0
    %1678 = vmatpush2.msra.mxu0 0.0
    %1679 = vmatprep.subr.mxu0 0.0
    %1680 = vmatpush2.msra.mxu0 0.0
    %1681 = vmatprep.subr.mxu0 0.0
    %1682 = vmatpush2.msra.mxu0 0.0
    %1683 = vmatprep.subr.mxu0 0.0
    %1684 = vmatpush2.msra.mxu0 0.0
    %1685 = vmatprep.subr.mxu0 0.0
    %1686 = vmatpush2.msra.mxu0 0.0
    %1687 = vmatprep.subr.mxu0 0.0
    %1688 = vmatpush2.msra.mxu0 0.0
    %1689 = vmatprep.subr.mxu0 0.0
    %1690 = vmatpush2.msra.mxu0 0.0
    %1691 = vmatprep.subr.mxu0 0.0
    %1692 = vmatpush2.msra.mxu0 0.0
    %1693 = vmatprep.mubr.f32.mxu0 0.0
    %1694 = vmatmul.mubr.f32.gmra.mxu0 %v1620
    %v1695 = vpop.f32.mrf.mxu0
    %v1696 = vadd.f32 0.0, %v1695
    %v1697 = vpop.f32.mrf.mxu0
    %1698 = vmatprep.mubr.f32.mxu0 0.0
    %1699 = vmatmul.mubr.f32.gmra.mxu0 %v1623
    %v1700 = vpop.f32.mrf.mxu0
    %v1701 = vadd.f32 0.0, %v1700
    %v1702 = vpop.f32.mrf.mxu0
    %1703 = vdwg.mxu0
    %1705 = vset.pattern.permute.xlu0 0
    %1706 = vperm.xlu0 %1705, %v1533
    %v1707 = vpop.permute.xlu0 %1706
    %1710 = vset.pattern.permute.xlu0 0
    %1711 = vperm.xlu0 %1710, %v1534
    %v1712 = vpop.permute.xlu0 %1711
    %v1714 = vadd.f32 %v1707, %v1696
    %v1715 = vadd.f32 %v1712, %v1701
    %1716 = vmatprep.subr.mxu0 0.0
    %1717 = vmatpush1.msra.mxu0 0.0
    %1718 = vmatprep.subr.mxu0 0.0
    %1719 = vmatpush1.msra.mxu0 0.0
    %1720 = vmatprep.subr.mxu0 0.0
    %1721 = vmatpush1.msra.mxu0 0.0
    %1722 = vmatprep.subr.mxu0 0.0
    %1723 = vmatpush1.msra.mxu0 0.0
    %1724 = vmatprep.subr.mxu0 0.0
    %1725 = vmatpush1.msra.mxu0 0.0
    %1726 = vmatprep.subr.mxu0 0.0
    %1727 = vmatpush1.msra.mxu0 0.0
    %1728 = vmatprep.subr.mxu0 0.0
    %1729 = vmatpush1.msra.mxu0 0.0
    %1730 = vmatprep.subr.mxu0 0.0
    %1731 = vmatpush1.msra.mxu0 0.0
    %1732 = vmatprep.subr.mxu0 0.0
    %1733 = vmatpush1.msra.mxu0 0.0
    %1734 = vmatprep.subr.mxu0 0.0
    %1735 = vmatpush1.msra.mxu0 0.0
    %1736 = vmatprep.subr.mxu0 0.0
    %1737 = vmatpush1.msra.mxu0 0.0
    %1738 = vmatprep.subr.mxu0 0.0
    %1739 = vmatpush1.msra.mxu0 %v234
    %1740 = vmatprep.subr.mxu0 0.0
    %1741 = vmatpush1.msra.mxu0 %v233
    %1742 = vmatprep.subr.mxu0 0.0
    %1743 = vmatpush1.msra.mxu0 %v232
    %1744 = vmatprep.subr.mxu0 0.0
    %1745 = vmatpush1.msra.mxu0 %v231
    %1746 = vmatprep.subr.mxu0 0.0
    %1747 = vmatpush1.msra.mxu0 %v230
    %1748 = vmatprep.subr.mxu0 0.0
    %1749 = vmatpush2.msra.mxu0 0.0
    %1750 = vmatprep.subr.mxu0 0.0
    %1751 = vmatpush2.msra.mxu0 0.0
    %1752 = vmatprep.subr.mxu0 0.0
    %1753 = vmatpush2.msra.mxu0 0.0
    %1754 = vmatprep.subr.mxu0 0.0
    %1755 = vmatpush2.msra.mxu0 0.0
    %1756 = vmatprep.subr.mxu0 0.0
    %1757 = vmatpush2.msra.mxu0 0.0
    %1758 = vmatprep.subr.mxu0 0.0
    %1759 = vmatpush2.msra.mxu0 0.0
    %1760 = vmatprep.subr.mxu0 0.0
    %1761 = vmatpush2.msra.mxu0 0.0
    %1762 = vmatprep.subr.mxu0 0.0
    %1763 = vmatpush2.msra.mxu0 0.0
    %1764 = vmatprep.subr.mxu0 0.0
    %1765 = vmatpush2.msra.mxu0 0.0
    %1766 = vmatprep.subr.mxu0 0.0
    %1767 = vmatpush2.msra.mxu0 0.0
    %1768 = vmatprep.subr.mxu0 0.0
    %1769 = vmatpush2.msra.mxu0 0.0
    %1770 = vmatprep.subr.mxu0 0.0
    %1771 = vmatpush2.msra.mxu0 0.0
    %1772 = vmatprep.subr.mxu0 0.0
    %1773 = vmatpush2.msra.mxu0 0.0
    %1774 = vmatprep.subr.mxu0 0.0
    %1775 = vmatpush2.msra.mxu0 0.0
    %1776 = vmatprep.subr.mxu0 0.0
    %1777 = vmatpush2.msra.mxu0 0.0
    %1778 = vmatprep.subr.mxu0 0.0
    %1779 = vmatpush2.msra.mxu0 0.0
    %1780 = vmatprep.mubr.f32.mxu0 0.0
    %1781 = vmatmul.mubr.f32.gmra.mxu0 %v1536
    %v1782 = vpop.f32.mrf.mxu0
    %v1783 = vadd.f32 0.0, %v1782
    %v1784 = vpop.f32.mrf.mxu0
    %1785 = vmatprep.mubr.f32.mxu0 0.0
    %1786 = vmatmul.mubr.f32.gmra.mxu0 %v1539
    %v1787 = vpop.f32.mrf.mxu0
    %v1788 = vadd.f32 0.0, %v1787
    %v1789 = vpop.f32.mrf.mxu0
    %1790 = vdwg.mxu0
    %s1791 = scalar_lea.vmem %s4, 16
    %v1792 = vld [vmem:[%s1791] sm:$0xff]
    %v1793 = vld [vmem:[%s1791 + $0x8] sm:$0xf]
    %v1795 = vsel %vm1618, %v1792, 0
    %v1798 = vsel %vm1618, %v1793, 0
    %v1801 = vsel %vm1625, %v1788, 0
    %1803 = vmatprep.subr.mxu0 0.0
    %1804 = vmatpush1.msra.mxu0 0.0
    %1805 = vmatprep.subr.mxu0 0.0
    %1806 = vmatpush1.msra.mxu0 0.0
    %1807 = vmatprep.subr.mxu0 0.0
    %1808 = vmatpush1.msra.mxu0 0.0
    %1809 = vmatprep.subr.mxu0 0.0
    %1810 = vmatpush1.msra.mxu0 0.0
    %1811 = vmatprep.subr.mxu0 0.0
    %1812 = vmatpush1.msra.mxu0 0.0
    %1813 = vmatprep.subr.mxu0 0.0
    %1814 = vmatpush1.msra.mxu0 0.0
    %1815 = vmatprep.subr.mxu0 0.0
    %1816 = vmatpush1.msra.mxu0 0.0
    %1817 = vmatprep.subr.mxu0 0.0
    %1818 = vmatpush1.msra.mxu0 0.0
    %1819 = vmatprep.subr.mxu0 0.0
    %1820 = vmatpush1.msra.mxu0 0.0
    %1821 = vmatprep.subr.mxu0 0.0
    %1822 = vmatpush1.msra.mxu0 0.0
    %1823 = vmatprep.subr.mxu0 0.0
    %1824 = vmatpush1.msra.mxu0 0.0
    %1825 = vmatprep.subr.mxu0 0.0
    %1826 = vmatpush1.msra.mxu0 0.0
    %1827 = vmatprep.subr.mxu0 0.0
    %1828 = vmatpush1.msra.mxu0 0.0
    %1829 = vmatprep.subr.mxu0 0.0
    %1830 = vmatpush1.msra.mxu0 0.0
    %1831 = vmatprep.subr.mxu0 0.0
    %1832 = vmatpush1.msra.mxu0 %v1801
    %1833 = vmatprep.subr.mxu0 0.0
    %1834 = vmatpush1.msra.mxu0 %v1783
    %1835 = vmatprep.subr.mxu0 0.0
    %1836 = vmatpush2.msra.mxu0 0.0
    %1837 = vmatprep.subr.mxu0 0.0
    %1838 = vmatpush2.msra.mxu0 0.0
    %1839 = vmatprep.subr.mxu0 0.0
    %1840 = vmatpush2.msra.mxu0 0.0
    %1841 = vmatprep.subr.mxu0 0.0
    %1842 = vmatpush2.msra.mxu0 0.0
    %1843 = vmatprep.subr.mxu0 0.0
    %1844 = vmatpush2.msra.mxu0 0.0
    %1845 = vmatprep.subr.mxu0 0.0
    %1846 = vmatpush2.msra.mxu0 0.0
    %1847 = vmatprep.subr.mxu0 0.0
    %1848 = vmatpush2.msra.mxu0 0.0
    %1849 = vmatprep.subr.mxu0 0.0
    %1850 = vmatpush2.msra.mxu0 0.0
    %1851 = vmatprep.subr.mxu0 0.0
    %1852 = vmatpush2.msra.mxu0 0.0
    %1853 = vmatprep.subr.mxu0 0.0
    %1854 = vmatpush2.msra.mxu0 0.0
    %1855 = vmatprep.subr.mxu0 0.0
    %1856 = vmatpush2.msra.mxu0 0.0
    %1857 = vmatprep.subr.mxu0 0.0
    %1858 = vmatpush2.msra.mxu0 0.0
    %1859 = vmatprep.subr.mxu0 0.0
    %1860 = vmatpush2.msra.mxu0 0.0
    %1861 = vmatprep.subr.mxu0 0.0
    %1862 = vmatpush2.msra.mxu0 0.0
    %1863 = vmatprep.subr.mxu0 0.0
    %1864 = vmatpush2.msra.mxu0 0.0
    %1865 = vmatprep.subr.mxu0 0.0
    %1866 = vmatpush2.msra.mxu0 0.0
    %1867 = vmatprep.mubr.f32.mxu0 0.0
    %1868 = vmatmul.mubr.f32.gmra.mxu0 %v1795
    %v1869 = vpop.f32.mrf.mxu0
    %v1870 = vadd.f32 0.0, %v1869
    %v1871 = vpop.f32.mrf.mxu0
    %1872 = vmatprep.mubr.f32.mxu0 0.0
    %1873 = vmatmul.mubr.f32.gmra.mxu0 %v1798
    %v1874 = vpop.f32.mrf.mxu0
    %v1875 = vadd.f32 0.0, %v1874
    %v1876 = vpop.f32.mrf.mxu0
    %1877 = vdwg.mxu0
    %v1878 = vadd.f32 %v1714, %v1870
    %v1879 = vadd.f32 %v1715, %v1875
    %1880 = vmatprep.subr.mxu0 0.0
    %1881 = vmatpush1.msra.mxu0 0.0
    %1882 = vmatprep.subr.mxu0 0.0
    %1883 = vmatpush1.msra.mxu0 0.0
    %1884 = vmatprep.subr.mxu0 0.0
    %1885 = vmatpush1.msra.mxu0 0.0
    %1886 = vmatprep.subr.mxu0 0.0
    %1887 = vmatpush1.msra.mxu0 0.0
    %1888 = vmatprep.subr.mxu0 0.0
    %1889 = vmatpush1.msra.mxu0 0.0
    %1890 = vmatprep.subr.mxu0 0.0
    %1891 = vmatpush1.msra.mxu0 0.0
    %1892 = vmatprep.subr.mxu0 0.0
    %1893 = vmatpush1.msra.mxu0 0.0
    %1894 = vmatprep.subr.mxu0 0.0
    %1895 = vmatpush1.msra.mxu0 0.0
    %1896 = vmatprep.subr.mxu0 0.0
    %1897 = vmatpush1.msra.mxu0 0.0
    %1898 = vmatprep.subr.mxu0 0.0
    %1899 = vmatpush1.msra.mxu0 0.0
    %1900 = vmatprep.subr.mxu0 0.0
    %1901 = vmatpush1.msra.mxu0 0.0
    %1902 = vmatprep.subr.mxu0 0.0
    %1903 = vmatpush1.msra.mxu0 %v396
    %1904 = vmatprep.subr.mxu0 0.0
    %1905 = vmatpush1.msra.mxu0 %v395
    %1906 = vmatprep.subr.mxu0 0.0
    %1907 = vmatpush1.msra.mxu0 %v394
    %1908 = vmatprep.subr.mxu0 0.0
    %1909 = vmatpush1.msra.mxu0 %v393
    %1910 = vmatprep.subr.mxu0 0.0
    %1911 = vmatpush1.msra.mxu0 %v392
    %1912 = vmatprep.subr.mxu0 0.0
    %1913 = vmatpush2.msra.mxu0 0.0
    %1914 = vmatprep.subr.mxu0 0.0
    %1915 = vmatpush2.msra.mxu0 0.0
    %1916 = vmatprep.subr.mxu0 0.0
    %1917 = vmatpush2.msra.mxu0 0.0
    %1918 = vmatprep.subr.mxu0 0.0
    %1919 = vmatpush2.msra.mxu0 0.0
    %1920 = vmatprep.subr.mxu0 0.0
    %1921 = vmatpush2.msra.mxu0 0.0
    %1922 = vmatprep.subr.mxu0 0.0
    %1923 = vmatpush2.msra.mxu0 0.0
    %1924 = vmatprep.subr.mxu0 0.0
    %1925 = vmatpush2.msra.mxu0 0.0
    %1926 = vmatprep.subr.mxu0 0.0
    %1927 = vmatpush2.msra.mxu0 0.0
    %1928 = vmatprep.subr.mxu0 0.0
    %1929 = vmatpush2.msra.mxu0 0.0
    %1930 = vmatprep.subr.mxu0 0.0
    %1931 = vmatpush2.msra.mxu0 0.0
    %1932 = vmatprep.subr.mxu0 0.0
    %1933 = vmatpush2.msra.mxu0 0.0
    %1934 = vmatprep.subr.mxu0 0.0
    %1935 = vmatpush2.msra.mxu0 0.0
    %1936 = vmatprep.subr.mxu0 0.0
    %1937 = vmatpush2.msra.mxu0 0.0
    %1938 = vmatprep.subr.mxu0 0.0
    %1939 = vmatpush2.msra.mxu0 0.0
    %1940 = vmatprep.subr.mxu0 0.0
    %1941 = vmatpush2.msra.mxu0 0.0
    %1942 = vmatprep.subr.mxu0 0.0
    %1943 = vmatpush2.msra.mxu0 0.0
    %1944 = vmatprep.mubr.f32.mxu0 0.0
    %1945 = vmatmul.mubr.f32.gmra.mxu0 %v1536
    %v1946 = vpop.f32.mrf.mxu0
    %v1947 = vadd.f32 0.0, %v1946
    %v1948 = vpop.f32.mrf.mxu0
    %1949 = vmatprep.mubr.f32.mxu0 0.0
    %1950 = vmatmul.mubr.f32.gmra.mxu0 %v1539
    %v1951 = vpop.f32.mrf.mxu0
    %v1952 = vadd.f32 0.0, %v1951
    %v1953 = vpop.f32.mrf.mxu0
    %1954 = vdwg.mxu0
    %s1955 = scalar_lea.vmem %s4, 32
    %v1956 = vld [vmem:[%s1955] sm:$0xff]
    %v1957 = vld [vmem:[%s1955 + $0x8] sm:$0xf]
    %v1959 = vsel %vm1618, %v1956, 0
    %v1962 = vsel %vm1618, %v1957, 0
    %v1965 = vsel %vm1625, %v1952, 0
    %1967 = vmatprep.subr.mxu0 0.0
    %1968 = vmatpush1.msra.mxu0 0.0
    %1969 = vmatprep.subr.mxu0 0.0
    %1970 = vmatpush1.msra.mxu0 0.0
    %1971 = vmatprep.subr.mxu0 0.0
    %1972 = vmatpush1.msra.mxu0 0.0
    %1973 = vmatprep.subr.mxu0 0.0
    %1974 = vmatpush1.msra.mxu0 0.0
    %1975 = vmatprep.subr.mxu0 0.0
    %1976 = vmatpush1.msra.mxu0 0.0
    %1977 = vmatprep.subr.mxu0 0.0
    %1978 = vmatpush1.msra.mxu0 0.0
    %1979 = vmatprep.subr.mxu0 0.0
    %1980 = vmatpush1.msra.mxu0 0.0
    %1981 = vmatprep.subr.mxu0 0.0
    %1982 = vmatpush1.msra.mxu0 0.0
    %1983 = vmatprep.subr.mxu0 0.0
    %1984 = vmatpush1.msra.mxu0 0.0
    %1985 = vmatprep.subr.mxu0 0.0
    %1986 = vmatpush1.msra.mxu0 0.0
    %1987 = vmatprep.subr.mxu0 0.0
    %1988 = vmatpush1.msra.mxu0 0.0
    %1989 = vmatprep.subr.mxu0 0.0
    %1990 = vmatpush1.msra.mxu0 0.0
    %1991 = vmatprep.subr.mxu0 0.0
    %1992 = vmatpush1.msra.mxu0 0.0
    %1993 = vmatprep.subr.mxu0 0.0
    %1994 = vmatpush1.msra.mxu0 0.0
    %1995 = vmatprep.subr.mxu0 0.0
    %1996 = vmatpush1.msra.mxu0 %v1965
    %1997 = vmatprep.subr.mxu0 0.0
    %1998 = vmatpush1.msra.mxu0 %v1947
    %1999 = vmatprep.subr.mxu0 0.0
    %2000 = vmatpush2.msra.mxu0 0.0
    %2001 = vmatprep.subr.mxu0 0.0
    %2002 = vmatpush2.msra.mxu0 0.0
    %2003 = vmatprep.subr.mxu0 0.0
    %2004 = vmatpush2.msra.mxu0 0.0
    %2005 = vmatprep.subr.mxu0 0.0
    %2006 = vmatpush2.msra.mxu0 0.0
    %2007 = vmatprep.subr.mxu0 0.0
    %2008 = vmatpush2.msra.mxu0 0.0
    %2009 = vmatprep.subr.mxu0 0.0
    %2010 = vmatpush2.msra.mxu0 0.0
    %2011 = vmatprep.subr.mxu0 0.0
    %2012 = vmatpush2.msra.mxu0 0.0
    %2013 = vmatprep.subr.mxu0 0.0
    %2014 = vmatpush2.msra.mxu0 0.0
    %2015 = vmatprep.subr.mxu0 0.0
    %2016 = vmatpush2.msra.mxu0 0.0
    %2017 = vmatprep.subr.mxu0 0.0
    %2018 = vmatpush2.msra.mxu0 0.0
    %2019 = vmatprep.subr.mxu0 0.0
    %2020 = vmatpush2.msra.mxu0 0.0
    %2021 = vmatprep.subr.mxu0 0.0
    %2022 = vmatpush2.msra.mxu0 0.0
    %2023 = vmatprep.subr.mxu0 0.0
    %2024 = vmatpush2.msra.mxu0 0.0
    %2025 = vmatprep.subr.mxu0 0.0
    %2026 = vmatpush2.msra.mxu0 0.0
    %2027 = vmatprep.subr.mxu0 0.0
    %2028 = vmatpush2.msra.mxu0 0.0
    %2029 = vmatprep.subr.mxu0 0.0
    %2030 = vmatpush2.msra.mxu0 0.0
    %2031 = vmatprep.mubr.f32.mxu0 0.0
    %2032 = vmatmul.mubr.f32.gmra.mxu0 %v1959
    %v2033 = vpop.f32.mrf.mxu0
    %v2034 = vadd.f32 0.0, %v2033
    %v2035 = vpop.f32.mrf.mxu0
    %2036 = vmatprep.mubr.f32.mxu0 0.0
    %2037 = vmatmul.mubr.f32.gmra.mxu0 %v1962
    %v2038 = vpop.f32.mrf.mxu0
    %v2039 = vadd.f32 0.0, %v2038
    %v2040 = vpop.f32.mrf.mxu0
    %2041 = vdwg.mxu0
    %v2042 = vadd.f32 %v1878, %v2034
    %v2043 = vadd.f32 %v1879, %v2039
    %2044 = vmatprep.subr.mxu0 0.0
    %2045 = vmatpush1.msra.mxu0 0.0
    %2046 = vmatprep.subr.mxu0 0.0
    %2047 = vmatpush1.msra.mxu0 0.0
    %2048 = vmatprep.subr.mxu0 0.0
    %2049 = vmatpush1.msra.mxu0 0.0
    %2050 = vmatprep.subr.mxu0 0.0
    %2051 = vmatpush1.msra.mxu0 0.0
    %2052 = vmatprep.subr.mxu0 0.0
    %2053 = vmatpush1.msra.mxu0 0.0
    %2054 = vmatprep.subr.mxu0 0.0
    %2055 = vmatpush1.msra.mxu0 0.0
    %2056 = vmatprep.subr.mxu0 0.0
    %2057 = vmatpush1.msra.mxu0 0.0
    %2058 = vmatprep.subr.mxu0 0.0
    %2059 = vmatpush1.msra.mxu0 0.0
    %2060 = vmatprep.subr.mxu0 0.0
    %2061 = vmatpush1.msra.mxu0 0.0
    %2062 = vmatprep.subr.mxu0 0.0
    %2063 = vmatpush1.msra.mxu0 0.0
    %2064 = vmatprep.subr.mxu0 0.0
    %2065 = vmatpush1.msra.mxu0 0.0
    %2066 = vmatprep.subr.mxu0 0.0
    %2067 = vmatpush1.msra.mxu0 %v558
    %2068 = vmatprep.subr.mxu0 0.0
    %2069 = vmatpush1.msra.mxu0 %v557
    %2070 = vmatprep.subr.mxu0 0.0
    %2071 = vmatpush1.msra.mxu0 %v556
    %2072 = vmatprep.subr.mxu0 0.0
    %2073 = vmatpush1.msra.mxu0 %v555
    %2074 = vmatprep.subr.mxu0 0.0
    %2075 = vmatpush1.msra.mxu0 %v554
    %2076 = vmatprep.subr.mxu0 0.0
    %2077 = vmatpush2.msra.mxu0 0.0
    %2078 = vmatprep.subr.mxu0 0.0
    %2079 = vmatpush2.msra.mxu0 0.0
    %2080 = vmatprep.subr.mxu0 0.0
    %2081 = vmatpush2.msra.mxu0 0.0
    %2082 = vmatprep.subr.mxu0 0.0
    %2083 = vmatpush2.msra.mxu0 0.0
    %2084 = vmatprep.subr.mxu0 0.0
    %2085 = vmatpush2.msra.mxu0 0.0
    %2086 = vmatprep.subr.mxu0 0.0
    %2087 = vmatpush2.msra.mxu0 0.0
    %2088 = vmatprep.subr.mxu0 0.0
    %2089 = vmatpush2.msra.mxu0 0.0
    %2090 = vmatprep.subr.mxu0 0.0
    %2091 = vmatpush2.msra.mxu0 0.0
    %2092 = vmatprep.subr.mxu0 0.0
    %2093 = vmatpush2.msra.mxu0 0.0
    %2094 = vmatprep.subr.mxu0 0.0
    %2095 = vmatpush2.msra.mxu0 0.0
    %2096 = vmatprep.subr.mxu0 0.0
    %2097 = vmatpush2.msra.mxu0 0.0
    %2098 = vmatprep.subr.mxu0 0.0
    %2099 = vmatpush2.msra.mxu0 0.0
    %2100 = vmatprep.subr.mxu0 0.0
    %2101 = vmatpush2.msra.mxu0 0.0
    %2102 = vmatprep.subr.mxu0 0.0
    %2103 = vmatpush2.msra.mxu0 0.0
    %2104 = vmatprep.subr.mxu0 0.0
    %2105 = vmatpush2.msra.mxu0 0.0
    %2106 = vmatprep.subr.mxu0 0.0
    %2107 = vmatpush2.msra.mxu0 0.0
    %2108 = vmatprep.mubr.f32.mxu0 0.0
    %2109 = vmatmul.mubr.f32.gmra.mxu0 %v1536
    %v2110 = vpop.f32.mrf.mxu0
    %v2111 = vadd.f32 0.0, %v2110
    %v2112 = vpop.f32.mrf.mxu0
    %2113 = vmatprep.mubr.f32.mxu0 0.0
    %2114 = vmatmul.mubr.f32.gmra.mxu0 %v1539
    %v2115 = vpop.f32.mrf.mxu0
    %v2116 = vadd.f32 0.0, %v2115
    %v2117 = vpop.f32.mrf.mxu0
    %2118 = vdwg.mxu0
    %s2119 = scalar_lea.vmem %s4, 48
    %v2120 = vld [vmem:[%s2119] sm:$0xff]
    %v2121 = vld [vmem:[%s2119 + $0x8] sm:$0xf]
    %v2123 = vsel %vm1618, %v2120, 0
    %v2126 = vsel %vm1618, %v2121, 0
    %v2129 = vsel %vm1625, %v2116, 0
    %2131 = vmatprep.subr.mxu0 0.0
    %2132 = vmatpush1.msra.mxu0 0.0
    %2133 = vmatprep.subr.mxu0 0.0
    %2134 = vmatpush1.msra.mxu0 0.0
    %2135 = vmatprep.subr.mxu0 0.0
    %2136 = vmatpush1.msra.mxu0 0.0
    %2137 = vmatprep.subr.mxu0 0.0
    %2138 = vmatpush1.msra.mxu0 0.0
    %2139 = vmatprep.subr.mxu0 0.0
    %2140 = vmatpush1.msra.mxu0 0.0
    %2141 = vmatprep.subr.mxu0 0.0
    %2142 = vmatpush1.msra.mxu0 0.0
    %2143 = vmatprep.subr.mxu0 0.0
    %2144 = vmatpush1.msra.mxu0 0.0
    %2145 = vmatprep.subr.mxu0 0.0
    %2146 = vmatpush1.msra.mxu0 0.0
    %2147 = vmatprep.subr.mxu0 0.0
    %2148 = vmatpush1.msra.mxu0 0.0
    %2149 = vmatprep.subr.mxu0 0.0
    %2150 = vmatpush1.msra.mxu0 0.0
    %2151 = vmatprep.subr.mxu0 0.0
    %2152 = vmatpush1.msra.mxu0 0.0
    %2153 = vmatprep.subr.mxu0 0.0
    %2154 = vmatpush1.msra.mxu0 0.0
    %2155 = vmatprep.subr.mxu0 0.0
    %2156 = vmatpush1.msra.mxu0 0.0
    %2157 = vmatprep.subr.mxu0 0.0
    %2158 = vmatpush1.msra.mxu0 0.0
    %2159 = vmatprep.subr.mxu0 0.0
    %2160 = vmatpush1.msra.mxu0 %v2129
    %2161 = vmatprep.subr.mxu0 0.0
    %2162 = vmatpush1.msra.mxu0 %v2111
    %2163 = vmatprep.subr.mxu0 0.0
    %2164 = vmatpush2.msra.mxu0 0.0
    %2165 = vmatprep.subr.mxu0 0.0
    %2166 = vmatpush2.msra.mxu0 0.0
    %2167 = vmatprep.subr.mxu0 0.0
    %2168 = vmatpush2.msra.mxu0 0.0
    %2169 = vmatprep.subr.mxu0 0.0
    %2170 = vmatpush2.msra.mxu0 0.0
    %2171 = vmatprep.subr.mxu0 0.0
    %2172 = vmatpush2.msra.mxu0 0.0
    %2173 = vmatprep.subr.mxu0 0.0
    %2174 = vmatpush2.msra.mxu0 0.0
    %2175 = vmatprep.subr.mxu0 0.0
    %2176 = vmatpush2.msra.mxu0 0.0
    %2177 = vmatprep.subr.mxu0 0.0
    %2178 = vmatpush2.msra.mxu0 0.0
    %2179 = vmatprep.subr.mxu0 0.0
    %2180 = vmatpush2.msra.mxu0 0.0
    %2181 = vmatprep.subr.mxu0 0.0
    %2182 = vmatpush2.msra.mxu0 0.0
    %2183 = vmatprep.subr.mxu0 0.0
    %2184 = vmatpush2.msra.mxu0 0.0
    %2185 = vmatprep.subr.mxu0 0.0
    %2186 = vmatpush2.msra.mxu0 0.0
    %2187 = vmatprep.subr.mxu0 0.0
    %2188 = vmatpush2.msra.mxu0 0.0
    %2189 = vmatprep.subr.mxu0 0.0
    %2190 = vmatpush2.msra.mxu0 0.0
    %2191 = vmatprep.subr.mxu0 0.0
    %2192 = vmatpush2.msra.mxu0 0.0
    %2193 = vmatprep.subr.mxu0 0.0
    %2194 = vmatpush2.msra.mxu0 0.0
    %2195 = vmatprep.mubr.f32.mxu0 0.0
    %2196 = vmatmul.mubr.f32.gmra.mxu0 %v2123
    %v2197 = vpop.f32.mrf.mxu0
    %v2198 = vadd.f32 0.0, %v2197
    %v2199 = vpop.f32.mrf.mxu0
    %2200 = vmatprep.mubr.f32.mxu0 0.0
    %2201 = vmatmul.mubr.f32.gmra.mxu0 %v2126
    %v2202 = vpop.f32.mrf.mxu0
    %v2203 = vadd.f32 0.0, %v2202
    %v2204 = vpop.f32.mrf.mxu0
    %2205 = vdwg.mxu0
    %v2206 = vadd.f32 %v2042, %v2198
    %v2207 = vadd.f32 %v2043, %v2203
    %2208 = vmatprep.subr.mxu0 0.0
    %2209 = vmatpush1.msra.mxu0 0.0
    %2210 = vmatprep.subr.mxu0 0.0
    %2211 = vmatpush1.msra.mxu0 0.0
    %2212 = vmatprep.subr.mxu0 0.0
    %2213 = vmatpush1.msra.mxu0 0.0
    %2214 = vmatprep.subr.mxu0 0.0
    %2215 = vmatpush1.msra.mxu0 0.0
    %2216 = vmatprep.subr.mxu0 0.0
    %2217 = vmatpush1.msra.mxu0 0.0
    %2218 = vmatprep.subr.mxu0 0.0
    %2219 = vmatpush1.msra.mxu0 0.0
    %2220 = vmatprep.subr.mxu0 0.0
    %2221 = vmatpush1.msra.mxu0 0.0
    %2222 = vmatprep.subr.mxu0 0.0
    %2223 = vmatpush1.msra.mxu0 0.0
    %2224 = vmatprep.subr.mxu0 0.0
    %2225 = vmatpush1.msra.mxu0 0.0
    %2226 = vmatprep.subr.mxu0 0.0
    %2227 = vmatpush1.msra.mxu0 0.0
    %2228 = vmatprep.subr.mxu0 0.0
    %2229 = vmatpush1.msra.mxu0 0.0
    %2230 = vmatprep.subr.mxu0 0.0
    %2231 = vmatpush1.msra.mxu0 %v720
    %2232 = vmatprep.subr.mxu0 0.0
    %2233 = vmatpush1.msra.mxu0 %v719
    %2234 = vmatprep.subr.mxu0 0.0
    %2235 = vmatpush1.msra.mxu0 %v718
    %2236 = vmatprep.subr.mxu0 0.0
    %2237 = vmatpush1.msra.mxu0 %v717
    %2238 = vmatprep.subr.mxu0 0.0
    %2239 = vmatpush1.msra.mxu0 %v716
    %2240 = vmatprep.subr.mxu0 0.0
    %2241 = vmatpush2.msra.mxu0 0.0
    %2242 = vmatprep.subr.mxu0 0.0
    %2243 = vmatpush2.msra.mxu0 0.0
    %2244 = vmatprep.subr.mxu0 0.0
    %2245 = vmatpush2.msra.mxu0 0.0
    %2246 = vmatprep.subr.mxu0 0.0
    %2247 = vmatpush2.msra.mxu0 0.0
    %2248 = vmatprep.subr.mxu0 0.0
    %2249 = vmatpush2.msra.mxu0 0.0
    %2250 = vmatprep.subr.mxu0 0.0
    %2251 = vmatpush2.msra.mxu0 0.0
    %2252 = vmatprep.subr.mxu0 0.0
    %2253 = vmatpush2.msra.mxu0 0.0
    %2254 = vmatprep.subr.mxu0 0.0
    %2255 = vmatpush2.msra.mxu0 0.0
    %2256 = vmatprep.subr.mxu0 0.0
    %2257 = vmatpush2.msra.mxu0 0.0
    %2258 = vmatprep.subr.mxu0 0.0
    %2259 = vmatpush2.msra.mxu0 0.0
    %2260 = vmatprep.subr.mxu0 0.0
    %2261 = vmatpush2.msra.mxu0 0.0
    %2262 = vmatprep.subr.mxu0 0.0
    %2263 = vmatpush2.msra.mxu0 0.0
    %2264 = vmatprep.subr.mxu0 0.0
    %2265 = vmatpush2.msra.mxu0 0.0
    %2266 = vmatprep.subr.mxu0 0.0
    %2267 = vmatpush2.msra.mxu0 0.0
    %2268 = vmatprep.subr.mxu0 0.0
    %2269 = vmatpush2.msra.mxu0 0.0
    %2270 = vmatprep.subr.mxu0 0.0
    %2271 = vmatpush2.msra.mxu0 0.0
    %2272 = vmatprep.mubr.f32.mxu0 0.0
    %2273 = vmatmul.mubr.f32.gmra.mxu0 %v1536
    %v2274 = vpop.f32.mrf.mxu0
    %v2275 = vadd.f32 0.0, %v2274
    %v2276 = vpop.f32.mrf.mxu0
    %2277 = vmatprep.mubr.f32.mxu0 0.0
    %2278 = vmatmul.mubr.f32.gmra.mxu0 %v1539
    %v2279 = vpop.f32.mrf.mxu0
    %v2280 = vadd.f32 0.0, %v2279
    %v2281 = vpop.f32.mrf.mxu0
    %2282 = vdwg.mxu0
    %s2283 = scalar_lea.vmem %s4, 64
    %v2284 = vld [vmem:[%s2283] sm:$0xff]
    %v2285 = vld [vmem:[%s2283 + $0x8] sm:$0xf]
    %v2287 = vsel %vm1618, %v2284, 0
    %v2290 = vsel %vm1618, %v2285, 0
    %v2293 = vsel %vm1625, %v2280, 0
    %2295 = vmatprep.subr.mxu0 0.0
    %2296 = vmatpush1.msra.mxu0 0.0
    %2297 = vmatprep.subr.mxu0 0.0
    %2298 = vmatpush1.msra.mxu0 0.0
    %2299 = vmatprep.subr.mxu0 0.0
    %2300 = vmatpush1.msra.mxu0 0.0
    %2301 = vmatprep.subr.mxu0 0.0
    %2302 = vmatpush1.msra.mxu0 0.0
    %2303 = vmatprep.subr.mxu0 0.0
    %2304 = vmatpush1.msra.mxu0 0.0
    %2305 = vmatprep.subr.mxu0 0.0
    %2306 = vmatpush1.msra.mxu0 0.0
    %2307 = vmatprep.subr.mxu0 0.0
    %2308 = vmatpush1.msra.mxu0 0.0
    %2309 = vmatprep.subr.mxu0 0.0
    %2310 = vmatpush1.msra.mxu0 0.0
    %2311 = vmatprep.subr.mxu0 0.0
    %2312 = vmatpush1.msra.mxu0 0.0
    %2313 = vmatprep.subr.mxu0 0.0
    %2314 = vmatpush1.msra.mxu0 0.0
    %2315 = vmatprep.subr.mxu0 0.0
    %2316 = vmatpush1.msra.mxu0 0.0
    %2317 = vmatprep.subr.mxu0 0.0
    %2318 = vmatpush1.msra.mxu0 0.0
    %2319 = vmatprep.subr.mxu0 0.0
    %2320 = vmatpush1.msra.mxu0 0.0
    %2321 = vmatprep.subr.mxu0 0.0
    %2322 = vmatpush1.msra.mxu0 0.0
    %2323 = vmatprep.subr.mxu0 0.0
    %2324 = vmatpush1.msra.mxu0 %v2293
    %2325 = vmatprep.subr.mxu0 0.0
    %2326 = vmatpush1.msra.mxu0 %v2275
    %2327 = vmatprep.subr.mxu0 0.0
    %2328 = vmatpush2.msra.mxu0 0.0
    %2329 = vmatprep.subr.mxu0 0.0
    %2330 = vmatpush2.msra.mxu0 0.0
    %2331 = vmatprep.subr.mxu0 0.0
    %2332 = vmatpush2.msra.mxu0 0.0
    %2333 = vmatprep.subr.mxu0 0.0
    %2334 = vmatpush2.msra.mxu0 0.0
    %2335 = vmatprep.subr.mxu0 0.0
    %2336 = vmatpush2.msra.mxu0 0.0
    %2337 = vmatprep.subr.mxu0 0.0
    %2338 = vmatpush2.msra.mxu0 0.0
    %2339 = vmatprep.subr.mxu0 0.0
    %2340 = vmatpush2.msra.mxu0 0.0
    %2341 = vmatprep.subr.mxu0 0.0
    %2342 = vmatpush2.msra.mxu0 0.0
    %2343 = vmatprep.subr.mxu0 0.0
    %2344 = vmatpush2.msra.mxu0 0.0
    %2345 = vmatprep.subr.mxu0 0.0
    %2346 = vmatpush2.msra.mxu0 0.0
    %2347 = vmatprep.subr.mxu0 0.0
    %2348 = vmatpush2.msra.mxu0 0.0
    %2349 = vmatprep.subr.mxu0 0.0
    %2350 = vmatpush2.msra.mxu0 0.0
    %2351 = vmatprep.subr.mxu0 0.0
    %2352 = vmatpush2.msra.mxu0 0.0
    %2353 = vmatprep.subr.mxu0 0.0
    %2354 = vmatpush2.msra.mxu0 0.0
    %2355 = vmatprep.subr.mxu0 0.0
    %2356 = vmatpush2.msra.mxu0 0.0
    %2357 = vmatprep.subr.mxu0 0.0
    %2358 = vmatpush2.msra.mxu0 0.0
    %2359 = vmatprep.mubr.f32.mxu0 0.0
    %2360 = vmatmul.mubr.f32.gmra.mxu0 %v2287
    %v2361 = vpop.f32.mrf.mxu0
    %v2362 = vadd.f32 0.0, %v2361
    %v2363 = vpop.f32.mrf.mxu0
    %2364 = vmatprep.mubr.f32.mxu0 0.0
    %2365 = vmatmul.mubr.f32.gmra.mxu0 %v2290
    %v2366 = vpop.f32.mrf.mxu0
    %v2367 = vadd.f32 0.0, %v2366
    %v2368 = vpop.f32.mrf.mxu0
    %2369 = vdwg.mxu0
    %v2370 = vadd.f32 %v2206, %v2362
    %v2371 = vadd.f32 %v2207, %v2367
    %2372 = vmatprep.subr.mxu0 0.0
    %2373 = vmatpush1.msra.mxu0 0.0
    %2374 = vmatprep.subr.mxu0 0.0
    %2375 = vmatpush1.msra.mxu0 0.0
    %2376 = vmatprep.subr.mxu0 0.0
    %2377 = vmatpush1.msra.mxu0 0.0
    %2378 = vmatprep.subr.mxu0 0.0
    %2379 = vmatpush1.msra.mxu0 0.0
    %2380 = vmatprep.subr.mxu0 0.0
    %2381 = vmatpush1.msra.mxu0 0.0
    %2382 = vmatprep.subr.mxu0 0.0
    %2383 = vmatpush1.msra.mxu0 0.0
    %2384 = vmatprep.subr.mxu0 0.0
    %2385 = vmatpush1.msra.mxu0 0.0
    %2386 = vmatprep.subr.mxu0 0.0
    %2387 = vmatpush1.msra.mxu0 0.0
    %2388 = vmatprep.subr.mxu0 0.0
    %2389 = vmatpush1.msra.mxu0 0.0
    %2390 = vmatprep.subr.mxu0 0.0
    %2391 = vmatpush1.msra.mxu0 0.0
    %2392 = vmatprep.subr.mxu0 0.0
    %2393 = vmatpush1.msra.mxu0 0.0
    %2394 = vmatprep.subr.mxu0 0.0
    %2395 = vmatpush1.msra.mxu0 %v882
    %2396 = vmatprep.subr.mxu0 0.0
    %2397 = vmatpush1.msra.mxu0 %v881
    %2398 = vmatprep.subr.mxu0 0.0
    %2399 = vmatpush1.msra.mxu0 %v880
    %2400 = vmatprep.subr.mxu0 0.0
    %2401 = vmatpush1.msra.mxu0 %v879
    %2402 = vmatprep.subr.mxu0 0.0
    %2403 = vmatpush1.msra.mxu0 %v878
    %2404 = vmatprep.subr.mxu0 0.0
    %2405 = vmatpush2.msra.mxu0 0.0
    %2406 = vmatprep.subr.mxu0 0.0
    %2407 = vmatpush2.msra.mxu0 0.0
    %2408 = vmatprep.subr.mxu0 0.0
    %2409 = vmatpush2.msra.mxu0 0.0
    %2410 = vmatprep.subr.mxu0 0.0
    %2411 = vmatpush2.msra.mxu0 0.0
    %2412 = vmatprep.subr.mxu0 0.0
    %2413 = vmatpush2.msra.mxu0 0.0
    %2414 = vmatprep.subr.mxu0 0.0
    %2415 = vmatpush2.msra.mxu0 0.0
    %2416 = vmatprep.subr.mxu0 0.0
    %2417 = vmatpush2.msra.mxu0 0.0
    %2418 = vmatprep.subr.mxu0 0.0
    %2419 = vmatpush2.msra.mxu0 0.0
    %2420 = vmatprep.subr.mxu0 0.0
    %2421 = vmatpush2.msra.mxu0 0.0
    %2422 = vmatprep.subr.mxu0 0.0
    %2423 = vmatpush2.msra.mxu0 0.0
    %2424 = vmatprep.subr.mxu0 0.0
    %2425 = vmatpush2.msra.mxu0 0.0
    %2426 = vmatprep.subr.mxu0 0.0
    %2427 = vmatpush2.msra.mxu0 0.0
    %2428 = vmatprep.subr.mxu0 0.0
    %2429 = vmatpush2.msra.mxu0 0.0
    %2430 = vmatprep.subr.mxu0 0.0
    %2431 = vmatpush2.msra.mxu0 0.0
    %2432 = vmatprep.subr.mxu0 0.0
    %2433 = vmatpush2.msra.mxu0 0.0
    %2434 = vmatprep.subr.mxu0 0.0
    %2435 = vmatpush2.msra.mxu0 0.0
    %2436 = vmatprep.mubr.f32.mxu0 0.0
    %2437 = vmatmul.mubr.f32.gmra.mxu0 %v1536
    %v2438 = vpop.f32.mrf.mxu0
    %v2439 = vadd.f32 0.0, %v2438
    %v2440 = vpop.f32.mrf.mxu0
    %2441 = vmatprep.mubr.f32.mxu0 0.0
    %2442 = vmatmul.mubr.f32.gmra.mxu0 %v1539
    %v2443 = vpop.f32.mrf.mxu0
    %v2444 = vadd.f32 0.0, %v2443
    %v2445 = vpop.f32.mrf.mxu0
    %2446 = vdwg.mxu0
    %s2447 = scalar_lea.vmem %s4, 80
    %v2448 = vld [vmem:[%s2447] sm:$0xff]
    %v2449 = vld [vmem:[%s2447 + $0x8] sm:$0xf]
    %v2451 = vsel %vm1618, %v2448, 0
    %v2454 = vsel %vm1618, %v2449, 0
    %v2457 = vsel %vm1625, %v2444, 0
    %2459 = vmatprep.subr.mxu0 0.0
    %2460 = vmatpush1.msra.mxu0 0.0
    %2461 = vmatprep.subr.mxu0 0.0
    %2462 = vmatpush1.msra.mxu0 0.0
    %2463 = vmatprep.subr.mxu0 0.0
    %2464 = vmatpush1.msra.mxu0 0.0
    %2465 = vmatprep.subr.mxu0 0.0
    %2466 = vmatpush1.msra.mxu0 0.0
    %2467 = vmatprep.subr.mxu0 0.0
    %2468 = vmatpush1.msra.mxu0 0.0
    %2469 = vmatprep.subr.mxu0 0.0
    %2470 = vmatpush1.msra.mxu0 0.0
    %2471 = vmatprep.subr.mxu0 0.0
    %2472 = vmatpush1.msra.mxu0 0.0
    %2473 = vmatprep.subr.mxu0 0.0
    %2474 = vmatpush1.msra.mxu0 0.0
    %2475 = vmatprep.subr.mxu0 0.0
    %2476 = vmatpush1.msra.mxu0 0.0
    %2477 = vmatprep.subr.mxu0 0.0
    %2478 = vmatpush1.msra.mxu0 0.0
    %2479 = vmatprep.subr.mxu0 0.0
    %2480 = vmatpush1.msra.mxu0 0.0
    %2481 = vmatprep.subr.mxu0 0.0
    %2482 = vmatpush1.msra.mxu0 0.0
    %2483 = vmatprep.subr.mxu0 0.0
    %2484 = vmatpush1.msra.mxu0 0.0
    %2485 = vmatprep.subr.mxu0 0.0
    %2486 = vmatpush1.msra.mxu0 0.0
    %2487 = vmatprep.subr.mxu0 0.0
    %2488 = vmatpush1.msra.mxu0 %v2457
    %2489 = vmatprep.subr.mxu0 0.0
    %2490 = vmatpush1.msra.mxu0 %v2439
    %2491 = vmatprep.subr.mxu0 0.0
    %2492 = vmatpush2.msra.mxu0 0.0
    %2493 = vmatprep.subr.mxu0 0.0
    %2494 = vmatpush2.msra.mxu0 0.0
    %2495 = vmatprep.subr.mxu0 0.0
    %2496 = vmatpush2.msra.mxu0 0.0
    %2497 = vmatprep.subr.mxu0 0.0
    %2498 = vmatpush2.msra.mxu0 0.0
    %2499 = vmatprep.subr.mxu0 0.0
    %2500 = vmatpush2.msra.mxu0 0.0
    %2501 = vmatprep.subr.mxu0 0.0
    %2502 = vmatpush2.msra.mxu0 0.0
    %2503 = vmatprep.subr.mxu0 0.0
    %2504 = vmatpush2.msra.mxu0 0.0
    %2505 = vmatprep.subr.mxu0 0.0
    %2506 = vmatpush2.msra.mxu0 0.0
    %2507 = vmatprep.subr.mxu0 0.0
    %2508 = vmatpush2.msra.mxu0 0.0
    %2509 = vmatprep.subr.mxu0 0.0
    %2510 = vmatpush2.msra.mxu0 0.0
    %2511 = vmatprep.subr.mxu0 0.0
    %2512 = vmatpush2.msra.mxu0 0.0
    %2513 = vmatprep.subr.mxu0 0.0
    %2514 = vmatpush2.msra.mxu0 0.0
    %2515 = vmatprep.subr.mxu0 0.0
    %2516 = vmatpush2.msra.mxu0 0.0
    %2517 = vmatprep.subr.mxu0 0.0
    %2518 = vmatpush2.msra.mxu0 0.0
    %2519 = vmatprep.subr.mxu0 0.0
    %2520 = vmatpush2.msra.mxu0 0.0
    %2521 = vmatprep.subr.mxu0 0.0
    %2522 = vmatpush2.msra.mxu0 0.0
    %2523 = vmatprep.mubr.f32.mxu0 0.0
    %2524 = vmatmul.mubr.f32.gmra.mxu0 %v2451
    %v2525 = vpop.f32.mrf.mxu0
    %v2526 = vadd.f32 0.0, %v2525
    %v2527 = vpop.f32.mrf.mxu0
    %2528 = vmatprep.mubr.f32.mxu0 0.0
    %2529 = vmatmul.mubr.f32.gmra.mxu0 %v2454
    %v2530 = vpop.f32.mrf.mxu0
    %v2531 = vadd.f32 0.0, %v2530
    %v2532 = vpop.f32.mrf.mxu0
    %2533 = vdwg.mxu0
    %v2534 = vadd.f32 %v2370, %v2526
    %v2535 = vadd.f32 %v2371, %v2531
    %2536 = vmatprep.subr.mxu0 0.0
    %2537 = vmatpush1.msra.mxu0 0.0
    %2538 = vmatprep.subr.mxu0 0.0
    %2539 = vmatpush1.msra.mxu0 0.0
    %2540 = vmatprep.subr.mxu0 0.0
    %2541 = vmatpush1.msra.mxu0 0.0
    %2542 = vmatprep.subr.mxu0 0.0
    %2543 = vmatpush1.msra.mxu0 0.0
    %2544 = vmatprep.subr.mxu0 0.0
    %2545 = vmatpush1.msra.mxu0 0.0
    %2546 = vmatprep.subr.mxu0 0.0
    %2547 = vmatpush1.msra.mxu0 0.0
    %2548 = vmatprep.subr.mxu0 0.0
    %2549 = vmatpush1.msra.mxu0 0.0
    %2550 = vmatprep.subr.mxu0 0.0
    %2551 = vmatpush1.msra.mxu0 0.0
    %2552 = vmatprep.subr.mxu0 0.0
    %2553 = vmatpush1.msra.mxu0 0.0
    %2554 = vmatprep.subr.mxu0 0.0
    %2555 = vmatpush1.msra.mxu0 0.0
    %2556 = vmatprep.subr.mxu0 0.0
    %2557 = vmatpush1.msra.mxu0 0.0
    %2558 = vmatprep.subr.mxu0 0.0
    %2559 = vmatpush1.msra.mxu0 %v1044
    %2560 = vmatprep.subr.mxu0 0.0
    %2561 = vmatpush1.msra.mxu0 %v1043
    %2562 = vmatprep.subr.mxu0 0.0
    %2563 = vmatpush1.msra.mxu0 %v1042
    %2564 = vmatprep.subr.mxu0 0.0
    %2565 = vmatpush1.msra.mxu0 %v1041
    %2566 = vmatprep.subr.mxu0 0.0
    %2567 = vmatpush1.msra.mxu0 %v1040
    %2568 = vmatprep.subr.mxu0 0.0
    %2569 = vmatpush2.msra.mxu0 0.0
    %2570 = vmatprep.subr.mxu0 0.0
    %2571 = vmatpush2.msra.mxu0 0.0
    %2572 = vmatprep.subr.mxu0 0.0
    %2573 = vmatpush2.msra.mxu0 0.0
    %2574 = vmatprep.subr.mxu0 0.0
    %2575 = vmatpush2.msra.mxu0 0.0
    %2576 = vmatprep.subr.mxu0 0.0
    %2577 = vmatpush2.msra.mxu0 0.0
    %2578 = vmatprep.subr.mxu0 0.0
    %2579 = vmatpush2.msra.mxu0 0.0
    %2580 = vmatprep.subr.mxu0 0.0
    %2581 = vmatpush2.msra.mxu0 0.0
    %2582 = vmatprep.subr.mxu0 0.0
    %2583 = vmatpush2.msra.mxu0 0.0
    %2584 = vmatprep.subr.mxu0 0.0
    %2585 = vmatpush2.msra.mxu0 0.0
    %2586 = vmatprep.subr.mxu0 0.0
    %2587 = vmatpush2.msra.mxu0 0.0
    %2588 = vmatprep.subr.mxu0 0.0
    %2589 = vmatpush2.msra.mxu0 0.0
    %2590 = vmatprep.subr.mxu0 0.0
    %2591 = vmatpush2.msra.mxu0 0.0
    %2592 = vmatprep.subr.mxu0 0.0
    %2593 = vmatpush2.msra.mxu0 0.0
    %2594 = vmatprep.subr.mxu0 0.0
    %2595 = vmatpush2.msra.mxu0 0.0
    %2596 = vmatprep.subr.mxu0 0.0
    %2597 = vmatpush2.msra.mxu0 0.0
    %2598 = vmatprep.subr.mxu0 0.0
    %2599 = vmatpush2.msra.mxu0 0.0
    %2600 = vmatprep.mubr.f32.mxu0 0.0
    %2601 = vmatmul.mubr.f32.gmra.mxu0 %v1536
    %v2602 = vpop.f32.mrf.mxu0
    %v2603 = vadd.f32 0.0, %v2602
    %v2604 = vpop.f32.mrf.mxu0
    %2605 = vmatprep.mubr.f32.mxu0 0.0
    %2606 = vmatmul.mubr.f32.gmra.mxu0 %v1539
    %v2607 = vpop.f32.mrf.mxu0
    %v2608 = vadd.f32 0.0, %v2607
    %v2609 = vpop.f32.mrf.mxu0
    %2610 = vdwg.mxu0
    %s2611 = scalar_lea.vmem %s4, 96
    %v2612 = vld [vmem:[%s2611] sm:$0xff]
    %v2613 = vld [vmem:[%s2611 + $0x8] sm:$0xf]
    %v2615 = vsel %vm1618, %v2612, 0
    %v2618 = vsel %vm1618, %v2613, 0
    %v2621 = vsel %vm1625, %v2608, 0
    %2623 = vmatprep.subr.mxu0 0.0
    %2624 = vmatpush1.msra.mxu0 0.0
    %2625 = vmatprep.subr.mxu0 0.0
    %2626 = vmatpush1.msra.mxu0 0.0
    %2627 = vmatprep.subr.mxu0 0.0
    %2628 = vmatpush1.msra.mxu0 0.0
    %2629 = vmatprep.subr.mxu0 0.0
    %2630 = vmatpush1.msra.mxu0 0.0
    %2631 = vmatprep.subr.mxu0 0.0
    %2632 = vmatpush1.msra.mxu0 0.0
    %2633 = vmatprep.subr.mxu0 0.0
    %2634 = vmatpush1.msra.mxu0 0.0
    %2635 = vmatprep.subr.mxu0 0.0
    %2636 = vmatpush1.msra.mxu0 0.0
    %2637 = vmatprep.subr.mxu0 0.0
    %2638 = vmatpush1.msra.mxu0 0.0
    %2639 = vmatprep.subr.mxu0 0.0
    %2640 = vmatpush1.msra.mxu0 0.0
    %2641 = vmatprep.subr.mxu0 0.0
    %2642 = vmatpush1.msra.mxu0 0.0
    %2643 = vmatprep.subr.mxu0 0.0
    %2644 = vmatpush1.msra.mxu0 0.0
    %2645 = vmatprep.subr.mxu0 0.0
    %2646 = vmatpush1.msra.mxu0 0.0
    %2647 = vmatprep.subr.mxu0 0.0
    %2648 = vmatpush1.msra.mxu0 0.0
    %2649 = vmatprep.subr.mxu0 0.0
    %2650 = vmatpush1.msra.mxu0 0.0
    %2651 = vmatprep.subr.mxu0 0.0
    %2652 = vmatpush1.msra.mxu0 %v2621
    %2653 = vmatprep.subr.mxu0 0.0
    %2654 = vmatpush1.msra.mxu0 %v2603
    %2655 = vmatprep.subr.mxu0 0.0
    %2656 = vmatpush2.msra.mxu0 0.0
    %2657 = vmatprep.subr.mxu0 0.0
    %2658 = vmatpush2.msra.mxu0 0.0
    %2659 = vmatprep.subr.mxu0 0.0
    %2660 = vmatpush2.msra.mxu0 0.0
    %2661 = vmatprep.subr.mxu0 0.0
    %2662 = vmatpush2.msra.mxu0 0.0
    %2663 = vmatprep.subr.mxu0 0.0
    %2664 = vmatpush2.msra.mxu0 0.0
    %2665 = vmatprep.subr.mxu0 0.0
    %2666 = vmatpush2.msra.mxu0 0.0
    %2667 = vmatprep.subr.mxu0 0.0
    %2668 = vmatpush2.msra.mxu0 0.0
    %2669 = vmatprep.subr.mxu0 0.0
    %2670 = vmatpush2.msra.mxu0 0.0
    %2671 = vmatprep.subr.mxu0 0.0
    %2672 = vmatpush2.msra.mxu0 0.0
    %2673 = vmatprep.subr.mxu0 0.0
    %2674 = vmatpush2.msra.mxu0 0.0
    %2675 = vmatprep.subr.mxu0 0.0
    %2676 = vmatpush2.msra.mxu0 0.0
    %2677 = vmatprep.subr.mxu0 0.0
    %2678 = vmatpush2.msra.mxu0 0.0
    %2679 = vmatprep.subr.mxu0 0.0
    %2680 = vmatpush2.msra.mxu0 0.0
    %2681 = vmatprep.subr.mxu0 0.0
    %2682 = vmatpush2.msra.mxu0 0.0
    %2683 = vmatprep.subr.mxu0 0.0
    %2684 = vmatpush2.msra.mxu0 0.0
    %2685 = vmatprep.subr.mxu0 0.0
    %2686 = vmatpush2.msra.mxu0 0.0
    %2687 = vmatprep.mubr.f32.mxu0 0.0
    %2688 = vmatmul.mubr.f32.gmra.mxu0 %v2615
    %v2689 = vpop.f32.mrf.mxu0
    %v2690 = vadd.f32 0.0, %v2689
    %v2691 = vpop.f32.mrf.mxu0
    %2692 = vmatprep.mubr.f32.mxu0 0.0
    %2693 = vmatmul.mubr.f32.gmra.mxu0 %v2618
    %v2694 = vpop.f32.mrf.mxu0
    %v2695 = vadd.f32 0.0, %v2694
    %v2696 = vpop.f32.mrf.mxu0
    %2697 = vdwg.mxu0
    %v2698 = vadd.f32 %v2534, %v2690
    %v2699 = vadd.f32 %v2535, %v2695
    %2700 = vmatprep.subr.mxu0 0.0
    %2701 = vmatpush1.msra.mxu0 0.0
    %2702 = vmatprep.subr.mxu0 0.0
    %2703 = vmatpush1.msra.mxu0 0.0
    %2704 = vmatprep.subr.mxu0 0.0
    %2705 = vmatpush1.msra.mxu0 0.0
    %2706 = vmatprep.subr.mxu0 0.0
    %2707 = vmatpush1.msra.mxu0 0.0
    %2708 = vmatprep.subr.mxu0 0.0
    %2709 = vmatpush1.msra.mxu0 0.0
    %2710 = vmatprep.subr.mxu0 0.0
    %2711 = vmatpush1.msra.mxu0 0.0
    %2712 = vmatprep.subr.mxu0 0.0
    %2713 = vmatpush1.msra.mxu0 0.0
    %2714 = vmatprep.subr.mxu0 0.0
    %2715 = vmatpush1.msra.mxu0 0.0
    %2716 = vmatprep.subr.mxu0 0.0
    %2717 = vmatpush1.msra.mxu0 0.0
    %2718 = vmatprep.subr.mxu0 0.0
    %2719 = vmatpush1.msra.mxu0 0.0
    %2720 = vmatprep.subr.mxu0 0.0
    %2721 = vmatpush1.msra.mxu0 0.0
    %2722 = vmatprep.subr.mxu0 0.0
    %2723 = vmatpush1.msra.mxu0 %v1206
    %2724 = vmatprep.subr.mxu0 0.0
    %2725 = vmatpush1.msra.mxu0 %v1205
    %2726 = vmatprep.subr.mxu0 0.0
    %2727 = vmatpush1.msra.mxu0 %v1204
    %2728 = vmatprep.subr.mxu0 0.0
    %2729 = vmatpush1.msra.mxu0 %v1203
    %2730 = vmatprep.subr.mxu0 0.0
    %2731 = vmatpush1.msra.mxu0 %v1202
    %2732 = vmatprep.subr.mxu0 0.0
    %2733 = vmatpush2.msra.mxu0 0.0
    %2734 = vmatprep.subr.mxu0 0.0
    %2735 = vmatpush2.msra.mxu0 0.0
    %2736 = vmatprep.subr.mxu0 0.0
    %2737 = vmatpush2.msra.mxu0 0.0
    %2738 = vmatprep.subr.mxu0 0.0
    %2739 = vmatpush2.msra.mxu0 0.0
    %2740 = vmatprep.subr.mxu0 0.0
    %2741 = vmatpush2.msra.mxu0 0.0
    %2742 = vmatprep.subr.mxu0 0.0
    %2743 = vmatpush2.msra.mxu0 0.0
    %2744 = vmatprep.subr.mxu0 0.0
    %2745 = vmatpush2.msra.mxu0 0.0
    %2746 = vmatprep.subr.mxu0 0.0
    %2747 = vmatpush2.msra.mxu0 0.0
    %2748 = vmatprep.subr.mxu0 0.0
    %2749 = vmatpush2.msra.mxu0 0.0
    %2750 = vmatprep.subr.mxu0 0.0
    %2751 = vmatpush2.msra.mxu0 0.0
    %2752 = vmatprep.subr.mxu0 0.0
    %2753 = vmatpush2.msra.mxu0 0.0
    %2754 = vmatprep.subr.mxu0 0.0
    %2755 = vmatpush2.msra.mxu0 0.0
    %2756 = vmatprep.subr.mxu0 0.0
    %2757 = vmatpush2.msra.mxu0 0.0
    %2758 = vmatprep.subr.mxu0 0.0
    %2759 = vmatpush2.msra.mxu0 0.0
    %2760 = vmatprep.subr.mxu0 0.0
    %2761 = vmatpush2.msra.mxu0 0.0
    %2762 = vmatprep.subr.mxu0 0.0
    %2763 = vmatpush2.msra.mxu0 0.0
    %2764 = vmatprep.mubr.f32.mxu0 0.0
    %2765 = vmatmul.mubr.f32.gmra.mxu0 %v1536
    %v2766 = vpop.f32.mrf.mxu0
    %v2767 = vadd.f32 0.0, %v2766
    %v2768 = vpop.f32.mrf.mxu0
    %2769 = vmatprep.mubr.f32.mxu0 0.0
    %2770 = vmatmul.mubr.f32.gmra.mxu0 %v1539
    %v2771 = vpop.f32.mrf.mxu0
    %v2772 = vadd.f32 0.0, %v2771
    %v2773 = vpop.f32.mrf.mxu0
    %2774 = vdwg.mxu0
    %s2775 = scalar_lea.vmem %s4, 112
    %v2776 = vld [vmem:[%s2775] sm:$0xff]
    %v2777 = vld [vmem:[%s2775 + $0x8] sm:$0xf]
    %v2779 = vsel %vm1618, %v2776, 0
    %v2782 = vsel %vm1618, %v2777, 0
    %v2785 = vsel %vm1625, %v2772, 0
    %2787 = vmatprep.subr.mxu0 0.0
    %2788 = vmatpush1.msra.mxu0 0.0
    %2789 = vmatprep.subr.mxu0 0.0
    %2790 = vmatpush1.msra.mxu0 0.0
    %2791 = vmatprep.subr.mxu0 0.0
    %2792 = vmatpush1.msra.mxu0 0.0
    %2793 = vmatprep.subr.mxu0 0.0
    %2794 = vmatpush1.msra.mxu0 0.0
    %2795 = vmatprep.subr.mxu0 0.0
    %2796 = vmatpush1.msra.mxu0 0.0
    %2797 = vmatprep.subr.mxu0 0.0
    %2798 = vmatpush1.msra.mxu0 0.0
    %2799 = vmatprep.subr.mxu0 0.0
    %2800 = vmatpush1.msra.mxu0 0.0
    %2801 = vmatprep.subr.mxu0 0.0
    %2802 = vmatpush1.msra.mxu0 0.0
    %2803 = vmatprep.subr.mxu0 0.0
    %2804 = vmatpush1.msra.mxu0 0.0
    %2805 = vmatprep.subr.mxu0 0.0
    %2806 = vmatpush1.msra.mxu0 0.0
    %2807 = vmatprep.subr.mxu0 0.0
    %2808 = vmatpush1.msra.mxu0 0.0
    %2809 = vmatprep.subr.mxu0 0.0
    %2810 = vmatpush1.msra.mxu0 0.0
    %2811 = vmatprep.subr.mxu0 0.0
    %2812 = vmatpush1.msra.mxu0 0.0
    %2813 = vmatprep.subr.mxu0 0.0
    %2814 = vmatpush1.msra.mxu0 0.0
    %2815 = vmatprep.subr.mxu0 0.0
    %2816 = vmatpush1.msra.mxu0 %v2785
    %2817 = vmatprep.subr.mxu0 0.0
    %2818 = vmatpush1.msra.mxu0 %v2767
    %2819 = vmatprep.subr.mxu0 0.0
    %2820 = vmatpush2.msra.mxu0 0.0
    %2821 = vmatprep.subr.mxu0 0.0
    %2822 = vmatpush2.msra.mxu0 0.0
    %2823 = vmatprep.subr.mxu0 0.0
    %2824 = vmatpush2.msra.mxu0 0.0
    %2825 = vmatprep.subr.mxu0 0.0
    %2826 = vmatpush2.msra.mxu0 0.0
    %2827 = vmatprep.subr.mxu0 0.0
    %2828 = vmatpush2.msra.mxu0 0.0
    %2829 = vmatprep.subr.mxu0 0.0
    %2830 = vmatpush2.msra.mxu0 0.0
    %2831 = vmatprep.subr.mxu0 0.0
    %2832 = vmatpush2.msra.mxu0 0.0
    %2833 = vmatprep.subr.mxu0 0.0
    %2834 = vmatpush2.msra.mxu0 0.0
    %2835 = vmatprep.subr.mxu0 0.0
    %2836 = vmatpush2.msra.mxu0 0.0
    %2837 = vmatprep.subr.mxu0 0.0
    %2838 = vmatpush2.msra.mxu0 0.0
    %2839 = vmatprep.subr.mxu0 0.0
    %2840 = vmatpush2.msra.mxu0 0.0
    %2841 = vmatprep.subr.mxu0 0.0
    %2842 = vmatpush2.msra.mxu0 0.0
    %2843 = vmatprep.subr.mxu0 0.0
    %2844 = vmatpush2.msra.mxu0 0.0
    %2845 = vmatprep.subr.mxu0 0.0
    %2846 = vmatpush2.msra.mxu0 0.0
    %2847 = vmatprep.subr.mxu0 0.0
    %2848 = vmatpush2.msra.mxu0 0.0
    %2849 = vmatprep.subr.mxu0 0.0
    %2850 = vmatpush2.msra.mxu0 0.0
    %2851 = vmatprep.mubr.f32.mxu0 0.0
    %2852 = vmatmul.mubr.f32.gmra.mxu0 %v2779
    %v2853 = vpop.f32.mrf.mxu0
    %v2854 = vadd.f32 0.0, %v2853
    %v2855 = vpop.f32.mrf.mxu0
    %2856 = vmatprep.mubr.f32.mxu0 0.0
    %2857 = vmatmul.mubr.f32.gmra.mxu0 %v2782
    %v2858 = vpop.f32.mrf.mxu0
    %v2859 = vadd.f32 0.0, %v2858
    %v2860 = vpop.f32.mrf.mxu0
    %2861 = vdwg.mxu0
    %v2862 = vadd.f32 %v2698, %v2854
    %v2863 = vadd.f32 %v2699, %v2859
    %2864 = vmatprep.subr.mxu0 0.0
    %2865 = vmatpush1.msra.mxu0 0.0
    %2866 = vmatprep.subr.mxu0 0.0
    %2867 = vmatpush1.msra.mxu0 0.0
    %2868 = vmatprep.subr.mxu0 0.0
    %2869 = vmatpush1.msra.mxu0 0.0
    %2870 = vmatprep.subr.mxu0 0.0
    %2871 = vmatpush1.msra.mxu0 0.0
    %2872 = vmatprep.subr.mxu0 0.0
    %2873 = vmatpush1.msra.mxu0 0.0
    %2874 = vmatprep.subr.mxu0 0.0
    %2875 = vmatpush1.msra.mxu0 0.0
    %2876 = vmatprep.subr.mxu0 0.0
    %2877 = vmatpush1.msra.mxu0 0.0
    %2878 = vmatprep.subr.mxu0 0.0
    %2879 = vmatpush1.msra.mxu0 0.0
    %2880 = vmatprep.subr.mxu0 0.0
    %2881 = vmatpush1.msra.mxu0 0.0
    %2882 = vmatprep.subr.mxu0 0.0
    %2883 = vmatpush1.msra.mxu0 0.0
    %2884 = vmatprep.subr.mxu0 0.0
    %2885 = vmatpush1.msra.mxu0 0.0
    %2886 = vmatprep.subr.mxu0 0.0
    %2887 = vmatpush1.msra.mxu0 %v1368
    %2888 = vmatprep.subr.mxu0 0.0
    %2889 = vmatpush1.msra.mxu0 %v1367
    %2890 = vmatprep.subr.mxu0 0.0
    %2891 = vmatpush1.msra.mxu0 %v1366
    %2892 = vmatprep.subr.mxu0 0.0
    %2893 = vmatpush1.msra.mxu0 %v1365
    %2894 = vmatprep.subr.mxu0 0.0
    %2895 = vmatpush1.msra.mxu0 %v1364
    %2896 = vmatprep.subr.mxu0 0.0
    %2897 = vmatpush2.msra.mxu0 0.0
    %2898 = vmatprep.subr.mxu0 0.0
    %2899 = vmatpush2.msra.mxu0 0.0
    %2900 = vmatprep.subr.mxu0 0.0
    %2901 = vmatpush2.msra.mxu0 0.0
    %2902 = vmatprep.subr.mxu0 0.0
    %2903 = vmatpush2.msra.mxu0 0.0
    %2904 = vmatprep.subr.mxu0 0.0
    %2905 = vmatpush2.msra.mxu0 0.0
    %2906 = vmatprep.subr.mxu0 0.0
    %2907 = vmatpush2.msra.mxu0 0.0
    %2908 = vmatprep.subr.mxu0 0.0
    %2909 = vmatpush2.msra.mxu0 0.0
    %2910 = vmatprep.subr.mxu0 0.0
    %2911 = vmatpush2.msra.mxu0 0.0
    %2912 = vmatprep.subr.mxu0 0.0
    %2913 = vmatpush2.msra.mxu0 0.0
    %2914 = vmatprep.subr.mxu0 0.0
    %2915 = vmatpush2.msra.mxu0 0.0
    %2916 = vmatprep.subr.mxu0 0.0
    %2917 = vmatpush2.msra.mxu0 0.0
    %2918 = vmatprep.subr.mxu0 0.0
    %2919 = vmatpush2.msra.mxu0 0.0
    %2920 = vmatprep.subr.mxu0 0.0
    %2921 = vmatpush2.msra.mxu0 0.0
    %2922 = vmatprep.subr.mxu0 0.0
    %2923 = vmatpush2.msra.mxu0 0.0
    %2924 = vmatprep.subr.mxu0 0.0
    %2925 = vmatpush2.msra.mxu0 0.0
    %2926 = vmatprep.subr.mxu0 0.0
    %2927 = vmatpush2.msra.mxu0 0.0
    %2928 = vmatprep.mubr.f32.mxu0 0.0
    %2929 = vmatmul.mubr.f32.gmra.mxu0 %v1536
    %v2930 = vpop.f32.mrf.mxu0
    %v2931 = vadd.f32 0.0, %v2930
    %v2932 = vpop.f32.mrf.mxu0
    %2933 = vmatprep.mubr.f32.mxu0 0.0
    %2934 = vmatmul.mubr.f32.gmra.mxu0 %v1539
    %v2935 = vpop.f32.mrf.mxu0
    %v2936 = vadd.f32 0.0, %v2935
    %v2937 = vpop.f32.mrf.mxu0
    %2938 = vdwg.mxu0
    %s2939 = scalar_lea.vmem %s4, 128
    %v2940 = vld [vmem:[%s2939] sm:$0xff]
    %v2941 = vld [vmem:[%s2939 + $0x8] sm:$0xf]
    %v2943 = vsel %vm1618, %v2940, 0
    %v2946 = vsel %vm1618, %v2941, 0
    %v2949 = vsel %vm1625, %v2936, 0
    %2951 = vmatprep.subr.mxu0 0.0
    %2952 = vmatpush1.msra.mxu0 0.0
    %2953 = vmatprep.subr.mxu0 0.0
    %2954 = vmatpush1.msra.mxu0 0.0
    %2955 = vmatprep.subr.mxu0 0.0
    %2956 = vmatpush1.msra.mxu0 0.0
    %2957 = vmatprep.subr.mxu0 0.0
    %2958 = vmatpush1.msra.mxu0 0.0
    %2959 = vmatprep.subr.mxu0 0.0
    %2960 = vmatpush1.msra.mxu0 0.0
    %2961 = vmatprep.subr.mxu0 0.0
    %2962 = vmatpush1.msra.mxu0 0.0
    %2963 = vmatprep.subr.mxu0 0.0
    %2964 = vmatpush1.msra.mxu0 0.0
    %2965 = vmatprep.subr.mxu0 0.0
    %2966 = vmatpush1.msra.mxu0 0.0
    %2967 = vmatprep.subr.mxu0 0.0
    %2968 = vmatpush1.msra.mxu0 0.0
    %2969 = vmatprep.subr.mxu0 0.0
    %2970 = vmatpush1.msra.mxu0 0.0
    %2971 = vmatprep.subr.mxu0 0.0
    %2972 = vmatpush1.msra.mxu0 0.0
    %2973 = vmatprep.subr.mxu0 0.0
    %2974 = vmatpush1.msra.mxu0 0.0
    %2975 = vmatprep.subr.mxu0 0.0
    %2976 = vmatpush1.msra.mxu0 0.0
    %2977 = vmatprep.subr.mxu0 0.0
    %2978 = vmatpush1.msra.mxu0 0.0
    %2979 = vmatprep.subr.mxu0 0.0
    %2980 = vmatpush1.msra.mxu0 %v2949
    %2981 = vmatprep.subr.mxu0 0.0
    %2982 = vmatpush1.msra.mxu0 %v2931
    %2983 = vmatprep.subr.mxu0 0.0
    %2984 = vmatpush2.msra.mxu0 0.0
    %2985 = vmatprep.subr.mxu0 0.0
    %2986 = vmatpush2.msra.mxu0 0.0
    %2987 = vmatprep.subr.mxu0 0.0
    %2988 = vmatpush2.msra.mxu0 0.0
    %2989 = vmatprep.subr.mxu0 0.0
    %2990 = vmatpush2.msra.mxu0 0.0
    %2991 = vmatprep.subr.mxu0 0.0
    %2992 = vmatpush2.msra.mxu0 0.0
    %2993 = vmatprep.subr.mxu0 0.0
    %2994 = vmatpush2.msra.mxu0 0.0
    %2995 = vmatprep.subr.mxu0 0.0
    %2996 = vmatpush2.msra.mxu0 0.0
    %2997 = vmatprep.subr.mxu0 0.0
    %2998 = vmatpush2.msra.mxu0 0.0
    %2999 = vmatprep.subr.mxu0 0.0
    %3000 = vmatpush2.msra.mxu0 0.0
    %3001 = vmatprep.subr.mxu0 0.0
    %3002 = vmatpush2.msra.mxu0 0.0
    %3003 = vmatprep.subr.mxu0 0.0
    %3004 = vmatpush2.msra.mxu0 0.0
    %3005 = vmatprep.subr.mxu0 0.0
    %3006 = vmatpush2.msra.mxu0 0.0
    %3007 = vmatprep.subr.mxu0 0.0
    %3008 = vmatpush2.msra.mxu0 0.0
    %3009 = vmatprep.subr.mxu0 0.0
    %3010 = vmatpush2.msra.mxu0 0.0
    %3011 = vmatprep.subr.mxu0 0.0
    %3012 = vmatpush2.msra.mxu0 0.0
    %3013 = vmatprep.subr.mxu0 0.0
    %3014 = vmatpush2.msra.mxu0 0.0
    %3015 = vmatprep.mubr.f32.mxu0 0.0
    %3016 = vmatmul.mubr.f32.gmra.mxu0 %v2943
    %v3017 = vpop.f32.mrf.mxu0
    %v3018 = vadd.f32 0.0, %v3017
    %v3019 = vpop.f32.mrf.mxu0
    %3020 = vmatprep.mubr.f32.mxu0 0.0
    %3021 = vmatmul.mubr.f32.gmra.mxu0 %v2946
    %v3022 = vpop.f32.mrf.mxu0
    %v3023 = vadd.f32 0.0, %v3022
    %v3024 = vpop.f32.mrf.mxu0
    %3025 = vdwg.mxu0
    %v3026 = vadd.f32 %v2862, %v3018
    %v3027 = vadd.f32 %v2863, %v3023
    %s3028 = sld [smem:[#allocation2 + $0x1]]
    %vm3029 = vcmp.ge.f32.partialorder %v3026, 0.0
    %vm3030 = vcmp.ge.f32.partialorder %v3027, 0.0
    %v3031 = vstv %s3028
    %v3032 = vmul.f32 %v3031, %v3026
    %v3033 = vmul.f32 %v3031, %v3027
    %v3034 = vsel %vm3029, %v3026, %v3032
    %v3035 = vsel %vm3030, %v3027, %v3033
    %v3036 = vadd.f32 %v3034, %v1531
    %v3037 = vadd.f32 %v3035, %v1532
    %v3038 = vld [vmem:[%s7] sm:$0xff]
    %v3039 = vld [vmem:[%s7 + $0x8] sm:$0xf]
    %v3041 = vsel %vm59, %v3036, 0
    %v3044 = vsel %vm59, %v3037, 0
    %3046 = vmatprep.subr.mxu0 0.0
    %3047 = vmatpush1.msra.mxu0 0.0
    %3048 = vmatprep.subr.mxu0 0.0
    %3049 = vmatpush1.msra.mxu0 0.0
    %3050 = vmatprep.subr.mxu0 0.0
    %3051 = vmatpush1.msra.mxu0 0.0
    %3052 = vmatprep.subr.mxu0 0.0
    %3053 = vmatpush1.msra.mxu0 0.0
    %3054 = vmatprep.subr.mxu0 0.0
    %3055 = vmatpush1.msra.mxu0 0.0
    %3056 = vmatprep.subr.mxu0 0.0
    %3057 = vmatpush1.msra.mxu0 0.0
    %3058 = vmatprep.subr.mxu0 0.0
    %3059 = vmatpush1.msra.mxu0 0.0
    %3060 = vmatprep.subr.mxu0 0.0
    %3061 = vmatpush1.msra.mxu0 0.0
    %3062 = vmatprep.subr.mxu0 0.0
    %3063 = vmatpush1.msra.mxu0 0.0
    %3064 = vmatprep.subr.mxu0 0.0
    %3065 = vmatpush1.msra.mxu0 0.0
    %3066 = vmatprep.subr.mxu0 0.0
    %3067 = vmatpush1.msra.mxu0 0.0
    %3068 = vmatprep.subr.mxu0 0.0
    %3069 = vmatpush1.msra.mxu0 %v58
    %3070 = vmatprep.subr.mxu0 0.0
    %3071 = vmatpush1.msra.mxu0 %v57
    %3072 = vmatprep.subr.mxu0 0.0
    %3073 = vmatpush1.msra.mxu0 %v56
    %3074 = vmatprep.subr.mxu0 0.0
    %3075 = vmatpush1.msra.mxu0 %v55
    %3076 = vmatprep.subr.mxu0 0.0
    %3077 = vmatpush1.msra.mxu0 %v54
    %3078 = vmatprep.subr.mxu0 0.0
    %3079 = vmatpush2.msra.mxu0 0.0
    %3080 = vmatprep.subr.mxu0 0.0
    %3081 = vmatpush2.msra.mxu0 0.0
    %3082 = vmatprep.subr.mxu0 0.0
    %3083 = vmatpush2.msra.mxu0 0.0
    %3084 = vmatprep.subr.mxu0 0.0
    %3085 = vmatpush2.msra.mxu0 0.0
    %3086 = vmatprep.subr.mxu0 0.0
    %3087 = vmatpush2.msra.mxu0 0.0
    %3088 = vmatprep.subr.mxu0 0.0
    %3089 = vmatpush2.msra.mxu0 0.0
    %3090 = vmatprep.subr.mxu0 0.0
    %3091 = vmatpush2.msra.mxu0 0.0
    %3092 = vmatprep.subr.mxu0 0.0
    %3093 = vmatpush2.msra.mxu0 0.0
    %3094 = vmatprep.subr.mxu0 0.0
    %3095 = vmatpush2.msra.mxu0 0.0
    %3096 = vmatprep.subr.mxu0 0.0
    %3097 = vmatpush2.msra.mxu0 0.0
    %3098 = vmatprep.subr.mxu0 0.0
    %3099 = vmatpush2.msra.mxu0 0.0
    %3100 = vmatprep.subr.mxu0 0.0
    %3101 = vmatpush2.msra.mxu0 0.0
    %3102 = vmatprep.subr.mxu0 0.0
    %3103 = vmatpush2.msra.mxu0 0.0
    %3104 = vmatprep.subr.mxu0 0.0
    %3105 = vmatpush2.msra.mxu0 0.0
    %3106 = vmatprep.subr.mxu0 0.0
    %3107 = vmatpush2.msra.mxu0 0.0
    %3108 = vmatprep.subr.mxu0 0.0
    %3109 = vmatpush2.msra.mxu0 0.0
    %3110 = vmatprep.mubr.f32.mxu0 0.0
    %3111 = vmatmul.mubr.f32.gmra.mxu0 %v3041
    %v3112 = vpop.f32.mrf.mxu0
    %v3113 = vadd.f32 0.0, %v3112
    %v3114 = vpop.f32.mrf.mxu0
    %3115 = vmatprep.mubr.f32.mxu0 0.0
    %3116 = vmatmul.mubr.f32.gmra.mxu0 %v3044
    %v3117 = vpop.f32.mrf.mxu0
    %v3118 = vadd.f32 0.0, %v3117
    %v3119 = vpop.f32.mrf.mxu0
    %3120 = vdwg.mxu0
    %v3121 = vld [vmem:[%s6] sm:$0xff]
    %v3122 = vld [vmem:[%s6 + $0x8] sm:$0xf]
    %v3124 = vsel %vm1618, %v3121, 0
    %v3127 = vsel %vm1618, %v3122, 0
    %v3130 = vsel %vm1625, %v3118, 0
    %3132 = vmatprep.subr.mxu0 0.0
    %3133 = vmatpush1.msra.mxu0 0.0
    %3134 = vmatprep.subr.mxu0 0.0
    %3135 = vmatpush1.msra.mxu0 0.0
    %3136 = vmatprep.subr.mxu0 0.0
    %3137 = vmatpush1.msra.mxu0 0.0
    %3138 = vmatprep.subr.mxu0 0.0
    %3139 = vmatpush1.msra.mxu0 0.0
    %3140 = vmatprep.subr.mxu0 0.0
    %3141 = vmatpush1.msra.mxu0 0.0
    %3142 = vmatprep.subr.mxu0 0.0
    %3143 = vmatpush1.msra.mxu0 0.0
    %3144 = vmatprep.subr.mxu0 0.0
    %3145 = vmatpush1.msra.mxu0 0.0
    %3146 = vmatprep.subr.mxu0 0.0
    %3147 = vmatpush1.msra.mxu0 0.0
    %3148 = vmatprep.subr.mxu0 0.0
    %3149 = vmatpush1.msra.mxu0 0.0
    %3150 = vmatprep.subr.mxu0 0.0
    %3151 = vmatpush1.msra.mxu0 0.0
    %3152 = vmatprep.subr.mxu0 0.0
    %3153 = vmatpush1.msra.mxu0 0.0
    %3154 = vmatprep.subr.mxu0 0.0
    %3155 = vmatpush1.msra.mxu0 0.0
    %3156 = vmatprep.subr.mxu0 0.0
    %3157 = vmatpush1.msra.mxu0 0.0
    %3158 = vmatprep.subr.mxu0 0.0
    %3159 = vmatpush1.msra.mxu0 0.0
    %3160 = vmatprep.subr.mxu0 0.0
    %3161 = vmatpush1.msra.mxu0 %v3130
    %3162 = vmatprep.subr.mxu0 0.0
    %3163 = vmatpush1.msra.mxu0 %v3113
    %3164 = vmatprep.subr.mxu0 0.0
    %3165 = vmatpush2.msra.mxu0 0.0
    %3166 = vmatprep.subr.mxu0 0.0
    %3167 = vmatpush2.msra.mxu0 0.0
    %3168 = vmatprep.subr.mxu0 0.0
    %3169 = vmatpush2.msra.mxu0 0.0
    %3170 = vmatprep.subr.mxu0 0.0
    %3171 = vmatpush2.msra.mxu0 0.0
    %3172 = vmatprep.subr.mxu0 0.0
    %3173 = vmatpush2.msra.mxu0 0.0
    %3174 = vmatprep.subr.mxu0 0.0
    %3175 = vmatpush2.msra.mxu0 0.0
    %3176 = vmatprep.subr.mxu0 0.0
    %3177 = vmatpush2.msra.mxu0 0.0
    %3178 = vmatprep.subr.mxu0 0.0
    %3179 = vmatpush2.msra.mxu0 0.0
    %3180 = vmatprep.subr.mxu0 0.0
    %3181 = vmatpush2.msra.mxu0 0.0
    %3182 = vmatprep.subr.mxu0 0.0
    %3183 = vmatpush2.msra.mxu0 0.0
    %3184 = vmatprep.subr.mxu0 0.0
    %3185 = vmatpush2.msra.mxu0 0.0
    %3186 = vmatprep.subr.mxu0 0.0
    %3187 = vmatpush2.msra.mxu0 0.0
    %3188 = vmatprep.subr.mxu0 0.0
    %3189 = vmatpush2.msra.mxu0 0.0
    %3190 = vmatprep.subr.mxu0 0.0
    %3191 = vmatpush2.msra.mxu0 0.0
    %3192 = vmatprep.subr.mxu0 0.0
    %3193 = vmatpush2.msra.mxu0 0.0
    %3194 = vmatprep.subr.mxu0 0.0
    %3195 = vmatpush2.msra.mxu0 0.0
    %3196 = vmatprep.mubr.f32.mxu0 0.0
    %3197 = vmatmul.mubr.f32.gmra.mxu0 %v3124
    %v3198 = vpop.f32.mrf.mxu0
    %v3199 = vadd.f32 0.0, %v3198
    %v3200 = vpop.f32.mrf.mxu0
    %3201 = vmatprep.mubr.f32.mxu0 0.0
    %3202 = vmatmul.mubr.f32.gmra.mxu0 %v3127
    %v3203 = vpop.f32.mrf.mxu0
    %v3204 = vadd.f32 0.0, %v3203
    %v3205 = vpop.f32.mrf.mxu0
    %3206 = vdwg.mxu0
    %3208 = vset.pattern.permute.xlu0 0
    %3209 = vperm.xlu0 %3208, %v3038
    %v3210 = vpop.permute.xlu0 %3209
    %3213 = vset.pattern.permute.xlu0 0
    %3214 = vperm.xlu0 %3213, %v3039
    %v3215 = vpop.permute.xlu0 %3214
    %v3217 = vadd.f32 %v3210, %v3199
    %v3218 = vadd.f32 %v3215, %v3204
    %3219 = vmatprep.subr.mxu0 0.0
    %3220 = vmatpush1.msra.mxu0 0.0
    %3221 = vmatprep.subr.mxu0 0.0
    %3222 = vmatpush1.msra.mxu0 0.0
    %3223 = vmatprep.subr.mxu0 0.0
    %3224 = vmatpush1.msra.mxu0 0.0
    %3225 = vmatprep.subr.mxu0 0.0
    %3226 = vmatpush1.msra.mxu0 0.0
    %3227 = vmatprep.subr.mxu0 0.0
    %3228 = vmatpush1.msra.mxu0 0.0
    %3229 = vmatprep.subr.mxu0 0.0
    %3230 = vmatpush1.msra.mxu0 0.0
    %3231 = vmatprep.subr.mxu0 0.0
    %3232 = vmatpush1.msra.mxu0 0.0
    %3233 = vmatprep.subr.mxu0 0.0
    %3234 = vmatpush1.msra.mxu0 0.0
    %3235 = vmatprep.subr.mxu0 0.0
    %3236 = vmatpush1.msra.mxu0 0.0
    %3237 = vmatprep.subr.mxu0 0.0
    %3238 = vmatpush1.msra.mxu0 0.0
    %3239 = vmatprep.subr.mxu0 0.0
    %3240 = vmatpush1.msra.mxu0 0.0
    %3241 = vmatprep.subr.mxu0 0.0
    %3242 = vmatpush1.msra.mxu0 %v234
    %3243 = vmatprep.subr.mxu0 0.0
    %3244 = vmatpush1.msra.mxu0 %v233
    %3245 = vmatprep.subr.mxu0 0.0
    %3246 = vmatpush1.msra.mxu0 %v232
    %3247 = vmatprep.subr.mxu0 0.0
    %3248 = vmatpush1.msra.mxu0 %v231
    %3249 = vmatprep.subr.mxu0 0.0
    %3250 = vmatpush1.msra.mxu0 %v230
    %3251 = vmatprep.subr.mxu0 0.0
    %3252 = vmatpush2.msra.mxu0 0.0
    %3253 = vmatprep.subr.mxu0 0.0
    %3254 = vmatpush2.msra.mxu0 0.0
    %3255 = vmatprep.subr.mxu0 0.0
    %3256 = vmatpush2.msra.mxu0 0.0
    %3257 = vmatprep.subr.mxu0 0.0
    %3258 = vmatpush2.msra.mxu0 0.0
    %3259 = vmatprep.subr.mxu0 0.0
    %3260 = vmatpush2.msra.mxu0 0.0
    %3261 = vmatprep.subr.mxu0 0.0
    %3262 = vmatpush2.msra.mxu0 0.0
    %3263 = vmatprep.subr.mxu0 0.0
    %3264 = vmatpush2.msra.mxu0 0.0
    %3265 = vmatprep.subr.mxu0 0.0
    %3266 = vmatpush2.msra.mxu0 0.0
    %3267 = vmatprep.subr.mxu0 0.0
    %3268 = vmatpush2.msra.mxu0 0.0
    %3269 = vmatprep.subr.mxu0 0.0
    %3270 = vmatpush2.msra.mxu0 0.0
    %3271 = vmatprep.subr.mxu0 0.0
    %3272 = vmatpush2.msra.mxu0 0.0
    %3273 = vmatprep.subr.mxu0 0.0
    %3274 = vmatpush2.msra.mxu0 0.0
    %3275 = vmatprep.subr.mxu0 0.0
    %3276 = vmatpush2.msra.mxu0 0.0
    %3277 = vmatprep.subr.mxu0 0.0
    %3278 = vmatpush2.msra.mxu0 0.0
    %3279 = vmatprep.subr.mxu0 0.0
    %3280 = vmatpush2.msra.mxu0 0.0
    %3281 = vmatprep.subr.mxu0 0.0
    %3282 = vmatpush2.msra.mxu0 0.0
    %3283 = vmatprep.mubr.f32.mxu0 0.0
    %3284 = vmatmul.mubr.f32.gmra.mxu0 %v3041
    %v3285 = vpop.f32.mrf.mxu0
    %v3286 = vadd.f32 0.0, %v3285
    %v3287 = vpop.f32.mrf.mxu0
    %3288 = vmatprep.mubr.f32.mxu0 0.0
    %3289 = vmatmul.mubr.f32.gmra.mxu0 %v3044
    %v3290 = vpop.f32.mrf.mxu0
    %v3291 = vadd.f32 0.0, %v3290
    %v3292 = vpop.f32.mrf.mxu0
    %3293 = vdwg.mxu0
    %s3294 = scalar_lea.vmem %s6, 16
    %v3295 = vld [vmem:[%s3294] sm:$0xff]
    %v3296 = vld [vmem:[%s3294 + $0x8] sm:$0xf]
    %v3298 = vsel %vm1618, %v3295, 0
    %v3301 = vsel %vm1618, %v3296, 0
    %v3304 = vsel %vm1625, %v3291, 0
    %3306 = vmatprep.subr.mxu0 0.0
    %3307 = vmatpush1.msra.mxu0 0.0
    %3308 = vmatprep.subr.mxu0 0.0
    %3309 = vmatpush1.msra.mxu0 0.0
    %3310 = vmatprep.subr.mxu0 0.0
    %3311 = vmatpush1.msra.mxu0 0.0
    %3312 = vmatprep.subr.mxu0 0.0
    %3313 = vmatpush1.msra.mxu0 0.0
    %3314 = vmatprep.subr.mxu0 0.0
    %3315 = vmatpush1.msra.mxu0 0.0
    %3316 = vmatprep.subr.mxu0 0.0
    %3317 = vmatpush1.msra.mxu0 0.0
    %3318 = vmatprep.subr.mxu0 0.0
    %3319 = vmatpush1.msra.mxu0 0.0
    %3320 = vmatprep.subr.mxu0 0.0
    %3321 = vmatpush1.msra.mxu0 0.0
    %3322 = vmatprep.subr.mxu0 0.0
    %3323 = vmatpush1.msra.mxu0 0.0
    %3324 = vmatprep.subr.mxu0 0.0
    %3325 = vmatpush1.msra.mxu0 0.0
    %3326 = vmatprep.subr.mxu0 0.0
    %3327 = vmatpush1.msra.mxu0 0.0
    %3328 = vmatprep.subr.mxu0 0.0
    %3329 = vmatpush1.msra.mxu0 0.0
    %3330 = vmatprep.subr.mxu0 0.0
    %3331 = vmatpush1.msra.mxu0 0.0
    %3332 = vmatprep.subr.mxu0 0.0
    %3333 = vmatpush1.msra.mxu0 0.0
    %3334 = vmatprep.subr.mxu0 0.0
    %3335 = vmatpush1.msra.mxu0 %v3304
    %3336 = vmatprep.subr.mxu0 0.0
    %3337 = vmatpush1.msra.mxu0 %v3286
    %3338 = vmatprep.subr.mxu0 0.0
    %3339 = vmatpush2.msra.mxu0 0.0
    %3340 = vmatprep.subr.mxu0 0.0
    %3341 = vmatpush2.msra.mxu0 0.0
    %3342 = vmatprep.subr.mxu0 0.0
    %3343 = vmatpush2.msra.mxu0 0.0
    %3344 = vmatprep.subr.mxu0 0.0
    %3345 = vmatpush2.msra.mxu0 0.0
    %3346 = vmatprep.subr.mxu0 0.0
    %3347 = vmatpush2.msra.mxu0 0.0
    %3348 = vmatprep.subr.mxu0 0.0
    %3349 = vmatpush2.msra.mxu0 0.0
    %3350 = vmatprep.subr.mxu0 0.0
    %3351 = vmatpush2.msra.mxu0 0.0
    %3352 = vmatprep.subr.mxu0 0.0
    %3353 = vmatpush2.msra.mxu0 0.0
    %3354 = vmatprep.subr.mxu0 0.0
    %3355 = vmatpush2.msra.mxu0 0.0
    %3356 = vmatprep.subr.mxu0 0.0
    %3357 = vmatpush2.msra.mxu0 0.0
    %3358 = vmatprep.subr.mxu0 0.0
    %3359 = vmatpush2.msra.mxu0 0.0
    %3360 = vmatprep.subr.mxu0 0.0
    %3361 = vmatpush2.msra.mxu0 0.0
    %3362 = vmatprep.subr.mxu0 0.0
    %3363 = vmatpush2.msra.mxu0 0.0
    %3364 = vmatprep.subr.mxu0 0.0
    %3365 = vmatpush2.msra.mxu0 0.0
    %3366 = vmatprep.subr.mxu0 0.0
    %3367 = vmatpush2.msra.mxu0 0.0
    %3368 = vmatprep.subr.mxu0 0.0
    %3369 = vmatpush2.msra.mxu0 0.0
    %3370 = vmatprep.mubr.f32.mxu0 0.0
    %3371 = vmatmul.mubr.f32.gmra.mxu0 %v3298
    %v3372 = vpop.f32.mrf.mxu0
    %v3373 = vadd.f32 0.0, %v3372
    %v3374 = vpop.f32.mrf.mxu0
    %3375 = vmatprep.mubr.f32.mxu0 0.0
    %3376 = vmatmul.mubr.f32.gmra.mxu0 %v3301
    %v3377 = vpop.f32.mrf.mxu0
    %v3378 = vadd.f32 0.0, %v3377
    %v3379 = vpop.f32.mrf.mxu0
    %3380 = vdwg.mxu0
    %v3381 = vadd.f32 %v3217, %v3373
    %v3382 = vadd.f32 %v3218, %v3378
    %3383 = vmatprep.subr.mxu0 0.0
    %3384 = vmatpush1.msra.mxu0 0.0
    %3385 = vmatprep.subr.mxu0 0.0
    %3386 = vmatpush1.msra.mxu0 0.0
    %3387 = vmatprep.subr.mxu0 0.0
    %3388 = vmatpush1.msra.mxu0 0.0
    %3389 = vmatprep.subr.mxu0 0.0
    %3390 = vmatpush1.msra.mxu0 0.0
    %3391 = vmatprep.subr.mxu0 0.0
    %3392 = vmatpush1.msra.mxu0 0.0
    %3393 = vmatprep.subr.mxu0 0.0
    %3394 = vmatpush1.msra.mxu0 0.0
    %3395 = vmatprep.subr.mxu0 0.0
    %3396 = vmatpush1.msra.mxu0 0.0
    %3397 = vmatprep.subr.mxu0 0.0
    %3398 = vmatpush1.msra.mxu0 0.0
    %3399 = vmatprep.subr.mxu0 0.0
    %3400 = vmatpush1.msra.mxu0 0.0
    %3401 = vmatprep.subr.mxu0 0.0
    %3402 = vmatpush1.msra.mxu0 0.0
    %3403 = vmatprep.subr.mxu0 0.0
    %3404 = vmatpush1.msra.mxu0 0.0
    %3405 = vmatprep.subr.mxu0 0.0
    %3406 = vmatpush1.msra.mxu0 %v396
    %3407 = vmatprep.subr.mxu0 0.0
    %3408 = vmatpush1.msra.mxu0 %v395
    %3409 = vmatprep.subr.mxu0 0.0
    %3410 = vmatpush1.msra.mxu0 %v394
    %3411 = vmatprep.subr.mxu0 0.0
    %3412 = vmatpush1.msra.mxu0 %v393
    %3413 = vmatprep.subr.mxu0 0.0
    %3414 = vmatpush1.msra.mxu0 %v392
    %3415 = vmatprep.subr.mxu0 0.0
    %3416 = vmatpush2.msra.mxu0 0.0
    %3417 = vmatprep.subr.mxu0 0.0
    %3418 = vmatpush2.msra.mxu0 0.0
    %3419 = vmatprep.subr.mxu0 0.0
    %3420 = vmatpush2.msra.mxu0 0.0
    %3421 = vmatprep.subr.mxu0 0.0
    %3422 = vmatpush2.msra.mxu0 0.0
    %3423 = vmatprep.subr.mxu0 0.0
    %3424 = vmatpush2.msra.mxu0 0.0
    %3425 = vmatprep.subr.mxu0 0.0
    %3426 = vmatpush2.msra.mxu0 0.0
    %3427 = vmatprep.subr.mxu0 0.0
    %3428 = vmatpush2.msra.mxu0 0.0
    %3429 = vmatprep.subr.mxu0 0.0
    %3430 = vmatpush2.msra.mxu0 0.0
    %3431 = vmatprep.subr.mxu0 0.0
    %3432 = vmatpush2.msra.mxu0 0.0
    %3433 = vmatprep.subr.mxu0 0.0
    %3434 = vmatpush2.msra.mxu0 0.0
    %3435 = vmatprep.subr.mxu0 0.0
    %3436 = vmatpush2.msra.mxu0 0.0
    %3437 = vmatprep.subr.mxu0 0.0
    %3438 = vmatpush2.msra.mxu0 0.0
    %3439 = vmatprep.subr.mxu0 0.0
    %3440 = vmatpush2.msra.mxu0 0.0
    %3441 = vmatprep.subr.mxu0 0.0
    %3442 = vmatpush2.msra.mxu0 0.0
    %3443 = vmatprep.subr.mxu0 0.0
    %3444 = vmatpush2.msra.mxu0 0.0
    %3445 = vmatprep.subr.mxu0 0.0
    %3446 = vmatpush2.msra.mxu0 0.0
    %3447 = vmatprep.mubr.f32.mxu0 0.0
    %3448 = vmatmul.mubr.f32.gmra.mxu0 %v3041
    %v3449 = vpop.f32.mrf.mxu0
    %v3450 = vadd.f32 0.0, %v3449
    %v3451 = vpop.f32.mrf.mxu0
    %3452 = vmatprep.mubr.f32.mxu0 0.0
    %3453 = vmatmul.mubr.f32.gmra.mxu0 %v3044
    %v3454 = vpop.f32.mrf.mxu0
    %v3455 = vadd.f32 0.0, %v3454
    %v3456 = vpop.f32.mrf.mxu0
    %3457 = vdwg.mxu0
    %s3458 = scalar_lea.vmem %s6, 32
    %v3459 = vld [vmem:[%s3458] sm:$0xff]
    %v3460 = vld [vmem:[%s3458 + $0x8] sm:$0xf]
    %v3462 = vsel %vm1618, %v3459, 0
    %v3465 = vsel %vm1618, %v3460, 0
    %v3468 = vsel %vm1625, %v3455, 0
    %3470 = vmatprep.subr.mxu0 0.0
    %3471 = vmatpush1.msra.mxu0 0.0
    %3472 = vmatprep.subr.mxu0 0.0
    %3473 = vmatpush1.msra.mxu0 0.0
    %3474 = vmatprep.subr.mxu0 0.0
    %3475 = vmatpush1.msra.mxu0 0.0
    %3476 = vmatprep.subr.mxu0 0.0
    %3477 = vmatpush1.msra.mxu0 0.0
    %3478 = vmatprep.subr.mxu0 0.0
    %3479 = vmatpush1.msra.mxu0 0.0
    %3480 = vmatprep.subr.mxu0 0.0
    %3481 = vmatpush1.msra.mxu0 0.0
    %3482 = vmatprep.subr.mxu0 0.0
    %3483 = vmatpush1.msra.mxu0 0.0
    %3484 = vmatprep.subr.mxu0 0.0
    %3485 = vmatpush1.msra.mxu0 0.0
    %3486 = vmatprep.subr.mxu0 0.0
    %3487 = vmatpush1.msra.mxu0 0.0
    %3488 = vmatprep.subr.mxu0 0.0
    %3489 = vmatpush1.msra.mxu0 0.0
    %3490 = vmatprep.subr.mxu0 0.0
    %3491 = vmatpush1.msra.mxu0 0.0
    %3492 = vmatprep.subr.mxu0 0.0
    %3493 = vmatpush1.msra.mxu0 0.0
    %3494 = vmatprep.subr.mxu0 0.0
    %3495 = vmatpush1.msra.mxu0 0.0
    %3496 = vmatprep.subr.mxu0 0.0
    %3497 = vmatpush1.msra.mxu0 0.0
    %3498 = vmatprep.subr.mxu0 0.0
    %3499 = vmatpush1.msra.mxu0 %v3468
    %3500 = vmatprep.subr.mxu0 0.0
    %3501 = vmatpush1.msra.mxu0 %v3450
    %3502 = vmatprep.subr.mxu0 0.0
    %3503 = vmatpush2.msra.mxu0 0.0
    %3504 = vmatprep.subr.mxu0 0.0
    %3505 = vmatpush2.msra.mxu0 0.0
    %3506 = vmatprep.subr.mxu0 0.0
    %3507 = vmatpush2.msra.mxu0 0.0
    %3508 = vmatprep.subr.mxu0 0.0
    %3509 = vmatpush2.msra.mxu0 0.0
    %3510 = vmatprep.subr.mxu0 0.0
    %3511 = vmatpush2.msra.mxu0 0.0
    %3512 = vmatprep.subr.mxu0 0.0
    %3513 = vmatpush2.msra.mxu0 0.0
    %3514 = vmatprep.subr.mxu0 0.0
    %3515 = vmatpush2.msra.mxu0 0.0
    %3516 = vmatprep.subr.mxu0 0.0
    %3517 = vmatpush2.msra.mxu0 0.0
    %3518 = vmatprep.subr.mxu0 0.0
    %3519 = vmatpush2.msra.mxu0 0.0
    %3520 = vmatprep.subr.mxu0 0.0
    %3521 = vmatpush2.msra.mxu0 0.0
    %3522 = vmatprep.subr.mxu0 0.0
    %3523 = vmatpush2.msra.mxu0 0.0
    %3524 = vmatprep.subr.mxu0 0.0
    %3525 = vmatpush2.msra.mxu0 0.0
    %3526 = vmatprep.subr.mxu0 0.0
    %3527 = vmatpush2.msra.mxu0 0.0
    %3528 = vmatprep.subr.mxu0 0.0
    %3529 = vmatpush2.msra.mxu0 0.0
    %3530 = vmatprep.subr.mxu0 0.0
    %3531 = vmatpush2.msra.mxu0 0.0
    %3532 = vmatprep.subr.mxu0 0.0
    %3533 = vmatpush2.msra.mxu0 0.0
    %3534 = vmatprep.mubr.f32.mxu0 0.0
    %3535 = vmatmul.mubr.f32.gmra.mxu0 %v3462
    %v3536 = vpop.f32.mrf.mxu0
    %v3537 = vadd.f32 0.0, %v3536
    %v3538 = vpop.f32.mrf.mxu0
    %3539 = vmatprep.mubr.f32.mxu0 0.0
    %3540 = vmatmul.mubr.f32.gmra.mxu0 %v3465
    %v3541 = vpop.f32.mrf.mxu0
    %v3542 = vadd.f32 0.0, %v3541
    %v3543 = vpop.f32.mrf.mxu0
    %3544 = vdwg.mxu0
    %v3545 = vadd.f32 %v3381, %v3537
    %v3546 = vadd.f32 %v3382, %v3542
    %3547 = vmatprep.subr.mxu0 0.0
    %3548 = vmatpush1.msra.mxu0 0.0
    %3549 = vmatprep.subr.mxu0 0.0
    %3550 = vmatpush1.msra.mxu0 0.0
    %3551 = vmatprep.subr.mxu0 0.0
    %3552 = vmatpush1.msra.mxu0 0.0
    %3553 = vmatprep.subr.mxu0 0.0
    %3554 = vmatpush1.msra.mxu0 0.0
    %3555 = vmatprep.subr.mxu0 0.0
    %3556 = vmatpush1.msra.mxu0 0.0
    %3557 = vmatprep.subr.mxu0 0.0
    %3558 = vmatpush1.msra.mxu0 0.0
    %3559 = vmatprep.subr.mxu0 0.0
    %3560 = vmatpush1.msra.mxu0 0.0
    %3561 = vmatprep.subr.mxu0 0.0
    %3562 = vmatpush1.msra.mxu0 0.0
    %3563 = vmatprep.subr.mxu0 0.0
    %3564 = vmatpush1.msra.mxu0 0.0
    %3565 = vmatprep.subr.mxu0 0.0
    %3566 = vmatpush1.msra.mxu0 0.0
    %3567 = vmatprep.subr.mxu0 0.0
    %3568 = vmatpush1.msra.mxu0 0.0
    %3569 = vmatprep.subr.mxu0 0.0
    %3570 = vmatpush1.msra.mxu0 %v558
    %3571 = vmatprep.subr.mxu0 0.0
    %3572 = vmatpush1.msra.mxu0 %v557
    %3573 = vmatprep.subr.mxu0 0.0
    %3574 = vmatpush1.msra.mxu0 %v556
    %3575 = vmatprep.subr.mxu0 0.0
    %3576 = vmatpush1.msra.mxu0 %v555
    %3577 = vmatprep.subr.mxu0 0.0
    %3578 = vmatpush1.msra.mxu0 %v554
    %3579 = vmatprep.subr.mxu0 0.0
    %3580 = vmatpush2.msra.mxu0 0.0
    %3581 = vmatprep.subr.mxu0 0.0
    %3582 = vmatpush2.msra.mxu0 0.0
    %3583 = vmatprep.subr.mxu0 0.0
    %3584 = vmatpush2.msra.mxu0 0.0
    %3585 = vmatprep.subr.mxu0 0.0
    %3586 = vmatpush2.msra.mxu0 0.0
    %3587 = vmatprep.subr.mxu0 0.0
    %3588 = vmatpush2.msra.mxu0 0.0
    %3589 = vmatprep.subr.mxu0 0.0
    %3590 = vmatpush2.msra.mxu0 0.0
    %3591 = vmatprep.subr.mxu0 0.0
    %3592 = vmatpush2.msra.mxu0 0.0
    %3593 = vmatprep.subr.mxu0 0.0
    %3594 = vmatpush2.msra.mxu0 0.0
    %3595 = vmatprep.subr.mxu0 0.0
    %3596 = vmatpush2.msra.mxu0 0.0
    %3597 = vmatprep.subr.mxu0 0.0
    %3598 = vmatpush2.msra.mxu0 0.0
    %3599 = vmatprep.subr.mxu0 0.0
    %3600 = vmatpush2.msra.mxu0 0.0
    %3601 = vmatprep.subr.mxu0 0.0
    %3602 = vmatpush2.msra.mxu0 0.0
    %3603 = vmatprep.subr.mxu0 0.0
    %3604 = vmatpush2.msra.mxu0 0.0
    %3605 = vmatprep.subr.mxu0 0.0
    %3606 = vmatpush2.msra.mxu0 0.0
    %3607 = vmatprep.subr.mxu0 0.0
    %3608 = vmatpush2.msra.mxu0 0.0
    %3609 = vmatprep.subr.mxu0 0.0
    %3610 = vmatpush2.msra.mxu0 0.0
    %3611 = vmatprep.mubr.f32.mxu0 0.0
    %3612 = vmatmul.mubr.f32.gmra.mxu0 %v3041
    %v3613 = vpop.f32.mrf.mxu0
    %v3614 = vadd.f32 0.0, %v3613
    %v3615 = vpop.f32.mrf.mxu0
    %3616 = vmatprep.mubr.f32.mxu0 0.0
    %3617 = vmatmul.mubr.f32.gmra.mxu0 %v3044
    %v3618 = vpop.f32.mrf.mxu0
    %v3619 = vadd.f32 0.0, %v3618
    %v3620 = vpop.f32.mrf.mxu0
    %3621 = vdwg.mxu0
    %s3622 = scalar_lea.vmem %s6, 48
    %v3623 = vld [vmem:[%s3622] sm:$0xff]
    %v3624 = vld [vmem:[%s3622 + $0x8] sm:$0xf]
    %v3626 = vsel %vm1618, %v3623, 0
    %v3629 = vsel %vm1618, %v3624, 0
    %v3632 = vsel %vm1625, %v3619, 0
    %3634 = vmatprep.subr.mxu0 0.0
    %3635 = vmatpush1.msra.mxu0 0.0
    %3636 = vmatprep.subr.mxu0 0.0
    %3637 = vmatpush1.msra.mxu0 0.0
    %3638 = vmatprep.subr.mxu0 0.0
    %3639 = vmatpush1.msra.mxu0 0.0
    %3640 = vmatprep.subr.mxu0 0.0
    %3641 = vmatpush1.msra.mxu0 0.0
    %3642 = vmatprep.subr.mxu0 0.0
    %3643 = vmatpush1.msra.mxu0 0.0
    %3644 = vmatprep.subr.mxu0 0.0
    %3645 = vmatpush1.msra.mxu0 0.0
    %3646 = vmatprep.subr.mxu0 0.0
    %3647 = vmatpush1.msra.mxu0 0.0
    %3648 = vmatprep.subr.mxu0 0.0
    %3649 = vmatpush1.msra.mxu0 0.0
    %3650 = vmatprep.subr.mxu0 0.0
    %3651 = vmatpush1.msra.mxu0 0.0
    %3652 = vmatprep.subr.mxu0 0.0
    %3653 = vmatpush1.msra.mxu0 0.0
    %3654 = vmatprep.subr.mxu0 0.0
    %3655 = vmatpush1.msra.mxu0 0.0
    %3656 = vmatprep.subr.mxu0 0.0
    %3657 = vmatpush1.msra.mxu0 0.0
    %3658 = vmatprep.subr.mxu0 0.0
    %3659 = vmatpush1.msra.mxu0 0.0
    %3660 = vmatprep.subr.mxu0 0.0
    %3661 = vmatpush1.msra.mxu0 0.0
    %3662 = vmatprep.subr.mxu0 0.0
    %3663 = vmatpush1.msra.mxu0 %v3632
    %3664 = vmatprep.subr.mxu0 0.0
    %3665 = vmatpush1.msra.mxu0 %v3614
    %3666 = vmatprep.subr.mxu0 0.0
    %3667 = vmatpush2.msra.mxu0 0.0
    %3668 = vmatprep.subr.mxu0 0.0
    %3669 = vmatpush2.msra.mxu0 0.0
    %3670 = vmatprep.subr.mxu0 0.0
    %3671 = vmatpush2.msra.mxu0 0.0
    %3672 = vmatprep.subr.mxu0 0.0
    %3673 = vmatpush2.msra.mxu0 0.0
    %3674 = vmatprep.subr.mxu0 0.0
    %3675 = vmatpush2.msra.mxu0 0.0
    %3676 = vmatprep.subr.mxu0 0.0
    %3677 = vmatpush2.msra.mxu0 0.0
    %3678 = vmatprep.subr.mxu0 0.0
    %3679 = vmatpush2.msra.mxu0 0.0
    %3680 = vmatprep.subr.mxu0 0.0
    %3681 = vmatpush2.msra.mxu0 0.0
    %3682 = vmatprep.subr.mxu0 0.0
    %3683 = vmatpush2.msra.mxu0 0.0
    %3684 = vmatprep.subr.mxu0 0.0
    %3685 = vmatpush2.msra.mxu0 0.0
    %3686 = vmatprep.subr.mxu0 0.0
    %3687 = vmatpush2.msra.mxu0 0.0
    %3688 = vmatprep.subr.mxu0 0.0
    %3689 = vmatpush2.msra.mxu0 0.0
    %3690 = vmatprep.subr.mxu0 0.0
    %3691 = vmatpush2.msra.mxu0 0.0
    %3692 = vmatprep.subr.mxu0 0.0
    %3693 = vmatpush2.msra.mxu0 0.0
    %3694 = vmatprep.subr.mxu0 0.0
    %3695 = vmatpush2.msra.mxu0 0.0
    %3696 = vmatprep.subr.mxu0 0.0
    %3697 = vmatpush2.msra.mxu0 0.0
    %3698 = vmatprep.mubr.f32.mxu0 0.0
    %3699 = vmatmul.mubr.f32.gmra.mxu0 %v3626
    %v3700 = vpop.f32.mrf.mxu0
    %v3701 = vadd.f32 0.0, %v3700
    %v3702 = vpop.f32.mrf.mxu0
    %3703 = vmatprep.mubr.f32.mxu0 0.0
    %3704 = vmatmul.mubr.f32.gmra.mxu0 %v3629
    %v3705 = vpop.f32.mrf.mxu0
    %v3706 = vadd.f32 0.0, %v3705
    %v3707 = vpop.f32.mrf.mxu0
    %3708 = vdwg.mxu0
    %v3709 = vadd.f32 %v3545, %v3701
    %v3710 = vadd.f32 %v3546, %v3706
    %3711 = vmatprep.subr.mxu0 0.0
    %3712 = vmatpush1.msra.mxu0 0.0
    %3713 = vmatprep.subr.mxu0 0.0
    %3714 = vmatpush1.msra.mxu0 0.0
    %3715 = vmatprep.subr.mxu0 0.0
    %3716 = vmatpush1.msra.mxu0 0.0
    %3717 = vmatprep.subr.mxu0 0.0
    %3718 = vmatpush1.msra.mxu0 0.0
    %3719 = vmatprep.subr.mxu0 0.0
    %3720 = vmatpush1.msra.mxu0 0.0
    %3721 = vmatprep.subr.mxu0 0.0
    %3722 = vmatpush1.msra.mxu0 0.0
    %3723 = vmatprep.subr.mxu0 0.0
    %3724 = vmatpush1.msra.mxu0 0.0
    %3725 = vmatprep.subr.mxu0 0.0
    %3726 = vmatpush1.msra.mxu0 0.0
    %3727 = vmatprep.subr.mxu0 0.0
    %3728 = vmatpush1.msra.mxu0 0.0
    %3729 = vmatprep.subr.mxu0 0.0
    %3730 = vmatpush1.msra.mxu0 0.0
    %3731 = vmatprep.subr.mxu0 0.0
    %3732 = vmatpush1.msra.mxu0 0.0
    %3733 = vmatprep.subr.mxu0 0.0
    %3734 = vmatpush1.msra.mxu0 %v720
    %3735 = vmatprep.subr.mxu0 0.0
    %3736 = vmatpush1.msra.mxu0 %v719
    %3737 = vmatprep.subr.mxu0 0.0
    %3738 = vmatpush1.msra.mxu0 %v718
    %3739 = vmatprep.subr.mxu0 0.0
    %3740 = vmatpush1.msra.mxu0 %v717
    %3741 = vmatprep.subr.mxu0 0.0
    %3742 = vmatpush1.msra.mxu0 %v716
    %3743 = vmatprep.subr.mxu0 0.0
    %3744 = vmatpush2.msra.mxu0 0.0
    %3745 = vmatprep.subr.mxu0 0.0
    %3746 = vmatpush2.msra.mxu0 0.0
    %3747 = vmatprep.subr.mxu0 0.0
    %3748 = vmatpush2.msra.mxu0 0.0
    %3749 = vmatprep.subr.mxu0 0.0
    %3750 = vmatpush2.msra.mxu0 0.0
    %3751 = vmatprep.subr.mxu0 0.0
    %3752 = vmatpush2.msra.mxu0 0.0
    %3753 = vmatprep.subr.mxu0 0.0
    %3754 = vmatpush2.msra.mxu0 0.0
    %3755 = vmatprep.subr.mxu0 0.0
    %3756 = vmatpush2.msra.mxu0 0.0
    %3757 = vmatprep.subr.mxu0 0.0
    %3758 = vmatpush2.msra.mxu0 0.0
    %3759 = vmatprep.subr.mxu0 0.0
    %3760 = vmatpush2.msra.mxu0 0.0
    %3761 = vmatprep.subr.mxu0 0.0
    %3762 = vmatpush2.msra.mxu0 0.0
    %3763 = vmatprep.subr.mxu0 0.0
    %3764 = vmatpush2.msra.mxu0 0.0
    %3765 = vmatprep.subr.mxu0 0.0
    %3766 = vmatpush2.msra.mxu0 0.0
    %3767 = vmatprep.subr.mxu0 0.0
    %3768 = vmatpush2.msra.mxu0 0.0
    %3769 = vmatprep.subr.mxu0 0.0
    %3770 = vmatpush2.msra.mxu0 0.0
    %3771 = vmatprep.subr.mxu0 0.0
    %3772 = vmatpush2.msra.mxu0 0.0
    %3773 = vmatprep.subr.mxu0 0.0
    %3774 = vmatpush2.msra.mxu0 0.0
    %3775 = vmatprep.mubr.f32.mxu0 0.0
    %3776 = vmatmul.mubr.f32.gmra.mxu0 %v3041
    %v3777 = vpop.f32.mrf.mxu0
    %v3778 = vadd.f32 0.0, %v3777
    %v3779 = vpop.f32.mrf.mxu0
    %3780 = vmatprep.mubr.f32.mxu0 0.0
    %3781 = vmatmul.mubr.f32.gmra.mxu0 %v3044
    %v3782 = vpop.f32.mrf.mxu0
    %v3783 = vadd.f32 0.0, %v3782
    %v3784 = vpop.f32.mrf.mxu0
    %3785 = vdwg.mxu0
    %s3786 = scalar_lea.vmem %s6, 64
    %v3787 = vld [vmem:[%s3786] sm:$0xff]
    %v3788 = vld [vmem:[%s3786 + $0x8] sm:$0xf]
    %v3790 = vsel %vm1618, %v3787, 0
    %v3793 = vsel %vm1618, %v3788, 0
    %v3796 = vsel %vm1625, %v3783, 0
    %3798 = vmatprep.subr.mxu0 0.0
    %3799 = vmatpush1.msra.mxu0 0.0
    %3800 = vmatprep.subr.mxu0 0.0
    %3801 = vmatpush1.msra.mxu0 0.0
    %3802 = vmatprep.subr.mxu0 0.0
    %3803 = vmatpush1.msra.mxu0 0.0
    %3804 = vmatprep.subr.mxu0 0.0
    %3805 = vmatpush1.msra.mxu0 0.0
    %3806 = vmatprep.subr.mxu0 0.0
    %3807 = vmatpush1.msra.mxu0 0.0
    %3808 = vmatprep.subr.mxu0 0.0
    %3809 = vmatpush1.msra.mxu0 0.0
    %3810 = vmatprep.subr.mxu0 0.0
    %3811 = vmatpush1.msra.mxu0 0.0
    %3812 = vmatprep.subr.mxu0 0.0
    %3813 = vmatpush1.msra.mxu0 0.0
    %3814 = vmatprep.subr.mxu0 0.0
    %3815 = vmatpush1.msra.mxu0 0.0
    %3816 = vmatprep.subr.mxu0 0.0
    %3817 = vmatpush1.msra.mxu0 0.0
    %3818 = vmatprep.subr.mxu0 0.0
    %3819 = vmatpush1.msra.mxu0 0.0
    %3820 = vmatprep.subr.mxu0 0.0
    %3821 = vmatpush1.msra.mxu0 0.0
    %3822 = vmatprep.subr.mxu0 0.0
    %3823 = vmatpush1.msra.mxu0 0.0
    %3824 = vmatprep.subr.mxu0 0.0
    %3825 = vmatpush1.msra.mxu0 0.0
    %3826 = vmatprep.subr.mxu0 0.0
    %3827 = vmatpush1.msra.mxu0 %v3796
    %3828 = vmatprep.subr.mxu0 0.0
    %3829 = vmatpush1.msra.mxu0 %v3778
    %3830 = vmatprep.subr.mxu0 0.0
    %3831 = vmatpush2.msra.mxu0 0.0
    %3832 = vmatprep.subr.mxu0 0.0
    %3833 = vmatpush2.msra.mxu0 0.0
    %3834 = vmatprep.subr.mxu0 0.0
    %3835 = vmatpush2.msra.mxu0 0.0
    %3836 = vmatprep.subr.mxu0 0.0
    %3837 = vmatpush2.msra.mxu0 0.0
    %3838 = vmatprep.subr.mxu0 0.0
    %3839 = vmatpush2.msra.mxu0 0.0
    %3840 = vmatprep.subr.mxu0 0.0
    %3841 = vmatpush2.msra.mxu0 0.0
    %3842 = vmatprep.subr.mxu0 0.0
    %3843 = vmatpush2.msra.mxu0 0.0
    %3844 = vmatprep.subr.mxu0 0.0
    %3845 = vmatpush2.msra.mxu0 0.0
    %3846 = vmatprep.subr.mxu0 0.0
    %3847 = vmatpush2.msra.mxu0 0.0
    %3848 = vmatprep.subr.mxu0 0.0
    %3849 = vmatpush2.msra.mxu0 0.0
    %3850 = vmatprep.subr.mxu0 0.0
    %3851 = vmatpush2.msra.mxu0 0.0
    %3852 = vmatprep.subr.mxu0 0.0
    %3853 = vmatpush2.msra.mxu0 0.0
    %3854 = vmatprep.subr.mxu0 0.0
    %3855 = vmatpush2.msra.mxu0 0.0
    %3856 = vmatprep.subr.mxu0 0.0
    %3857 = vmatpush2.msra.mxu0 0.0
    %3858 = vmatprep.subr.mxu0 0.0
    %3859 = vmatpush2.msra.mxu0 0.0
    %3860 = vmatprep.subr.mxu0 0.0
    %3861 = vmatpush2.msra.mxu0 0.0
    %3862 = vmatprep.mubr.f32.mxu0 0.0
    %3863 = vmatmul.mubr.f32.gmra.mxu0 %v3790
    %v3864 = vpop.f32.mrf.mxu0
    %v3865 = vadd.f32 0.0, %v3864
    %v3866 = vpop.f32.mrf.mxu0
    %3867 = vmatprep.mubr.f32.mxu0 0.0
    %3868 = vmatmul.mubr.f32.gmra.mxu0 %v3793
    %v3869 = vpop.f32.mrf.mxu0
    %v3870 = vadd.f32 0.0, %v3869
    %v3871 = vpop.f32.mrf.mxu0
    %3872 = vdwg.mxu0
    %v3873 = vadd.f32 %v3709, %v3865
    %v3874 = vadd.f32 %v3710, %v3870
    %3875 = vmatprep.subr.mxu0 0.0
    %3876 = vmatpush1.msra.mxu0 0.0
    %3877 = vmatprep.subr.mxu0 0.0
    %3878 = vmatpush1.msra.mxu0 0.0
    %3879 = vmatprep.subr.mxu0 0.0
    %3880 = vmatpush1.msra.mxu0 0.0
    %3881 = vmatprep.subr.mxu0 0.0
    %3882 = vmatpush1.msra.mxu0 0.0
    %3883 = vmatprep.subr.mxu0 0.0
    %3884 = vmatpush1.msra.mxu0 0.0
    %3885 = vmatprep.subr.mxu0 0.0
    %3886 = vmatpush1.msra.mxu0 0.0
    %3887 = vmatprep.subr.mxu0 0.0
    %3888 = vmatpush1.msra.mxu0 0.0
    %3889 = vmatprep.subr.mxu0 0.0
    %3890 = vmatpush1.msra.mxu0 0.0
    %3891 = vmatprep.subr.mxu0 0.0
    %3892 = vmatpush1.msra.mxu0 0.0
    %3893 = vmatprep.subr.mxu0 0.0
    %3894 = vmatpush1.msra.mxu0 0.0
    %3895 = vmatprep.subr.mxu0 0.0
    %3896 = vmatpush1.msra.mxu0 0.0
    %3897 = vmatprep.subr.mxu0 0.0
    %3898 = vmatpush1.msra.mxu0 %v882
    %3899 = vmatprep.subr.mxu0 0.0
    %3900 = vmatpush1.msra.mxu0 %v881
    %3901 = vmatprep.subr.mxu0 0.0
    %3902 = vmatpush1.msra.mxu0 %v880
    %3903 = vmatprep.subr.mxu0 0.0
    %3904 = vmatpush1.msra.mxu0 %v879
    %3905 = vmatprep.subr.mxu0 0.0
    %3906 = vmatpush1.msra.mxu0 %v878
    %3907 = vmatprep.subr.mxu0 0.0
    %3908 = vmatpush2.msra.mxu0 0.0
    %3909 = vmatprep.subr.mxu0 0.0
    %3910 = vmatpush2.msra.mxu0 0.0
    %3911 = vmatprep.subr.mxu0 0.0
    %3912 = vmatpush2.msra.mxu0 0.0
    %3913 = vmatprep.subr.mxu0 0.0
    %3914 = vmatpush2.msra.mxu0 0.0
    %3915 = vmatprep.subr.mxu0 0.0
    %3916 = vmatpush2.msra.mxu0 0.0
    %3917 = vmatprep.subr.mxu0 0.0
    %3918 = vmatpush2.msra.mxu0 0.0
    %3919 = vmatprep.subr.mxu0 0.0
    %3920 = vmatpush2.msra.mxu0 0.0
    %3921 = vmatprep.subr.mxu0 0.0
    %3922 = vmatpush2.msra.mxu0 0.0
    %3923 = vmatprep.subr.mxu0 0.0
    %3924 = vmatpush2.msra.mxu0 0.0
    %3925 = vmatprep.subr.mxu0 0.0
    %3926 = vmatpush2.msra.mxu0 0.0
    %3927 = vmatprep.subr.mxu0 0.0
    %3928 = vmatpush2.msra.mxu0 0.0
    %3929 = vmatprep.subr.mxu0 0.0
    %3930 = vmatpush2.msra.mxu0 0.0
    %3931 = vmatprep.subr.mxu0 0.0
    %3932 = vmatpush2.msra.mxu0 0.0
    %3933 = vmatprep.subr.mxu0 0.0
    %3934 = vmatpush2.msra.mxu0 0.0
    %3935 = vmatprep.subr.mxu0 0.0
    %3936 = vmatpush2.msra.mxu0 0.0
    %3937 = vmatprep.subr.mxu0 0.0
    %3938 = vmatpush2.msra.mxu0 0.0
    %3939 = vmatprep.mubr.f32.mxu0 0.0
    %3940 = vmatmul.mubr.f32.gmra.mxu0 %v3041
    %v3941 = vpop.f32.mrf.mxu0
    %v3942 = vadd.f32 0.0, %v3941
    %v3943 = vpop.f32.mrf.mxu0
    %3944 = vmatprep.mubr.f32.mxu0 0.0
    %3945 = vmatmul.mubr.f32.gmra.mxu0 %v3044
    %v3946 = vpop.f32.mrf.mxu0
    %v3947 = vadd.f32 0.0, %v3946
    %v3948 = vpop.f32.mrf.mxu0
    %3949 = vdwg.mxu0
    %s3950 = scalar_lea.vmem %s6, 80
    %v3951 = vld [vmem:[%s3950] sm:$0xff]
    %v3952 = vld [vmem:[%s3950 + $0x8] sm:$0xf]
    %v3954 = vsel %vm1618, %v3951, 0
    %v3957 = vsel %vm1618, %v3952, 0
    %v3960 = vsel %vm1625, %v3947, 0
    %3962 = vmatprep.subr.mxu0 0.0
    %3963 = vmatpush1.msra.mxu0 0.0
    %3964 = vmatprep.subr.mxu0 0.0
    %3965 = vmatpush1.msra.mxu0 0.0
    %3966 = vmatprep.subr.mxu0 0.0
    %3967 = vmatpush1.msra.mxu0 0.0
    %3968 = vmatprep.subr.mxu0 0.0
    %3969 = vmatpush1.msra.mxu0 0.0
    %3970 = vmatprep.subr.mxu0 0.0
    %3971 = vmatpush1.msra.mxu0 0.0
    %3972 = vmatprep.subr.mxu0 0.0
    %3973 = vmatpush1.msra.mxu0 0.0
    %3974 = vmatprep.subr.mxu0 0.0
    %3975 = vmatpush1.msra.mxu0 0.0
    %3976 = vmatprep.subr.mxu0 0.0
    %3977 = vmatpush1.msra.mxu0 0.0
    %3978 = vmatprep.subr.mxu0 0.0
    %3979 = vmatpush1.msra.mxu0 0.0
    %3980 = vmatprep.subr.mxu0 0.0
    %3981 = vmatpush1.msra.mxu0 0.0
    %3982 = vmatprep.subr.mxu0 0.0
    %3983 = vmatpush1.msra.mxu0 0.0
    %3984 = vmatprep.subr.mxu0 0.0
    %3985 = vmatpush1.msra.mxu0 0.0
    %3986 = vmatprep.subr.mxu0 0.0
    %3987 = vmatpush1.msra.mxu0 0.0
    %3988 = vmatprep.subr.mxu0 0.0
    %3989 = vmatpush1.msra.mxu0 0.0
    %3990 = vmatprep.subr.mxu0 0.0
    %3991 = vmatpush1.msra.mxu0 %v3960
    %3992 = vmatprep.subr.mxu0 0.0
    %3993 = vmatpush1.msra.mxu0 %v3942
    %3994 = vmatprep.subr.mxu0 0.0
    %3995 = vmatpush2.msra.mxu0 0.0
    %3996 = vmatprep.subr.mxu0 0.0
    %3997 = vmatpush2.msra.mxu0 0.0
    %3998 = vmatprep.subr.mxu0 0.0
    %3999 = vmatpush2.msra.mxu0 0.0
    %4000 = vmatprep.subr.mxu0 0.0
    %4001 = vmatpush2.msra.mxu0 0.0
    %4002 = vmatprep.subr.mxu0 0.0
    %4003 = vmatpush2.msra.mxu0 0.0
    %4004 = vmatprep.subr.mxu0 0.0
    %4005 = vmatpush2.msra.mxu0 0.0
    %4006 = vmatprep.subr.mxu0 0.0
    %4007 = vmatpush2.msra.mxu0 0.0
    %4008 = vmatprep.subr.mxu0 0.0
    %4009 = vmatpush2.msra.mxu0 0.0
    %4010 = vmatprep.subr.mxu0 0.0
    %4011 = vmatpush2.msra.mxu0 0.0
    %4012 = vmatprep.subr.mxu0 0.0
    %4013 = vmatpush2.msra.mxu0 0.0
    %4014 = vmatprep.subr.mxu0 0.0
    %4015 = vmatpush2.msra.mxu0 0.0
    %4016 = vmatprep.subr.mxu0 0.0
    %4017 = vmatpush2.msra.mxu0 0.0
    %4018 = vmatprep.subr.mxu0 0.0
    %4019 = vmatpush2.msra.mxu0 0.0
    %4020 = vmatprep.subr.mxu0 0.0
    %4021 = vmatpush2.msra.mxu0 0.0
    %4022 = vmatprep.subr.mxu0 0.0
    %4023 = vmatpush2.msra.mxu0 0.0
    %4024 = vmatprep.subr.mxu0 0.0
    %4025 = vmatpush2.msra.mxu0 0.0
    %4026 = vmatprep.mubr.f32.mxu0 0.0
    %4027 = vmatmul.mubr.f32.gmra.mxu0 %v3954
    %v4028 = vpop.f32.mrf.mxu0
    %v4029 = vadd.f32 0.0, %v4028
    %v4030 = vpop.f32.mrf.mxu0
    %4031 = vmatprep.mubr.f32.mxu0 0.0
    %4032 = vmatmul.mubr.f32.gmra.mxu0 %v3957
    %v4033 = vpop.f32.mrf.mxu0
    %v4034 = vadd.f32 0.0, %v4033
    %v4035 = vpop.f32.mrf.mxu0
    %4036 = vdwg.mxu0
    %v4037 = vadd.f32 %v3873, %v4029
    %v4038 = vadd.f32 %v3874, %v4034
    %4039 = vmatprep.subr.mxu0 0.0
    %4040 = vmatpush1.msra.mxu0 0.0
    %4041 = vmatprep.subr.mxu0 0.0
    %4042 = vmatpush1.msra.mxu0 0.0
    %4043 = vmatprep.subr.mxu0 0.0
    %4044 = vmatpush1.msra.mxu0 0.0
    %4045 = vmatprep.subr.mxu0 0.0
    %4046 = vmatpush1.msra.mxu0 0.0
    %4047 = vmatprep.subr.mxu0 0.0
    %4048 = vmatpush1.msra.mxu0 0.0
    %4049 = vmatprep.subr.mxu0 0.0
    %4050 = vmatpush1.msra.mxu0 0.0
    %4051 = vmatprep.subr.mxu0 0.0
    %4052 = vmatpush1.msra.mxu0 0.0
    %4053 = vmatprep.subr.mxu0 0.0
    %4054 = vmatpush1.msra.mxu0 0.0
    %4055 = vmatprep.subr.mxu0 0.0
    %4056 = vmatpush1.msra.mxu0 0.0
    %4057 = vmatprep.subr.mxu0 0.0
    %4058 = vmatpush1.msra.mxu0 0.0
    %4059 = vmatprep.subr.mxu0 0.0
    %4060 = vmatpush1.msra.mxu0 0.0
    %4061 = vmatprep.subr.mxu0 0.0
    %4062 = vmatpush1.msra.mxu0 %v1044
    %4063 = vmatprep.subr.mxu0 0.0
    %4064 = vmatpush1.msra.mxu0 %v1043
    %4065 = vmatprep.subr.mxu0 0.0
    %4066 = vmatpush1.msra.mxu0 %v1042
    %4067 = vmatprep.subr.mxu0 0.0
    %4068 = vmatpush1.msra.mxu0 %v1041
    %4069 = vmatprep.subr.mxu0 0.0
    %4070 = vmatpush1.msra.mxu0 %v1040
    %4071 = vmatprep.subr.mxu0 0.0
    %4072 = vmatpush2.msra.mxu0 0.0
    %4073 = vmatprep.subr.mxu0 0.0
    %4074 = vmatpush2.msra.mxu0 0.0
    %4075 = vmatprep.subr.mxu0 0.0
    %4076 = vmatpush2.msra.mxu0 0.0
    %4077 = vmatprep.subr.mxu0 0.0
    %4078 = vmatpush2.msra.mxu0 0.0
    %4079 = vmatprep.subr.mxu0 0.0
    %4080 = vmatpush2.msra.mxu0 0.0
    %4081 = vmatprep.subr.mxu0 0.0
    %4082 = vmatpush2.msra.mxu0 0.0
    %4083 = vmatprep.subr.mxu0 0.0
    %4084 = vmatpush2.msra.mxu0 0.0
    %4085 = vmatprep.subr.mxu0 0.0
    %4086 = vmatpush2.msra.mxu0 0.0
    %4087 = vmatprep.subr.mxu0 0.0
    %4088 = vmatpush2.msra.mxu0 0.0
    %4089 = vmatprep.subr.mxu0 0.0
    %4090 = vmatpush2.msra.mxu0 0.0
    %4091 = vmatprep.subr.mxu0 0.0
    %4092 = vmatpush2.msra.mxu0 0.0
    %4093 = vmatprep.subr.mxu0 0.0
    %4094 = vmatpush2.msra.mxu0 0.0
    %4095 = vmatprep.subr.mxu0 0.0
    %4096 = vmatpush2.msra.mxu0 0.0
    %4097 = vmatprep.subr.mxu0 0.0
    %4098 = vmatpush2.msra.mxu0 0.0
    %4099 = vmatprep.subr.mxu0 0.0
    %4100 = vmatpush2.msra.mxu0 0.0
    %4101 = vmatprep.subr.mxu0 0.0
    %4102 = vmatpush2.msra.mxu0 0.0
    %4103 = vmatprep.mubr.f32.mxu0 0.0
    %4104 = vmatmul.mubr.f32.gmra.mxu0 %v3041
    %v4105 = vpop.f32.mrf.mxu0
    %v4106 = vadd.f32 0.0, %v4105
    %v4107 = vpop.f32.mrf.mxu0
    %4108 = vmatprep.mubr.f32.mxu0 0.0
    %4109 = vmatmul.mubr.f32.gmra.mxu0 %v3044
    %v4110 = vpop.f32.mrf.mxu0
    %v4111 = vadd.f32 0.0, %v4110
    %v4112 = vpop.f32.mrf.mxu0
    %4113 = vdwg.mxu0
    %s4114 = scalar_lea.vmem %s6, 96
    %v4115 = vld [vmem:[%s4114] sm:$0xff]
    %v4116 = vld [vmem:[%s4114 + $0x8] sm:$0xf]
    %v4118 = vsel %vm1618, %v4115, 0
    %v4121 = vsel %vm1618, %v4116, 0
    %v4124 = vsel %vm1625, %v4111, 0
    %4126 = vmatprep.subr.mxu0 0.0
    %4127 = vmatpush1.msra.mxu0 0.0
    %4128 = vmatprep.subr.mxu0 0.0
    %4129 = vmatpush1.msra.mxu0 0.0
    %4130 = vmatprep.subr.mxu0 0.0
    %4131 = vmatpush1.msra.mxu0 0.0
    %4132 = vmatprep.subr.mxu0 0.0
    %4133 = vmatpush1.msra.mxu0 0.0
    %4134 = vmatprep.subr.mxu0 0.0
    %4135 = vmatpush1.msra.mxu0 0.0
    %4136 = vmatprep.subr.mxu0 0.0
    %4137 = vmatpush1.msra.mxu0 0.0
    %4138 = vmatprep.subr.mxu0 0.0
    %4139 = vmatpush1.msra.mxu0 0.0
    %4140 = vmatprep.subr.mxu0 0.0
    %4141 = vmatpush1.msra.mxu0 0.0
    %4142 = vmatprep.subr.mxu0 0.0
    %4143 = vmatpush1.msra.mxu0 0.0
    %4144 = vmatprep.subr.mxu0 0.0
    %4145 = vmatpush1.msra.mxu0 0.0
    %4146 = vmatprep.subr.mxu0 0.0
    %4147 = vmatpush1.msra.mxu0 0.0
    %4148 = vmatprep.subr.mxu0 0.0
    %4149 = vmatpush1.msra.mxu0 0.0
    %4150 = vmatprep.subr.mxu0 0.0
    %4151 = vmatpush1.msra.mxu0 0.0
    %4152 = vmatprep.subr.mxu0 0.0
    %4153 = vmatpush1.msra.mxu0 0.0
    %4154 = vmatprep.subr.mxu0 0.0
    %4155 = vmatpush1.msra.mxu0 %v4124
    %4156 = vmatprep.subr.mxu0 0.0
    %4157 = vmatpush1.msra.mxu0 %v4106
    %4158 = vmatprep.subr.mxu0 0.0
    %4159 = vmatpush2.msra.mxu0 0.0
    %4160 = vmatprep.subr.mxu0 0.0
    %4161 = vmatpush2.msra.mxu0 0.0
    %4162 = vmatprep.subr.mxu0 0.0
    %4163 = vmatpush2.msra.mxu0 0.0
    %4164 = vmatprep.subr.mxu0 0.0
    %4165 = vmatpush2.msra.mxu0 0.0
    %4166 = vmatprep.subr.mxu0 0.0
    %4167 = vmatpush2.msra.mxu0 0.0
    %4168 = vmatprep.subr.mxu0 0.0
    %4169 = vmatpush2.msra.mxu0 0.0
    %4170 = vmatprep.subr.mxu0 0.0
    %4171 = vmatpush2.msra.mxu0 0.0
    %4172 = vmatprep.subr.mxu0 0.0
    %4173 = vmatpush2.msra.mxu0 0.0
    %4174 = vmatprep.subr.mxu0 0.0
    %4175 = vmatpush2.msra.mxu0 0.0
    %4176 = vmatprep.subr.mxu0 0.0
    %4177 = vmatpush2.msra.mxu0 0.0
    %4178 = vmatprep.subr.mxu0 0.0
    %4179 = vmatpush2.msra.mxu0 0.0
    %4180 = vmatprep.subr.mxu0 0.0
    %4181 = vmatpush2.msra.mxu0 0.0
    %4182 = vmatprep.subr.mxu0 0.0
    %4183 = vmatpush2.msra.mxu0 0.0
    %4184 = vmatprep.subr.mxu0 0.0
    %4185 = vmatpush2.msra.mxu0 0.0
    %4186 = vmatprep.subr.mxu0 0.0
    %4187 = vmatpush2.msra.mxu0 0.0
    %4188 = vmatprep.subr.mxu0 0.0
    %4189 = vmatpush2.msra.mxu0 0.0
    %4190 = vmatprep.mubr.f32.mxu0 0.0
    %4191 = vmatmul.mubr.f32.gmra.mxu0 %v4118
    %v4192 = vpop.f32.mrf.mxu0
    %v4193 = vadd.f32 0.0, %v4192
    %v4194 = vpop.f32.mrf.mxu0
    %4195 = vmatprep.mubr.f32.mxu0 0.0
    %4196 = vmatmul.mubr.f32.gmra.mxu0 %v4121
    %v4197 = vpop.f32.mrf.mxu0
    %v4198 = vadd.f32 0.0, %v4197
    %v4199 = vpop.f32.mrf.mxu0
    %4200 = vdwg.mxu0
    %v4201 = vadd.f32 %v4037, %v4193
    %v4202 = vadd.f32 %v4038, %v4198
    %4203 = vmatprep.subr.mxu0 0.0
    %4204 = vmatpush1.msra.mxu0 0.0
    %4205 = vmatprep.subr.mxu0 0.0
    %4206 = vmatpush1.msra.mxu0 0.0
    %4207 = vmatprep.subr.mxu0 0.0
    %4208 = vmatpush1.msra.mxu0 0.0
    %4209 = vmatprep.subr.mxu0 0.0
    %4210 = vmatpush1.msra.mxu0 0.0
    %4211 = vmatprep.subr.mxu0 0.0
    %4212 = vmatpush1.msra.mxu0 0.0
    %4213 = vmatprep.subr.mxu0 0.0
    %4214 = vmatpush1.msra.mxu0 0.0
    %4215 = vmatprep.subr.mxu0 0.0
    %4216 = vmatpush1.msra.mxu0 0.0
    %4217 = vmatprep.subr.mxu0 0.0
    %4218 = vmatpush1.msra.mxu0 0.0
    %4219 = vmatprep.subr.mxu0 0.0
    %4220 = vmatpush1.msra.mxu0 0.0
    %4221 = vmatprep.subr.mxu0 0.0
    %4222 = vmatpush1.msra.mxu0 0.0
    %4223 = vmatprep.subr.mxu0 0.0
    %4224 = vmatpush1.msra.mxu0 0.0
    %4225 = vmatprep.subr.mxu0 0.0
    %4226 = vmatpush1.msra.mxu0 %v1206
    %4227 = vmatprep.subr.mxu0 0.0
    %4228 = vmatpush1.msra.mxu0 %v1205
    %4229 = vmatprep.subr.mxu0 0.0
    %4230 = vmatpush1.msra.mxu0 %v1204
    %4231 = vmatprep.subr.mxu0 0.0
    %4232 = vmatpush1.msra.mxu0 %v1203
    %4233 = vmatprep.subr.mxu0 0.0
    %4234 = vmatpush1.msra.mxu0 %v1202
    %4235 = vmatprep.subr.mxu0 0.0
    %4236 = vmatpush2.msra.mxu0 0.0
    %4237 = vmatprep.subr.mxu0 0.0
    %4238 = vmatpush2.msra.mxu0 0.0
    %4239 = vmatprep.subr.mxu0 0.0
    %4240 = vmatpush2.msra.mxu0 0.0
    %4241 = vmatprep.subr.mxu0 0.0
    %4242 = vmatpush2.msra.mxu0 0.0
    %4243 = vmatprep.subr.mxu0 0.0
    %4244 = vmatpush2.msra.mxu0 0.0
    %4245 = vmatprep.subr.mxu0 0.0
    %4246 = vmatpush2.msra.mxu0 0.0
    %4247 = vmatprep.subr.mxu0 0.0
    %4248 = vmatpush2.msra.mxu0 0.0
    %4249 = vmatprep.subr.mxu0 0.0
    %4250 = vmatpush2.msra.mxu0 0.0
    %4251 = vmatprep.subr.mxu0 0.0
    %4252 = vmatpush2.msra.mxu0 0.0
    %4253 = vmatprep.subr.mxu0 0.0
    %4254 = vmatpush2.msra.mxu0 0.0
    %4255 = vmatprep.subr.mxu0 0.0
    %4256 = vmatpush2.msra.mxu0 0.0
    %4257 = vmatprep.subr.mxu0 0.0
    %4258 = vmatpush2.msra.mxu0 0.0
    %4259 = vmatprep.subr.mxu0 0.0
    %4260 = vmatpush2.msra.mxu0 0.0
    %4261 = vmatprep.subr.mxu0 0.0
    %4262 = vmatpush2.msra.mxu0 0.0
    %4263 = vmatprep.subr.mxu0 0.0
    %4264 = vmatpush2.msra.mxu0 0.0
    %4265 = vmatprep.subr.mxu0 0.0
    %4266 = vmatpush2.msra.mxu0 0.0
    %4267 = vmatprep.mubr.f32.mxu0 0.0
    %4268 = vmatmul.mubr.f32.gmra.mxu0 %v3041
    %v4269 = vpop.f32.mrf.mxu0
    %v4270 = vadd.f32 0.0, %v4269
    %v4271 = vpop.f32.mrf.mxu0
    %4272 = vmatprep.mubr.f32.mxu0 0.0
    %4273 = vmatmul.mubr.f32.gmra.mxu0 %v3044
    %v4274 = vpop.f32.mrf.mxu0
    %v4275 = vadd.f32 0.0, %v4274
    %v4276 = vpop.f32.mrf.mxu0
    %4277 = vdwg.mxu0
    %s4278 = scalar_lea.vmem %s6, 112
    %v4279 = vld [vmem:[%s4278] sm:$0xff]
    %v4280 = vld [vmem:[%s4278 + $0x8] sm:$0xf]
    %v4282 = vsel %vm1618, %v4279, 0
    %v4285 = vsel %vm1618, %v4280, 0
    %v4288 = vsel %vm1625, %v4275, 0
    %4290 = vmatprep.subr.mxu0 0.0
    %4291 = vmatpush1.msra.mxu0 0.0
    %4292 = vmatprep.subr.mxu0 0.0
    %4293 = vmatpush1.msra.mxu0 0.0
    %4294 = vmatprep.subr.mxu0 0.0
    %4295 = vmatpush1.msra.mxu0 0.0
    %4296 = vmatprep.subr.mxu0 0.0
    %4297 = vmatpush1.msra.mxu0 0.0
    %4298 = vmatprep.subr.mxu0 0.0
    %4299 = vmatpush1.msra.mxu0 0.0
    %4300 = vmatprep.subr.mxu0 0.0
    %4301 = vmatpush1.msra.mxu0 0.0
    %4302 = vmatprep.subr.mxu0 0.0
    %4303 = vmatpush1.msra.mxu0 0.0
    %4304 = vmatprep.subr.mxu0 0.0
    %4305 = vmatpush1.msra.mxu0 0.0
    %4306 = vmatprep.subr.mxu0 0.0
    %4307 = vmatpush1.msra.mxu0 0.0
    %4308 = vmatprep.subr.mxu0 0.0
    %4309 = vmatpush1.msra.mxu0 0.0
    %4310 = vmatprep.subr.mxu0 0.0
    %4311 = vmatpush1.msra.mxu0 0.0
    %4312 = vmatprep.subr.mxu0 0.0
    %4313 = vmatpush1.msra.mxu0 0.0
    %4314 = vmatprep.subr.mxu0 0.0
    %4315 = vmatpush1.msra.mxu0 0.0
    %4316 = vmatprep.subr.mxu0 0.0
    %4317 = vmatpush1.msra.mxu0 0.0
    %4318 = vmatprep.subr.mxu0 0.0
    %4319 = vmatpush1.msra.mxu0 %v4288
    %4320 = vmatprep.subr.mxu0 0.0
    %4321 = vmatpush1.msra.mxu0 %v4270
    %4322 = vmatprep.subr.mxu0 0.0
    %4323 = vmatpush2.msra.mxu0 0.0
    %4324 = vmatprep.subr.mxu0 0.0
    %4325 = vmatpush2.msra.mxu0 0.0
    %4326 = vmatprep.subr.mxu0 0.0
    %4327 = vmatpush2.msra.mxu0 0.0
    %4328 = vmatprep.subr.mxu0 0.0
    %4329 = vmatpush2.msra.mxu0 0.0
    %4330 = vmatprep.subr.mxu0 0.0
    %4331 = vmatpush2.msra.mxu0 0.0
    %4332 = vmatprep.subr.mxu0 0.0
    %4333 = vmatpush2.msra.mxu0 0.0
    %4334 = vmatprep.subr.mxu0 0.0
    %4335 = vmatpush2.msra.mxu0 0.0
    %4336 = vmatprep.subr.mxu0 0.0
    %4337 = vmatpush2.msra.mxu0 0.0
    %4338 = vmatprep.subr.mxu0 0.0
    %4339 = vmatpush2.msra.mxu0 0.0
    %4340 = vmatprep.subr.mxu0 0.0
    %4341 = vmatpush2.msra.mxu0 0.0
    %4342 = vmatprep.subr.mxu0 0.0
    %4343 = vmatpush2.msra.mxu0 0.0
    %4344 = vmatprep.subr.mxu0 0.0
    %4345 = vmatpush2.msra.mxu0 0.0
    %4346 = vmatprep.subr.mxu0 0.0
    %4347 = vmatpush2.msra.mxu0 0.0
    %4348 = vmatprep.subr.mxu0 0.0
    %4349 = vmatpush2.msra.mxu0 0.0
    %4350 = vmatprep.subr.mxu0 0.0
    %4351 = vmatpush2.msra.mxu0 0.0
    %4352 = vmatprep.subr.mxu0 0.0
    %4353 = vmatpush2.msra.mxu0 0.0
    %4354 = vmatprep.mubr.f32.mxu0 0.0
    %4355 = vmatmul.mubr.f32.gmra.mxu0 %v4282
    %v4356 = vpop.f32.mrf.mxu0
    %v4357 = vadd.f32 0.0, %v4356
    %v4358 = vpop.f32.mrf.mxu0
    %4359 = vmatprep.mubr.f32.mxu0 0.0
    %4360 = vmatmul.mubr.f32.gmra.mxu0 %v4285
    %v4361 = vpop.f32.mrf.mxu0
    %v4362 = vadd.f32 0.0, %v4361
    %v4363 = vpop.f32.mrf.mxu0
    %4364 = vdwg.mxu0
    %v4365 = vadd.f32 %v4201, %v4357
    %v4366 = vadd.f32 %v4202, %v4362
    %4367 = vmatprep.subr.mxu0 0.0
    %4368 = vmatpush1.msra.mxu0 0.0
    %4369 = vmatprep.subr.mxu0 0.0
    %4370 = vmatpush1.msra.mxu0 0.0
    %4371 = vmatprep.subr.mxu0 0.0
    %4372 = vmatpush1.msra.mxu0 0.0
    %4373 = vmatprep.subr.mxu0 0.0
    %4374 = vmatpush1.msra.mxu0 0.0
    %4375 = vmatprep.subr.mxu0 0.0
    %4376 = vmatpush1.msra.mxu0 0.0
    %4377 = vmatprep.subr.mxu0 0.0
    %4378 = vmatpush1.msra.mxu0 0.0
    %4379 = vmatprep.subr.mxu0 0.0
    %4380 = vmatpush1.msra.mxu0 0.0
    %4381 = vmatprep.subr.mxu0 0.0
    %4382 = vmatpush1.msra.mxu0 0.0
    %4383 = vmatprep.subr.mxu0 0.0
    %4384 = vmatpush1.msra.mxu0 0.0
    %4385 = vmatprep.subr.mxu0 0.0
    %4386 = vmatpush1.msra.mxu0 0.0
    %4387 = vmatprep.subr.mxu0 0.0
    %4388 = vmatpush1.msra.mxu0 0.0
    %4389 = vmatprep.subr.mxu0 0.0
    %4390 = vmatpush1.msra.mxu0 %v1368
    %4391 = vmatprep.subr.mxu0 0.0
    %4392 = vmatpush1.msra.mxu0 %v1367
    %4393 = vmatprep.subr.mxu0 0.0
    %4394 = vmatpush1.msra.mxu0 %v1366
    %4395 = vmatprep.subr.mxu0 0.0
    %4396 = vmatpush1.msra.mxu0 %v1365
    %4397 = vmatprep.subr.mxu0 0.0
    %4398 = vmatpush1.msra.mxu0 %v1364
    %4399 = vmatprep.subr.mxu0 0.0
    %4400 = vmatpush2.msra.mxu0 0.0
    %4401 = vmatprep.subr.mxu0 0.0
    %4402 = vmatpush2.msra.mxu0 0.0
    %4403 = vmatprep.subr.mxu0 0.0
    %4404 = vmatpush2.msra.mxu0 0.0
    %4405 = vmatprep.subr.mxu0 0.0
    %4406 = vmatpush2.msra.mxu0 0.0
    %4407 = vmatprep.subr.mxu0 0.0
    %4408 = vmatpush2.msra.mxu0 0.0
    %4409 = vmatprep.subr.mxu0 0.0
    %4410 = vmatpush2.msra.mxu0 0.0
    %4411 = vmatprep.subr.mxu0 0.0
    %4412 = vmatpush2.msra.mxu0 0.0
    %4413 = vmatprep.subr.mxu0 0.0
    %4414 = vmatpush2.msra.mxu0 0.0
    %4415 = vmatprep.subr.mxu0 0.0
    %4416 = vmatpush2.msra.mxu0 0.0
    %4417 = vmatprep.subr.mxu0 0.0
    %4418 = vmatpush2.msra.mxu0 0.0
    %4419 = vmatprep.subr.mxu0 0.0
    %4420 = vmatpush2.msra.mxu0 0.0
    %4421 = vmatprep.subr.mxu0 0.0
    %4422 = vmatpush2.msra.mxu0 0.0
    %4423 = vmatprep.subr.mxu0 0.0
    %4424 = vmatpush2.msra.mxu0 0.0
    %4425 = vmatprep.subr.mxu0 0.0
    %4426 = vmatpush2.msra.mxu0 0.0
    %4427 = vmatprep.subr.mxu0 0.0
    %4428 = vmatpush2.msra.mxu0 0.0
    %4429 = vmatprep.subr.mxu0 0.0
    %4430 = vmatpush2.msra.mxu0 0.0
    %4431 = vmatprep.mubr.f32.mxu0 0.0
    %4432 = vmatmul.mubr.f32.gmra.mxu0 %v3041
    %v4433 = vpop.f32.mrf.mxu0
    %v4434 = vadd.f32 0.0, %v4433
    %v4435 = vpop.f32.mrf.mxu0
    %4436 = vmatprep.mubr.f32.mxu0 0.0
    %4437 = vmatmul.mubr.f32.gmra.mxu0 %v3044
    %v4438 = vpop.f32.mrf.mxu0
    %v4439 = vadd.f32 0.0, %v4438
    %v4440 = vpop.f32.mrf.mxu0
    %4441 = vdwg.mxu0
    %s4442 = scalar_lea.vmem %s6, 128
    %v4443 = vld [vmem:[%s4442] sm:$0xff]
    %v4444 = vld [vmem:[%s4442 + $0x8] sm:$0xf]
    %v4446 = vsel %vm1618, %v4443, 0
    %v4449 = vsel %vm1618, %v4444, 0
    %v4452 = vsel %vm1625, %v4439, 0
    %4454 = vmatprep.subr.mxu0 0.0
    %4455 = vmatpush1.msra.mxu0 0.0
    %4456 = vmatprep.subr.mxu0 0.0
    %4457 = vmatpush1.msra.mxu0 0.0
    %4458 = vmatprep.subr.mxu0 0.0
    %4459 = vmatpush1.msra.mxu0 0.0
    %4460 = vmatprep.subr.mxu0 0.0
    %4461 = vmatpush1.msra.mxu0 0.0
    %4462 = vmatprep.subr.mxu0 0.0
    %4463 = vmatpush1.msra.mxu0 0.0
    %4464 = vmatprep.subr.mxu0 0.0
    %4465 = vmatpush1.msra.mxu0 0.0
    %4466 = vmatprep.subr.mxu0 0.0
    %4467 = vmatpush1.msra.mxu0 0.0
    %4468 = vmatprep.subr.mxu0 0.0
    %4469 = vmatpush1.msra.mxu0 0.0
    %4470 = vmatprep.subr.mxu0 0.0
    %4471 = vmatpush1.msra.mxu0 0.0
    %4472 = vmatprep.subr.mxu0 0.0
    %4473 = vmatpush1.msra.mxu0 0.0
    %4474 = vmatprep.subr.mxu0 0.0
    %4475 = vmatpush1.msra.mxu0 0.0
    %4476 = vmatprep.subr.mxu0 0.0
    %4477 = vmatpush1.msra.mxu0 0.0
    %4478 = vmatprep.subr.mxu0 0.0
    %4479 = vmatpush1.msra.mxu0 0.0
    %4480 = vmatprep.subr.mxu0 0.0
    %4481 = vmatpush1.msra.mxu0 0.0
    %4482 = vmatprep.subr.mxu0 0.0
    %4483 = vmatpush1.msra.mxu0 %v4452
    %4484 = vmatprep.subr.mxu0 0.0
    %4485 = vmatpush1.msra.mxu0 %v4434
    %4486 = vmatprep.subr.mxu0 0.0
    %4487 = vmatpush2.msra.mxu0 0.0
    %4488 = vmatprep.subr.mxu0 0.0
    %4489 = vmatpush2.msra.mxu0 0.0
    %4490 = vmatprep.subr.mxu0 0.0
    %4491 = vmatpush2.msra.mxu0 0.0
    %4492 = vmatprep.subr.mxu0 0.0
    %4493 = vmatpush2.msra.mxu0 0.0
    %4494 = vmatprep.subr.mxu0 0.0
    %4495 = vmatpush2.msra.mxu0 0.0
    %4496 = vmatprep.subr.mxu0 0.0
    %4497 = vmatpush2.msra.mxu0 0.0
    %4498 = vmatprep.subr.mxu0 0.0
    %4499 = vmatpush2.msra.mxu0 0.0
    %4500 = vmatprep.subr.mxu0 0.0
    %4501 = vmatpush2.msra.mxu0 0.0
    %4502 = vmatprep.subr.mxu0 0.0
    %4503 = vmatpush2.msra.mxu0 0.0
    %4504 = vmatprep.subr.mxu0 0.0
    %4505 = vmatpush2.msra.mxu0 0.0
    %4506 = vmatprep.subr.mxu0 0.0
    %4507 = vmatpush2.msra.mxu0 0.0
    %4508 = vmatprep.subr.mxu0 0.0
    %4509 = vmatpush2.msra.mxu0 0.0
    %4510 = vmatprep.subr.mxu0 0.0
    %4511 = vmatpush2.msra.mxu0 0.0
    %4512 = vmatprep.subr.mxu0 0.0
    %4513 = vmatpush2.msra.mxu0 0.0
    %4514 = vmatprep.subr.mxu0 0.0
    %4515 = vmatpush2.msra.mxu0 0.0
    %4516 = vmatprep.subr.mxu0 0.0
    %4517 = vmatpush2.msra.mxu0 0.0
    %4518 = vmatprep.mubr.f32.mxu0 0.0
    %4519 = vmatmul.mubr.f32.gmra.mxu0 %v4446
    %v4520 = vpop.f32.mrf.mxu0
    %v4521 = vadd.f32 0.0, %v4520
    %v4522 = vpop.f32.mrf.mxu0
    %4523 = vmatprep.mubr.f32.mxu0 0.0
    %4524 = vmatmul.mubr.f32.gmra.mxu0 %v4449
    %v4525 = vpop.f32.mrf.mxu0
    %v4526 = vadd.f32 0.0, %v4525
    %v4527 = vpop.f32.mrf.mxu0
    %4528 = vdwg.mxu0
    %v4529 = vadd.f32 %v4365, %v4521
    %v4530 = vadd.f32 %v4366, %v4526
    %s4531 = sld [smem:[#allocation2 + $0x2]]
    %vm4532 = vcmp.ge.f32.partialorder %v4529, 0.0
    %vm4533 = vcmp.ge.f32.partialorder %v4530, 0.0
    %v4534 = vstv %s4531
    %v4535 = vmul.f32 %v4534, %v4529
    %v4536 = vmul.f32 %v4534, %v4530
    %v4537 = vsel %vm4532, %v4529, %v4535
    %v4538 = vsel %vm4533, %v4530, %v4536
    %v4539 = vadd.f32 %v4537, %v3036
    %v4540 = vadd.f32 %v4538, %v3037
    %v4541 = vld [vmem:[%s9] sm:$0xff]
    %v4542 = vld [vmem:[%s9 + $0x8] sm:$0xf]
    %v4544 = vsel %vm59, %v4539, 0
    %v4547 = vsel %vm59, %v4540, 0
    %4549 = vmatprep.subr.mxu0 0.0
    %4550 = vmatpush1.msra.mxu0 0.0
    %4551 = vmatprep.subr.mxu0 0.0
    %4552 = vmatpush1.msra.mxu0 0.0
    %4553 = vmatprep.subr.mxu0 0.0
    %4554 = vmatpush1.msra.mxu0 0.0
    %4555 = vmatprep.subr.mxu0 0.0
    %4556 = vmatpush1.msra.mxu0 0.0
    %4557 = vmatprep.subr.mxu0 0.0
    %4558 = vmatpush1.msra.mxu0 0.0
    %4559 = vmatprep.subr.mxu0 0.0
    %4560 = vmatpush1.msra.mxu0 0.0
    %4561 = vmatprep.subr.mxu0 0.0
    %4562 = vmatpush1.msra.mxu0 0.0
    %4563 = vmatprep.subr.mxu0 0.0
    %4564 = vmatpush1.msra.mxu0 0.0
    %4565 = vmatprep.subr.mxu0 0.0
    %4566 = vmatpush1.msra.mxu0 0.0
    %4567 = vmatprep.subr.mxu0 0.0
    %4568 = vmatpush1.msra.mxu0 0.0
    %4569 = vmatprep.subr.mxu0 0.0
    %4570 = vmatpush1.msra.mxu0 0.0
    %4571 = vmatprep.subr.mxu0 0.0
    %4572 = vmatpush1.msra.mxu0 %v58
    %4573 = vmatprep.subr.mxu0 0.0
    %4574 = vmatpush1.msra.mxu0 %v57
    %4575 = vmatprep.subr.mxu0 0.0
    %4576 = vmatpush1.msra.mxu0 %v56
    %4577 = vmatprep.subr.mxu0 0.0
    %4578 = vmatpush1.msra.mxu0 %v55
    %4579 = vmatprep.subr.mxu0 0.0
    %4580 = vmatpush1.msra.mxu0 %v54
    %4581 = vmatprep.subr.mxu0 0.0
    %4582 = vmatpush2.msra.mxu0 0.0
    %4583 = vmatprep.subr.mxu0 0.0
    %4584 = vmatpush2.msra.mxu0 0.0
    %4585 = vmatprep.subr.mxu0 0.0
    %4586 = vmatpush2.msra.mxu0 0.0
    %4587 = vmatprep.subr.mxu0 0.0
    %4588 = vmatpush2.msra.mxu0 0.0
    %4589 = vmatprep.subr.mxu0 0.0
    %4590 = vmatpush2.msra.mxu0 0.0
    %4591 = vmatprep.subr.mxu0 0.0
    %4592 = vmatpush2.msra.mxu0 0.0
    %4593 = vmatprep.subr.mxu0 0.0
    %4594 = vmatpush2.msra.mxu0 0.0
    %4595 = vmatprep.subr.mxu0 0.0
    %4596 = vmatpush2.msra.mxu0 0.0
    %4597 = vmatprep.subr.mxu0 0.0
    %4598 = vmatpush2.msra.mxu0 0.0
    %4599 = vmatprep.subr.mxu0 0.0
    %4600 = vmatpush2.msra.mxu0 0.0
    %4601 = vmatprep.subr.mxu0 0.0
    %4602 = vmatpush2.msra.mxu0 0.0
    %4603 = vmatprep.subr.mxu0 0.0
    %4604 = vmatpush2.msra.mxu0 0.0
    %4605 = vmatprep.subr.mxu0 0.0
    %4606 = vmatpush2.msra.mxu0 0.0
    %4607 = vmatprep.subr.mxu0 0.0
    %4608 = vmatpush2.msra.mxu0 0.0
    %4609 = vmatprep.subr.mxu0 0.0
    %4610 = vmatpush2.msra.mxu0 0.0
    %4611 = vmatprep.subr.mxu0 0.0
    %4612 = vmatpush2.msra.mxu0 0.0
    %4613 = vmatprep.mubr.f32.mxu0 0.0
    %4614 = vmatmul.mubr.f32.gmra.mxu0 %v4544
    %v4615 = vpop.f32.mrf.mxu0
    %v4616 = vadd.f32 0.0, %v4615
    %v4617 = vpop.f32.mrf.mxu0
    %4618 = vmatprep.mubr.f32.mxu0 0.0
    %4619 = vmatmul.mubr.f32.gmra.mxu0 %v4547
    %v4620 = vpop.f32.mrf.mxu0
    %v4621 = vadd.f32 0.0, %v4620
    %v4622 = vpop.f32.mrf.mxu0
    %4623 = vdwg.mxu0
    %v4624 = vld [vmem:[%s8] sm:$0xff]
    %v4625 = vld [vmem:[%s8 + $0x8] sm:$0xf]
    %v4627 = vsel %vm1618, %v4624, 0
    %v4630 = vsel %vm1618, %v4625, 0
    %v4633 = vsel %vm1625, %v4621, 0
    %4635 = vmatprep.subr.mxu0 0.0
    %4636 = vmatpush1.msra.mxu0 0.0
    %4637 = vmatprep.subr.mxu0 0.0
    %4638 = vmatpush1.msra.mxu0 0.0
    %4639 = vmatprep.subr.mxu0 0.0
    %4640 = vmatpush1.msra.mxu0 0.0
    %4641 = vmatprep.subr.mxu0 0.0
    %4642 = vmatpush1.msra.mxu0 0.0
    %4643 = vmatprep.subr.mxu0 0.0
    %4644 = vmatpush1.msra.mxu0 0.0
    %4645 = vmatprep.subr.mxu0 0.0
    %4646 = vmatpush1.msra.mxu0 0.0
    %4647 = vmatprep.subr.mxu0 0.0
    %4648 = vmatpush1.msra.mxu0 0.0
    %4649 = vmatprep.subr.mxu0 0.0
    %4650 = vmatpush1.msra.mxu0 0.0
    %4651 = vmatprep.subr.mxu0 0.0
    %4652 = vmatpush1.msra.mxu0 0.0
    %4653 = vmatprep.subr.mxu0 0.0
    %4654 = vmatpush1.msra.mxu0 0.0
    %4655 = vmatprep.subr.mxu0 0.0
    %4656 = vmatpush1.msra.mxu0 0.0
    %4657 = vmatprep.subr.mxu0 0.0
    %4658 = vmatpush1.msra.mxu0 0.0
    %4659 = vmatprep.subr.mxu0 0.0
    %4660 = vmatpush1.msra.mxu0 0.0
    %4661 = vmatprep.subr.mxu0 0.0
    %4662 = vmatpush1.msra.mxu0 0.0
    %4663 = vmatprep.subr.mxu0 0.0
    %4664 = vmatpush1.msra.mxu0 %v4633
    %4665 = vmatprep.subr.mxu0 0.0
    %4666 = vmatpush1.msra.mxu0 %v4616
    %4667 = vmatprep.subr.mxu0 0.0
    %4668 = vmatpush2.msra.mxu0 0.0
    %4669 = vmatprep.subr.mxu0 0.0
    %4670 = vmatpush2.msra.mxu0 0.0
    %4671 = vmatprep.subr.mxu0 0.0
    %4672 = vmatpush2.msra.mxu0 0.0
    %4673 = vmatprep.subr.mxu0 0.0
    %4674 = vmatpush2.msra.mxu0 0.0
    %4675 = vmatprep.subr.mxu0 0.0
    %4676 = vmatpush2.msra.mxu0 0.0
    %4677 = vmatprep.subr.mxu0 0.0
    %4678 = vmatpush2.msra.mxu0 0.0
    %4679 = vmatprep.subr.mxu0 0.0
    %4680 = vmatpush2.msra.mxu0 0.0
    %4681 = vmatprep.subr.mxu0 0.0
    %4682 = vmatpush2.msra.mxu0 0.0
    %4683 = vmatprep.subr.mxu0 0.0
    %4684 = vmatpush2.msra.mxu0 0.0
    %4685 = vmatprep.subr.mxu0 0.0
    %4686 = vmatpush2.msra.mxu0 0.0
    %4687 = vmatprep.subr.mxu0 0.0
    %4688 = vmatpush2.msra.mxu0 0.0
    %4689 = vmatprep.subr.mxu0 0.0
    %4690 = vmatpush2.msra.mxu0 0.0
    %4691 = vmatprep.subr.mxu0 0.0
    %4692 = vmatpush2.msra.mxu0 0.0
    %4693 = vmatprep.subr.mxu0 0.0
    %4694 = vmatpush2.msra.mxu0 0.0
    %4695 = vmatprep.subr.mxu0 0.0
    %4696 = vmatpush2.msra.mxu0 0.0
    %4697 = vmatprep.subr.mxu0 0.0
    %4698 = vmatpush2.msra.mxu0 0.0
    %4699 = vmatprep.mubr.f32.mxu0 0.0
    %4700 = vmatmul.mubr.f32.gmra.mxu0 %v4627
    %v4701 = vpop.f32.mrf.mxu0
    %v4702 = vadd.f32 0.0, %v4701
    %v4703 = vpop.f32.mrf.mxu0
    %4704 = vmatprep.mubr.f32.mxu0 0.0
    %4705 = vmatmul.mubr.f32.gmra.mxu0 %v4630
    %v4706 = vpop.f32.mrf.mxu0
    %v4707 = vadd.f32 0.0, %v4706
    %v4708 = vpop.f32.mrf.mxu0
    %4709 = vdwg.mxu0
    %4711 = vset.pattern.permute.xlu0 0
    %4712 = vperm.xlu0 %4711, %v4541
    %v4713 = vpop.permute.xlu0 %4712
    %4716 = vset.pattern.permute.xlu0 0
    %4717 = vperm.xlu0 %4716, %v4542
    %v4718 = vpop.permute.xlu0 %4717
    %v4720 = vadd.f32 %v4713, %v4702
    %v4721 = vadd.f32 %v4718, %v4707
    %4722 = vmatprep.subr.mxu0 0.0
    %4723 = vmatpush1.msra.mxu0 0.0
    %4724 = vmatprep.subr.mxu0 0.0
    %4725 = vmatpush1.msra.mxu0 0.0
    %4726 = vmatprep.subr.mxu0 0.0
    %4727 = vmatpush1.msra.mxu0 0.0
    %4728 = vmatprep.subr.mxu0 0.0
    %4729 = vmatpush1.msra.mxu0 0.0
    %4730 = vmatprep.subr.mxu0 0.0
    %4731 = vmatpush1.msra.mxu0 0.0
    %4732 = vmatprep.subr.mxu0 0.0
    %4733 = vmatpush1.msra.mxu0 0.0
    %4734 = vmatprep.subr.mxu0 0.0
    %4735 = vmatpush1.msra.mxu0 0.0
    %4736 = vmatprep.subr.mxu0 0.0
    %4737 = vmatpush1.msra.mxu0 0.0
    %4738 = vmatprep.subr.mxu0 0.0
    %4739 = vmatpush1.msra.mxu0 0.0
    %4740 = vmatprep.subr.mxu0 0.0
    %4741 = vmatpush1.msra.mxu0 0.0
    %4742 = vmatprep.subr.mxu0 0.0
    %4743 = vmatpush1.msra.mxu0 0.0
    %4744 = vmatprep.subr.mxu0 0.0
    %4745 = vmatpush1.msra.mxu0 %v234
    %4746 = vmatprep.subr.mxu0 0.0
    %4747 = vmatpush1.msra.mxu0 %v233
    %4748 = vmatprep.subr.mxu0 0.0
    %4749 = vmatpush1.msra.mxu0 %v232
    %4750 = vmatprep.subr.mxu0 0.0
    %4751 = vmatpush1.msra.mxu0 %v231
    %4752 = vmatprep.subr.mxu0 0.0
    %4753 = vmatpush1.msra.mxu0 %v230
    %4754 = vmatprep.subr.mxu0 0.0
    %4755 = vmatpush2.msra.mxu0 0.0
    %4756 = vmatprep.subr.mxu0 0.0
    %4757 = vmatpush2.msra.mxu0 0.0
    %4758 = vmatprep.subr.mxu0 0.0
    %4759 = vmatpush2.msra.mxu0 0.0
    %4760 = vmatprep.subr.mxu0 0.0
    %4761 = vmatpush2.msra.mxu0 0.0
    %4762 = vmatprep.subr.mxu0 0.0
    %4763 = vmatpush2.msra.mxu0 0.0
    %4764 = vmatprep.subr.mxu0 0.0
    %4765 = vmatpush2.msra.mxu0 0.0
    %4766 = vmatprep.subr.mxu0 0.0
    %4767 = vmatpush2.msra.mxu0 0.0
    %4768 = vmatprep.subr.mxu0 0.0
    %4769 = vmatpush2.msra.mxu0 0.0
    %4770 = vmatprep.subr.mxu0 0.0
    %4771 = vmatpush2.msra.mxu0 0.0
    %4772 = vmatprep.subr.mxu0 0.0
    %4773 = vmatpush2.msra.mxu0 0.0
    %4774 = vmatprep.subr.mxu0 0.0
    %4775 = vmatpush2.msra.mxu0 0.0
    %4776 = vmatprep.subr.mxu0 0.0
    %4777 = vmatpush2.msra.mxu0 0.0
    %4778 = vmatprep.subr.mxu0 0.0
    %4779 = vmatpush2.msra.mxu0 0.0
    %4780 = vmatprep.subr.mxu0 0.0
    %4781 = vmatpush2.msra.mxu0 0.0
    %4782 = vmatprep.subr.mxu0 0.0
    %4783 = vmatpush2.msra.mxu0 0.0
    %4784 = vmatprep.subr.mxu0 0.0
    %4785 = vmatpush2.msra.mxu0 0.0
    %4786 = vmatprep.mubr.f32.mxu0 0.0
    %4787 = vmatmul.mubr.f32.gmra.mxu0 %v4544
    %v4788 = vpop.f32.mrf.mxu0
    %v4789 = vadd.f32 0.0, %v4788
    %v4790 = vpop.f32.mrf.mxu0
    %4791 = vmatprep.mubr.f32.mxu0 0.0
    %4792 = vmatmul.mubr.f32.gmra.mxu0 %v4547
    %v4793 = vpop.f32.mrf.mxu0
    %v4794 = vadd.f32 0.0, %v4793
    %v4795 = vpop.f32.mrf.mxu0
    %4796 = vdwg.mxu0
    %s4797 = scalar_lea.vmem %s8, 16
    %v4798 = vld [vmem:[%s4797] sm:$0xff]
    %v4799 = vld [vmem:[%s4797 + $0x8] sm:$0xf]
    %v4801 = vsel %vm1618, %v4798, 0
    %v4804 = vsel %vm1618, %v4799, 0
    %v4807 = vsel %vm1625, %v4794, 0
    %4809 = vmatprep.subr.mxu0 0.0
    %4810 = vmatpush1.msra.mxu0 0.0
    %4811 = vmatprep.subr.mxu0 0.0
    %4812 = vmatpush1.msra.mxu0 0.0
    %4813 = vmatprep.subr.mxu0 0.0
    %4814 = vmatpush1.msra.mxu0 0.0
    %4815 = vmatprep.subr.mxu0 0.0
    %4816 = vmatpush1.msra.mxu0 0.0
    %4817 = vmatprep.subr.mxu0 0.0
    %4818 = vmatpush1.msra.mxu0 0.0
    %4819 = vmatprep.subr.mxu0 0.0
    %4820 = vmatpush1.msra.mxu0 0.0
    %4821 = vmatprep.subr.mxu0 0.0
    %4822 = vmatpush1.msra.mxu0 0.0
    %4823 = vmatprep.subr.mxu0 0.0
    %4824 = vmatpush1.msra.mxu0 0.0
    %4825 = vmatprep.subr.mxu0 0.0
    %4826 = vmatpush1.msra.mxu0 0.0
    %4827 = vmatprep.subr.mxu0 0.0
    %4828 = vmatpush1.msra.mxu0 0.0
    %4829 = vmatprep.subr.mxu0 0.0
    %4830 = vmatpush1.msra.mxu0 0.0
    %4831 = vmatprep.subr.mxu0 0.0
    %4832 = vmatpush1.msra.mxu0 0.0
    %4833 = vmatprep.subr.mxu0 0.0
    %4834 = vmatpush1.msra.mxu0 0.0
    %4835 = vmatprep.subr.mxu0 0.0
    %4836 = vmatpush1.msra.mxu0 0.0
    %4837 = vmatprep.subr.mxu0 0.0
    %4838 = vmatpush1.msra.mxu0 %v4807
    %4839 = vmatprep.subr.mxu0 0.0
    %4840 = vmatpush1.msra.mxu0 %v4789
    %4841 = vmatprep.subr.mxu0 0.0
    %4842 = vmatpush2.msra.mxu0 0.0
    %4843 = vmatprep.subr.mxu0 0.0
    %4844 = vmatpush2.msra.mxu0 0.0
    %4845 = vmatprep.subr.mxu0 0.0
    %4846 = vmatpush2.msra.mxu0 0.0
    %4847 = vmatprep.subr.mxu0 0.0
    %4848 = vmatpush2.msra.mxu0 0.0
    %4849 = vmatprep.subr.mxu0 0.0
    %4850 = vmatpush2.msra.mxu0 0.0
    %4851 = vmatprep.subr.mxu0 0.0
    %4852 = vmatpush2.msra.mxu0 0.0
    %4853 = vmatprep.subr.mxu0 0.0
    %4854 = vmatpush2.msra.mxu0 0.0
    %4855 = vmatprep.subr.mxu0 0.0
    %4856 = vmatpush2.msra.mxu0 0.0
    %4857 = vmatprep.subr.mxu0 0.0
    %4858 = vmatpush2.msra.mxu0 0.0
    %4859 = vmatprep.subr.mxu0 0.0
    %4860 = vmatpush2.msra.mxu0 0.0
    %4861 = vmatprep.subr.mxu0 0.0
    %4862 = vmatpush2.msra.mxu0 0.0
    %4863 = vmatprep.subr.mxu0 0.0
    %4864 = vmatpush2.msra.mxu0 0.0
    %4865 = vmatprep.subr.mxu0 0.0
    %4866 = vmatpush2.msra.mxu0 0.0
    %4867 = vmatprep.subr.mxu0 0.0
    %4868 = vmatpush2.msra.mxu0 0.0
    %4869 = vmatprep.subr.mxu0 0.0
    %4870 = vmatpush2.msra.mxu0 0.0
    %4871 = vmatprep.subr.mxu0 0.0
    %4872 = vmatpush2.msra.mxu0 0.0
    %4873 = vmatprep.mubr.f32.mxu0 0.0
    %4874 = vmatmul.mubr.f32.gmra.mxu0 %v4801
    %v4875 = vpop.f32.mrf.mxu0
    %v4876 = vadd.f32 0.0, %v4875
    %v4877 = vpop.f32.mrf.mxu0
    %4878 = vmatprep.mubr.f32.mxu0 0.0
    %4879 = vmatmul.mubr.f32.gmra.mxu0 %v4804
    %v4880 = vpop.f32.mrf.mxu0
    %v4881 = vadd.f32 0.0, %v4880
    %v4882 = vpop.f32.mrf.mxu0
    %4883 = vdwg.mxu0
    %v4884 = vadd.f32 %v4720, %v4876
    %v4885 = vadd.f32 %v4721, %v4881
    %4886 = vmatprep.subr.mxu0 0.0
    %4887 = vmatpush1.msra.mxu0 0.0
    %4888 = vmatprep.subr.mxu0 0.0
    %4889 = vmatpush1.msra.mxu0 0.0
    %4890 = vmatprep.subr.mxu0 0.0
    %4891 = vmatpush1.msra.mxu0 0.0
    %4892 = vmatprep.subr.mxu0 0.0
    %4893 = vmatpush1.msra.mxu0 0.0
    %4894 = vmatprep.subr.mxu0 0.0
    %4895 = vmatpush1.msra.mxu0 0.0
    %4896 = vmatprep.subr.mxu0 0.0
    %4897 = vmatpush1.msra.mxu0 0.0
    %4898 = vmatprep.subr.mxu0 0.0
    %4899 = vmatpush1.msra.mxu0 0.0
    %4900 = vmatprep.subr.mxu0 0.0
    %4901 = vmatpush1.msra.mxu0 0.0
    %4902 = vmatprep.subr.mxu0 0.0
    %4903 = vmatpush1.msra.mxu0 0.0
    %4904 = vmatprep.subr.mxu0 0.0
    %4905 = vmatpush1.msra.mxu0 0.0
    %4906 = vmatprep.subr.mxu0 0.0
    %4907 = vmatpush1.msra.mxu0 0.0
    %4908 = vmatprep.subr.mxu0 0.0
    %4909 = vmatpush1.msra.mxu0 %v396
    %4910 = vmatprep.subr.mxu0 0.0
    %4911 = vmatpush1.msra.mxu0 %v395
    %4912 = vmatprep.subr.mxu0 0.0
    %4913 = vmatpush1.msra.mxu0 %v394
    %4914 = vmatprep.subr.mxu0 0.0
    %4915 = vmatpush1.msra.mxu0 %v393
    %4916 = vmatprep.subr.mxu0 0.0
    %4917 = vmatpush1.msra.mxu0 %v392
    %4918 = vmatprep.subr.mxu0 0.0
    %4919 = vmatpush2.msra.mxu0 0.0
    %4920 = vmatprep.subr.mxu0 0.0
    %4921 = vmatpush2.msra.mxu0 0.0
    %4922 = vmatprep.subr.mxu0 0.0
    %4923 = vmatpush2.msra.mxu0 0.0
    %4924 = vmatprep.subr.mxu0 0.0
    %4925 = vmatpush2.msra.mxu0 0.0
    %4926 = vmatprep.subr.mxu0 0.0
    %4927 = vmatpush2.msra.mxu0 0.0
    %4928 = vmatprep.subr.mxu0 0.0
    %4929 = vmatpush2.msra.mxu0 0.0
    %4930 = vmatprep.subr.mxu0 0.0
    %4931 = vmatpush2.msra.mxu0 0.0
    %4932 = vmatprep.subr.mxu0 0.0
    %4933 = vmatpush2.msra.mxu0 0.0
    %4934 = vmatprep.subr.mxu0 0.0
    %4935 = vmatpush2.msra.mxu0 0.0
    %4936 = vmatprep.subr.mxu0 0.0
    %4937 = vmatpush2.msra.mxu0 0.0
    %4938 = vmatprep.subr.mxu0 0.0
    %4939 = vmatpush2.msra.mxu0 0.0
    %4940 = vmatprep.subr.mxu0 0.0
    %4941 = vmatpush2.msra.mxu0 0.0
    %4942 = vmatprep.subr.mxu0 0.0
    %4943 = vmatpush2.msra.mxu0 0.0
    %4944 = vmatprep.subr.mxu0 0.0
    %4945 = vmatpush2.msra.mxu0 0.0
    %4946 = vmatprep.subr.mxu0 0.0
    %4947 = vmatpush2.msra.mxu0 0.0
    %4948 = vmatprep.subr.mxu0 0.0
    %4949 = vmatpush2.msra.mxu0 0.0
    %4950 = vmatprep.mubr.f32.mxu0 0.0
    %4951 = vmatmul.mubr.f32.gmra.mxu0 %v4544
    %v4952 = vpop.f32.mrf.mxu0
    %v4953 = vadd.f32 0.0, %v4952
    %v4954 = vpop.f32.mrf.mxu0
    %4955 = vmatprep.mubr.f32.mxu0 0.0
    %4956 = vmatmul.mubr.f32.gmra.mxu0 %v4547
    %v4957 = vpop.f32.mrf.mxu0
    %v4958 = vadd.f32 0.0, %v4957
    %v4959 = vpop.f32.mrf.mxu0
    %4960 = vdwg.mxu0
    %s4961 = scalar_lea.vmem %s8, 32
    %v4962 = vld [vmem:[%s4961] sm:$0xff]
    %v4963 = vld [vmem:[%s4961 + $0x8] sm:$0xf]
    %v4965 = vsel %vm1618, %v4962, 0
    %v4968 = vsel %vm1618, %v4963, 0
    %v4971 = vsel %vm1625, %v4958, 0
    %4973 = vmatprep.subr.mxu0 0.0
    %4974 = vmatpush1.msra.mxu0 0.0
    %4975 = vmatprep.subr.mxu0 0.0
    %4976 = vmatpush1.msra.mxu0 0.0
    %4977 = vmatprep.subr.mxu0 0.0
    %4978 = vmatpush1.msra.mxu0 0.0
    %4979 = vmatprep.subr.mxu0 0.0
    %4980 = vmatpush1.msra.mxu0 0.0
    %4981 = vmatprep.subr.mxu0 0.0
    %4982 = vmatpush1.msra.mxu0 0.0
    %4983 = vmatprep.subr.mxu0 0.0
    %4984 = vmatpush1.msra.mxu0 0.0
    %4985 = vmatprep.subr.mxu0 0.0
    %4986 = vmatpush1.msra.mxu0 0.0
    %4987 = vmatprep.subr.mxu0 0.0
    %4988 = vmatpush1.msra.mxu0 0.0
    %4989 = vmatprep.subr.mxu0 0.0
    %4990 = vmatpush1.msra.mxu0 0.0
    %4991 = vmatprep.subr.mxu0 0.0
    %4992 = vmatpush1.msra.mxu0 0.0
    %4993 = vmatprep.subr.mxu0 0.0
    %4994 = vmatpush1.msra.mxu0 0.0
    %4995 = vmatprep.subr.mxu0 0.0
    %4996 = vmatpush1.msra.mxu0 0.0
    %4997 = vmatprep.subr.mxu0 0.0
    %4998 = vmatpush1.msra.mxu0 0.0
    %4999 = vmatprep.subr.mxu0 0.0
    %5000 = vmatpush1.msra.mxu0 0.0
    %5001 = vmatprep.subr.mxu0 0.0
    %5002 = vmatpush1.msra.mxu0 %v4971
    %5003 = vmatprep.subr.mxu0 0.0
    %5004 = vmatpush1.msra.mxu0 %v4953
    %5005 = vmatprep.subr.mxu0 0.0
    %5006 = vmatpush2.msra.mxu0 0.0
    %5007 = vmatprep.subr.mxu0 0.0
    %5008 = vmatpush2.msra.mxu0 0.0
    %5009 = vmatprep.subr.mxu0 0.0
    %5010 = vmatpush2.msra.mxu0 0.0
    %5011 = vmatprep.subr.mxu0 0.0
    %5012 = vmatpush2.msra.mxu0 0.0
    %5013 = vmatprep.subr.mxu0 0.0
    %5014 = vmatpush2.msra.mxu0 0.0
    %5015 = vmatprep.subr.mxu0 0.0
    %5016 = vmatpush2.msra.mxu0 0.0
    %5017 = vmatprep.subr.mxu0 0.0
    %5018 = vmatpush2.msra.mxu0 0.0
    %5019 = vmatprep.subr.mxu0 0.0
    %5020 = vmatpush2.msra.mxu0 0.0
    %5021 = vmatprep.subr.mxu0 0.0
    %5022 = vmatpush2.msra.mxu0 0.0
    %5023 = vmatprep.subr.mxu0 0.0
    %5024 = vmatpush2.msra.mxu0 0.0
    %5025 = vmatprep.subr.mxu0 0.0
    %5026 = vmatpush2.msra.mxu0 0.0
    %5027 = vmatprep.subr.mxu0 0.0
    %5028 = vmatpush2.msra.mxu0 0.0
    %5029 = vmatprep.subr.mxu0 0.0
    %5030 = vmatpush2.msra.mxu0 0.0
    %5031 = vmatprep.subr.mxu0 0.0
    %5032 = vmatpush2.msra.mxu0 0.0
    %5033 = vmatprep.subr.mxu0 0.0
    %5034 = vmatpush2.msra.mxu0 0.0
    %5035 = vmatprep.subr.mxu0 0.0
    %5036 = vmatpush2.msra.mxu0 0.0
    %5037 = vmatprep.mubr.f32.mxu0 0.0
    %5038 = vmatmul.mubr.f32.gmra.mxu0 %v4965
    %v5039 = vpop.f32.mrf.mxu0
    %v5040 = vadd.f32 0.0, %v5039
    %v5041 = vpop.f32.mrf.mxu0
    %5042 = vmatprep.mubr.f32.mxu0 0.0
    %5043 = vmatmul.mubr.f32.gmra.mxu0 %v4968
    %v5044 = vpop.f32.mrf.mxu0
    %v5045 = vadd.f32 0.0, %v5044
    %v5046 = vpop.f32.mrf.mxu0
    %5047 = vdwg.mxu0
    %v5048 = vadd.f32 %v4884, %v5040
    %v5049 = vadd.f32 %v4885, %v5045
    %5050 = vmatprep.subr.mxu0 0.0
    %5051 = vmatpush1.msra.mxu0 0.0
    %5052 = vmatprep.subr.mxu0 0.0
    %5053 = vmatpush1.msra.mxu0 0.0
    %5054 = vmatprep.subr.mxu0 0.0
    %5055 = vmatpush1.msra.mxu0 0.0
    %5056 = vmatprep.subr.mxu0 0.0
    %5057 = vmatpush1.msra.mxu0 0.0
    %5058 = vmatprep.subr.mxu0 0.0
    %5059 = vmatpush1.msra.mxu0 0.0
    %5060 = vmatprep.subr.mxu0 0.0
    %5061 = vmatpush1.msra.mxu0 0.0
    %5062 = vmatprep.subr.mxu0 0.0
    %5063 = vmatpush1.msra.mxu0 0.0
    %5064 = vmatprep.subr.mxu0 0.0
    %5065 = vmatpush1.msra.mxu0 0.0
    %5066 = vmatprep.subr.mxu0 0.0
    %5067 = vmatpush1.msra.mxu0 0.0
    %5068 = vmatprep.subr.mxu0 0.0
    %5069 = vmatpush1.msra.mxu0 0.0
    %5070 = vmatprep.subr.mxu0 0.0
    %5071 = vmatpush1.msra.mxu0 0.0
    %5072 = vmatprep.subr.mxu0 0.0
    %5073 = vmatpush1.msra.mxu0 %v558
    %5074 = vmatprep.subr.mxu0 0.0
    %5075 = vmatpush1.msra.mxu0 %v557
    %5076 = vmatprep.subr.mxu0 0.0
    %5077 = vmatpush1.msra.mxu0 %v556
    %5078 = vmatprep.subr.mxu0 0.0
    %5079 = vmatpush1.msra.mxu0 %v555
    %5080 = vmatprep.subr.mxu0 0.0
    %5081 = vmatpush1.msra.mxu0 %v554
    %5082 = vmatprep.subr.mxu0 0.0
    %5083 = vmatpush2.msra.mxu0 0.0
    %5084 = vmatprep.subr.mxu0 0.0
    %5085 = vmatpush2.msra.mxu0 0.0
    %5086 = vmatprep.subr.mxu0 0.0
    %5087 = vmatpush2.msra.mxu0 0.0
    %5088 = vmatprep.subr.mxu0 0.0
    %5089 = vmatpush2.msra.mxu0 0.0
    %5090 = vmatprep.subr.mxu0 0.0
    %5091 = vmatpush2.msra.mxu0 0.0
    %5092 = vmatprep.subr.mxu0 0.0
    %5093 = vmatpush2.msra.mxu0 0.0
    %5094 = vmatprep.subr.mxu0 0.0
    %5095 = vmatpush2.msra.mxu0 0.0
    %5096 = vmatprep.subr.mxu0 0.0
    %5097 = vmatpush2.msra.mxu0 0.0
    %5098 = vmatprep.subr.mxu0 0.0
    %5099 = vmatpush2.msra.mxu0 0.0
    %5100 = vmatprep.subr.mxu0 0.0
    %5101 = vmatpush2.msra.mxu0 0.0
    %5102 = vmatprep.subr.mxu0 0.0
    %5103 = vmatpush2.msra.mxu0 0.0
    %5104 = vmatprep.subr.mxu0 0.0
    %5105 = vmatpush2.msra.mxu0 0.0
    %5106 = vmatprep.subr.mxu0 0.0
    %5107 = vmatpush2.msra.mxu0 0.0
    %5108 = vmatprep.subr.mxu0 0.0
    %5109 = vmatpush2.msra.mxu0 0.0
    %5110 = vmatprep.subr.mxu0 0.0
    %5111 = vmatpush2.msra.mxu0 0.0
    %5112 = vmatprep.subr.mxu0 0.0
    %5113 = vmatpush2.msra.mxu0 0.0
    %5114 = vmatprep.mubr.f32.mxu0 0.0
    %5115 = vmatmul.mubr.f32.gmra.mxu0 %v4544
    %v5116 = vpop.f32.mrf.mxu0
    %v5117 = vadd.f32 0.0, %v5116
    %v5118 = vpop.f32.mrf.mxu0
    %5119 = vmatprep.mubr.f32.mxu0 0.0
    %5120 = vmatmul.mubr.f32.gmra.mxu0 %v4547
    %v5121 = vpop.f32.mrf.mxu0
    %v5122 = vadd.f32 0.0, %v5121
    %v5123 = vpop.f32.mrf.mxu0
    %5124 = vdwg.mxu0
    %s5125 = scalar_lea.vmem %s8, 48
    %v5126 = vld [vmem:[%s5125] sm:$0xff]
    %v5127 = vld [vmem:[%s5125 + $0x8] sm:$0xf]
    %v5129 = vsel %vm1618, %v5126, 0
    %v5132 = vsel %vm1618, %v5127, 0
    %v5135 = vsel %vm1625, %v5122, 0
    %5137 = vmatprep.subr.mxu0 0.0
    %5138 = vmatpush1.msra.mxu0 0.0
    %5139 = vmatprep.subr.mxu0 0.0
    %5140 = vmatpush1.msra.mxu0 0.0
    %5141 = vmatprep.subr.mxu0 0.0
    %5142 = vmatpush1.msra.mxu0 0.0
    %5143 = vmatprep.subr.mxu0 0.0
    %5144 = vmatpush1.msra.mxu0 0.0
    %5145 = vmatprep.subr.mxu0 0.0
    %5146 = vmatpush1.msra.mxu0 0.0
    %5147 = vmatprep.subr.mxu0 0.0
    %5148 = vmatpush1.msra.mxu0 0.0
    %5149 = vmatprep.subr.mxu0 0.0
    %5150 = vmatpush1.msra.mxu0 0.0
    %5151 = vmatprep.subr.mxu0 0.0
    %5152 = vmatpush1.msra.mxu0 0.0
    %5153 = vmatprep.subr.mxu0 0.0
    %5154 = vmatpush1.msra.mxu0 0.0
    %5155 = vmatprep.subr.mxu0 0.0
    %5156 = vmatpush1.msra.mxu0 0.0
    %5157 = vmatprep.subr.mxu0 0.0
    %5158 = vmatpush1.msra.mxu0 0.0
    %5159 = vmatprep.subr.mxu0 0.0
    %5160 = vmatpush1.msra.mxu0 0.0
    %5161 = vmatprep.subr.mxu0 0.0
    %5162 = vmatpush1.msra.mxu0 0.0
    %5163 = vmatprep.subr.mxu0 0.0
    %5164 = vmatpush1.msra.mxu0 0.0
    %5165 = vmatprep.subr.mxu0 0.0
    %5166 = vmatpush1.msra.mxu0 %v5135
    %5167 = vmatprep.subr.mxu0 0.0
    %5168 = vmatpush1.msra.mxu0 %v5117
    %5169 = vmatprep.subr.mxu0 0.0
    %5170 = vmatpush2.msra.mxu0 0.0
    %5171 = vmatprep.subr.mxu0 0.0
    %5172 = vmatpush2.msra.mxu0 0.0
    %5173 = vmatprep.subr.mxu0 0.0
    %5174 = vmatpush2.msra.mxu0 0.0
    %5175 = vmatprep.subr.mxu0 0.0
    %5176 = vmatpush2.msra.mxu0 0.0
    %5177 = vmatprep.subr.mxu0 0.0
    %5178 = vmatpush2.msra.mxu0 0.0
    %5179 = vmatprep.subr.mxu0 0.0
    %5180 = vmatpush2.msra.mxu0 0.0
    %5181 = vmatprep.subr.mxu0 0.0
    %5182 = vmatpush2.msra.mxu0 0.0
    %5183 = vmatprep.subr.mxu0 0.0
    %5184 = vmatpush2.msra.mxu0 0.0
    %5185 = vmatprep.subr.mxu0 0.0
    %5186 = vmatpush2.msra.mxu0 0.0
    %5187 = vmatprep.subr.mxu0 0.0
    %5188 = vmatpush2.msra.mxu0 0.0
    %5189 = vmatprep.subr.mxu0 0.0
    %5190 = vmatpush2.msra.mxu0 0.0
    %5191 = vmatprep.subr.mxu0 0.0
    %5192 = vmatpush2.msra.mxu0 0.0
    %5193 = vmatprep.subr.mxu0 0.0
    %5194 = vmatpush2.msra.mxu0 0.0
    %5195 = vmatprep.subr.mxu0 0.0
    %5196 = vmatpush2.msra.mxu0 0.0
    %5197 = vmatprep.subr.mxu0 0.0
    %5198 = vmatpush2.msra.mxu0 0.0
    %5199 = vmatprep.subr.mxu0 0.0
    %5200 = vmatpush2.msra.mxu0 0.0
    %5201 = vmatprep.mubr.f32.mxu0 0.0
    %5202 = vmatmul.mubr.f32.gmra.mxu0 %v5129
    %v5203 = vpop.f32.mrf.mxu0
    %v5204 = vadd.f32 0.0, %v5203
    %v5205 = vpop.f32.mrf.mxu0
    %5206 = vmatprep.mubr.f32.mxu0 0.0
    %5207 = vmatmul.mubr.f32.gmra.mxu0 %v5132
    %v5208 = vpop.f32.mrf.mxu0
    %v5209 = vadd.f32 0.0, %v5208
    %v5210 = vpop.f32.mrf.mxu0
    %5211 = vdwg.mxu0
    %v5212 = vadd.f32 %v5048, %v5204
    %v5213 = vadd.f32 %v5049, %v5209
    %5214 = vmatprep.subr.mxu0 0.0
    %5215 = vmatpush1.msra.mxu0 0.0
    %5216 = vmatprep.subr.mxu0 0.0
    %5217 = vmatpush1.msra.mxu0 0.0
    %5218 = vmatprep.subr.mxu0 0.0
    %5219 = vmatpush1.msra.mxu0 0.0
    %5220 = vmatprep.subr.mxu0 0.0
    %5221 = vmatpush1.msra.mxu0 0.0
    %5222 = vmatprep.subr.mxu0 0.0
    %5223 = vmatpush1.msra.mxu0 0.0
    %5224 = vmatprep.subr.mxu0 0.0
    %5225 = vmatpush1.msra.mxu0 0.0
    %5226 = vmatprep.subr.mxu0 0.0
    %5227 = vmatpush1.msra.mxu0 0.0
    %5228 = vmatprep.subr.mxu0 0.0
    %5229 = vmatpush1.msra.mxu0 0.0
    %5230 = vmatprep.subr.mxu0 0.0
    %5231 = vmatpush1.msra.mxu0 0.0
    %5232 = vmatprep.subr.mxu0 0.0
    %5233 = vmatpush1.msra.mxu0 0.0
    %5234 = vmatprep.subr.mxu0 0.0
    %5235 = vmatpush1.msra.mxu0 0.0
    %5236 = vmatprep.subr.mxu0 0.0
    %5237 = vmatpush1.msra.mxu0 %v720
    %5238 = vmatprep.subr.mxu0 0.0
    %5239 = vmatpush1.msra.mxu0 %v719
    %5240 = vmatprep.subr.mxu0 0.0
    %5241 = vmatpush1.msra.mxu0 %v718
    %5242 = vmatprep.subr.mxu0 0.0
    %5243 = vmatpush1.msra.mxu0 %v717
    %5244 = vmatprep.subr.mxu0 0.0
    %5245 = vmatpush1.msra.mxu0 %v716
    %5246 = vmatprep.subr.mxu0 0.0
    %5247 = vmatpush2.msra.mxu0 0.0
    %5248 = vmatprep.subr.mxu0 0.0
    %5249 = vmatpush2.msra.mxu0 0.0
    %5250 = vmatprep.subr.mxu0 0.0
    %5251 = vmatpush2.msra.mxu0 0.0
    %5252 = vmatprep.subr.mxu0 0.0
    %5253 = vmatpush2.msra.mxu0 0.0
    %5254 = vmatprep.subr.mxu0 0.0
    %5255 = vmatpush2.msra.mxu0 0.0
    %5256 = vmatprep.subr.mxu0 0.0
    %5257 = vmatpush2.msra.mxu0 0.0
    %5258 = vmatprep.subr.mxu0 0.0
    %5259 = vmatpush2.msra.mxu0 0.0
    %5260 = vmatprep.subr.mxu0 0.0
    %5261 = vmatpush2.msra.mxu0 0.0
    %5262 = vmatprep.subr.mxu0 0.0
    %5263 = vmatpush2.msra.mxu0 0.0
    %5264 = vmatprep.subr.mxu0 0.0
    %5265 = vmatpush2.msra.mxu0 0.0
    %5266 = vmatprep.subr.mxu0 0.0
    %5267 = vmatpush2.msra.mxu0 0.0
    %5268 = vmatprep.subr.mxu0 0.0
    %5269 = vmatpush2.msra.mxu0 0.0
    %5270 = vmatprep.subr.mxu0 0.0
    %5271 = vmatpush2.msra.mxu0 0.0
    %5272 = vmatprep.subr.mxu0 0.0
    %5273 = vmatpush2.msra.mxu0 0.0
    %5274 = vmatprep.subr.mxu0 0.0
    %5275 = vmatpush2.msra.mxu0 0.0
    %5276 = vmatprep.subr.mxu0 0.0
    %5277 = vmatpush2.msra.mxu0 0.0
    %5278 = vmatprep.mubr.f32.mxu0 0.0
    %5279 = vmatmul.mubr.f32.gmra.mxu0 %v4544
    %v5280 = vpop.f32.mrf.mxu0
    %v5281 = vadd.f32 0.0, %v5280
    %v5282 = vpop.f32.mrf.mxu0
    %5283 = vmatprep.mubr.f32.mxu0 0.0
    %5284 = vmatmul.mubr.f32.gmra.mxu0 %v4547
    %v5285 = vpop.f32.mrf.mxu0
    %v5286 = vadd.f32 0.0, %v5285
    %v5287 = vpop.f32.mrf.mxu0
    %5288 = vdwg.mxu0
    %s5289 = scalar_lea.vmem %s8, 64
    %v5290 = vld [vmem:[%s5289] sm:$0xff]
    %v5291 = vld [vmem:[%s5289 + $0x8] sm:$0xf]
    %v5293 = vsel %vm1618, %v5290, 0
    %v5296 = vsel %vm1618, %v5291, 0
    %v5299 = vsel %vm1625, %v5286, 0
    %5301 = vmatprep.subr.mxu0 0.0
    %5302 = vmatpush1.msra.mxu0 0.0
    %5303 = vmatprep.subr.mxu0 0.0
    %5304 = vmatpush1.msra.mxu0 0.0
    %5305 = vmatprep.subr.mxu0 0.0
    %5306 = vmatpush1.msra.mxu0 0.0
    %5307 = vmatprep.subr.mxu0 0.0
    %5308 = vmatpush1.msra.mxu0 0.0
    %5309 = vmatprep.subr.mxu0 0.0
    %5310 = vmatpush1.msra.mxu0 0.0
    %5311 = vmatprep.subr.mxu0 0.0
    %5312 = vmatpush1.msra.mxu0 0.0
    %5313 = vmatprep.subr.mxu0 0.0
    %5314 = vmatpush1.msra.mxu0 0.0
    %5315 = vmatprep.subr.mxu0 0.0
    %5316 = vmatpush1.msra.mxu0 0.0
    %5317 = vmatprep.subr.mxu0 0.0
    %5318 = vmatpush1.msra.mxu0 0.0
    %5319 = vmatprep.subr.mxu0 0.0
    %5320 = vmatpush1.msra.mxu0 0.0
    %5321 = vmatprep.subr.mxu0 0.0
    %5322 = vmatpush1.msra.mxu0 0.0
    %5323 = vmatprep.subr.mxu0 0.0
    %5324 = vmatpush1.msra.mxu0 0.0
    %5325 = vmatprep.subr.mxu0 0.0
    %5326 = vmatpush1.msra.mxu0 0.0
    %5327 = vmatprep.subr.mxu0 0.0
    %5328 = vmatpush1.msra.mxu0 0.0
    %5329 = vmatprep.subr.mxu0 0.0
    %5330 = vmatpush1.msra.mxu0 %v5299
    %5331 = vmatprep.subr.mxu0 0.0
    %5332 = vmatpush1.msra.mxu0 %v5281
    %5333 = vmatprep.subr.mxu0 0.0
    %5334 = vmatpush2.msra.mxu0 0.0
    %5335 = vmatprep.subr.mxu0 0.0
    %5336 = vmatpush2.msra.mxu0 0.0
    %5337 = vmatprep.subr.mxu0 0.0
    %5338 = vmatpush2.msra.mxu0 0.0
    %5339 = vmatprep.subr.mxu0 0.0
    %5340 = vmatpush2.msra.mxu0 0.0
    %5341 = vmatprep.subr.mxu0 0.0
    %5342 = vmatpush2.msra.mxu0 0.0
    %5343 = vmatprep.subr.mxu0 0.0
    %5344 = vmatpush2.msra.mxu0 0.0
    %5345 = vmatprep.subr.mxu0 0.0
    %5346 = vmatpush2.msra.mxu0 0.0
    %5347 = vmatprep.subr.mxu0 0.0
    %5348 = vmatpush2.msra.mxu0 0.0
    %5349 = vmatprep.subr.mxu0 0.0
    %5350 = vmatpush2.msra.mxu0 0.0
    %5351 = vmatprep.subr.mxu0 0.0
    %5352 = vmatpush2.msra.mxu0 0.0
    %5353 = vmatprep.subr.mxu0 0.0
    %5354 = vmatpush2.msra.mxu0 0.0
    %5355 = vmatprep.subr.mxu0 0.0
    %5356 = vmatpush2.msra.mxu0 0.0
    %5357 = vmatprep.subr.mxu0 0.0
    %5358 = vmatpush2.msra.mxu0 0.0
    %5359 = vmatprep.subr.mxu0 0.0
    %5360 = vmatpush2.msra.mxu0 0.0
    %5361 = vmatprep.subr.mxu0 0.0
    %5362 = vmatpush2.msra.mxu0 0.0
    %5363 = vmatprep.subr.mxu0 0.0
    %5364 = vmatpush2.msra.mxu0 0.0
    %5365 = vmatprep.mubr.f32.mxu0 0.0
    %5366 = vmatmul.mubr.f32.gmra.mxu0 %v5293
    %v5367 = vpop.f32.mrf.mxu0
    %v5368 = vadd.f32 0.0, %v5367
    %v5369 = vpop.f32.mrf.mxu0
    %5370 = vmatprep.mubr.f32.mxu0 0.0
    %5371 = vmatmul.mubr.f32.gmra.mxu0 %v5296
    %v5372 = vpop.f32.mrf.mxu0
    %v5373 = vadd.f32 0.0, %v5372
    %v5374 = vpop.f32.mrf.mxu0
    %5375 = vdwg.mxu0
    %v5376 = vadd.f32 %v5212, %v5368
    %v5377 = vadd.f32 %v5213, %v5373
    %5378 = vmatprep.subr.mxu0 0.0
    %5379 = vmatpush1.msra.mxu0 0.0
    %5380 = vmatprep.subr.mxu0 0.0
    %5381 = vmatpush1.msra.mxu0 0.0
    %5382 = vmatprep.subr.mxu0 0.0
    %5383 = vmatpush1.msra.mxu0 0.0
    %5384 = vmatprep.subr.mxu0 0.0
    %5385 = vmatpush1.msra.mxu0 0.0
    %5386 = vmatprep.subr.mxu0 0.0
    %5387 = vmatpush1.msra.mxu0 0.0
    %5388 = vmatprep.subr.mxu0 0.0
    %5389 = vmatpush1.msra.mxu0 0.0
    %5390 = vmatprep.subr.mxu0 0.0
    %5391 = vmatpush1.msra.mxu0 0.0
    %5392 = vmatprep.subr.mxu0 0.0
    %5393 = vmatpush1.msra.mxu0 0.0
    %5394 = vmatprep.subr.mxu0 0.0
    %5395 = vmatpush1.msra.mxu0 0.0
    %5396 = vmatprep.subr.mxu0 0.0
    %5397 = vmatpush1.msra.mxu0 0.0
    %5398 = vmatprep.subr.mxu0 0.0
    %5399 = vmatpush1.msra.mxu0 0.0
    %5400 = vmatprep.subr.mxu0 0.0
    %5401 = vmatpush1.msra.mxu0 %v882
    %5402 = vmatprep.subr.mxu0 0.0
    %5403 = vmatpush1.msra.mxu0 %v881
    %5404 = vmatprep.subr.mxu0 0.0
    %5405 = vmatpush1.msra.mxu0 %v880
    %5406 = vmatprep.subr.mxu0 0.0
    %5407 = vmatpush1.msra.mxu0 %v879
    %5408 = vmatprep.subr.mxu0 0.0
    %5409 = vmatpush1.msra.mxu0 %v878
    %5410 = vmatprep.subr.mxu0 0.0
    %5411 = vmatpush2.msra.mxu0 0.0
    %5412 = vmatprep.subr.mxu0 0.0
    %5413 = vmatpush2.msra.mxu0 0.0
    %5414 = vmatprep.subr.mxu0 0.0
    %5415 = vmatpush2.msra.mxu0 0.0
    %5416 = vmatprep.subr.mxu0 0.0
    %5417 = vmatpush2.msra.mxu0 0.0
    %5418 = vmatprep.subr.mxu0 0.0
    %5419 = vmatpush2.msra.mxu0 0.0
    %5420 = vmatprep.subr.mxu0 0.0
    %5421 = vmatpush2.msra.mxu0 0.0
    %5422 = vmatprep.subr.mxu0 0.0
    %5423 = vmatpush2.msra.mxu0 0.0
    %5424 = vmatprep.subr.mxu0 0.0
    %5425 = vmatpush2.msra.mxu0 0.0
    %5426 = vmatprep.subr.mxu0 0.0
    %5427 = vmatpush2.msra.mxu0 0.0
    %5428 = vmatprep.subr.mxu0 0.0
    %5429 = vmatpush2.msra.mxu0 0.0
    %5430 = vmatprep.subr.mxu0 0.0
    %5431 = vmatpush2.msra.mxu0 0.0
    %5432 = vmatprep.subr.mxu0 0.0
    %5433 = vmatpush2.msra.mxu0 0.0
    %5434 = vmatprep.subr.mxu0 0.0
    %5435 = vmatpush2.msra.mxu0 0.0
    %5436 = vmatprep.subr.mxu0 0.0
    %5437 = vmatpush2.msra.mxu0 0.0
    %5438 = vmatprep.subr.mxu0 0.0
    %5439 = vmatpush2.msra.mxu0 0.0
    %5440 = vmatprep.subr.mxu0 0.0
    %5441 = vmatpush2.msra.mxu0 0.0
    %5442 = vmatprep.mubr.f32.mxu0 0.0
    %5443 = vmatmul.mubr.f32.gmra.mxu0 %v4544
    %v5444 = vpop.f32.mrf.mxu0
    %v5445 = vadd.f32 0.0, %v5444
    %v5446 = vpop.f32.mrf.mxu0
    %5447 = vmatprep.mubr.f32.mxu0 0.0
    %5448 = vmatmul.mubr.f32.gmra.mxu0 %v4547
    %v5449 = vpop.f32.mrf.mxu0
    %v5450 = vadd.f32 0.0, %v5449
    %v5451 = vpop.f32.mrf.mxu0
    %5452 = vdwg.mxu0
    %s5453 = scalar_lea.vmem %s8, 80
    %v5454 = vld [vmem:[%s5453] sm:$0xff]
    %v5455 = vld [vmem:[%s5453 + $0x8] sm:$0xf]
    %v5457 = vsel %vm1618, %v5454, 0
    %v5460 = vsel %vm1618, %v5455, 0
    %v5463 = vsel %vm1625, %v5450, 0
    %5465 = vmatprep.subr.mxu0 0.0
    %5466 = vmatpush1.msra.mxu0 0.0
    %5467 = vmatprep.subr.mxu0 0.0
    %5468 = vmatpush1.msra.mxu0 0.0
    %5469 = vmatprep.subr.mxu0 0.0
    %5470 = vmatpush1.msra.mxu0 0.0
    %5471 = vmatprep.subr.mxu0 0.0
    %5472 = vmatpush1.msra.mxu0 0.0
    %5473 = vmatprep.subr.mxu0 0.0
    %5474 = vmatpush1.msra.mxu0 0.0
    %5475 = vmatprep.subr.mxu0 0.0
    %5476 = vmatpush1.msra.mxu0 0.0
    %5477 = vmatprep.subr.mxu0 0.0
    %5478 = vmatpush1.msra.mxu0 0.0
    %5479 = vmatprep.subr.mxu0 0.0
    %5480 = vmatpush1.msra.mxu0 0.0
    %5481 = vmatprep.subr.mxu0 0.0
    %5482 = vmatpush1.msra.mxu0 0.0
    %5483 = vmatprep.subr.mxu0 0.0
    %5484 = vmatpush1.msra.mxu0 0.0
    %5485 = vmatprep.subr.mxu0 0.0
    %5486 = vmatpush1.msra.mxu0 0.0
    %5487 = vmatprep.subr.mxu0 0.0
    %5488 = vmatpush1.msra.mxu0 0.0
    %5489 = vmatprep.subr.mxu0 0.0
    %5490 = vmatpush1.msra.mxu0 0.0
    %5491 = vmatprep.subr.mxu0 0.0
    %5492 = vmatpush1.msra.mxu0 0.0
    %5493 = vmatprep.subr.mxu0 0.0
    %5494 = vmatpush1.msra.mxu0 %v5463
    %5495 = vmatprep.subr.mxu0 0.0
    %5496 = vmatpush1.msra.mxu0 %v5445
    %5497 = vmatprep.subr.mxu0 0.0
    %5498 = vmatpush2.msra.mxu0 0.0
    %5499 = vmatprep.subr.mxu0 0.0
    %5500 = vmatpush2.msra.mxu0 0.0
    %5501 = vmatprep.subr.mxu0 0.0
    %5502 = vmatpush2.msra.mxu0 0.0
    %5503 = vmatprep.subr.mxu0 0.0
    %5504 = vmatpush2.msra.mxu0 0.0
    %5505 = vmatprep.subr.mxu0 0.0
    %5506 = vmatpush2.msra.mxu0 0.0
    %5507 = vmatprep.subr.mxu0 0.0
    %5508 = vmatpush2.msra.mxu0 0.0
    %5509 = vmatprep.subr.mxu0 0.0
    %5510 = vmatpush2.msra.mxu0 0.0
    %5511 = vmatprep.subr.mxu0 0.0
    %5512 = vmatpush2.msra.mxu0 0.0
    %5513 = vmatprep.subr.mxu0 0.0
    %5514 = vmatpush2.msra.mxu0 0.0
    %5515 = vmatprep.subr.mxu0 0.0
    %5516 = vmatpush2.msra.mxu0 0.0
    %5517 = vmatprep.subr.mxu0 0.0
    %5518 = vmatpush2.msra.mxu0 0.0
    %5519 = vmatprep.subr.mxu0 0.0
    %5520 = vmatpush2.msra.mxu0 0.0
    %5521 = vmatprep.subr.mxu0 0.0
    %5522 = vmatpush2.msra.mxu0 0.0
    %5523 = vmatprep.subr.mxu0 0.0
    %5524 = vmatpush2.msra.mxu0 0.0
    %5525 = vmatprep.subr.mxu0 0.0
    %5526 = vmatpush2.msra.mxu0 0.0
    %5527 = vmatprep.subr.mxu0 0.0
    %5528 = vmatpush2.msra.mxu0 0.0
    %5529 = vmatprep.mubr.f32.mxu0 0.0
    %5530 = vmatmul.mubr.f32.gmra.mxu0 %v5457
    %v5531 = vpop.f32.mrf.mxu0
    %v5532 = vadd.f32 0.0, %v5531
    %v5533 = vpop.f32.mrf.mxu0
    %5534 = vmatprep.mubr.f32.mxu0 0.0
    %5535 = vmatmul.mubr.f32.gmra.mxu0 %v5460
    %v5536 = vpop.f32.mrf.mxu0
    %v5537 = vadd.f32 0.0, %v5536
    %v5538 = vpop.f32.mrf.mxu0
    %5539 = vdwg.mxu0
    %v5540 = vadd.f32 %v5376, %v5532
    %v5541 = vadd.f32 %v5377, %v5537
    %5542 = vmatprep.subr.mxu0 0.0
    %5543 = vmatpush1.msra.mxu0 0.0
    %5544 = vmatprep.subr.mxu0 0.0
    %5545 = vmatpush1.msra.mxu0 0.0
    %5546 = vmatprep.subr.mxu0 0.0
    %5547 = vmatpush1.msra.mxu0 0.0
    %5548 = vmatprep.subr.mxu0 0.0
    %5549 = vmatpush1.msra.mxu0 0.0
    %5550 = vmatprep.subr.mxu0 0.0
    %5551 = vmatpush1.msra.mxu0 0.0
    %5552 = vmatprep.subr.mxu0 0.0
    %5553 = vmatpush1.msra.mxu0 0.0
    %5554 = vmatprep.subr.mxu0 0.0
    %5555 = vmatpush1.msra.mxu0 0.0
    %5556 = vmatprep.subr.mxu0 0.0
    %5557 = vmatpush1.msra.mxu0 0.0
    %5558 = vmatprep.subr.mxu0 0.0
    %5559 = vmatpush1.msra.mxu0 0.0
    %5560 = vmatprep.subr.mxu0 0.0
    %5561 = vmatpush1.msra.mxu0 0.0
    %5562 = vmatprep.subr.mxu0 0.0
    %5563 = vmatpush1.msra.mxu0 0.0
    %5564 = vmatprep.subr.mxu0 0.0
    %5565 = vmatpush1.msra.mxu0 %v1044
    %5566 = vmatprep.subr.mxu0 0.0
    %5567 = vmatpush1.msra.mxu0 %v1043
    %5568 = vmatprep.subr.mxu0 0.0
    %5569 = vmatpush1.msra.mxu0 %v1042
    %5570 = vmatprep.subr.mxu0 0.0
    %5571 = vmatpush1.msra.mxu0 %v1041
    %5572 = vmatprep.subr.mxu0 0.0
    %5573 = vmatpush1.msra.mxu0 %v1040
    %5574 = vmatprep.subr.mxu0 0.0
    %5575 = vmatpush2.msra.mxu0 0.0
    %5576 = vmatprep.subr.mxu0 0.0
    %5577 = vmatpush2.msra.mxu0 0.0
    %5578 = vmatprep.subr.mxu0 0.0
    %5579 = vmatpush2.msra.mxu0 0.0
    %5580 = vmatprep.subr.mxu0 0.0
    %5581 = vmatpush2.msra.mxu0 0.0
    %5582 = vmatprep.subr.mxu0 0.0
    %5583 = vmatpush2.msra.mxu0 0.0
    %5584 = vmatprep.subr.mxu0 0.0
    %5585 = vmatpush2.msra.mxu0 0.0
    %5586 = vmatprep.subr.mxu0 0.0
    %5587 = vmatpush2.msra.mxu0 0.0
    %5588 = vmatprep.subr.mxu0 0.0
    %5589 = vmatpush2.msra.mxu0 0.0
    %5590 = vmatprep.subr.mxu0 0.0
    %5591 = vmatpush2.msra.mxu0 0.0
    %5592 = vmatprep.subr.mxu0 0.0
    %5593 = vmatpush2.msra.mxu0 0.0
    %5594 = vmatprep.subr.mxu0 0.0
    %5595 = vmatpush2.msra.mxu0 0.0
    %5596 = vmatprep.subr.mxu0 0.0
    %5597 = vmatpush2.msra.mxu0 0.0
    %5598 = vmatprep.subr.mxu0 0.0
    %5599 = vmatpush2.msra.mxu0 0.0
    %5600 = vmatprep.subr.mxu0 0.0
    %5601 = vmatpush2.msra.mxu0 0.0
    %5602 = vmatprep.subr.mxu0 0.0
    %5603 = vmatpush2.msra.mxu0 0.0
    %5604 = vmatprep.subr.mxu0 0.0
    %5605 = vmatpush2.msra.mxu0 0.0
    %5606 = vmatprep.mubr.f32.mxu0 0.0
    %5607 = vmatmul.mubr.f32.gmra.mxu0 %v4544
    %v5608 = vpop.f32.mrf.mxu0
    %v5609 = vadd.f32 0.0, %v5608
    %v5610 = vpop.f32.mrf.mxu0
    %5611 = vmatprep.mubr.f32.mxu0 0.0
    %5612 = vmatmul.mubr.f32.gmra.mxu0 %v4547
    %v5613 = vpop.f32.mrf.mxu0
    %v5614 = vadd.f32 0.0, %v5613
    %v5615 = vpop.f32.mrf.mxu0
    %5616 = vdwg.mxu0
    %s5617 = scalar_lea.vmem %s8, 96
    %v5618 = vld [vmem:[%s5617] sm:$0xff]
    %v5619 = vld [vmem:[%s5617 + $0x8] sm:$0xf]
    %v5621 = vsel %vm1618, %v5618, 0
    %v5624 = vsel %vm1618, %v5619, 0
    %v5627 = vsel %vm1625, %v5614, 0
    %5629 = vmatprep.subr.mxu0 0.0
    %5630 = vmatpush1.msra.mxu0 0.0
    %5631 = vmatprep.subr.mxu0 0.0
    %5632 = vmatpush1.msra.mxu0 0.0
    %5633 = vmatprep.subr.mxu0 0.0
    %5634 = vmatpush1.msra.mxu0 0.0
    %5635 = vmatprep.subr.mxu0 0.0
    %5636 = vmatpush1.msra.mxu0 0.0
    %5637 = vmatprep.subr.mxu0 0.0
    %5638 = vmatpush1.msra.mxu0 0.0
    %5639 = vmatprep.subr.mxu0 0.0
    %5640 = vmatpush1.msra.mxu0 0.0
    %5641 = vmatprep.subr.mxu0 0.0
    %5642 = vmatpush1.msra.mxu0 0.0
    %5643 = vmatprep.subr.mxu0 0.0
    %5644 = vmatpush1.msra.mxu0 0.0
    %5645 = vmatprep.subr.mxu0 0.0
    %5646 = vmatpush1.msra.mxu0 0.0
    %5647 = vmatprep.subr.mxu0 0.0
    %5648 = vmatpush1.msra.mxu0 0.0
    %5649 = vmatprep.subr.mxu0 0.0
    %5650 = vmatpush1.msra.mxu0 0.0
    %5651 = vmatprep.subr.mxu0 0.0
    %5652 = vmatpush1.msra.mxu0 0.0
    %5653 = vmatprep.subr.mxu0 0.0
    %5654 = vmatpush1.msra.mxu0 0.0
    %5655 = vmatprep.subr.mxu0 0.0
    %5656 = vmatpush1.msra.mxu0 0.0
    %5657 = vmatprep.subr.mxu0 0.0
    %5658 = vmatpush1.msra.mxu0 %v5627
    %5659 = vmatprep.subr.mxu0 0.0
    %5660 = vmatpush1.msra.mxu0 %v5609
    %5661 = vmatprep.subr.mxu0 0.0
    %5662 = vmatpush2.msra.mxu0 0.0
    %5663 = vmatprep.subr.mxu0 0.0
    %5664 = vmatpush2.msra.mxu0 0.0
    %5665 = vmatprep.subr.mxu0 0.0
    %5666 = vmatpush2.msra.mxu0 0.0
    %5667 = vmatprep.subr.mxu0 0.0
    %5668 = vmatpush2.msra.mxu0 0.0
    %5669 = vmatprep.subr.mxu0 0.0
    %5670 = vmatpush2.msra.mxu0 0.0
    %5671 = vmatprep.subr.mxu0 0.0
    %5672 = vmatpush2.msra.mxu0 0.0
    %5673 = vmatprep.subr.mxu0 0.0
    %5674 = vmatpush2.msra.mxu0 0.0
    %5675 = vmatprep.subr.mxu0 0.0
    %5676 = vmatpush2.msra.mxu0 0.0
    %5677 = vmatprep.subr.mxu0 0.0
    %5678 = vmatpush2.msra.mxu0 0.0
    %5679 = vmatprep.subr.mxu0 0.0
    %5680 = vmatpush2.msra.mxu0 0.0
    %5681 = vmatprep.subr.mxu0 0.0
    %5682 = vmatpush2.msra.mxu0 0.0
    %5683 = vmatprep.subr.mxu0 0.0
    %5684 = vmatpush2.msra.mxu0 0.0
    %5685 = vmatprep.subr.mxu0 0.0
    %5686 = vmatpush2.msra.mxu0 0.0
    %5687 = vmatprep.subr.mxu0 0.0
    %5688 = vmatpush2.msra.mxu0 0.0
    %5689 = vmatprep.subr.mxu0 0.0
    %5690 = vmatpush2.msra.mxu0 0.0
    %5691 = vmatprep.subr.mxu0 0.0
    %5692 = vmatpush2.msra.mxu0 0.0
    %5693 = vmatprep.mubr.f32.mxu0 0.0
    %5694 = vmatmul.mubr.f32.gmra.mxu0 %v5621
    %v5695 = vpop.f32.mrf.mxu0
    %v5696 = vadd.f32 0.0, %v5695
    %v5697 = vpop.f32.mrf.mxu0
    %5698 = vmatprep.mubr.f32.mxu0 0.0
    %5699 = vmatmul.mubr.f32.gmra.mxu0 %v5624
    %v5700 = vpop.f32.mrf.mxu0
    %v5701 = vadd.f32 0.0, %v5700
    %v5702 = vpop.f32.mrf.mxu0
    %5703 = vdwg.mxu0
    %v5704 = vadd.f32 %v5540, %v5696
    %v5705 = vadd.f32 %v5541, %v5701
    %5706 = vmatprep.subr.mxu0 0.0
    %5707 = vmatpush1.msra.mxu0 0.0
    %5708 = vmatprep.subr.mxu0 0.0
    %5709 = vmatpush1.msra.mxu0 0.0
    %5710 = vmatprep.subr.mxu0 0.0
    %5711 = vmatpush1.msra.mxu0 0.0
    %5712 = vmatprep.subr.mxu0 0.0
    %5713 = vmatpush1.msra.mxu0 0.0
    %5714 = vmatprep.subr.mxu0 0.0
    %5715 = vmatpush1.msra.mxu0 0.0
    %5716 = vmatprep.subr.mxu0 0.0
    %5717 = vmatpush1.msra.mxu0 0.0
    %5718 = vmatprep.subr.mxu0 0.0
    %5719 = vmatpush1.msra.mxu0 0.0
    %5720 = vmatprep.subr.mxu0 0.0
    %5721 = vmatpush1.msra.mxu0 0.0
    %5722 = vmatprep.subr.mxu0 0.0
    %5723 = vmatpush1.msra.mxu0 0.0
    %5724 = vmatprep.subr.mxu0 0.0
    %5725 = vmatpush1.msra.mxu0 0.0
    %5726 = vmatprep.subr.mxu0 0.0
    %5727 = vmatpush1.msra.mxu0 0.0
    %5728 = vmatprep.subr.mxu0 0.0
    %5729 = vmatpush1.msra.mxu0 %v1206
    %5730 = vmatprep.subr.mxu0 0.0
    %5731 = vmatpush1.msra.mxu0 %v1205
    %5732 = vmatprep.subr.mxu0 0.0
    %5733 = vmatpush1.msra.mxu0 %v1204
    %5734 = vmatprep.subr.mxu0 0.0
    %5735 = vmatpush1.msra.mxu0 %v1203
    %5736 = vmatprep.subr.mxu0 0.0
    %5737 = vmatpush1.msra.mxu0 %v1202
    %5738 = vmatprep.subr.mxu0 0.0
    %5739 = vmatpush2.msra.mxu0 0.0
    %5740 = vmatprep.subr.mxu0 0.0
    %5741 = vmatpush2.msra.mxu0 0.0
    %5742 = vmatprep.subr.mxu0 0.0
    %5743 = vmatpush2.msra.mxu0 0.0
    %5744 = vmatprep.subr.mxu0 0.0
    %5745 = vmatpush2.msra.mxu0 0.0
    %5746 = vmatprep.subr.mxu0 0.0
    %5747 = vmatpush2.msra.mxu0 0.0
    %5748 = vmatprep.subr.mxu0 0.0
    %5749 = vmatpush2.msra.mxu0 0.0
    %5750 = vmatprep.subr.mxu0 0.0
    %5751 = vmatpush2.msra.mxu0 0.0
    %5752 = vmatprep.subr.mxu0 0.0
    %5753 = vmatpush2.msra.mxu0 0.0
    %5754 = vmatprep.subr.mxu0 0.0
    %5755 = vmatpush2.msra.mxu0 0.0
    %5756 = vmatprep.subr.mxu0 0.0
    %5757 = vmatpush2.msra.mxu0 0.0
    %5758 = vmatprep.subr.mxu0 0.0
    %5759 = vmatpush2.msra.mxu0 0.0
    %5760 = vmatprep.subr.mxu0 0.0
    %5761 = vmatpush2.msra.mxu0 0.0
    %5762 = vmatprep.subr.mxu0 0.0
    %5763 = vmatpush2.msra.mxu0 0.0
    %5764 = vmatprep.subr.mxu0 0.0
    %5765 = vmatpush2.msra.mxu0 0.0
    %5766 = vmatprep.subr.mxu0 0.0
    %5767 = vmatpush2.msra.mxu0 0.0
    %5768 = vmatprep.subr.mxu0 0.0
    %5769 = vmatpush2.msra.mxu0 0.0
    %5770 = vmatprep.mubr.f32.mxu0 0.0
    %5771 = vmatmul.mubr.f32.gmra.mxu0 %v4544
    %v5772 = vpop.f32.mrf.mxu0
    %v5773 = vadd.f32 0.0, %v5772
    %v5774 = vpop.f32.mrf.mxu0
    %5775 = vmatprep.mubr.f32.mxu0 0.0
    %5776 = vmatmul.mubr.f32.gmra.mxu0 %v4547
    %v5777 = vpop.f32.mrf.mxu0
    %v5778 = vadd.f32 0.0, %v5777
    %v5779 = vpop.f32.mrf.mxu0
    %5780 = vdwg.mxu0
    %s5781 = scalar_lea.vmem %s8, 112
    %v5782 = vld [vmem:[%s5781] sm:$0xff]
    %v5783 = vld [vmem:[%s5781 + $0x8] sm:$0xf]
    %v5785 = vsel %vm1618, %v5782, 0
    %v5788 = vsel %vm1618, %v5783, 0
    %v5791 = vsel %vm1625, %v5778, 0
    %5793 = vmatprep.subr.mxu0 0.0
    %5794 = vmatpush1.msra.mxu0 0.0
    %5795 = vmatprep.subr.mxu0 0.0
    %5796 = vmatpush1.msra.mxu0 0.0
    %5797 = vmatprep.subr.mxu0 0.0
    %5798 = vmatpush1.msra.mxu0 0.0
    %5799 = vmatprep.subr.mxu0 0.0
    %5800 = vmatpush1.msra.mxu0 0.0
    %5801 = vmatprep.subr.mxu0 0.0
    %5802 = vmatpush1.msra.mxu0 0.0
    %5803 = vmatprep.subr.mxu0 0.0
    %5804 = vmatpush1.msra.mxu0 0.0
    %5805 = vmatprep.subr.mxu0 0.0
    %5806 = vmatpush1.msra.mxu0 0.0
    %5807 = vmatprep.subr.mxu0 0.0
    %5808 = vmatpush1.msra.mxu0 0.0
    %5809 = vmatprep.subr.mxu0 0.0
    %5810 = vmatpush1.msra.mxu0 0.0
    %5811 = vmatprep.subr.mxu0 0.0
    %5812 = vmatpush1.msra.mxu0 0.0
    %5813 = vmatprep.subr.mxu0 0.0
    %5814 = vmatpush1.msra.mxu0 0.0
    %5815 = vmatprep.subr.mxu0 0.0
    %5816 = vmatpush1.msra.mxu0 0.0
    %5817 = vmatprep.subr.mxu0 0.0
    %5818 = vmatpush1.msra.mxu0 0.0
    %5819 = vmatprep.subr.mxu0 0.0
    %5820 = vmatpush1.msra.mxu0 0.0
    %5821 = vmatprep.subr.mxu0 0.0
    %5822 = vmatpush1.msra.mxu0 %v5791
    %5823 = vmatprep.subr.mxu0 0.0
    %5824 = vmatpush1.msra.mxu0 %v5773
    %5825 = vmatprep.subr.mxu0 0.0
    %5826 = vmatpush2.msra.mxu0 0.0
    %5827 = vmatprep.subr.mxu0 0.0
    %5828 = vmatpush2.msra.mxu0 0.0
    %5829 = vmatprep.subr.mxu0 0.0
    %5830 = vmatpush2.msra.mxu0 0.0
    %5831 = vmatprep.subr.mxu0 0.0
    %5832 = vmatpush2.msra.mxu0 0.0
    %5833 = vmatprep.subr.mxu0 0.0
    %5834 = vmatpush2.msra.mxu0 0.0
    %5835 = vmatprep.subr.mxu0 0.0
    %5836 = vmatpush2.msra.mxu0 0.0
    %5837 = vmatprep.subr.mxu0 0.0
    %5838 = vmatpush2.msra.mxu0 0.0
    %5839 = vmatprep.subr.mxu0 0.0
    %5840 = vmatpush2.msra.mxu0 0.0
    %5841 = vmatprep.subr.mxu0 0.0
    %5842 = vmatpush2.msra.mxu0 0.0
    %5843 = vmatprep.subr.mxu0 0.0
    %5844 = vmatpush2.msra.mxu0 0.0
    %5845 = vmatprep.subr.mxu0 0.0
    %5846 = vmatpush2.msra.mxu0 0.0
    %5847 = vmatprep.subr.mxu0 0.0
    %5848 = vmatpush2.msra.mxu0 0.0
    %5849 = vmatprep.subr.mxu0 0.0
    %5850 = vmatpush2.msra.mxu0 0.0
    %5851 = vmatprep.subr.mxu0 0.0
    %5852 = vmatpush2.msra.mxu0 0.0
    %5853 = vmatprep.subr.mxu0 0.0
    %5854 = vmatpush2.msra.mxu0 0.0
    %5855 = vmatprep.subr.mxu0 0.0
    %5856 = vmatpush2.msra.mxu0 0.0
    %5857 = vmatprep.mubr.f32.mxu0 0.0
    %5858 = vmatmul.mubr.f32.gmra.mxu0 %v5785
    %v5859 = vpop.f32.mrf.mxu0
    %v5860 = vadd.f32 0.0, %v5859
    %v5861 = vpop.f32.mrf.mxu0
    %5862 = vmatprep.mubr.f32.mxu0 0.0
    %5863 = vmatmul.mubr.f32.gmra.mxu0 %v5788
    %v5864 = vpop.f32.mrf.mxu0
    %v5865 = vadd.f32 0.0, %v5864
    %v5866 = vpop.f32.mrf.mxu0
    %5867 = vdwg.mxu0
    %v5868 = vadd.f32 %v5704, %v5860
    %v5869 = vadd.f32 %v5705, %v5865
    %5870 = vmatprep.subr.mxu0 0.0
    %5871 = vmatpush1.msra.mxu0 0.0
    %5872 = vmatprep.subr.mxu0 0.0
    %5873 = vmatpush1.msra.mxu0 0.0
    %5874 = vmatprep.subr.mxu0 0.0
    %5875 = vmatpush1.msra.mxu0 0.0
    %5876 = vmatprep.subr.mxu0 0.0
    %5877 = vmatpush1.msra.mxu0 0.0
    %5878 = vmatprep.subr.mxu0 0.0
    %5879 = vmatpush1.msra.mxu0 0.0
    %5880 = vmatprep.subr.mxu0 0.0
    %5881 = vmatpush1.msra.mxu0 0.0
    %5882 = vmatprep.subr.mxu0 0.0
    %5883 = vmatpush1.msra.mxu0 0.0
    %5884 = vmatprep.subr.mxu0 0.0
    %5885 = vmatpush1.msra.mxu0 0.0
    %5886 = vmatprep.subr.mxu0 0.0
    %5887 = vmatpush1.msra.mxu0 0.0
    %5888 = vmatprep.subr.mxu0 0.0
    %5889 = vmatpush1.msra.mxu0 0.0
    %5890 = vmatprep.subr.mxu0 0.0
    %5891 = vmatpush1.msra.mxu0 0.0
    %5892 = vmatprep.subr.mxu0 0.0
    %5893 = vmatpush1.msra.mxu0 %v1368
    %5894 = vmatprep.subr.mxu0 0.0
    %5895 = vmatpush1.msra.mxu0 %v1367
    %5896 = vmatprep.subr.mxu0 0.0
    %5897 = vmatpush1.msra.mxu0 %v1366
    %5898 = vmatprep.subr.mxu0 0.0
    %5899 = vmatpush1.msra.mxu0 %v1365
    %5900 = vmatprep.subr.mxu0 0.0
    %5901 = vmatpush1.msra.mxu0 %v1364
    %5902 = vmatprep.subr.mxu0 0.0
    %5903 = vmatpush2.msra.mxu0 0.0
    %5904 = vmatprep.subr.mxu0 0.0
    %5905 = vmatpush2.msra.mxu0 0.0
    %5906 = vmatprep.subr.mxu0 0.0
    %5907 = vmatpush2.msra.mxu0 0.0
    %5908 = vmatprep.subr.mxu0 0.0
    %5909 = vmatpush2.msra.mxu0 0.0
    %5910 = vmatprep.subr.mxu0 0.0
    %5911 = vmatpush2.msra.mxu0 0.0
    %5912 = vmatprep.subr.mxu0 0.0
    %5913 = vmatpush2.msra.mxu0 0.0
    %5914 = vmatprep.subr.mxu0 0.0
    %5915 = vmatpush2.msra.mxu0 0.0
    %5916 = vmatprep.subr.mxu0 0.0
    %5917 = vmatpush2.msra.mxu0 0.0
    %5918 = vmatprep.subr.mxu0 0.0
    %5919 = vmatpush2.msra.mxu0 0.0
    %5920 = vmatprep.subr.mxu0 0.0
    %5921 = vmatpush2.msra.mxu0 0.0
    %5922 = vmatprep.subr.mxu0 0.0
    %5923 = vmatpush2.msra.mxu0 0.0
    %5924 = vmatprep.subr.mxu0 0.0
    %5925 = vmatpush2.msra.mxu0 0.0
    %5926 = vmatprep.subr.mxu0 0.0
    %5927 = vmatpush2.msra.mxu0 0.0
    %5928 = vmatprep.subr.mxu0 0.0
    %5929 = vmatpush2.msra.mxu0 0.0
    %5930 = vmatprep.subr.mxu0 0.0
    %5931 = vmatpush2.msra.mxu0 0.0
    %5932 = vmatprep.subr.mxu0 0.0
    %5933 = vmatpush2.msra.mxu0 0.0
    %5934 = vmatprep.mubr.f32.mxu0 0.0
    %5935 = vmatmul.mubr.f32.gmra.mxu0 %v4544
    %v5936 = vpop.f32.mrf.mxu0
    %v5937 = vadd.f32 0.0, %v5936
    %v5938 = vpop.f32.mrf.mxu0
    %5939 = vmatprep.mubr.f32.mxu0 0.0
    %5940 = vmatmul.mubr.f32.gmra.mxu0 %v4547
    %v5941 = vpop.f32.mrf.mxu0
    %v5942 = vadd.f32 0.0, %v5941
    %v5943 = vpop.f32.mrf.mxu0
    %5944 = vdwg.mxu0
    %s5945 = scalar_lea.vmem %s8, 128
    %v5946 = vld [vmem:[%s5945] sm:$0xff]
    %v5947 = vld [vmem:[%s5945 + $0x8] sm:$0xf]
    %v5949 = vsel %vm1618, %v5946, 0
    %v5952 = vsel %vm1618, %v5947, 0
    %v5955 = vsel %vm1625, %v5942, 0
    %5957 = vmatprep.subr.mxu0 0.0
    %5958 = vmatpush1.msra.mxu0 0.0
    %5959 = vmatprep.subr.mxu0 0.0
    %5960 = vmatpush1.msra.mxu0 0.0
    %5961 = vmatprep.subr.mxu0 0.0
    %5962 = vmatpush1.msra.mxu0 0.0
    %5963 = vmatprep.subr.mxu0 0.0
    %5964 = vmatpush1.msra.mxu0 0.0
    %5965 = vmatprep.subr.mxu0 0.0
    %5966 = vmatpush1.msra.mxu0 0.0
    %5967 = vmatprep.subr.mxu0 0.0
    %5968 = vmatpush1.msra.mxu0 0.0
    %5969 = vmatprep.subr.mxu0 0.0
    %5970 = vmatpush1.msra.mxu0 0.0
    %5971 = vmatprep.subr.mxu0 0.0
    %5972 = vmatpush1.msra.mxu0 0.0
    %5973 = vmatprep.subr.mxu0 0.0
    %5974 = vmatpush1.msra.mxu0 0.0
    %5975 = vmatprep.subr.mxu0 0.0
    %5976 = vmatpush1.msra.mxu0 0.0
    %5977 = vmatprep.subr.mxu0 0.0
    %5978 = vmatpush1.msra.mxu0 0.0
    %5979 = vmatprep.subr.mxu0 0.0
    %5980 = vmatpush1.msra.mxu0 0.0
    %5981 = vmatprep.subr.mxu0 0.0
    %5982 = vmatpush1.msra.mxu0 0.0
    %5983 = vmatprep.subr.mxu0 0.0
    %5984 = vmatpush1.msra.mxu0 0.0
    %5985 = vmatprep.subr.mxu0 0.0
    %5986 = vmatpush1.msra.mxu0 %v5955
    %5987 = vmatprep.subr.mxu0 0.0
    %5988 = vmatpush1.msra.mxu0 %v5937
    %5989 = vmatprep.subr.mxu0 0.0
    %5990 = vmatpush2.msra.mxu0 0.0
    %5991 = vmatprep.subr.mxu0 0.0
    %5992 = vmatpush2.msra.mxu0 0.0
    %5993 = vmatprep.subr.mxu0 0.0
    %5994 = vmatpush2.msra.mxu0 0.0
    %5995 = vmatprep.subr.mxu0 0.0
    %5996 = vmatpush2.msra.mxu0 0.0
    %5997 = vmatprep.subr.mxu0 0.0
    %5998 = vmatpush2.msra.mxu0 0.0
    %5999 = vmatprep.subr.mxu0 0.0
    %6000 = vmatpush2.msra.mxu0 0.0
    %6001 = vmatprep.subr.mxu0 0.0
    %6002 = vmatpush2.msra.mxu0 0.0
    %6003 = vmatprep.subr.mxu0 0.0
    %6004 = vmatpush2.msra.mxu0 0.0
    %6005 = vmatprep.subr.mxu0 0.0
    %6006 = vmatpush2.msra.mxu0 0.0
    %6007 = vmatprep.subr.mxu0 0.0
    %6008 = vmatpush2.msra.mxu0 0.0
    %6009 = vmatprep.subr.mxu0 0.0
    %6010 = vmatpush2.msra.mxu0 0.0
    %6011 = vmatprep.subr.mxu0 0.0
    %6012 = vmatpush2.msra.mxu0 0.0
    %6013 = vmatprep.subr.mxu0 0.0
    %6014 = vmatpush2.msra.mxu0 0.0
    %6015 = vmatprep.subr.mxu0 0.0
    %6016 = vmatpush2.msra.mxu0 0.0
    %6017 = vmatprep.subr.mxu0 0.0
    %6018 = vmatpush2.msra.mxu0 0.0
    %6019 = vmatprep.subr.mxu0 0.0
    %6020 = vmatpush2.msra.mxu0 0.0
    %6021 = vmatprep.mubr.f32.mxu0 0.0
    %6022 = vmatmul.mubr.f32.gmra.mxu0 %v5949
    %v6023 = vpop.f32.mrf.mxu0
    %v6024 = vadd.f32 0.0, %v6023
    %v6025 = vpop.f32.mrf.mxu0
    %6026 = vmatprep.mubr.f32.mxu0 0.0
    %6027 = vmatmul.mubr.f32.gmra.mxu0 %v5952
    %v6028 = vpop.f32.mrf.mxu0
    %v6029 = vadd.f32 0.0, %v6028
    %v6030 = vpop.f32.mrf.mxu0
    %6031 = vdwg.mxu0
    %v6032 = vadd.f32 %v5868, %v6024
    %v6033 = vadd.f32 %v5869, %v6029
    %6034 = vst.msk [vmem:[%s11] sm:$0xff] %vm59, %v6032
    %vm6035 = vcmask 322560
    %6036 = vst.msk [vmem:[%s11 + $0x8] sm:$0xf] %vm6035, %v6033
    // Predicated region
    $region50: #{_lambda_.3} parent=1 // pred_check
      _
    $region51: #{_lambda_.3} parent=1 // pred_check_branch
      %6038 = sbr.rel (0) target = $region53
    $region52: #{_lambda_.3} parent=1 // pred_region
      _
    $region53: #{_lambda_.3} parent=1 // pred_fallthru
      _
    // Predicated region
    $region54: #{_lambda_.3} parent=1 // pred_check
      _
    $region55: #{_lambda_.3} parent=1 // pred_check_branch
      %6040 = sbr.rel (0) target = $region57
    $region56: #{_lambda_.3} parent=1 // pred_region
      _
    $region57: #{_lambda_.3} parent=1 // pred_fallthru
      _
    %6041 = vsyncpa [#allocation3], 1

</llo_original>
